<compile_context>
chip_gen: v6e
topology: v6e:2x2x1
jax: 0.10.0
libtpu: 0.0.40
codegen_flags: <defaults>
</compile_context>

<pallas_src>
import functools

import jax
import jax.numpy as jnp
import numpy as np
from jax.experimental import pallas as pl
from jax.experimental.pallas import tpu as pltpu


# --------------------------------------------------------------------------- #
# Pallas kernel: Bt graphs folded into the row axis per grid step
# --------------------------------------------------------------------------- #
def hetgat_kernel(featP_ref, featA_ref,
                  w3P_ref, b3P_ref, w3A_ref, b3A_ref,
                  adj_p2p_ref, adj_p2a_ref, adj_a2p_ref, adj_a2a_ref,
                  outP_ref, outA_ref,
                  *, H, dP, dA, neg_slope=0.2):
    KP = H * dP
    KA = H * dA

    fP = featP_ref[...]                                   # (Bt*NP, inP)
    fA = featA_ref[...]                                   # (Bt*NA, inA)

    # One lane-dense 2-D matmul per node type; everything downstream is a
    # static lane slice of its result (column map defined in _pack_params).
    whP3 = jnp.dot(fP, w3P_ref[...],
                   preferred_element_type=jnp.float32) + b3P_ref[...]
    whA3 = jnp.dot(fA, w3A_ref[...],
                   preferred_element_type=jnp.float32) + b3A_ref[...]

    # ---- P columns: [Wh_P | Wh_p2p | Wh_p2a | s_p2p | s_p2a | d_p2p | d_a2p]
    whP     = whP3[:, 0:KP]                               # base transform == output layout
    whp2p   = whP3[:, KP:2 * KP]
    whp2a   = whP3[:, 2 * KP:2 * KP + KA]
    c = 2 * KP + KA
    src_p2p = whP3[:, c:c + KP]; c += KP                  # per-head score, pre-broadcast over dP lanes
    src_p2a = whP3[:, c:c + KA]; c += KA
    dst_p2p = whP3[:, c:c + KP]; c += KP
    dst_a2p = whP3[:, c:c + KP]

    # ---- A columns: [Wh_A | Wh_a2p | Wh_a2a | d_p2a | s_a2p | s_a2a | d_a2a]
    whA     = whA3[:, 0:KA]
    wha2p   = whA3[:, KA:KA + KP]
    wha2a   = whA3[:, KA + KP:2 * KA + KP]
    c = 2 * KA + KP
    dst_p2a = whA3[:, c:c + KA]; c += KA
    src_a2p = whA3[:, c:c + KP]; c += KP
    src_a2a = whA3[:, c:c + KA]; c += KA
    dst_a2a = whA3[:, c:c + KA]

    def gat_edge(dst_score, src_score, wh_src, adj):
        """Masked edge-softmax + aggregation in the flat head-major layout.

        dst_score: (Nd, K)  per-head dst attention score (broadcast over D lanes)
        src_score: (Ns, K)  per-head src attention score (broadcast over D lanes)
        wh_src:    (Ns, K)  edge-type feature transform of source nodes
        adj:       (Nd, Ns) 1.0 where edge src->dst exists (block-diagonal
                            across the Bt folded graphs)
        returns    (Nd, K)
        """
        e = dst_score[:, None, :] + src_score[None, :, :]          # (Nd, Ns, K)
        e = jnp.where(e > 0, e, neg_slope * e)                     # LeakyReLU
        adj3 = adj[:, :, None]                                     # (Nd, Ns, 1)
        e = jnp.where(adj3 > 0, e, -1e9)
        e = e - jnp.max(e, axis=1, keepdims=True)
        p = jnp.exp(e) * adj3
        denom = jnp.maximum(jnp.sum(p, axis=1, keepdims=True), 1e-12)
        alpha = p * pl.reciprocal(denom, approx=True)
        # Ns-contraction on the VPU (Ns is tiny here); no per-head matmuls.
        return jnp.sum(alpha * wh_src[None, :, :], axis=1)         # (Nd, K)

    ft_p2p = gat_edge(dst_p2p, src_p2p, whp2p, adj_p2p_ref[...])
    ft_a2p = gat_edge(dst_a2p, src_a2p, wha2p, adj_a2p_ref[...])
    ft_p2a = gat_edge(dst_p2a, src_p2a, whp2a, adj_p2a_ref[...])
    ft_a2a = gat_edge(dst_a2a, src_a2a, wha2a, adj_a2a_ref[...])

    # Residual combine + ReLU (merge='cat' => use_relu=True); single full-width
    # lane-dense store per node type.
    outP_ref[...] = jnp.maximum(whP + ft_p2p + ft_a2p, 0.0).astype(outP_ref.dtype)
    outA_ref[...] = jnp.maximum(whA + ft_p2a + ft_a2a, 0.0).astype(outA_ref.dtype)


# --------------------------------------------------------------------------- #
# Host-side parameter packing (torch nn.Linear layout -> fused 2-D slabs)
# --------------------------------------------------------------------------- #
def _pack_params(params, H, dP, dA):
    def t(w):                                   # torch (out, in) -> (in, out)
        return jnp.transpose(w)

    def score_cols(W, b, attn, D):
        # score[n,h] = sum_d (x @ W.T + b)[n, h*D+d] * attn[0,h,d], emitted as
        # D identical columns per head (pre-broadcast over the head's lanes).
        in_dim = W.shape[1]
        Wh = W.reshape(H, D, in_dim)                        # (H, D, in)
        v = attn[0]                                         # (H, D)
        w_proj = jnp.einsum('hdi,hd->hi', Wh, v)            # (H, in)
        b_proj = jnp.sum(b.reshape(H, D) * v, axis=-1)      # (H,)
        w_cols = jnp.repeat(w_proj, D, axis=0).T            # (in, H*D)
        b_cols = jnp.repeat(b_proj, D)                      # (H*D,)
        return w_cols, b_cols

    s_p2p_w, s_p2p_b = score_cols(params['W_p2p'], params['b_p2p'], params['p2p_src'], dP)
    s_p2a_w, s_p2a_b = score_cols(params['W_p2a'], params['b_p2a'], params['p2a_src'], dA)
    d_p2p_w, d_p2p_b = score_cols(params['W_P'],   params['b_P'],   params['p2p_dst'], dP)
    d_a2p_w, d_a2p_b = score_cols(params['W_P'],   params['b_P'],   params['a2p_dst'], dP)

    W3P = jnp.concatenate([t(params['W_P']), t(params['W_p2p']), t(params['W_p2a']),
                           s_p2p_w, s_p2a_w, d_p2p_w, d_a2p_w], axis=1)
    b3P = jnp.concatenate([params['b_P'], params['b_p2p'], params['b_p2a'],
                           s_p2p_b, s_p2a_b, d_p2p_b, d_a2p_b])[None, :]

    d_p2a_w, d_p2a_b = score_cols(params['W_A'],   params['b_A'],   params['p2a_dst'], dA)
    s_a2p_w, s_a2p_b = score_cols(params['W_a2p'], params['b_a2p'], params['a2p_src'], dP)
    s_a2a_w, s_a2a_b = score_cols(params['W_a2a'], params['b_a2a'], params['a2a_src'], dA)
    d_a2a_w, d_a2a_b = score_cols(params['W_A'],   params['b_A'],   params['a2a_dst'], dA)

    W3A = jnp.concatenate([t(params['W_A']), t(params['W_a2p']), t(params['W_a2a']),
                           d_p2a_w, s_a2p_w, s_a2a_w, d_a2a_w], axis=1)
    b3A = jnp.concatenate([params['b_A'], params['b_a2p'], params['b_a2a'],
                           d_p2a_b, s_a2p_b, s_a2a_b, d_a2a_b])[None, :]

    return W3P, b3P, W3A, b3A


def _block_diag_adj(adj, G, Bt):
    """(B, Nd, Ns) -> (G, Bt*Nd, Bt*Ns) with each step's Bt graphs on the diagonal."""
    _, Nd, Ns = adj.shape
    a = adj.reshape(G, Bt, Nd, Ns)
    eye = jnp.eye(Bt, dtype=adj.dtype)
    bd = a[:, :, :, None, :] * eye[None, :, None, :, None]     # (G, Bt, Nd, Bt, Ns)
    return bd.reshape(G, Bt * Nd, Bt * Ns)


def _choose_graphs_per_step(B, NP, NA, target=8):
    """Largest divisor of B (<= target) whose folded row counts make full
    8-row sublane tiles, preferring >= 2 grid steps (both v7x TensorCores)."""
    def ok(d):
        if B % d != 0:
            return False
        return ((d * NP) % 8 == 0 and (d * NA) % 8 == 0) or d == B
    cands = [d for d in range(1, B + 1) if ok(d) and d <= target]
    pref = [d for d in cands if B // d >= 2]
    if pref:
        return max(pref)
    if cands:
        return max(cands)
    return B        # single step with full-array blocks (always a legal BlockSpec)


# --------------------------------------------------------------------------- #
# Wrapper
# --------------------------------------------------------------------------- #
def multi_hetero_gat_real(feat_P, feat_A, params, adj, num_heads, in_dim, out_dim,
                          graphs_per_step=None):
    B, NP, inP = feat_P.shape
    _, NA, inA = feat_A.shape
    dP, dA = out_dim['P'], out_dim['A']
    H = num_heads
    KP, KA = H * dP, H * dA

    Bt = graphs_per_step or _choose_graphs_per_step(B, NP, NA)
    assert B % Bt == 0
    G = B // Bt

    featP_flat = feat_P.reshape(B * NP, inP)
    featA_flat = feat_A.reshape(B * NA, inA)
    adj_bd = {k: _block_diag_adj(v, G, Bt) for k, v in adj.items()}
    W3P, b3P, W3A, b3A = _pack_params(params, H, dP, dA)

    kernel = functools.partial(hetgat_kernel, H=H, dP=dP, dA=dA)

    def row_spec(rows, cols):
        return pl.BlockSpec((rows, cols), lambda g: (g, 0))

    def const_spec(shape):
        return pl.BlockSpec(shape, lambda g: (0,) * len(shape))

    def adj_spec(Nd, Ns):
        return pl.BlockSpec((None, Bt * Nd, Bt * Ns), lambda g: (g, 0, 0))

    in_specs = [
        row_spec(Bt * NP, inP), row_spec(Bt * NA, inA),
        const_spec(W3P.shape), const_spec(b3P.shape),
        const_spec(W3A.shape), const_spec(b3A.shape),
        adj_spec(NP, NP), adj_spec(NA, NP), adj_spec(NP, NA), adj_spec(NA, NA),
    ]
    out_specs = (row_spec(Bt * NP, KP), row_spec(Bt * NA, KA))

    # Advisory cost estimate so XLA can schedule around the custom call.
    WPc, WAc = int(W3P.shape[1]), int(W3A.shape[1])
    flops = 2 * B * (NP * inP * WPc + NA * inA * WAc)
    trans = 0
    for Nd, Ns, K in ((NP, NP, KP), (NP, NA, KP), (NA, NP, KA), (NA, NA, KA)):
        pairs = B * Bt * Nd * Ns          # block-diagonal folding -> Bt x pairs
        flops += 10 * pairs * K
        trans += pairs * K
    bytes_accessed = 4 * int(
        featP_flat.size + featA_flat.size + W3P.size + b3P.size + W3A.size + b3A.size
        + sum(int(v.size) for v in adj_bd.values())
        + B * NP * KP + B * NA * KA)

    outP_flat, outA_flat = pl.pallas_call(
        kernel,
        grid=(G,),
        in_specs=in_specs,
        out_specs=out_specs,
        out_shape=(jax.ShapeDtypeStruct((B * NP, KP), jnp.float32),
                   jax.ShapeDtypeStruct((B * NA, KA), jnp.float32)),
        compiler_params=pltpu.CompilerParams(
            dimension_semantics=("parallel",)),
        cost_estimate=pl.CostEstimate(flops=int(flops),
                                      transcendentals=int(trans),
                                      bytes_accessed=int(bytes_accessed)),
    )(featP_flat, featA_flat, W3P, b3P, W3A, b3A,
      adj_bd['p2p'], adj_bd['p2a'], adj_bd['a2p'], adj_bd['a2a'])

    return {'P': outP_flat.reshape(B, NP, KP), 'A': outA_flat.reshape(B, NA, KA)}


# --------------------------------------------------------------------------- #
# Pure-JAX reference (mirrors the PyTorch/DGL semantics), single graph
# --------------------------------------------------------------------------- #
def reference(feat_P, feat_A, params, adj, H, out_dim):
    dP, dA = out_dim['P'], out_dim['A']

    def lin(x, w, b):
        return x @ w.T + b

    whP   = lin(feat_P, params['W_P'],   params['b_P'])
    whA   = lin(feat_A, params['W_A'],   params['b_A'])
    whp2p = lin(feat_P, params['W_p2p'], params['b_p2p'])
    whp2a = lin(feat_P, params['W_p2a'], params['b_p2a'])
    wha2p = lin(feat_A, params['W_a2p'], params['b_a2p'])
    wha2a = lin(feat_A, params['W_a2a'], params['b_a2a'])

    def agg(wh_src, wh_dst, p_src, p_dst, adj_m, D):
        Ns, Nd = wh_src.shape[0], wh_dst.shape[0]
        ws = wh_src.reshape(Ns, H, D)
        wd = wh_dst.reshape(Nd, H, D)
        a_src = (ws * p_src).sum(-1)                       # (Ns, H)
        a_dst = (wd * p_dst).sum(-1)                       # (Nd, H)
        e = a_dst[:, None, :] + a_src[None, :, :]          # (Nd, Ns, H)
        e = jnp.where(e > 0, e, 0.2 * e)
        mask = adj_m[:, :, None]
        e = jnp.where(mask > 0, e, -jnp.inf)
        e = e - e.max(axis=1, keepdims=True)
        p = jnp.exp(e) * mask
        alpha = p / p.sum(axis=1, keepdims=True)
        ft = jnp.einsum('nsh,shd->nhd', alpha, ws)
        return ft.reshape(Nd, H * D)

    ft_p2p = agg(whp2p, whP, params['p2p_src'], params['p2p_dst'], adj['p2p'], dP)
    ft_a2p = agg(wha2p, whP, params['a2p_src'], params['a2p_dst'], adj['a2p'], dP)
    ft_p2a = agg(whp2a, whA, params['p2a_src'], params['p2a_dst'], adj['p2a'], dA)
    ft_a2a = agg(wha2a, whA, params['a2a_src'], params['a2a_dst'], adj['a2a'], dA)

    hP = jnp.maximum(whP + ft_p2p + ft_a2p, 0.0)
    hA = jnp.maximum(whA + ft_p2a + ft_a2a, 0.0)
    return {'P': hP, 'A': hA}


# --------------------------------------------------------------------------- #
if __name__ == "__main__":
    key = jax.random.PRNGKey(0)
    B = 8                               # batch of independent graphs (envs)
    NP, NA = 4, 8                       # num 'P' nodes, num 'A' nodes
    in_dim = {'P': 32, 'A': 24}
    out_dim = {'P': 16, 'A': 8}
    H = 4                               # num_heads

    keys = iter(jax.random.split(key, 48))

    def nrm(shape, scale=0.1):
        return jax.random.normal(next(keys), shape, jnp.float32) * scale

    params = {
        # torch nn.Linear layout: weight (out_features, in_features), bias (out,)
        'W_P':   nrm((H * out_dim['P'], in_dim['P'])), 'b_P':   nrm((H * out_dim['P'],)),
        'W_A':   nrm((H * out_dim['A'], in_dim['A'])), 'b_A':   nrm((H * out_dim['A'],)),
        'W_p2p': nrm((H * out_dim['P'], in_dim['P'])), 'b_p2p': nrm((H * out_dim['P'],)),
        'W_p2a': nrm((H * out_dim['A'], in_dim['P'])), 'b_p2a': nrm((H * out_dim['A'],)),
        'W_a2p': nrm((H * out_dim['P'], in_dim['A'])), 'b_a2p': nrm((H * out_dim['P'],)),
        'W_a2a': nrm((H * out_dim['A'], in_dim['A'])), 'b_a2a': nrm((H * out_dim['A'],)),
        # attention vectors, torch shape (1, H, D)
        'p2p_src': nrm((1, H, out_dim['P']), 0.5), 'p2p_dst': nrm((1, H, out_dim['P']), 0.5),
        'p2a_src': nrm((1, H, out_dim['A']), 0.5), 'p2a_dst': nrm((1, H, out_dim['A']), 0.5),
        'a2p_src': nrm((1, H, out_dim['P']), 0.5), 'a2p_dst': nrm((1, H, out_dim['P']), 0.5),
        'a2a_src': nrm((1, H, out_dim['A']), 0.5), 'a2a_dst': nrm((1, H, out_dim['A']), 0.5),
    }

    feat_P = jax.random.normal(next(keys), (B, NP, in_dim['P']), jnp.float32)
    feat_A = jax.random.normal(next(keys), (B, NA, in_dim['A']), jnp.float32)

    def make_adj(k, Nd, Ns):
        m = (jax.random.uniform(k, (B, Nd, Ns)) < 0.7).astype(jnp.float32)
        return m.at[:, :, 0].set(1.0)   # every destination has >= 1 in-edge

    adj = {
        'p2p': make_adj(next(keys), NP, NP),
        'p2a': make_adj(next(keys), NA, NP),
        'a2p': make_adj(next(keys), NP, NA),
        'a2a': make_adj(next(keys), NA, NA),
    }

    out = multi_hetero_gat_real(feat_P, feat_A, params, adj, H, in_dim, out_dim)
    jax.block_until_ready(out)

    for b in range(B):
        ref = reference(feat_P[b], feat_A[b], params,
                        {k: v[b] for k, v in adj.items()}, H, out_dim)
        np.testing.assert_allclose(np.asarray(out['P'][b]), np.asarray(ref['P']),
                                   rtol=2e-2, atol=2e-2)
        np.testing.assert_allclose(np.asarray(out['A'][b]), np.asarray(ref['A']),
                                   rtol=2e-2, atol=2e-2)
    assert out['P'].shape == (B, NP, H * out_dim['P'])
    assert out['A'].shape == (B, NA, H * out_dim['A'])

    print("KERNEL_OK")
</pallas_src>

<mosaic_0001>
module attributes {stable_mosaic.version = 11 : i64} {
  func.func @hetgat_kernel(%arg0: i32, %arg1: memref<16x32xf32, #tpu.memory_space<vmem>>, %arg2: memref<32x24xf32, #tpu.memory_space<vmem>>, %arg3: memref<32x384xf32, #tpu.memory_space<vmem>>, %arg4: memref<1x384xf32, #tpu.memory_space<vmem>>, %arg5: memref<24x288xf32, #tpu.memory_space<vmem>>, %arg6: memref<1x288xf32, #tpu.memory_space<vmem>>, %arg7: memref<1x16x16xf32, #tpu.memory_space<vmem>>, %arg8: memref<1x32x16xf32, #tpu.memory_space<vmem>>, %arg9: memref<1x16x32xf32, #tpu.memory_space<vmem>>, %arg10: memref<1x32x32xf32, #tpu.memory_space<vmem>>, %arg11: memref<16x64xf32, #tpu.memory_space<vmem>>, %arg12: memref<32x32xf32, #tpu.memory_space<vmem>>) attributes {dimension_semantics = [#tpu.dimension_semantics<parallel>], iteration_bounds = array<i64: 2>, scalar_prefetch = 0 : i64, scratch_operands = 0 : i64, tpu.core_type = #tpu.core_type<tc>, window_params = [{transform_indices = @transform_0, window_bounds = array<i64: 16, 32>}, {transform_indices = @transform_1, window_bounds = array<i64: 32, 24>}, {pipeline_mode = #tpu.pipeline_mode<synchronous>, transform_indices = @transform_2, window_bounds = array<i64: 32, 384>}, {pipeline_mode = #tpu.pipeline_mode<synchronous>, transform_indices = @transform_3, window_bounds = array<i64: 1, 384>}, {pipeline_mode = #tpu.pipeline_mode<synchronous>, transform_indices = @transform_4, window_bounds = array<i64: 24, 288>}, {pipeline_mode = #tpu.pipeline_mode<synchronous>, transform_indices = @transform_5, window_bounds = array<i64: 1, 288>}, {transform_indices = @transform_6, window_bounds = array<i64: 1, 16, 16>}, {transform_indices = @transform_7, window_bounds = array<i64: 1, 32, 16>}, {transform_indices = @transform_8, window_bounds = array<i64: 1, 16, 32>}, {transform_indices = @transform_9, window_bounds = array<i64: 1, 32, 32>}, {transform_indices = @transform_10, window_bounds = array<i64: 16, 64>}, {transform_indices = @transform_11, window_bounds = array<i64: 32, 32>}]} {
    %c0 = arith.constant 0 : index
    %c0_0 = arith.constant 0 : index
    %0 = vector.load %arg1[%c0, %c0_0] : memref<16x32xf32, #tpu.memory_space<vmem>>, vector<16x32xf32>
    %c0_1 = arith.constant 0 : index
    %c0_2 = arith.constant 0 : index
    %1 = vector.load %arg2[%c0_1, %c0_2] : memref<32x24xf32, #tpu.memory_space<vmem>>, vector<32x24xf32>
    %c0_3 = arith.constant 0 : index
    %c0_4 = arith.constant 0 : index
    %2 = vector.load %arg3[%c0_3, %c0_4] : memref<32x384xf32, #tpu.memory_space<vmem>>, vector<32x384xf32>
    %cst = arith.constant dense<0.000000e+00> : vector<16x384xf32>
    %3 = tpu.matmul %0, %2, %cst {dimension_numbers = #tpu.dot_dimension_numbers<[1], [0], [0], [1], [0, 0, 1, 1], [], []>} : vector<16x32xf32>, vector<32x384xf32>, vector<16x384xf32> -> vector<16x384xf32>
    %c0_5 = arith.constant 0 : index
    %c0_6 = arith.constant 0 : index
    %4 = vector.load %arg4[%c0_5, %c0_6] : memref<1x384xf32, #tpu.memory_space<vmem>>, vector<1x384xf32>
    %5 = vector.broadcast %4 : vector<1x384xf32> to vector<16x384xf32>
    %6 = arith.addf %3, %5 : vector<16x384xf32>
    %c0_7 = arith.constant 0 : index
    %c0_8 = arith.constant 0 : index
    %7 = vector.load %arg5[%c0_7, %c0_8] : memref<24x288xf32, #tpu.memory_space<vmem>>, vector<24x288xf32>
    %cst_9 = arith.constant dense<0.000000e+00> : vector<32x288xf32>
    %8 = tpu.matmul %1, %7, %cst_9 {dimension_numbers = #tpu.dot_dimension_numbers<[1], [0], [0], [1], [0, 0, 1, 1], [], []>} : vector<32x24xf32>, vector<24x288xf32>, vector<32x288xf32> -> vector<32x288xf32>
    %c0_10 = arith.constant 0 : index
    %c0_11 = arith.constant 0 : index
    %9 = vector.load %arg6[%c0_10, %c0_11] : memref<1x288xf32, #tpu.memory_space<vmem>>, vector<1x288xf32>
    %10 = vector.broadcast %9 : vector<1x288xf32> to vector<32x288xf32>
    %11 = arith.addf %8, %10 : vector<32x288xf32>
    %12 = vector.extract_strided_slice %6 {offsets = [0, 0], sizes = [16, 64], strides = [1, 1]} : vector<16x384xf32> to vector<16x64xf32>
    %13 = vector.extract_strided_slice %6 {offsets = [0, 64], sizes = [16, 64], strides = [1, 1]} : vector<16x384xf32> to vector<16x64xf32>
    %14 = vector.extract_strided_slice %6 {offsets = [0, 128], sizes = [16, 32], strides = [1, 1]} : vector<16x384xf32> to vector<16x32xf32>
    %15 = vector.extract_strided_slice %6 {offsets = [0, 160], sizes = [16, 64], strides = [1, 1]} : vector<16x384xf32> to vector<16x64xf32>
    %16 = vector.extract_strided_slice %6 {offsets = [0, 224], sizes = [16, 32], strides = [1, 1]} : vector<16x384xf32> to vector<16x32xf32>
    %17 = vector.extract_strided_slice %6 {offsets = [0, 256], sizes = [16, 64], strides = [1, 1]} : vector<16x384xf32> to vector<16x64xf32>
    %18 = vector.extract_strided_slice %6 {offsets = [0, 320], sizes = [16, 64], strides = [1, 1]} : vector<16x384xf32> to vector<16x64xf32>
    %19 = vector.extract_strided_slice %11 {offsets = [0, 0], sizes = [32, 32], strides = [1, 1]} : vector<32x288xf32> to vector<32x32xf32>
    %20 = vector.extract_strided_slice %11 {offsets = [0, 32], sizes = [32, 64], strides = [1, 1]} : vector<32x288xf32> to vector<32x64xf32>
    %21 = vector.extract_strided_slice %11 {offsets = [0, 96], sizes = [32, 32], strides = [1, 1]} : vector<32x288xf32> to vector<32x32xf32>
    %22 = vector.extract_strided_slice %11 {offsets = [0, 128], sizes = [32, 32], strides = [1, 1]} : vector<32x288xf32> to vector<32x32xf32>
    %23 = vector.extract_strided_slice %11 {offsets = [0, 160], sizes = [32, 64], strides = [1, 1]} : vector<32x288xf32> to vector<32x64xf32>
    %24 = vector.extract_strided_slice %11 {offsets = [0, 224], sizes = [32, 32], strides = [1, 1]} : vector<32x288xf32> to vector<32x32xf32>
    %25 = vector.extract_strided_slice %11 {offsets = [0, 256], sizes = [32, 32], strides = [1, 1]} : vector<32x288xf32> to vector<32x32xf32>
    %c0_12 = arith.constant 0 : index
    %c0_13 = arith.constant 0 : index
    %c0_14 = arith.constant 0 : index
    %26 = vector.load %arg7[%c0_12, %c0_13, %c0_14] : memref<1x16x16xf32, #tpu.memory_space<vmem>>, vector<1x16x16xf32>
    %27 = vector.shape_cast %26 : vector<1x16x16xf32> to vector<16x16xf32>
    %28 = vector.shape_cast %17 : vector<16x64xf32> to vector<16x1x64xf32>
    %29 = vector.shape_cast %15 : vector<16x64xf32> to vector<1x16x64xf32>
    %30 = vector.broadcast %28 : vector<16x1x64xf32> to vector<16x16x64xf32>
    %31 = vector.broadcast %29 : vector<1x16x64xf32> to vector<16x16x64xf32>
    %32 = arith.addf %30, %31 : vector<16x16x64xf32>
    %cst_15 = arith.constant 0.000000e+00 : f32
    %33 = vector.broadcast %cst_15 : f32 to vector<16x16x64xf32>
    %34 = arith.cmpf ogt, %32, %33 : vector<16x16x64xf32>
    %cst_16 = arith.constant 2.000000e-01 : f32
    %35 = vector.broadcast %cst_16 : f32 to vector<16x16x64xf32>
    %36 = arith.mulf %35, %32 : vector<16x16x64xf32>
    %37 = arith.select %34, %32, %36 : vector<16x16x64xi1>, vector<16x16x64xf32>
    %38 = vector.shape_cast %27 : vector<16x16xf32> to vector<16x16x1xf32>
    %cst_17 = arith.constant 0.000000e+00 : f32
    %39 = vector.broadcast %cst_17 : f32 to vector<16x16x1xf32>
    %40 = arith.cmpf ogt, %38, %39 : vector<16x16x1xf32>
    %cst_18 = arith.constant -1.000000e+09 : f32
    %41 = vector.shape_cast %40 : vector<16x16x1xi1> to vector<16x16x1xi1>
    %42 = vector.broadcast %41 : vector<16x16x1xi1> to vector<16x16x64xi1>
    %43 = vector.broadcast %cst_18 : f32 to vector<16x16x64xf32>
    %44 = arith.select %42, %37, %43 : vector<16x16x64xi1>, vector<16x16x64xf32>
    %cst_19 = arith.constant dense<0xFF800000> : vector<16x64xf32>
    %45 = vector.multi_reduction <maximumf>, %44, %cst_19 [1] : vector<16x16x64xf32> to vector<16x64xf32>
    %46 = vector.shape_cast %45 : vector<16x64xf32> to vector<16x1x64xf32>
    %47 = vector.broadcast %46 : vector<16x1x64xf32> to vector<16x16x64xf32>
    %48 = arith.subf %44, %47 : vector<16x16x64xf32>
    %49 = math.exp %48 : vector<16x16x64xf32>
    %50 = vector.broadcast %38 : vector<16x16x1xf32> to vector<16x16x64xf32>
    %51 = arith.mulf %49, %50 : vector<16x16x64xf32>
    %cst_20 = arith.constant dense<0.000000e+00> : vector<16x64xf32>
    %52 = vector.multi_reduction <add>, %51, %cst_20 [1] : vector<16x16x64xf32> to vector<16x64xf32>
    %53 = vector.shape_cast %52 : vector<16x64xf32> to vector<16x1x64xf32>
    %cst_21 = arith.constant 9.99999996E-13 : f32
    %54 = vector.broadcast %cst_21 : f32 to vector<16x1x64xf32>
    %55 = arith.maximumf %53, %54 : vector<16x1x64xf32>
    %56 = tpu.reciprocal %55 {approx = true} : vector<16x1x64xf32> -> vector<16x1x64xf32>
    %57 = vector.broadcast %56 : vector<16x1x64xf32> to vector<16x16x64xf32>
    %58 = arith.mulf %51, %57 : vector<16x16x64xf32>
    %59 = vector.shape_cast %13 : vector<16x64xf32> to vector<1x16x64xf32>
    %60 = vector.broadcast %59 : vector<1x16x64xf32> to vector<16x16x64xf32>
    %61 = arith.mulf %58, %60 : vector<16x16x64xf32>
    %cst_22 = arith.constant dense<0.000000e+00> : vector<16x64xf32>
    %62 = vector.multi_reduction <add>, %61, %cst_22 [1] : vector<16x16x64xf32> to vector<16x64xf32>
    %c0_23 = arith.constant 0 : index
    %c0_24 = arith.constant 0 : index
    %c0_25 = arith.constant 0 : index
    %63 = vector.load %arg9[%c0_23, %c0_24, %c0_25] : memref<1x16x32xf32, #tpu.memory_space<vmem>>, vector<1x16x32xf32>
    %64 = vector.shape_cast %63 : vector<1x16x32xf32> to vector<16x32xf32>
    %65 = vector.shape_cast %18 : vector<16x64xf32> to vector<16x1x64xf32>
    %66 = vector.shape_cast %23 : vector<32x64xf32> to vector<1x32x64xf32>
    %67 = vector.broadcast %65 : vector<16x1x64xf32> to vector<16x32x64xf32>
    %68 = vector.broadcast %66 : vector<1x32x64xf32> to vector<16x32x64xf32>
    %69 = arith.addf %67, %68 : vector<16x32x64xf32>
    %cst_26 = arith.constant 0.000000e+00 : f32
    %70 = vector.broadcast %cst_26 : f32 to vector<16x32x64xf32>
    %71 = arith.cmpf ogt, %69, %70 : vector<16x32x64xf32>
    %cst_27 = arith.constant 2.000000e-01 : f32
    %72 = vector.broadcast %cst_27 : f32 to vector<16x32x64xf32>
    %73 = arith.mulf %72, %69 : vector<16x32x64xf32>
    %74 = arith.select %71, %69, %73 : vector<16x32x64xi1>, vector<16x32x64xf32>
    %75 = vector.shape_cast %64 : vector<16x32xf32> to vector<16x32x1xf32>
    %cst_28 = arith.constant 0.000000e+00 : f32
    %76 = vector.broadcast %cst_28 : f32 to vector<16x32x1xf32>
    %77 = arith.cmpf ogt, %75, %76 : vector<16x32x1xf32>
    %cst_29 = arith.constant -1.000000e+09 : f32
    %78 = vector.shape_cast %77 : vector<16x32x1xi1> to vector<16x32x1xi1>
    %79 = vector.broadcast %78 : vector<16x32x1xi1> to vector<16x32x64xi1>
    %80 = vector.broadcast %cst_29 : f32 to vector<16x32x64xf32>
    %81 = arith.select %79, %74, %80 : vector<16x32x64xi1>, vector<16x32x64xf32>
    %cst_30 = arith.constant dense<0xFF800000> : vector<16x64xf32>
    %82 = vector.multi_reduction <maximumf>, %81, %cst_30 [1] : vector<16x32x64xf32> to vector<16x64xf32>
    %83 = vector.shape_cast %82 : vector<16x64xf32> to vector<16x1x64xf32>
    %84 = vector.broadcast %83 : vector<16x1x64xf32> to vector<16x32x64xf32>
    %85 = arith.subf %81, %84 : vector<16x32x64xf32>
    %86 = math.exp %85 : vector<16x32x64xf32>
    %87 = vector.broadcast %75 : vector<16x32x1xf32> to vector<16x32x64xf32>
    %88 = arith.mulf %86, %87 : vector<16x32x64xf32>
    %cst_31 = arith.constant dense<0.000000e+00> : vector<16x64xf32>
    %89 = vector.multi_reduction <add>, %88, %cst_31 [1] : vector<16x32x64xf32> to vector<16x64xf32>
    %90 = vector.shape_cast %89 : vector<16x64xf32> to vector<16x1x64xf32>
    %cst_32 = arith.constant 9.99999996E-13 : f32
    %91 = vector.broadcast %cst_32 : f32 to vector<16x1x64xf32>
    %92 = arith.maximumf %90, %91 : vector<16x1x64xf32>
    %93 = tpu.reciprocal %92 {approx = true} : vector<16x1x64xf32> -> vector<16x1x64xf32>
    %94 = vector.broadcast %93 : vector<16x1x64xf32> to vector<16x32x64xf32>
    %95 = arith.mulf %88, %94 : vector<16x32x64xf32>
    %96 = vector.shape_cast %20 : vector<32x64xf32> to vector<1x32x64xf32>
    %97 = vector.broadcast %96 : vector<1x32x64xf32> to vector<16x32x64xf32>
    %98 = arith.mulf %95, %97 : vector<16x32x64xf32>
    %cst_33 = arith.constant dense<0.000000e+00> : vector<16x64xf32>
    %99 = vector.multi_reduction <add>, %98, %cst_33 [1] : vector<16x32x64xf32> to vector<16x64xf32>
    %c0_34 = arith.constant 0 : index
    %c0_35 = arith.constant 0 : index
    %c0_36 = arith.constant 0 : index
    %100 = vector.load %arg8[%c0_34, %c0_35, %c0_36] : memref<1x32x16xf32, #tpu.memory_space<vmem>>, vector<1x32x16xf32>
    %101 = vector.shape_cast %100 : vector<1x32x16xf32> to vector<32x16xf32>
    %102 = vector.shape_cast %22 : vector<32x32xf32> to vector<32x1x32xf32>
    %103 = vector.shape_cast %16 : vector<16x32xf32> to vector<1x16x32xf32>
    %104 = vector.broadcast %102 : vector<32x1x32xf32> to vector<32x16x32xf32>
    %105 = vector.broadcast %103 : vector<1x16x32xf32> to vector<32x16x32xf32>
    %106 = arith.addf %104, %105 : vector<32x16x32xf32>
    %cst_37 = arith.constant 0.000000e+00 : f32
    %107 = vector.broadcast %cst_37 : f32 to vector<32x16x32xf32>
    %108 = arith.cmpf ogt, %106, %107 : vector<32x16x32xf32>
    %cst_38 = arith.constant 2.000000e-01 : f32
    %109 = vector.broadcast %cst_38 : f32 to vector<32x16x32xf32>
    %110 = arith.mulf %109, %106 : vector<32x16x32xf32>
    %111 = arith.select %108, %106, %110 : vector<32x16x32xi1>, vector<32x16x32xf32>
    %112 = vector.shape_cast %101 : vector<32x16xf32> to vector<32x16x1xf32>
    %cst_39 = arith.constant 0.000000e+00 : f32
    %113 = vector.broadcast %cst_39 : f32 to vector<32x16x1xf32>
    %114 = arith.cmpf ogt, %112, %113 : vector<32x16x1xf32>
    %cst_40 = arith.constant -1.000000e+09 : f32
    %115 = vector.shape_cast %114 : vector<32x16x1xi1> to vector<32x16x1xi1>
    %116 = vector.broadcast %115 : vector<32x16x1xi1> to vector<32x16x32xi1>
    %117 = vector.broadcast %cst_40 : f32 to vector<32x16x32xf32>
    %118 = arith.select %116, %111, %117 : vector<32x16x32xi1>, vector<32x16x32xf32>
    %cst_41 = arith.constant dense<0xFF800000> : vector<32x32xf32>
    %119 = vector.multi_reduction <maximumf>, %118, %cst_41 [1] : vector<32x16x32xf32> to vector<32x32xf32>
    %120 = vector.shape_cast %119 : vector<32x32xf32> to vector<32x1x32xf32>
    %121 = vector.broadcast %120 : vector<32x1x32xf32> to vector<32x16x32xf32>
    %122 = arith.subf %118, %121 : vector<32x16x32xf32>
    %123 = math.exp %122 : vector<32x16x32xf32>
    %124 = vector.broadcast %112 : vector<32x16x1xf32> to vector<32x16x32xf32>
    %125 = arith.mulf %123, %124 : vector<32x16x32xf32>
    %cst_42 = arith.constant dense<0.000000e+00> : vector<32x32xf32>
    %126 = vector.multi_reduction <add>, %125, %cst_42 [1] : vector<32x16x32xf32> to vector<32x32xf32>
    %127 = vector.shape_cast %126 : vector<32x32xf32> to vector<32x1x32xf32>
    %cst_43 = arith.constant 9.99999996E-13 : f32
    %128 = vector.broadcast %cst_43 : f32 to vector<32x1x32xf32>
    %129 = arith.maximumf %127, %128 : vector<32x1x32xf32>
    %130 = tpu.reciprocal %129 {approx = true} : vector<32x1x32xf32> -> vector<32x1x32xf32>
    %131 = vector.broadcast %130 : vector<32x1x32xf32> to vector<32x16x32xf32>
    %132 = arith.mulf %125, %131 : vector<32x16x32xf32>
    %133 = vector.shape_cast %14 : vector<16x32xf32> to vector<1x16x32xf32>
    %134 = vector.broadcast %133 : vector<1x16x32xf32> to vector<32x16x32xf32>
    %135 = arith.mulf %132, %134 : vector<32x16x32xf32>
    %cst_44 = arith.constant dense<0.000000e+00> : vector<32x32xf32>
    %136 = vector.multi_reduction <add>, %135, %cst_44 [1] : vector<32x16x32xf32> to vector<32x32xf32>
    %c0_45 = arith.constant 0 : index
    %c0_46 = arith.constant 0 : index
    %c0_47 = arith.constant 0 : index
    %137 = vector.load %arg10[%c0_45, %c0_46, %c0_47] : memref<1x32x32xf32, #tpu.memory_space<vmem>>, vector<1x32x32xf32>
    %138 = vector.shape_cast %137 : vector<1x32x32xf32> to vector<32x32xf32>
    %139 = vector.shape_cast %25 : vector<32x32xf32> to vector<32x1x32xf32>
    %140 = vector.shape_cast %24 : vector<32x32xf32> to vector<1x32x32xf32>
    %141 = vector.broadcast %139 : vector<32x1x32xf32> to vector<32x32x32xf32>
    %142 = vector.broadcast %140 : vector<1x32x32xf32> to vector<32x32x32xf32>
    %143 = arith.addf %141, %142 : vector<32x32x32xf32>
    %cst_48 = arith.constant 0.000000e+00 : f32
    %144 = vector.broadcast %cst_48 : f32 to vector<32x32x32xf32>
    %145 = arith.cmpf ogt, %143, %144 : vector<32x32x32xf32>
    %cst_49 = arith.constant 2.000000e-01 : f32
    %146 = vector.broadcast %cst_49 : f32 to vector<32x32x32xf32>
    %147 = arith.mulf %146, %143 : vector<32x32x32xf32>
    %148 = arith.select %145, %143, %147 : vector<32x32x32xi1>, vector<32x32x32xf32>
    %149 = vector.shape_cast %138 : vector<32x32xf32> to vector<32x32x1xf32>
    %cst_50 = arith.constant 0.000000e+00 : f32
    %150 = vector.broadcast %cst_50 : f32 to vector<32x32x1xf32>
    %151 = arith.cmpf ogt, %149, %150 : vector<32x32x1xf32>
    %cst_51 = arith.constant -1.000000e+09 : f32
    %152 = vector.shape_cast %151 : vector<32x32x1xi1> to vector<32x32x1xi1>
    %153 = vector.broadcast %152 : vector<32x32x1xi1> to vector<32x32x32xi1>
    %154 = vector.broadcast %cst_51 : f32 to vector<32x32x32xf32>
    %155 = arith.select %153, %148, %154 : vector<32x32x32xi1>, vector<32x32x32xf32>
    %cst_52 = arith.constant dense<0xFF800000> : vector<32x32xf32>
    %156 = vector.multi_reduction <maximumf>, %155, %cst_52 [1] : vector<32x32x32xf32> to vector<32x32xf32>
    %157 = vector.shape_cast %156 : vector<32x32xf32> to vector<32x1x32xf32>
    %158 = vector.broadcast %157 : vector<32x1x32xf32> to vector<32x32x32xf32>
    %159 = arith.subf %155, %158 : vector<32x32x32xf32>
    %160 = math.exp %159 : vector<32x32x32xf32>
    %161 = vector.broadcast %149 : vector<32x32x1xf32> to vector<32x32x32xf32>
    %162 = arith.mulf %160, %161 : vector<32x32x32xf32>
    %cst_53 = arith.constant dense<0.000000e+00> : vector<32x32xf32>
    %163 = vector.multi_reduction <add>, %162, %cst_53 [1] : vector<32x32x32xf32> to vector<32x32xf32>
    %164 = vector.shape_cast %163 : vector<32x32xf32> to vector<32x1x32xf32>
    %cst_54 = arith.constant 9.99999996E-13 : f32
    %165 = vector.broadcast %cst_54 : f32 to vector<32x1x32xf32>
    %166 = arith.maximumf %164, %165 : vector<32x1x32xf32>
    %167 = tpu.reciprocal %166 {approx = true} : vector<32x1x32xf32> -> vector<32x1x32xf32>
    %168 = vector.broadcast %167 : vector<32x1x32xf32> to vector<32x32x32xf32>
    %169 = arith.mulf %162, %168 : vector<32x32x32xf32>
    %170 = vector.shape_cast %21 : vector<32x32xf32> to vector<1x32x32xf32>
    %171 = vector.broadcast %170 : vector<1x32x32xf32> to vector<32x32x32xf32>
    %172 = arith.mulf %169, %171 : vector<32x32x32xf32>
    %cst_55 = arith.constant dense<0.000000e+00> : vector<32x32xf32>
    %173 = vector.multi_reduction <add>, %172, %cst_55 [1] : vector<32x32x32xf32> to vector<32x32xf32>
    %174 = arith.addf %12, %62 : vector<16x64xf32>
    %175 = arith.addf %174, %99 : vector<16x64xf32>
    %cst_56 = arith.constant 0.000000e+00 : f32
    %176 = vector.broadcast %cst_56 : f32 to vector<16x64xf32>
    %177 = arith.maximumf %175, %176 : vector<16x64xf32>
    %c0_57 = arith.constant 0 : index
    %c0_58 = arith.constant 0 : index
    %178 = vector.load %arg11[%c0_57, %c0_58] : memref<16x64xf32, #tpu.memory_space<vmem>>, vector<16x64xf32>
    tpu.vector_store %arg11[%c0_57, %c0_58], %177 {strides = array<i32>} : memref<16x64xf32, #tpu.memory_space<vmem>>, vector<16x64xf32>,
    %179 = arith.addf %19, %136 : vector<32x32xf32>
    %180 = arith.addf %179, %173 : vector<32x32xf32>
    %cst_59 = arith.constant 0.000000e+00 : f32
    %181 = vector.broadcast %cst_59 : f32 to vector<32x32xf32>
    %182 = arith.maximumf %180, %181 : vector<32x32xf32>
    %c0_60 = arith.constant 0 : index
    %c0_61 = arith.constant 0 : index
    %183 = vector.load %arg12[%c0_60, %c0_61] : memref<32x32xf32, #tpu.memory_space<vmem>>, vector<32x32xf32>
    tpu.vector_store %arg12[%c0_60, %c0_61], %182 {strides = array<i32>} : memref<32x32xf32, #tpu.memory_space<vmem>>, vector<32x32xf32>,
    return
  }
  func.func @transform_0(%arg0: i32) -> (i32, i32) {
    %c0_i32 = arith.constant 0 : i32
    %c0_i32_0 = arith.constant 0 : i32
    return %arg0, %c0_i32 : i32, i32
  }
  func.func @transform_1(%arg0: i32) -> (i32, i32) {
    %c0_i32 = arith.constant 0 : i32
    %c0_i32_0 = arith.constant 0 : i32
    return %arg0, %c0_i32 : i32, i32
  }
  func.func @transform_2(%arg0: i32) -> (i32, i32) {
    %c0_i32 = arith.constant 0 : i32
    %c0_i32_0 = arith.constant 0 : i32
    %c0_i32_1 = arith.constant 0 : i32
    return %c0_i32, %c0_i32_0 : i32, i32
  }
  func.func @transform_3(%arg0: i32) -> (i32, i32) {
    %c0_i32 = arith.constant 0 : i32
    %c0_i32_0 = arith.constant 0 : i32
    %c0_i32_1 = arith.constant 0 : i32
    return %c0_i32, %c0_i32_0 : i32, i32
  }
  func.func @transform_4(%arg0: i32) -> (i32, i32) {
    %c0_i32 = arith.constant 0 : i32
    %c0_i32_0 = arith.constant 0 : i32
    %c0_i32_1 = arith.constant 0 : i32
    return %c0_i32, %c0_i32_0 : i32, i32
  }
  func.func @transform_5(%arg0: i32) -> (i32, i32) {
    %c0_i32 = arith.constant 0 : i32
    %c0_i32_0 = arith.constant 0 : i32
    %c0_i32_1 = arith.constant 0 : i32
    return %c0_i32, %c0_i32_0 : i32, i32
  }
  func.func @transform_6(%arg0: i32) -> (i32, i32, i32) {
    %c0_i32 = arith.constant 0 : i32
    %c0_i32_0 = arith.constant 0 : i32
    %c0_i32_1 = arith.constant 0 : i32
    return %arg0, %c0_i32, %c0_i32_0 : i32, i32, i32
  }
  func.func @transform_7(%arg0: i32) -> (i32, i32, i32) {
    %c0_i32 = arith.constant 0 : i32
    %c0_i32_0 = arith.constant 0 : i32
    %c0_i32_1 = arith.constant 0 : i32
    return %arg0, %c0_i32, %c0_i32_0 : i32, i32, i32
  }
  func.func @transform_8(%arg0: i32) -> (i32, i32, i32) {
    %c0_i32 = arith.constant 0 : i32
    %c0_i32_0 = arith.constant 0 : i32
    %c0_i32_1 = arith.constant 0 : i32
    return %arg0, %c0_i32, %c0_i32_0 : i32, i32, i32
  }
  func.func @transform_9(%arg0: i32) -> (i32, i32, i32) {
    %c0_i32 = arith.constant 0 : i32
    %c0_i32_0 = arith.constant 0 : i32
    %c0_i32_1 = arith.constant 0 : i32
    return %arg0, %c0_i32, %c0_i32_0 : i32, i32, i32
  }
  func.func @transform_10(%arg0: i32) -> (i32, i32) {
    %c0_i32 = arith.constant 0 : i32
    %c0_i32_0 = arith.constant 0 : i32
    return %arg0, %c0_i32 : i32, i32
  }
  func.func @transform_11(%arg0: i32) -> (i32, i32) {
    %c0_i32 = arith.constant 0 : i32
    %c0_i32_0 = arith.constant 0 : i32
    return %arg0, %c0_i32 : i32, i32
  }
}

</mosaic_0001>

<llo_original>
// kernel: tpu_custom_call.1
$region0: #{tpu_custom_call.1}
  #allocation0 [shape = 'u32[]', space=smem, size = 0x4, offset = 0x4, fixed_abs, tag = 'smem constant byte address 0x4 - core index']
  #allocation1 [shape = 'u32[144,128]{1,0:T(1,128)}', space=vmem, size = 0x12000, scoped, tag = 'internal scratch']
  %s0 = inlined_call_operand.hbm [shape: f32[32,32], index: 0, kind: input, shape index: {}]
  %s1 = inlined_call_operand.vmem [shape: f32[64,24], index: 1, kind: input, shape index: {}]
  %s2 = inlined_call_operand.vmem [shape: f32[32,384], index: 2, kind: input, shape index: {}]
  %s3 = inlined_call_operand.vmem [shape: f32[1,384], index: 3, kind: input, shape index: {}]
  %s4 = inlined_call_operand.vmem [shape: f32[24,288], index: 4, kind: input, shape index: {}]
  %s5 = inlined_call_operand.vmem [shape: f32[1,288], index: 5, kind: input, shape index: {}]
  %s6 = inlined_call_operand.hbm [shape: f32[2,16,16], index: 6, kind: input, shape index: {}]
  %s7 = inlined_call_operand.vmem [shape: f32[2,32,16], index: 7, kind: input, shape index: {}]
  %s8 = inlined_call_operand.hbm [shape: f32[2,16,32], index: 8, kind: input, shape index: {}]
  %s9 = inlined_call_operand.hbm [shape: f32[2,32,32], index: 9, kind: input, shape index: {}]
  %s10 = inlined_call_operand.hbm [shape: f32[32,64], index: 10, kind: output, shape index: {0}]
  %s11 = inlined_call_operand.vmem [shape: f32[64,32], index: 11, kind: output, shape index: {1}]
  %12 = xla_tuple %s10, %s11
  %s13 = sld [smem:[#allocation0]]
  $region97: #{tpu_custom_call.1} parent=0
    _
  %s15 = ssub.s32 1, %s13
  %s16 = scalar_select 0, %s15, %s13
  $region1: #{tpu_custom_call.1} parent=0
    #allocation2 [shape = 'u8[16384]{0}', space=vmem, size = 0x4000, scoped, tag = 'input window, operand 0']
    #allocation3 [shape = 's32[2]{0}', space=sflag, size = 0x8, scoped, tag = 'scoped memory for tpu_custom_call.1']
    #allocation4 [shape = 's32[2]{0}', space=sflag, size = 0x8, scoped, tag = 'scoped memory for tpu_custom_call.1']
    #allocation5 [shape = 'u8[16384]{0}', space=vmem, size = 0x4000, scoped, tag = 'input window, operand 6']
    #allocation6 [shape = 's32[2]{0}', space=sflag, size = 0x8, scoped, tag = 'scoped memory for tpu_custom_call.1']
    #allocation7 [shape = 'u8[16384]{0}', space=vmem, size = 0x4000, scoped, tag = 'input window, operand 8']
    #allocation8 [shape = 'u8[32768]{0}', space=vmem, size = 0x8000, scoped, tag = 'input window, operand 9']
    #allocation9 [shape = 's32[2]{0}', space=sflag, size = 0x8, scoped, tag = 'scoped memory for tpu_custom_call.1']
    #allocation10 [shape = 'u8[16384]{0}', space=vmem, size = 0x4000, scoped, tag = 'output window, operand 0']
    %17 = vsyncpa [#allocation3], 0
    %s18 = scalar_lea.sflag [#allocation3], 1
    %19 = vsyncpa %s18, 0
    %20 = vsyncpa [#allocation6], 0
    %s21 = scalar_lea.sflag [#allocation6], 1
    %22 = vsyncpa %s21, 0
    %23 = vsyncpa [#allocation9], 0
    %s24 = scalar_lea.sflag [#allocation9], 1
    %25 = vsyncpa %s24, 0
    %26 = vsyncpa [#allocation4], 0
    %s27 = scalar_lea.sflag [#allocation4], 1
    %28 = vsyncpa %s27, 0
    loop: start=0, step=1, limit=4
    $region2: #{tpu_custom_call.1} parent=1 // loop_pre_header
      _
    $region3: #{tpu_custom_call.1} parent=1 // loop_header
      %s30 = sphi 0, %s34
      %p31 = scmp.ge.s32.totalorder %s30, 4
      %s40 = sphi 0, %s42
      %s43 = sphi 0, %s40
      %s44 = sphi 0, %s43
      %s60 = sphi 0, %s44
      %s66 = sphi 0, %s68
      %s69 = sphi 0, %s66
      %s70 = sphi 0, %s69
      %s86 = sphi 0, %s70
      %s90 = sphi 0, %s90
      %s92 = sphi 0, %s90
      %s93 = sphi 0, %s92
      %s107 = sphi 0, %s93
      %s111 = sphi 0, %s111
      %s113 = sphi 0, %s111
      %s114 = sphi 0, %s113
      %s128 = sphi 0, %s114
      %s132 = sphi 0, %s132
      %s134 = sphi 0, %s132
      %s135 = sphi 0, %s134
      %s149 = sphi 0, %s135
      %s153 = sphi 0, %s153
      %s155 = sphi 0, %s153
      %s156 = sphi 0, %s155
      %s170 = sphi 0, %s156
      %s176 = sphi 0, %s178
      %s179 = sphi 0, %s176
      %s180 = sphi 0, %s179
      %s196 = sphi 0, %s180
      %s202 = sphi 0, %s204
      %s205 = sphi 0, %s202
      %s206 = sphi 0, %s205
      %s222 = sphi 0, %s206
      %s228 = sphi 0, %s230
      %s231 = sphi 0, %s228
      %s232 = sphi 0, %s231
      %s248 = sphi 0, %s232
      %s254 = sphi 0, %s256
      %s257 = sphi 0, %s254
      %s258 = sphi 0, %s257
      %s274 = sphi 0, %s258
      %s280 = sphi 0, %s282
      %s283 = sphi 0, %s280
      %s284 = sphi 0, %s283
      %s300 = sphi 0, %s284
      %s306 = sphi 0, %s308
      %s309 = sphi 0, %s306
      %s310 = sphi 0, %s309
      %s326 = sphi 0, %s310
    $region4: #{tpu_custom_call.1} parent=1 // loop_header_branch
      %33 = sbr.rel (%p31) target = $region8
    $region5: #{tpu_custom_call.1} parent=1 // loop_body
      %s35 = ssub.s32 %s30, 1
      %s36 = ssub.s32 %s30, 2
      %s37 = sadd.s32 %s30, 1
      %s38 = ssub.s32 %s30, %s37
      %p39 = scmp.eq.s32.totalorder %s38, 0
      %s41 = sadd.s32 %s40, 1
      %s42 = scalar_select %p39, %s40, %s41
      %p45 = pneg %p39
      %p46 = scmp.eq.s32.totalorder %s30, 1
      %p47 = por %p45, %p46
      %p48 = scmp.ne.s32.totalorder %s40, %s43
      %p49 = scmp.eq.s32.totalorder %s30, 0
      %p50 = por %p48, %p49
      %p51 = scmp.ne.s32.totalorder %s40, %s43
      %p52 = scmp.eq.s32.totalorder %s35, 1
      %p53 = por %p51, %p52
      %p54 = scmp.ne.s32.totalorder %s43, %s44
      %p55 = scmp.eq.s32.totalorder %s35, 0
      %p56 = por %p54, %p55
      %p57 = scmp.ne.s32.totalorder %s43, %s44
      %p58 = scmp.eq.s32.totalorder %s36, 1
      %p59 = por %p57, %p58
      %p61 = scmp.ne.s32.totalorder %s44, %s60
      %p62 = scmp.eq.s32.totalorder %s36, 0
      %p63 = por %p61, %p62
      %s64 = ssub.s32 %s30, %s37
      %p65 = scmp.eq.s32.totalorder %s64, 0
      %s67 = sadd.s32 %s66, 1
      %s68 = scalar_select %p65, %s66, %s67
      %p71 = pneg %p65
      %p72 = scmp.eq.s32.totalorder %s30, 1
      %p73 = por %p71, %p72
      %p74 = scmp.ne.s32.totalorder %s66, %s69
      %p75 = scmp.eq.s32.totalorder %s30, 0
      %p76 = por %p74, %p75
      %p77 = scmp.ne.s32.totalorder %s66, %s69
      %p78 = scmp.eq.s32.totalorder %s35, 1
      %p79 = por %p77, %p78
      %p80 = scmp.ne.s32.totalorder %s69, %s70
      %p81 = scmp.eq.s32.totalorder %s35, 0
      %p82 = por %p80, %p81
      %p83 = scmp.ne.s32.totalorder %s69, %s70
      %p84 = scmp.eq.s32.totalorder %s36, 1
      %p85 = por %p83, %p84
      %p87 = scmp.ne.s32.totalorder %s70, %s86
      %p88 = scmp.eq.s32.totalorder %s36, 0
      %p89 = por %p87, %p88
      %s91 = sadd.s32 %s90, 1
      %p94 = scmp.eq.s32.totalorder %s30, 1
      %p95 = scmp.ne.s32.totalorder %s90, %s92
      %p96 = scmp.eq.s32.totalorder %s30, 0
      %p97 = por %p95, %p96
      %p98 = scmp.ne.s32.totalorder %s90, %s92
      %p99 = scmp.eq.s32.totalorder %s35, 1
      %p100 = por %p98, %p99
      %p101 = scmp.ne.s32.totalorder %s92, %s93
      %p102 = scmp.eq.s32.totalorder %s35, 0
      %p103 = por %p101, %p102
      %p104 = scmp.ne.s32.totalorder %s92, %s93
      %p105 = scmp.eq.s32.totalorder %s36, 1
      %p106 = por %p104, %p105
      %p108 = scmp.ne.s32.totalorder %s93, %s107
      %p109 = scmp.eq.s32.totalorder %s36, 0
      %p110 = por %p108, %p109
      %s112 = sadd.s32 %s111, 1
      %p115 = scmp.eq.s32.totalorder %s30, 1
      %p116 = scmp.ne.s32.totalorder %s111, %s113
      %p117 = scmp.eq.s32.totalorder %s30, 0
      %p118 = por %p116, %p117
      %p119 = scmp.ne.s32.totalorder %s111, %s113
      %p120 = scmp.eq.s32.totalorder %s35, 1
      %p121 = por %p119, %p120
      %p122 = scmp.ne.s32.totalorder %s113, %s114
      %p123 = scmp.eq.s32.totalorder %s35, 0
      %p124 = por %p122, %p123
      %p125 = scmp.ne.s32.totalorder %s113, %s114
      %p126 = scmp.eq.s32.totalorder %s36, 1
      %p127 = por %p125, %p126
      %p129 = scmp.ne.s32.totalorder %s114, %s128
      %p130 = scmp.eq.s32.totalorder %s36, 0
      %p131 = por %p129, %p130
      %s133 = sadd.s32 %s132, 1
      %p136 = scmp.eq.s32.totalorder %s30, 1
      %p137 = scmp.ne.s32.totalorder %s132, %s134
      %p138 = scmp.eq.s32.totalorder %s30, 0
      %p139 = por %p137, %p138
      %p140 = scmp.ne.s32.totalorder %s132, %s134
      %p141 = scmp.eq.s32.totalorder %s35, 1
      %p142 = por %p140, %p141
      %p143 = scmp.ne.s32.totalorder %s134, %s135
      %p144 = scmp.eq.s32.totalorder %s35, 0
      %p145 = por %p143, %p144
      %p146 = scmp.ne.s32.totalorder %s134, %s135
      %p147 = scmp.eq.s32.totalorder %s36, 1
      %p148 = por %p146, %p147
      %p150 = scmp.ne.s32.totalorder %s135, %s149
      %p151 = scmp.eq.s32.totalorder %s36, 0
      %p152 = por %p150, %p151
      %s154 = sadd.s32 %s153, 1
      %p157 = scmp.eq.s32.totalorder %s30, 1
      %p158 = scmp.ne.s32.totalorder %s153, %s155
      %p159 = scmp.eq.s32.totalorder %s30, 0
      %p160 = por %p158, %p159
      %p161 = scmp.ne.s32.totalorder %s153, %s155
      %p162 = scmp.eq.s32.totalorder %s35, 1
      %p163 = por %p161, %p162
      %p164 = scmp.ne.s32.totalorder %s155, %s156
      %p165 = scmp.eq.s32.totalorder %s35, 0
      %p166 = por %p164, %p165
      %p167 = scmp.ne.s32.totalorder %s155, %s156
      %p168 = scmp.eq.s32.totalorder %s36, 1
      %p169 = por %p167, %p168
      %p171 = scmp.ne.s32.totalorder %s156, %s170
      %p172 = scmp.eq.s32.totalorder %s36, 0
      %p173 = por %p171, %p172
      %s174 = ssub.s32 %s30, %s37
      %p175 = scmp.eq.s32.totalorder %s174, 0
      %s177 = sadd.s32 %s176, 1
      %s178 = scalar_select %p175, %s176, %s177
      %p181 = pneg %p175
      %p182 = scmp.eq.s32.totalorder %s30, 1
      %p183 = por %p181, %p182
      %p184 = scmp.ne.s32.totalorder %s176, %s179
      %p185 = scmp.eq.s32.totalorder %s30, 0
      %p186 = por %p184, %p185
      %p187 = scmp.ne.s32.totalorder %s176, %s179
      %p188 = scmp.eq.s32.totalorder %s35, 1
      %p189 = por %p187, %p188
      %p190 = scmp.ne.s32.totalorder %s179, %s180
      %p191 = scmp.eq.s32.totalorder %s35, 0
      %p192 = por %p190, %p191
      %p193 = scmp.ne.s32.totalorder %s179, %s180
      %p194 = scmp.eq.s32.totalorder %s36, 1
      %p195 = por %p193, %p194
      %p197 = scmp.ne.s32.totalorder %s180, %s196
      %p198 = scmp.eq.s32.totalorder %s36, 0
      %p199 = por %p197, %p198
      %s200 = ssub.s32 %s30, %s37
      %p201 = scmp.eq.s32.totalorder %s200, 0
      %s203 = sadd.s32 %s202, 1
      %s204 = scalar_select %p201, %s202, %s203
      %p207 = pneg %p201
      %p208 = scmp.eq.s32.totalorder %s30, 1
      %p209 = por %p207, %p208
      %p210 = scmp.ne.s32.totalorder %s202, %s205
      %p211 = scmp.eq.s32.totalorder %s30, 0
      %p212 = por %p210, %p211
      %p213 = scmp.ne.s32.totalorder %s202, %s205
      %p214 = scmp.eq.s32.totalorder %s35, 1
      %p215 = por %p213, %p214
      %p216 = scmp.ne.s32.totalorder %s205, %s206
      %p217 = scmp.eq.s32.totalorder %s35, 0
      %p218 = por %p216, %p217
      %p219 = scmp.ne.s32.totalorder %s205, %s206
      %p220 = scmp.eq.s32.totalorder %s36, 1
      %p221 = por %p219, %p220
      %p223 = scmp.ne.s32.totalorder %s206, %s222
      %p224 = scmp.eq.s32.totalorder %s36, 0
      %p225 = por %p223, %p224
      %s226 = ssub.s32 %s30, %s37
      %p227 = scmp.eq.s32.totalorder %s226, 0
      %s229 = sadd.s32 %s228, 1
      %s230 = scalar_select %p227, %s228, %s229
      %p233 = pneg %p227
      %p234 = scmp.eq.s32.totalorder %s30, 1
      %p235 = por %p233, %p234
      %p236 = scmp.ne.s32.totalorder %s228, %s231
      %p237 = scmp.eq.s32.totalorder %s30, 0
      %p238 = por %p236, %p237
      %p239 = scmp.ne.s32.totalorder %s228, %s231
      %p240 = scmp.eq.s32.totalorder %s35, 1
      %p241 = por %p239, %p240
      %p242 = scmp.ne.s32.totalorder %s231, %s232
      %p243 = scmp.eq.s32.totalorder %s35, 0
      %p244 = por %p242, %p243
      %p245 = scmp.ne.s32.totalorder %s231, %s232
      %p246 = scmp.eq.s32.totalorder %s36, 1
      %p247 = por %p245, %p246
      %p249 = scmp.ne.s32.totalorder %s232, %s248
      %p250 = scmp.eq.s32.totalorder %s36, 0
      %p251 = por %p249, %p250
      %s252 = ssub.s32 %s30, %s37
      %p253 = scmp.eq.s32.totalorder %s252, 0
      %s255 = sadd.s32 %s254, 1
      %s256 = scalar_select %p253, %s254, %s255
      %p259 = pneg %p253
      %p260 = scmp.eq.s32.totalorder %s30, 1
      %p261 = por %p259, %p260
      %p262 = scmp.ne.s32.totalorder %s254, %s257
      %p263 = scmp.eq.s32.totalorder %s30, 0
      %p264 = por %p262, %p263
      %p265 = scmp.ne.s32.totalorder %s254, %s257
      %p266 = scmp.eq.s32.totalorder %s35, 1
      %p267 = por %p265, %p266
      %p268 = scmp.ne.s32.totalorder %s257, %s258
      %p269 = scmp.eq.s32.totalorder %s35, 0
      %p270 = por %p268, %p269
      %p271 = scmp.ne.s32.totalorder %s257, %s258
      %p272 = scmp.eq.s32.totalorder %s36, 1
      %p273 = por %p271, %p272
      %p275 = scmp.ne.s32.totalorder %s258, %s274
      %p276 = scmp.eq.s32.totalorder %s36, 0
      %p277 = por %p275, %p276
      %s278 = ssub.s32 %s30, %s37
      %p279 = scmp.eq.s32.totalorder %s278, 0
      %s281 = sadd.s32 %s280, 1
      %s282 = scalar_select %p279, %s280, %s281
      %p285 = pneg %p279
      %p286 = scmp.eq.s32.totalorder %s30, 1
      %p287 = por %p285, %p286
      %p288 = scmp.ne.s32.totalorder %s280, %s283
      %p289 = scmp.eq.s32.totalorder %s30, 0
      %p290 = por %p288, %p289
      %p291 = scmp.ne.s32.totalorder %s280, %s283
      %p292 = scmp.eq.s32.totalorder %s35, 1
      %p293 = por %p291, %p292
      %p294 = scmp.ne.s32.totalorder %s283, %s284
      %p295 = scmp.eq.s32.totalorder %s35, 0
      %p296 = por %p294, %p295
      %p297 = scmp.ne.s32.totalorder %s283, %s284
      %p298 = scmp.eq.s32.totalorder %s36, 1
      %p299 = por %p297, %p298
      %p301 = scmp.ne.s32.totalorder %s284, %s300
      %p302 = scmp.eq.s32.totalorder %s36, 0
      %p303 = por %p301, %p302
      %s304 = ssub.s32 %s30, %s37
      %p305 = scmp.eq.s32.totalorder %s304, 0
      %s307 = sadd.s32 %s306, 1
      %s308 = scalar_select %p305, %s306, %s307
      %p311 = pneg %p305
      %p312 = scmp.eq.s32.totalorder %s30, 1
      %p313 = por %p311, %p312
      %p314 = scmp.ne.s32.totalorder %s306, %s309
      %p315 = scmp.eq.s32.totalorder %s30, 0
      %p316 = por %p314, %p315
      %p317 = scmp.ne.s32.totalorder %s306, %s309
      %p318 = scmp.eq.s32.totalorder %s35, 1
      %p319 = por %p317, %p318
      %p320 = scmp.ne.s32.totalorder %s309, %s310
      %p321 = scmp.eq.s32.totalorder %s35, 0
      %p322 = por %p320, %p321
      %p323 = scmp.ne.s32.totalorder %s309, %s310
      %p324 = scmp.eq.s32.totalorder %s36, 1
      %p325 = por %p323, %p324
      %p327 = scmp.ne.s32.totalorder %s310, %s326
      %p328 = scmp.eq.s32.totalorder %s36, 0
      %p329 = por %p327, %p328
      %p330 = scmp.le.s32.totalorder 1, %s30
      %p331 = scmp.lt.s32.totalorder %s30, 3
      %p332 = pnand %p330, %p331
      %p333 = pneg %p332
      // Predicated region
      $region9: #{tpu_custom_call.1} parent=5 // pred_check
        _
      $region10: #{tpu_custom_call.1} parent=5 // pred_check_branch
        %335 = sbr.rel (%p332) target = $region12
      $region11: #{tpu_custom_call.1} parent=5 // pred_region
        %s336 = ssub.s32 %s30, 1
        // Predicated region
        $region13: #{tpu_custom_call.1} parent=11 // pred_check
          %p337 = pneg %p103
        $region14: #{tpu_custom_call.1} parent=11 // pred_check_branch
          %339 = sbr.rel (%p337) target = $region16
        $region15: #{tpu_custom_call.1} parent=11 // pred_region
          _
        $region16: #{tpu_custom_call.1} parent=11 // pred_fallthru
          _
        // Predicated region
        $region17: #{tpu_custom_call.1} parent=11 // pred_check
          %p340 = pneg %p124
        $region18: #{tpu_custom_call.1} parent=11 // pred_check_branch
          %342 = sbr.rel (%p340) target = $region20
        $region19: #{tpu_custom_call.1} parent=11 // pred_region
          _
        $region20: #{tpu_custom_call.1} parent=11 // pred_fallthru
          _
        // Predicated region
        $region21: #{tpu_custom_call.1} parent=11 // pred_check
          %p343 = pneg %p145
        $region22: #{tpu_custom_call.1} parent=11 // pred_check_branch
          %345 = sbr.rel (%p343) target = $region24
        $region23: #{tpu_custom_call.1} parent=11 // pred_region
          _
        $region24: #{tpu_custom_call.1} parent=11 // pred_fallthru
          _
        // Predicated region
        $region25: #{tpu_custom_call.1} parent=11 // pred_check
          %p346 = pneg %p166
        $region26: #{tpu_custom_call.1} parent=11 // pred_check_branch
          %348 = sbr.rel (%p346) target = $region28
        $region27: #{tpu_custom_call.1} parent=11 // pred_region
          _
        $region28: #{tpu_custom_call.1} parent=11 // pred_fallthru
          _
      $region12: #{tpu_custom_call.1} parent=5 // pred_fallthru
        _
      %p349 = scmp.lt.s32.totalorder %s30, 2
      // Predicated region
      $region29: #{tpu_custom_call.1} parent=5 // pred_check
        %p350 = pneg %p349
      $region30: #{tpu_custom_call.1} parent=5 // pred_check_branch
        %352 = sbr.rel (%p350) target = $region32
      $region31: #{tpu_custom_call.1} parent=5 // pred_region
        // Predicated region
        $region33: #{tpu_custom_call.1} parent=31 // pred_check
          %p353 = pneg %p50
        $region34: #{tpu_custom_call.1} parent=31 // pred_check_branch
          %355 = sbr.rel (%p353) target = $region36
        $region35: #{tpu_custom_call.1} parent=31 // pred_region
          %s356 = sand.u32 %s40, 1
          %s357 = scalar_lea.sflag [#allocation3], %s356
          %s358 = sand.u32 %s40, 1
          %s359 = smul.addr %s358, 16
          %s360 = scalar_lea.vmem [#allocation2], %s359
          %s361 = smul.u32 2, %s30
          %s363 = ssub.s32 256, 256
          %364 = vsyncadd %s357, %s363
          %s365 = smul.addr %s361, 128
          %s366 = scalar_lea.hbm %s0, %s365
          %s367 = sshll.u32 %s360, 4
          %s368 = int_to_ptr.vmem [resolvable:$true] %s367
          %373 = dma.hbm_to_vmem [thread:$0]  %s366, 256, %s368, %s357, 128, 128, 8
        $region36: #{tpu_custom_call.1} parent=31 // pred_fallthru
          _
        // Predicated region
        $region37: #{tpu_custom_call.1} parent=31 // pred_check
          %p374 = pneg %p76
        $region38: #{tpu_custom_call.1} parent=31 // pred_check_branch
          %376 = sbr.rel (%p374) target = $region40
        $region39: #{tpu_custom_call.1} parent=31 // pred_region
          %s377 = smul.u32 4, %s30
          %p378 = scmp.lt.s32.totalorder %s377, 7
          %s379 = scalar_select %p378, %s377, 7
          %s380 = smul.addr %s379, 8
          %s381 = scalar_lea.vmem %s1, %s380
          %s382 = smul.u32 4, %s30
        $region40: #{tpu_custom_call.1} parent=31 // pred_fallthru
          _
        // Predicated region
        $region41: #{tpu_custom_call.1} parent=31 // pred_check
          %p383 = pneg %p186
        $region42: #{tpu_custom_call.1} parent=31 // pred_check_branch
          %385 = sbr.rel (%p383) target = $region44
        $region43: #{tpu_custom_call.1} parent=31 // pred_region
          %s386 = sand.u32 %s30, 1
          %s387 = scalar_lea.sflag [#allocation6], %s386
          %s388 = sand.u32 %s176, 1
          %s389 = smul.addr %s388, 16
          %s390 = scalar_lea.vmem [#allocation5], %s389
          %s392 = ssub.s32 256, 256
          %393 = vsyncadd %s387, %s392
          %s394 = smul.addr %s30, 2
          %s395 = smul.addr %s394, 128
          %s396 = scalar_lea.hbm %s6, %s395
          %s397 = sshll.u32 %s390, 4
          %s398 = int_to_ptr.vmem [resolvable:$true] %s397
          %403 = dma.hbm_to_vmem [thread:$0]  %s396, 256, %s398, %s387, 128, 128, 8
        $region44: #{tpu_custom_call.1} parent=31 // pred_fallthru
          _
        // Predicated region
        $region45: #{tpu_custom_call.1} parent=31 // pred_check
          %p404 = pneg %p212
        $region46: #{tpu_custom_call.1} parent=31 // pred_check_branch
          %406 = sbr.rel (%p404) target = $region48
        $region47: #{tpu_custom_call.1} parent=31 // pred_region
          %p407 = scmp.lt.s32.totalorder %s30, 1
          %s408 = scalar_select %p407, %s30, 1
          %s409 = smul.addr %s408, 4
          %s410 = smul.addr %s409, 8
          %s411 = scalar_lea.vmem %s7, %s410
        $region48: #{tpu_custom_call.1} parent=31 // pred_fallthru
          _
        // Predicated region
        $region49: #{tpu_custom_call.1} parent=31 // pred_check
          %p412 = pneg %p238
        $region50: #{tpu_custom_call.1} parent=31 // pred_check_branch
          %414 = sbr.rel (%p412) target = $region52
        $region51: #{tpu_custom_call.1} parent=31 // pred_region
          %s415 = sand.u32 %s30, 1
          %s416 = scalar_lea.sflag [#allocation6], %s415
          %s417 = sand.u32 %s228, 1
          %s418 = smul.addr %s417, 16
          %s419 = scalar_lea.vmem [#allocation7], %s418
          %s421 = ssub.s32 256, 256
          %422 = vsyncadd %s416, %s421
          %s423 = smul.addr %s30, 2
          %s424 = smul.addr %s423, 128
          %s425 = scalar_lea.hbm %s8, %s424
          %s426 = sshll.u32 %s419, 4
          %s427 = int_to_ptr.vmem [resolvable:$true] %s426
          %432 = dma.hbm_to_vmem [thread:$0]  %s425, 256, %s427, %s416, 128, 128, 8
        $region52: #{tpu_custom_call.1} parent=31 // pred_fallthru
          _
        // Predicated region
        $region53: #{tpu_custom_call.1} parent=31 // pred_check
          %p433 = pneg %p264
        $region54: #{tpu_custom_call.1} parent=31 // pred_check_branch
          %435 = sbr.rel (%p433) target = $region56
        $region55: #{tpu_custom_call.1} parent=31 // pred_region
          %s436 = sand.u32 %s254, 1
          %s437 = scalar_lea.sflag [#allocation9], %s436
          %s438 = sand.u32 %s254, 1
          %s439 = smul.addr %s438, 32
          %s440 = scalar_lea.vmem [#allocation8], %s439
          %s442 = ssub.s32 512, 512
          %443 = vsyncadd %s437, %s442
          %s444 = smul.addr %s30, 4
          %s445 = smul.addr %s444, 128
          %s446 = scalar_lea.hbm %s9, %s445
          %s447 = sshll.u32 %s440, 4
          %s448 = int_to_ptr.vmem [resolvable:$true] %s447
          %453 = dma.hbm_to_vmem [thread:$0]  %s446, 512, %s448, %s437, 128, 128, 8
        $region56: #{tpu_custom_call.1} parent=31 // pred_fallthru
          _
      $region32: #{tpu_custom_call.1} parent=5 // pred_fallthru
        _
      %p454 = scmp.le.s32.totalorder 1, %s30
      %p455 = scmp.lt.s32.totalorder %s30, 3
      %p456 = pnand %p454, %p455
      %p457 = pneg %p456
      // Predicated region
      $region57: #{tpu_custom_call.1} parent=5 // pred_check
        _
      $region58: #{tpu_custom_call.1} parent=5 // pred_check_branch
        %459 = sbr.rel (%p456) target = $region60
      $region59: #{tpu_custom_call.1} parent=5 // pred_region
        %s460 = ssub.s32 %s30, 1
        %s461 = sand.u32 %s43, 1
        %s462 = scalar_lea.sflag [#allocation3], %s461
        %s463 = sand.u32 %s43, 1
        %s464 = smul.addr %s463, 16
        %s465 = scalar_lea.vmem [#allocation2], %s464
        // Predicated region
        $region61: #{tpu_custom_call.1} parent=59 // pred_check
          %p466 = pneg %p56
        $region62: #{tpu_custom_call.1} parent=59 // pred_check_branch
          %468 = sbr.rel (%p466) target = $region64
        $region63: #{tpu_custom_call.1} parent=59 // pred_region
          %469 = dma.done %s462, 256
        $region64: #{tpu_custom_call.1} parent=59 // pred_fallthru
          _
        %s470 = sand.u32 %s35, 1
        %s471 = scalar_lea.sflag [#allocation6], %s470
        %s472 = sand.u32 %s179, 1
        %s473 = smul.addr %s472, 16
        %s474 = scalar_lea.vmem [#allocation5], %s473
        // Predicated region
        $region65: #{tpu_custom_call.1} parent=59 // pred_check
          %p475 = pneg %p192
        $region66: #{tpu_custom_call.1} parent=59 // pred_check_branch
          %477 = sbr.rel (%p475) target = $region68
        $region67: #{tpu_custom_call.1} parent=59 // pred_region
          %478 = dma.done %s471, 256
        $region68: #{tpu_custom_call.1} parent=59 // pred_fallthru
          _
        %s479 = sand.u32 %s35, 1
        %s480 = scalar_lea.sflag [#allocation6], %s479
        %s481 = sand.u32 %s231, 1
        %s482 = smul.addr %s481, 16
        %s483 = scalar_lea.vmem [#allocation7], %s482
        // Predicated region
        $region69: #{tpu_custom_call.1} parent=59 // pred_check
          %p484 = pneg %p244
        $region70: #{tpu_custom_call.1} parent=59 // pred_check_branch
          %486 = sbr.rel (%p484) target = $region72
        $region71: #{tpu_custom_call.1} parent=59 // pred_region
          %487 = dma.done %s480, 256
        $region72: #{tpu_custom_call.1} parent=59 // pred_fallthru
          _
        %s488 = sand.u32 %s257, 1
        %s489 = scalar_lea.sflag [#allocation9], %s488
        %s490 = sand.u32 %s257, 1
        %s491 = smul.addr %s490, 32
        %s492 = scalar_lea.vmem [#allocation8], %s491
        // Predicated region
        $region73: #{tpu_custom_call.1} parent=59 // pred_check
          %p493 = pneg %p270
        $region74: #{tpu_custom_call.1} parent=59 // pred_check_branch
          %495 = sbr.rel (%p493) target = $region76
        $region75: #{tpu_custom_call.1} parent=59 // pred_region
          %496 = dma.done %s489, 512
        $region76: #{tpu_custom_call.1} parent=59 // pred_fallthru
          _
        %s497 = sand.u32 %s43, 1
        %s498 = scalar_lea.sflag [#allocation3], %s497
        %s499 = sand.u32 %s43, 1
        %s500 = smul.addr %s499, 16
        %s501 = scalar_lea.vmem [#allocation2], %s500
        %p502 = pneg %p56
        %p503 = pneg %p53
        %s504 = smul.u32 4, %s35
        %p505 = scmp.lt.s32.totalorder %s504, 7
        %s506 = scalar_select %p505, %s504, 7
        %s507 = smul.addr %s506, 8
        %s508 = scalar_lea.vmem %s1, %s507
        %p509 = pneg %p82
        %p510 = pneg %p79
        %p511 = pneg %p103
        %p512 = pneg %p100
        %p513 = pneg %p124
        %p514 = pneg %p121
        %p515 = pneg %p145
        %p516 = pneg %p142
        %p517 = pneg %p166
        %p518 = pneg %p163
        %s519 = sand.u32 %s35, 1
        %s520 = scalar_lea.sflag [#allocation6], %s519
        %s521 = sand.u32 %s179, 1
        %s522 = smul.addr %s521, 16
        %s523 = scalar_lea.vmem [#allocation5], %s522
        %p524 = pneg %p192
        %p525 = pneg %p189
        %p526 = scmp.lt.s32.totalorder %s35, 1
        %s527 = scalar_select %p526, %s35, 1
        %s528 = smul.addr %s527, 4
        %s529 = smul.addr %s528, 8
        %s530 = scalar_lea.vmem %s7, %s529
        %p531 = pneg %p218
        %p532 = pneg %p215
        %s533 = sand.u32 %s35, 1
        %s534 = scalar_lea.sflag [#allocation6], %s533
        %s535 = sand.u32 %s231, 1
        %s536 = smul.addr %s535, 16
        %s537 = scalar_lea.vmem [#allocation7], %s536
        %p538 = pneg %p244
        %p539 = pneg %p241
        %s540 = sand.u32 %s257, 1
        %s541 = scalar_lea.sflag [#allocation9], %s540
        %s542 = sand.u32 %s257, 1
        %s543 = smul.addr %s542, 32
        %s544 = scalar_lea.vmem [#allocation8], %s543
        %p545 = pneg %p270
        %p546 = pneg %p267
        %p547 = pneg %p296
        %p548 = pneg %p293
        %s549 = sand.u32 %s283, 1
        %s550 = scalar_lea.sflag [#allocation4], %s549
        %s551 = sand.u32 %s283, 1
        %s552 = smul.addr %s551, 16
        %s553 = scalar_lea.vmem [#allocation10], %s552
        %p554 = pneg %p322
        %p555 = pneg %p319
        %s556 = smul.u32 4, %s35
        %p557 = scmp.lt.s32.totalorder %s556, 7
        %s558 = scalar_select %p557, %s556, 7
        %s559 = smul.addr %s558, 8
        %s560 = scalar_lea.vmem %s11, %s559
        %s561 = smul.u32 2, %s35
        %s562 = smul.u32 4, %s35
        %p563 = scmp.lt.s32.totalorder %s562, 7
        %s564 = scalar_select %p563, %s562, 7
        %s565 = smul.addr %s564, 8
        %s566 = scalar_lea.vmem %s1, %s565
        %s567 = smul.u32 4, %s35
        %p568 = scmp.lt.s32.totalorder %s35, 1
        %s569 = scalar_select %p568, %s35, 1
        %s570 = smul.addr %s569, 4
        %s571 = smul.addr %s570, 8
        %s572 = scalar_lea.vmem %s7, %s571
        %s573 = smul.u32 2, %s35
        %s574 = smul.u32 4, %s35
        %p575 = scmp.lt.s32.totalorder %s574, 7
        %s576 = scalar_select %p575, %s574, 7
        %s577 = smul.addr %s576, 8
        %s578 = scalar_lea.vmem %s11, %s577
        %s579 = smul.u32 4, %s35
        %v580 = vld [vmem:[%s465] sm:$0xff]
        %v581 = vld [vmem:[%s465 + $0x8] sm:$0xff]
        %v582 = vld [vmem:[%s566] sm:$0xff]
        %v583 = vld [vmem:[%s566 + $0x8] sm:$0xff]
        %v584 = vld [vmem:[%s566 + $0x10] sm:$0xff]
        %v585 = vld [vmem:[%s566 + $0x18] sm:$0xff]
        %v586 = vld [vmem:[%s2] sm:$0xff]
        %v587 = vld [vmem:[%s2 + $0x8] sm:$0xff]
        %v588 = vld [vmem:[%s2 + $0x10] sm:$0xff]
        %v589 = vld [vmem:[%s2 + $0x18] sm:$0xff]
        %v590 = vld [vmem:[%s2 + $0x20] sm:$0xff]
        %v591 = vld [vmem:[%s2 + $0x28] sm:$0xff]
        %v592 = vld [vmem:[%s2 + $0x30] sm:$0xff]
        %v593 = vld [vmem:[%s2 + $0x38] sm:$0xff]
        %v594 = vld [vmem:[%s2 + $0x40] sm:$0xff]
        %v595 = vld [vmem:[%s2 + $0x48] sm:$0xff]
        %v596 = vld [vmem:[%s2 + $0x50] sm:$0xff]
        %v597 = vld [vmem:[%s2 + $0x58] sm:$0xff]
        %v598 = vld [vmem:[%s3] sm:$0x7]
        %v600 = vlaneseq
        %v601 = vshrl.u32 %v600, 7
        %v602 = vsub.s32 0, %v601
        %v603 = vrot.slane %v598, %v602
        %v604 = vlaneseq
        %v605 = vshrl.u32 %v604, 7
        %v606 = vsub.s32 1, %v605
        %v607 = vrot.slane %v598, %v606
        %v608 = vlaneseq
        %v609 = vshrl.u32 %v608, 7
        %v610 = vsub.s32 2, %v609
        %v611 = vrot.slane %v598, %v610
        %vm615 = vcmask 261120
        %v617 = vsel %vm615, %v580, 0
        %v620 = vsel %vm615, %v581, 0
        %622 = vmatprep.subr.mxu0 0.0
        %623 = vmatpush1.msra.mxu0 0.0
        %624 = vmatprep.subr.mxu0 0.0
        %625 = vmatpush1.msra.mxu0 0.0
        %626 = vmatprep.subr.mxu0 0.0
        %627 = vmatpush1.msra.mxu0 0.0
        %628 = vmatprep.subr.mxu0 0.0
        %629 = vmatpush1.msra.mxu0 0.0
        %630 = vmatprep.subr.mxu0 0.0
        %631 = vmatpush1.msra.mxu0 0.0
        %632 = vmatprep.subr.mxu0 0.0
        %633 = vmatpush1.msra.mxu0 0.0
        %634 = vmatprep.subr.mxu0 0.0
        %635 = vmatpush1.msra.mxu0 0.0
        %636 = vmatprep.subr.mxu0 0.0
        %637 = vmatpush1.msra.mxu0 0.0
        %638 = vmatprep.subr.mxu0 0.0
        %639 = vmatpush1.msra.mxu0 0.0
        %640 = vmatprep.subr.mxu0 0.0
        %641 = vmatpush1.msra.mxu0 0.0
        %642 = vmatprep.subr.mxu0 0.0
        %643 = vmatpush1.msra.mxu0 0.0
        %644 = vmatprep.subr.mxu0 0.0
        %645 = vmatpush1.msra.mxu0 0.0
        %646 = vmatprep.subr.mxu0 %v596
        %647 = vmatpush1.msra.mxu0 %v595
        %648 = vmatprep.subr.mxu0 %v593
        %649 = vmatpush1.msra.mxu0 %v592
        %650 = vmatprep.subr.mxu0 %v590
        %651 = vmatpush1.msra.mxu0 %v589
        %652 = vmatprep.subr.mxu0 %v587
        %653 = vmatpush1.msra.mxu0 %v586
        %654 = vmatprep.subr.mxu0 0.0
        %655 = vmatpush2.msra.mxu0 0.0
        %656 = vmatprep.subr.mxu0 0.0
        %657 = vmatpush2.msra.mxu0 0.0
        %658 = vmatprep.subr.mxu0 0.0
        %659 = vmatpush2.msra.mxu0 0.0
        %660 = vmatprep.subr.mxu0 0.0
        %661 = vmatpush2.msra.mxu0 0.0
        %662 = vmatprep.subr.mxu0 0.0
        %663 = vmatpush2.msra.mxu0 0.0
        %664 = vmatprep.subr.mxu0 0.0
        %665 = vmatpush2.msra.mxu0 0.0
        %666 = vmatprep.subr.mxu0 0.0
        %667 = vmatpush2.msra.mxu0 0.0
        %668 = vmatprep.subr.mxu0 0.0
        %669 = vmatpush2.msra.mxu0 0.0
        %670 = vmatprep.subr.mxu0 0.0
        %671 = vmatpush2.msra.mxu0 0.0
        %672 = vmatprep.subr.mxu0 0.0
        %673 = vmatpush2.msra.mxu0 0.0
        %674 = vmatprep.subr.mxu0 0.0
        %675 = vmatpush2.msra.mxu0 0.0
        %676 = vmatprep.subr.mxu0 0.0
        %677 = vmatpush2.msra.mxu0 0.0
        %678 = vmatprep.subr.mxu0 0.0
        %679 = vmatpush2.msra.mxu0 0.0
        %680 = vmatprep.subr.mxu0 0.0
        %681 = vmatpush2.msra.mxu0 0.0
        %682 = vmatprep.subr.mxu0 0.0
        %683 = vmatpush2.msra.mxu0 0.0
        %684 = vmatprep.subr.mxu0 0.0
        %685 = vmatpush2.msra.mxu0 0.0
        %686 = vmatprep.mubr.f32.mxu0 0.0
        %687 = vmatmul.mubr.f32.gmra.mxu0 %v617
        %v688 = vpop.f32.mrf.mxu0
        %v689 = vadd.f32 %v603, %v688
        %v690 = vpop.f32.mrf.mxu0
        %v691 = vadd.f32 %v607, %v690
        %692 = vmatprep.mubr.f32.mxu0 0.0
        %693 = vmatmul.mubr.f32.gmra.mxu0 %v620
        %v694 = vpop.f32.mrf.mxu0
        %v695 = vadd.f32 %v603, %v694
        %v696 = vpop.f32.mrf.mxu0
        %v697 = vadd.f32 %v607, %v696
        %698 = vdwg.mxu0
        %699 = vmatprep.subr.mxu0 0.0
        %700 = vmatpush1.msra.mxu0 0.0
        %701 = vmatprep.subr.mxu0 0.0
        %702 = vmatpush1.msra.mxu0 0.0
        %703 = vmatprep.subr.mxu0 0.0
        %704 = vmatpush1.msra.mxu0 0.0
        %705 = vmatprep.subr.mxu0 0.0
        %706 = vmatpush1.msra.mxu0 0.0
        %707 = vmatprep.subr.mxu0 0.0
        %708 = vmatpush1.msra.mxu0 0.0
        %709 = vmatprep.subr.mxu0 0.0
        %710 = vmatpush1.msra.mxu0 0.0
        %711 = vmatprep.subr.mxu0 0.0
        %712 = vmatpush1.msra.mxu0 0.0
        %713 = vmatprep.subr.mxu0 0.0
        %714 = vmatpush1.msra.mxu0 0.0
        %715 = vmatprep.subr.mxu0 0.0
        %716 = vmatpush1.msra.mxu0 0.0
        %717 = vmatprep.subr.mxu0 0.0
        %718 = vmatpush1.msra.mxu0 0.0
        %719 = vmatprep.subr.mxu0 0.0
        %720 = vmatpush1.msra.mxu0 0.0
        %721 = vmatprep.subr.mxu0 0.0
        %722 = vmatpush1.msra.mxu0 0.0
        %723 = vmatprep.subr.mxu0 0.0
        %724 = vmatpush1.msra.mxu0 %v597
        %725 = vmatprep.subr.mxu0 0.0
        %726 = vmatpush1.msra.mxu0 %v594
        %727 = vmatprep.subr.mxu0 0.0
        %728 = vmatpush1.msra.mxu0 %v591
        %729 = vmatprep.subr.mxu0 0.0
        %730 = vmatpush1.msra.mxu0 %v588
        %731 = vmatprep.subr.mxu0 0.0
        %732 = vmatpush2.msra.mxu0 0.0
        %733 = vmatprep.subr.mxu0 0.0
        %734 = vmatpush2.msra.mxu0 0.0
        %735 = vmatprep.subr.mxu0 0.0
        %736 = vmatpush2.msra.mxu0 0.0
        %737 = vmatprep.subr.mxu0 0.0
        %738 = vmatpush2.msra.mxu0 0.0
        %739 = vmatprep.subr.mxu0 0.0
        %740 = vmatpush2.msra.mxu0 0.0
        %741 = vmatprep.subr.mxu0 0.0
        %742 = vmatpush2.msra.mxu0 0.0
        %743 = vmatprep.subr.mxu0 0.0
        %744 = vmatpush2.msra.mxu0 0.0
        %745 = vmatprep.subr.mxu0 0.0
        %746 = vmatpush2.msra.mxu0 0.0
        %747 = vmatprep.subr.mxu0 0.0
        %748 = vmatpush2.msra.mxu0 0.0
        %749 = vmatprep.subr.mxu0 0.0
        %750 = vmatpush2.msra.mxu0 0.0
        %751 = vmatprep.subr.mxu0 0.0
        %752 = vmatpush2.msra.mxu0 0.0
        %753 = vmatprep.subr.mxu0 0.0
        %754 = vmatpush2.msra.mxu0 0.0
        %755 = vmatprep.subr.mxu0 0.0
        %756 = vmatpush2.msra.mxu0 0.0
        %757 = vmatprep.subr.mxu0 0.0
        %758 = vmatpush2.msra.mxu0 0.0
        %759 = vmatprep.subr.mxu0 0.0
        %760 = vmatpush2.msra.mxu0 0.0
        %761 = vmatprep.subr.mxu0 0.0
        %762 = vmatpush2.msra.mxu0 0.0
        %763 = vmatprep.mubr.f32.mxu0 0.0
        %764 = vmatmul.mubr.f32.gmra.mxu0 %v617
        %v765 = vpop.f32.mrf.mxu0
        %v766 = vadd.f32 %v611, %v765
        %v767 = vpop.f32.mrf.mxu0
        %768 = vmatprep.mubr.f32.mxu0 0.0
        %769 = vmatmul.mubr.f32.gmra.mxu0 %v620
        %v770 = vpop.f32.mrf.mxu0
        %v771 = vadd.f32 %v611, %v770
        %v772 = vpop.f32.mrf.mxu0
        %773 = vdwg.mxu0
        %v774 = vld [vmem:[%s4] sm:$0xff]
        %v775 = vld [vmem:[%s4 + $0x8] sm:$0xff]
        %v776 = vld [vmem:[%s4 + $0x10] sm:$0xff]
        %v777 = vld [vmem:[%s4 + $0x18] sm:$0xff]
        %v778 = vld [vmem:[%s4 + $0x20] sm:$0xff]
        %v779 = vld [vmem:[%s4 + $0x28] sm:$0xff]
        %v780 = vld [vmem:[%s4 + $0x30] sm:$0xff]
        %v781 = vld [vmem:[%s4 + $0x38] sm:$0xff]
        %v782 = vld [vmem:[%s4 + $0x40] sm:$0xff]
        %v783 = vld [vmem:[%s5] sm:$0x7]
        %v785 = vlaneseq
        %v786 = vshrl.u32 %v785, 7
        %v787 = vsub.s32 0, %v786
        %v788 = vrot.slane %v783, %v787
        %v789 = vlaneseq
        %v790 = vshrl.u32 %v789, 7
        %v791 = vsub.s32 1, %v790
        %v792 = vrot.slane %v783, %v791
        %v793 = vlaneseq
        %v794 = vshrl.u32 %v793, 7
        %v795 = vsub.s32 2, %v794
        %v796 = vrot.slane %v783, %v795
        %vm800 = vcmask 195584
        %v802 = vsel %vm800, %v582, 0
        %v805 = vsel %vm800, %v583, 0
        %v808 = vsel %vm800, %v584, 0
        %v811 = vsel %vm800, %v585, 0
        %813 = vmatprep.subr.mxu0 0.0
        %814 = vmatpush1.msra.mxu0 0.0
        %815 = vmatprep.subr.mxu0 0.0
        %816 = vmatpush1.msra.mxu0 0.0
        %817 = vmatprep.subr.mxu0 0.0
        %818 = vmatpush1.msra.mxu0 0.0
        %819 = vmatprep.subr.mxu0 0.0
        %820 = vmatpush1.msra.mxu0 0.0
        %821 = vmatprep.subr.mxu0 0.0
        %822 = vmatpush1.msra.mxu0 0.0
        %823 = vmatprep.subr.mxu0 0.0
        %824 = vmatpush1.msra.mxu0 0.0
        %825 = vmatprep.subr.mxu0 0.0
        %826 = vmatpush1.msra.mxu0 0.0
        %827 = vmatprep.subr.mxu0 0.0
        %828 = vmatpush1.msra.mxu0 0.0
        %829 = vmatprep.subr.mxu0 0.0
        %830 = vmatpush1.msra.mxu0 0.0
        %831 = vmatprep.subr.mxu0 0.0
        %832 = vmatpush1.msra.mxu0 0.0
        %833 = vmatprep.subr.mxu0 0.0
        %834 = vmatpush1.msra.mxu0 0.0
        %835 = vmatprep.subr.mxu0 0.0
        %836 = vmatpush1.msra.mxu0 0.0
        %837 = vmatprep.subr.mxu0 0.0
        %838 = vmatpush1.msra.mxu0 0.0
        %839 = vmatprep.subr.mxu0 %v781
        %840 = vmatpush1.msra.mxu0 %v780
        %841 = vmatprep.subr.mxu0 %v778
        %842 = vmatpush1.msra.mxu0 %v777
        %843 = vmatprep.subr.mxu0 %v775
        %844 = vmatpush1.msra.mxu0 %v774
        %845 = vmatprep.subr.mxu0 0.0
        %846 = vmatpush2.msra.mxu0 0.0
        %847 = vmatprep.subr.mxu0 0.0
        %848 = vmatpush2.msra.mxu0 0.0
        %849 = vmatprep.subr.mxu0 0.0
        %850 = vmatpush2.msra.mxu0 0.0
        %851 = vmatprep.subr.mxu0 0.0
        %852 = vmatpush2.msra.mxu0 0.0
        %853 = vmatprep.subr.mxu0 0.0
        %854 = vmatpush2.msra.mxu0 0.0
        %855 = vmatprep.subr.mxu0 0.0
        %856 = vmatpush2.msra.mxu0 0.0
        %857 = vmatprep.subr.mxu0 0.0
        %858 = vmatpush2.msra.mxu0 0.0
        %859 = vmatprep.subr.mxu0 0.0
        %860 = vmatpush2.msra.mxu0 0.0
        %861 = vmatprep.subr.mxu0 0.0
        %862 = vmatpush2.msra.mxu0 0.0
        %863 = vmatprep.subr.mxu0 0.0
        %864 = vmatpush2.msra.mxu0 0.0
        %865 = vmatprep.subr.mxu0 0.0
        %866 = vmatpush2.msra.mxu0 0.0
        %867 = vmatprep.subr.mxu0 0.0
        %868 = vmatpush2.msra.mxu0 0.0
        %869 = vmatprep.subr.mxu0 0.0
        %870 = vmatpush2.msra.mxu0 0.0
        %871 = vmatprep.subr.mxu0 0.0
        %872 = vmatpush2.msra.mxu0 0.0
        %873 = vmatprep.subr.mxu0 0.0
        %874 = vmatpush2.msra.mxu0 0.0
        %875 = vmatprep.subr.mxu0 0.0
        %876 = vmatpush2.msra.mxu0 0.0
        %877 = vmatprep.mubr.f32.mxu0 0.0
        %878 = vmatmul.mubr.f32.gmra.mxu0 %v802
        %v879 = vpop.f32.mrf.mxu0
        %v880 = vadd.f32 %v788, %v879
        %v881 = vpop.f32.mrf.mxu0
        %v882 = vadd.f32 %v792, %v881
        %883 = vmatprep.mubr.f32.mxu0 0.0
        %884 = vmatmul.mubr.f32.gmra.mxu0 %v805
        %v885 = vpop.f32.mrf.mxu0
        %v886 = vadd.f32 %v788, %v885
        %v887 = vpop.f32.mrf.mxu0
        %v888 = vadd.f32 %v792, %v887
        %889 = vmatprep.mubr.f32.mxu0 0.0
        %890 = vmatmul.mubr.f32.gmra.mxu0 %v808
        %v891 = vpop.f32.mrf.mxu0
        %v892 = vadd.f32 %v788, %v891
        %v893 = vpop.f32.mrf.mxu0
        %v894 = vadd.f32 %v792, %v893
        %895 = vmatprep.mubr.f32.mxu0 0.0
        %896 = vmatmul.mubr.f32.gmra.mxu0 %v811
        %v897 = vpop.f32.mrf.mxu0
        %v898 = vadd.f32 %v788, %v897
        %v899 = vpop.f32.mrf.mxu0
        %v900 = vadd.f32 %v792, %v899
        %901 = vdwg.mxu0
        %902 = vmatprep.subr.mxu0 0.0
        %903 = vmatpush1.msra.mxu0 0.0
        %904 = vmatprep.subr.mxu0 0.0
        %905 = vmatpush1.msra.mxu0 0.0
        %906 = vmatprep.subr.mxu0 0.0
        %907 = vmatpush1.msra.mxu0 0.0
        %908 = vmatprep.subr.mxu0 0.0
        %909 = vmatpush1.msra.mxu0 0.0
        %910 = vmatprep.subr.mxu0 0.0
        %911 = vmatpush1.msra.mxu0 0.0
        %912 = vmatprep.subr.mxu0 0.0
        %913 = vmatpush1.msra.mxu0 0.0
        %914 = vmatprep.subr.mxu0 0.0
        %915 = vmatpush1.msra.mxu0 0.0
        %916 = vmatprep.subr.mxu0 0.0
        %917 = vmatpush1.msra.mxu0 0.0
        %918 = vmatprep.subr.mxu0 0.0
        %919 = vmatpush1.msra.mxu0 0.0
        %920 = vmatprep.subr.mxu0 0.0
        %921 = vmatpush1.msra.mxu0 0.0
        %922 = vmatprep.subr.mxu0 0.0
        %923 = vmatpush1.msra.mxu0 0.0
        %924 = vmatprep.subr.mxu0 0.0
        %925 = vmatpush1.msra.mxu0 0.0
        %926 = vmatprep.subr.mxu0 0.0
        %927 = vmatpush1.msra.mxu0 0.0
        %928 = vmatprep.subr.mxu0 0.0
        %929 = vmatpush1.msra.mxu0 %v782
        %930 = vmatprep.subr.mxu0 0.0
        %931 = vmatpush1.msra.mxu0 %v779
        %932 = vmatprep.subr.mxu0 0.0
        %933 = vmatpush1.msra.mxu0 %v776
        %934 = vmatprep.subr.mxu0 0.0
        %935 = vmatpush2.msra.mxu0 0.0
        %936 = vmatprep.subr.mxu0 0.0
        %937 = vmatpush2.msra.mxu0 0.0
        %938 = vmatprep.subr.mxu0 0.0
        %939 = vmatpush2.msra.mxu0 0.0
        %940 = vmatprep.subr.mxu0 0.0
        %941 = vmatpush2.msra.mxu0 0.0
        %942 = vmatprep.subr.mxu0 0.0
        %943 = vmatpush2.msra.mxu0 0.0
        %944 = vmatprep.subr.mxu0 0.0
        %945 = vmatpush2.msra.mxu0 0.0
        %946 = vmatprep.subr.mxu0 0.0
        %947 = vmatpush2.msra.mxu0 0.0
        %948 = vmatprep.subr.mxu0 0.0
        %949 = vmatpush2.msra.mxu0 0.0
        %950 = vmatprep.subr.mxu0 0.0
        %951 = vmatpush2.msra.mxu0 0.0
        %952 = vmatprep.subr.mxu0 0.0
        %953 = vmatpush2.msra.mxu0 0.0
        %954 = vmatprep.subr.mxu0 0.0
        %955 = vmatpush2.msra.mxu0 0.0
        %956 = vmatprep.subr.mxu0 0.0
        %957 = vmatpush2.msra.mxu0 0.0
        %958 = vmatprep.subr.mxu0 0.0
        %959 = vmatpush2.msra.mxu0 0.0
        %960 = vmatprep.subr.mxu0 0.0
        %961 = vmatpush2.msra.mxu0 0.0
        %962 = vmatprep.subr.mxu0 0.0
        %963 = vmatpush2.msra.mxu0 0.0
        %964 = vmatprep.subr.mxu0 0.0
        %965 = vmatpush2.msra.mxu0 0.0
        %966 = vmatprep.mubr.f32.mxu0 0.0
        %967 = vmatmul.mubr.f32.gmra.mxu0 %v802
        %v968 = vpop.f32.mrf.mxu0
        %v969 = vadd.f32 %v796, %v968
        %v970 = vpop.f32.mrf.mxu0
        %971 = vmatprep.mubr.f32.mxu0 0.0
        %972 = vmatmul.mubr.f32.gmra.mxu0 %v805
        %v973 = vpop.f32.mrf.mxu0
        %v974 = vadd.f32 %v796, %v973
        %v975 = vpop.f32.mrf.mxu0
        %976 = vmatprep.mubr.f32.mxu0 0.0
        %977 = vmatmul.mubr.f32.gmra.mxu0 %v808
        %v978 = vpop.f32.mrf.mxu0
        %v979 = vadd.f32 %v796, %v978
        %v980 = vpop.f32.mrf.mxu0
        %981 = vmatprep.mubr.f32.mxu0 0.0
        %982 = vmatmul.mubr.f32.gmra.mxu0 %v811
        %v983 = vpop.f32.mrf.mxu0
        %v984 = vadd.f32 %v796, %v983
        %v985 = vpop.f32.mrf.mxu0
        %986 = vdwg.mxu0
        %v987 = vld [vmem:[%s474] sm:$0xff]
        %v988 = vld [vmem:[%s474 + $0x8] sm:$0xff]
        %v991 = vcombine.high %v766, %v766
        %v993 = vunpack.c.l.s4 1966171168
        %v994 = vunpack.c.0.s8 %v993
        %v995 = vlaneseq
        %v996 = vshrl.u32 %v995, 7
        %v997 = vsub.s32 %v994, %v996
        %v998 = vrot.slane %v766, %v997
        %v1000 = vunpack.c.l.s4 1966171168
        %v1001 = vunpack.c.0.s8 %v1000
        %v1002 = vlaneseq
        %v1003 = vshrl.u32 %v1002, 7
        %v1004 = vsub.s32 %v1001, %v1003
        %v1005 = vrot.slane %v991, %v1004
        %v1006 = vcombine.high %v998, %v998
        %v1007 = vcombine.high %v1005, %v1005
        %v1009 = vunpack.c.l.s4 1966171168
        %v1010 = vunpack.c.0.s8 %v1009
        %v1011 = vlaneseq
        %v1012 = vshrl.u32 %v1011, 7
        %v1013 = vsub.s32 %v1010, %v1012
        %v1014 = vrot.slane %v998, %v1013
        %v1016 = vunpack.c.l.s4 1966171168
        %v1017 = vunpack.c.0.s8 %v1016
        %v1018 = vlaneseq
        %v1019 = vshrl.u32 %v1018, 7
        %v1020 = vsub.s32 %v1017, %v1019
        %v1021 = vrot.slane %v1005, %v1020
        %v1023 = vunpack.c.l.s4 1966171168
        %v1024 = vunpack.c.0.s8 %v1023
        %v1025 = vlaneseq
        %v1026 = vshrl.u32 %v1025, 7
        %v1027 = vsub.s32 %v1024, %v1026
        %v1028 = vrot.slane %v1006, %v1027
        %v1030 = vunpack.c.l.s4 1966171168
        %v1031 = vunpack.c.0.s8 %v1030
        %v1032 = vlaneseq
        %v1033 = vshrl.u32 %v1032, 7
        %v1034 = vsub.s32 %v1031, %v1033
        %v1035 = vrot.slane %v1007, %v1034
        %v1036 = vcombine.high %v1014, %v1014
        %v1037 = vcombine.high %v1021, %v1021
        %v1038 = vcombine.high %v1028, %v1028
        %v1039 = vcombine.high %v1035, %v1035
        %v1040 = vcombine.high %v771, %v771
        %v1042 = vunpack.c.l.s4 1966171168
        %v1043 = vunpack.c.0.s8 %v1042
        %v1044 = vlaneseq
        %v1045 = vshrl.u32 %v1044, 7
        %v1046 = vsub.s32 %v1043, %v1045
        %v1047 = vrot.slane %v771, %v1046
        %v1049 = vunpack.c.l.s4 1966171168
        %v1050 = vunpack.c.0.s8 %v1049
        %v1051 = vlaneseq
        %v1052 = vshrl.u32 %v1051, 7
        %v1053 = vsub.s32 %v1050, %v1052
        %v1054 = vrot.slane %v1040, %v1053
        %v1055 = vcombine.high %v1047, %v1047
        %v1056 = vcombine.high %v1054, %v1054
        %v1058 = vunpack.c.l.s4 1966171168
        %v1059 = vunpack.c.0.s8 %v1058
        %v1060 = vlaneseq
        %v1061 = vshrl.u32 %v1060, 7
        %v1062 = vsub.s32 %v1059, %v1061
        %v1063 = vrot.slane %v1047, %v1062
        %v1065 = vunpack.c.l.s4 1966171168
        %v1066 = vunpack.c.0.s8 %v1065
        %v1067 = vlaneseq
        %v1068 = vshrl.u32 %v1067, 7
        %v1069 = vsub.s32 %v1066, %v1068
        %v1070 = vrot.slane %v1054, %v1069
        %v1072 = vunpack.c.l.s4 1966171168
        %v1073 = vunpack.c.0.s8 %v1072
        %v1074 = vlaneseq
        %v1075 = vshrl.u32 %v1074, 7
        %v1076 = vsub.s32 %v1073, %v1075
        %v1077 = vrot.slane %v1055, %v1076
        %v1079 = vunpack.c.l.s4 1966171168
        %v1080 = vunpack.c.0.s8 %v1079
        %v1081 = vlaneseq
        %v1082 = vshrl.u32 %v1081, 7
        %v1083 = vsub.s32 %v1080, %v1082
        %v1084 = vrot.slane %v1056, %v1083
        %v1085 = vcombine.high %v1063, %v1063
        %v1086 = vcombine.high %v1070, %v1070
        %v1087 = vcombine.high %v1077, %v1077
        %v1088 = vcombine.high %v1084, %v1084
        %v1089 = vlaneseq
        %v1090 = vshrl.u32 %v1089, 7
        %v1091 = vsub.s32 0, %v1090
        %v1092 = vrot.slane %v1014, %v1091
        %v1093 = vlaneseq
        %v1094 = vshrl.u32 %v1093, 7
        %v1095 = vsub.s32 0, %v1094
        %v1096 = vrot.slane %v1028, %v1095
        %v1097 = vlaneseq
        %v1098 = vshrl.u32 %v1097, 7
        %v1099 = vsub.s32 0, %v1098
        %v1100 = vrot.slane %v1036, %v1099
        %v1101 = vlaneseq
        %v1102 = vshrl.u32 %v1101, 7
        %v1103 = vsub.s32 0, %v1102
        %v1104 = vrot.slane %v1038, %v1103
        %v1105 = vlaneseq
        %v1106 = vshrl.u32 %v1105, 7
        %v1107 = vsub.s32 0, %v1106
        %v1108 = vrot.slane %v1021, %v1107
        %v1109 = vlaneseq
        %v1110 = vshrl.u32 %v1109, 7
        %v1111 = vsub.s32 0, %v1110
        %v1112 = vrot.slane %v1035, %v1111
        %v1113 = vlaneseq
        %v1114 = vshrl.u32 %v1113, 7
        %v1115 = vsub.s32 0, %v1114
        %v1116 = vrot.slane %v1037, %v1115
        %v1117 = vlaneseq
        %v1118 = vshrl.u32 %v1117, 7
        %v1119 = vsub.s32 0, %v1118
        %v1120 = vrot.slane %v1039, %v1119
        %v1121 = vlaneseq
        %v1122 = vshrl.u32 %v1121, 7
        %v1123 = vsub.s32 0, %v1122
        %v1124 = vrot.slane %v1063, %v1123
        %v1125 = vlaneseq
        %v1126 = vshrl.u32 %v1125, 7
        %v1127 = vsub.s32 0, %v1126
        %v1128 = vrot.slane %v1077, %v1127
        %v1129 = vlaneseq
        %v1130 = vshrl.u32 %v1129, 7
        %v1131 = vsub.s32 0, %v1130
        %v1132 = vrot.slane %v1085, %v1131
        %v1133 = vlaneseq
        %v1134 = vshrl.u32 %v1133, 7
        %v1135 = vsub.s32 0, %v1134
        %v1136 = vrot.slane %v1087, %v1135
        %v1137 = vlaneseq
        %v1138 = vshrl.u32 %v1137, 7
        %v1139 = vsub.s32 0, %v1138
        %v1140 = vrot.slane %v1070, %v1139
        %v1141 = vlaneseq
        %v1142 = vshrl.u32 %v1141, 7
        %v1143 = vsub.s32 0, %v1142
        %v1144 = vrot.slane %v1084, %v1143
        %v1145 = vlaneseq
        %v1146 = vshrl.u32 %v1145, 7
        %v1147 = vsub.s32 0, %v1146
        %v1148 = vrot.slane %v1086, %v1147
        %v1149 = vlaneseq
        %v1150 = vshrl.u32 %v1149, 7
        %v1151 = vsub.s32 0, %v1150
        %v1152 = vrot.slane %v1088, %v1151
        %1171 = vrot.lane.b32.xlu0 %v691, 96
        %v1172 = vpop.permute.xlu0 %1171
        %1173 = vrot.lane.b32.xlu0 %v697, 96
        %v1174 = vpop.permute.xlu0 %1173
        %v1177 = vadd.f32 %v1092, %v1172
        %v1178 = vadd.f32 %v1092, %v1174
        %v1179 = vadd.f32 %v1096, %v1172
        %v1180 = vadd.f32 %v1096, %v1174
        %v1181 = vadd.f32 %v1100, %v1172
        %v1182 = vadd.f32 %v1100, %v1174
        %v1183 = vadd.f32 %v1104, %v1172
        %v1184 = vadd.f32 %v1104, %v1174
        %v1185 = vadd.f32 %v1108, %v1172
        %v1186 = vadd.f32 %v1108, %v1174
        %v1187 = vadd.f32 %v1112, %v1172
        %v1188 = vadd.f32 %v1112, %v1174
        %v1189 = vadd.f32 %v1116, %v1172
        %v1190 = vadd.f32 %v1116, %v1174
        %v1191 = vadd.f32 %v1120, %v1172
        %v1192 = vadd.f32 %v1120, %v1174
        %v1193 = vadd.f32 %v1124, %v1172
        %v1194 = vadd.f32 %v1124, %v1174
        %v1195 = vadd.f32 %v1128, %v1172
        %v1196 = vadd.f32 %v1128, %v1174
        %v1197 = vadd.f32 %v1132, %v1172
        %v1198 = vadd.f32 %v1132, %v1174
        %v1199 = vadd.f32 %v1136, %v1172
        %v1200 = vadd.f32 %v1136, %v1174
        %v1201 = vadd.f32 %v1140, %v1172
        %v1202 = vadd.f32 %v1140, %v1174
        %v1203 = vadd.f32 %v1144, %v1172
        %v1204 = vadd.f32 %v1144, %v1174
        %v1205 = vadd.f32 %v1148, %v1172
        %v1206 = vadd.f32 %v1148, %v1174
        %v1207 = vadd.f32 %v1152, %v1172
        %v1208 = vadd.f32 %v1152, %v1174
        %vm1209 = vcmp.gt.f32.partialorder %v1177, 0.0
        %vm1210 = vcmp.gt.f32.partialorder %v1178, 0.0
        %vm1211 = vcmp.gt.f32.partialorder %v1179, 0.0
        %vm1212 = vcmp.gt.f32.partialorder %v1180, 0.0
        %vm1213 = vcmp.gt.f32.partialorder %v1181, 0.0
        %vm1214 = vcmp.gt.f32.partialorder %v1182, 0.0
        %vm1215 = vcmp.gt.f32.partialorder %v1183, 0.0
        %vm1216 = vcmp.gt.f32.partialorder %v1184, 0.0
        %vm1217 = vcmp.gt.f32.partialorder %v1185, 0.0
        %vm1218 = vcmp.gt.f32.partialorder %v1186, 0.0
        %vm1219 = vcmp.gt.f32.partialorder %v1187, 0.0
        %vm1220 = vcmp.gt.f32.partialorder %v1188, 0.0
        %vm1221 = vcmp.gt.f32.partialorder %v1189, 0.0
        %vm1222 = vcmp.gt.f32.partialorder %v1190, 0.0
        %vm1223 = vcmp.gt.f32.partialorder %v1191, 0.0
        %vm1224 = vcmp.gt.f32.partialorder %v1192, 0.0
        %vm1225 = vcmp.gt.f32.partialorder %v1193, 0.0
        %vm1226 = vcmp.gt.f32.partialorder %v1194, 0.0
        %vm1227 = vcmp.gt.f32.partialorder %v1195, 0.0
        %vm1228 = vcmp.gt.f32.partialorder %v1196, 0.0
        %vm1229 = vcmp.gt.f32.partialorder %v1197, 0.0
        %vm1230 = vcmp.gt.f32.partialorder %v1198, 0.0
        %vm1231 = vcmp.gt.f32.partialorder %v1199, 0.0
        %vm1232 = vcmp.gt.f32.partialorder %v1200, 0.0
        %vm1233 = vcmp.gt.f32.partialorder %v1201, 0.0
        %vm1234 = vcmp.gt.f32.partialorder %v1202, 0.0
        %vm1235 = vcmp.gt.f32.partialorder %v1203, 0.0
        %vm1236 = vcmp.gt.f32.partialorder %v1204, 0.0
        %vm1237 = vcmp.gt.f32.partialorder %v1205, 0.0
        %vm1238 = vcmp.gt.f32.partialorder %v1206, 0.0
        %vm1239 = vcmp.gt.f32.partialorder %v1207, 0.0
        %vm1240 = vcmp.gt.f32.partialorder %v1208, 0.0
        %v1241 = vmul.f32 %v1177, 0.2
        %v1242 = vmul.f32 %v1178, 0.2
        %v1243 = vmul.f32 %v1179, 0.2
        %v1244 = vmul.f32 %v1180, 0.2
        %v1245 = vmul.f32 %v1181, 0.2
        %v1246 = vmul.f32 %v1182, 0.2
        %v1247 = vmul.f32 %v1183, 0.2
        %v1248 = vmul.f32 %v1184, 0.2
        %v1249 = vmul.f32 %v1185, 0.2
        %v1250 = vmul.f32 %v1186, 0.2
        %v1251 = vmul.f32 %v1187, 0.2
        %v1252 = vmul.f32 %v1188, 0.2
        %v1253 = vmul.f32 %v1189, 0.2
        %v1254 = vmul.f32 %v1190, 0.2
        %v1255 = vmul.f32 %v1191, 0.2
        %v1256 = vmul.f32 %v1192, 0.2
        %v1257 = vmul.f32 %v1193, 0.2
        %v1258 = vmul.f32 %v1194, 0.2
        %v1259 = vmul.f32 %v1195, 0.2
        %v1260 = vmul.f32 %v1196, 0.2
        %v1261 = vmul.f32 %v1197, 0.2
        %v1262 = vmul.f32 %v1198, 0.2
        %v1263 = vmul.f32 %v1199, 0.2
        %v1264 = vmul.f32 %v1200, 0.2
        %v1265 = vmul.f32 %v1201, 0.2
        %v1266 = vmul.f32 %v1202, 0.2
        %v1267 = vmul.f32 %v1203, 0.2
        %v1268 = vmul.f32 %v1204, 0.2
        %v1269 = vmul.f32 %v1205, 0.2
        %v1270 = vmul.f32 %v1206, 0.2
        %v1271 = vmul.f32 %v1207, 0.2
        %v1272 = vmul.f32 %v1208, 0.2
        %v1273 = vsel %vm1209, %v1177, %v1241
        %v1274 = vsel %vm1210, %v1178, %v1242
        %v1275 = vsel %vm1211, %v1179, %v1243
        %v1276 = vsel %vm1212, %v1180, %v1244
        %v1277 = vsel %vm1213, %v1181, %v1245
        %v1278 = vsel %vm1214, %v1182, %v1246
        %v1279 = vsel %vm1215, %v1183, %v1247
        %v1280 = vsel %vm1216, %v1184, %v1248
        %v1281 = vsel %vm1217, %v1185, %v1249
        %v1282 = vsel %vm1218, %v1186, %v1250
        %v1283 = vsel %vm1219, %v1187, %v1251
        %v1284 = vsel %vm1220, %v1188, %v1252
        %v1285 = vsel %vm1221, %v1189, %v1253
        %v1286 = vsel %vm1222, %v1190, %v1254
        %v1287 = vsel %vm1223, %v1191, %v1255
        %v1288 = vsel %vm1224, %v1192, %v1256
        %v1289 = vsel %vm1225, %v1193, %v1257
        %v1290 = vsel %vm1226, %v1194, %v1258
        %v1291 = vsel %vm1227, %v1195, %v1259
        %v1292 = vsel %vm1228, %v1196, %v1260
        %v1293 = vsel %vm1229, %v1197, %v1261
        %v1294 = vsel %vm1230, %v1198, %v1262
        %v1295 = vsel %vm1231, %v1199, %v1263
        %v1296 = vsel %vm1232, %v1200, %v1264
        %v1297 = vsel %vm1233, %v1201, %v1265
        %v1298 = vsel %vm1234, %v1202, %v1266
        %v1299 = vsel %vm1235, %v1203, %v1267
        %v1300 = vsel %vm1236, %v1204, %v1268
        %v1301 = vsel %vm1237, %v1205, %v1269
        %v1302 = vsel %vm1238, %v1206, %v1270
        %v1303 = vsel %vm1239, %v1207, %v1271
        %v1304 = vsel %vm1240, %v1208, %v1272
        %v1305 = vlaneseq
        %v1306 = vshrl.u32 %v1305, 7
        %v1307 = vsub.s32 0, %v1306
        %v1308 = vrot.slane %v987, %v1307
        %1310 = vbcast.lane.b32.xlu0 %v1308, 256
        %v1311 = vpop.permute.xlu0 %1310
        %s1313 = sor.u32 256, 8
        %1314 = vbcast.lane.b32.xlu0 %v1308, %s1313
        %v1315 = vpop.permute.xlu0 %1314
        %v1316 = vlaneseq
        %v1317 = vshrl.u32 %v1316, 7
        %v1318 = vsub.s32 1, %v1317
        %v1319 = vrot.slane %v987, %v1318
        %1321 = vbcast.lane.b32.xlu0 %v1319, 256
        %v1322 = vpop.permute.xlu0 %1321
        %s1324 = sor.u32 256, 8
        %1325 = vbcast.lane.b32.xlu0 %v1319, %s1324
        %v1326 = vpop.permute.xlu0 %1325
        %v1327 = vlaneseq
        %v1328 = vshrl.u32 %v1327, 7
        %v1329 = vsub.s32 2, %v1328
        %v1330 = vrot.slane %v987, %v1329
        %1332 = vbcast.lane.b32.xlu0 %v1330, 256
        %v1333 = vpop.permute.xlu0 %1332
        %s1335 = sor.u32 256, 8
        %1336 = vbcast.lane.b32.xlu0 %v1330, %s1335
        %v1337 = vpop.permute.xlu0 %1336
        %v1338 = vlaneseq
        %v1339 = vshrl.u32 %v1338, 7
        %v1340 = vsub.s32 3, %v1339
        %v1341 = vrot.slane %v987, %v1340
        %1343 = vbcast.lane.b32.xlu0 %v1341, 256
        %v1344 = vpop.permute.xlu0 %1343
        %s1346 = sor.u32 256, 8
        %1347 = vbcast.lane.b32.xlu0 %v1341, %s1346
        %v1348 = vpop.permute.xlu0 %1347
        %v1349 = vlaneseq
        %v1350 = vshrl.u32 %v1349, 7
        %v1351 = vsub.s32 4, %v1350
        %v1352 = vrot.slane %v987, %v1351
        %1354 = vbcast.lane.b32.xlu0 %v1352, 256
        %v1355 = vpop.permute.xlu0 %1354
        %s1357 = sor.u32 256, 8
        %1358 = vbcast.lane.b32.xlu0 %v1352, %s1357
        %v1359 = vpop.permute.xlu0 %1358
        %v1360 = vlaneseq
        %v1361 = vshrl.u32 %v1360, 7
        %v1362 = vsub.s32 5, %v1361
        %v1363 = vrot.slane %v987, %v1362
        %1365 = vbcast.lane.b32.xlu0 %v1363, 256
        %v1366 = vpop.permute.xlu0 %1365
        %s1368 = sor.u32 256, 8
        %1369 = vbcast.lane.b32.xlu0 %v1363, %s1368
        %v1370 = vpop.permute.xlu0 %1369
        %v1371 = vlaneseq
        %v1372 = vshrl.u32 %v1371, 7
        %v1373 = vsub.s32 6, %v1372
        %v1374 = vrot.slane %v987, %v1373
        %1376 = vbcast.lane.b32.xlu0 %v1374, 256
        %v1377 = vpop.permute.xlu0 %1376
        %s1379 = sor.u32 256, 8
        %1380 = vbcast.lane.b32.xlu0 %v1374, %s1379
        %v1381 = vpop.permute.xlu0 %1380
        %v1382 = vlaneseq
        %v1383 = vshrl.u32 %v1382, 7
        %v1384 = vsub.s32 7, %v1383
        %v1385 = vrot.slane %v987, %v1384
        %1387 = vbcast.lane.b32.xlu0 %v1385, 256
        %v1388 = vpop.permute.xlu0 %1387
        %s1390 = sor.u32 256, 8
        %1391 = vbcast.lane.b32.xlu0 %v1385, %s1390
        %v1392 = vpop.permute.xlu0 %1391
        %v1393 = vlaneseq
        %v1394 = vshrl.u32 %v1393, 7
        %v1395 = vsub.s32 0, %v1394
        %v1396 = vrot.slane %v988, %v1395
        %1398 = vbcast.lane.b32.xlu0 %v1396, 256
        %v1399 = vpop.permute.xlu0 %1398
        %s1401 = sor.u32 256, 8
        %1402 = vbcast.lane.b32.xlu0 %v1396, %s1401
        %v1403 = vpop.permute.xlu0 %1402
        %v1404 = vlaneseq
        %v1405 = vshrl.u32 %v1404, 7
        %v1406 = vsub.s32 1, %v1405
        %v1407 = vrot.slane %v988, %v1406
        %1409 = vbcast.lane.b32.xlu0 %v1407, 256
        %v1410 = vpop.permute.xlu0 %1409
        %s1412 = sor.u32 256, 8
        %1413 = vbcast.lane.b32.xlu0 %v1407, %s1412
        %v1414 = vpop.permute.xlu0 %1413
        %v1415 = vlaneseq
        %v1416 = vshrl.u32 %v1415, 7
        %v1417 = vsub.s32 2, %v1416
        %v1418 = vrot.slane %v988, %v1417
        %1420 = vbcast.lane.b32.xlu0 %v1418, 256
        %v1421 = vpop.permute.xlu0 %1420
        %s1423 = sor.u32 256, 8
        %1424 = vbcast.lane.b32.xlu0 %v1418, %s1423
        %v1425 = vpop.permute.xlu0 %1424
        %v1426 = vlaneseq
        %v1427 = vshrl.u32 %v1426, 7
        %v1428 = vsub.s32 3, %v1427
        %v1429 = vrot.slane %v988, %v1428
        %1431 = vbcast.lane.b32.xlu0 %v1429, 256
        %v1432 = vpop.permute.xlu0 %1431
        %s1434 = sor.u32 256, 8
        %1435 = vbcast.lane.b32.xlu0 %v1429, %s1434
        %v1436 = vpop.permute.xlu0 %1435
        %v1437 = vlaneseq
        %v1438 = vshrl.u32 %v1437, 7
        %v1439 = vsub.s32 4, %v1438
        %v1440 = vrot.slane %v988, %v1439
        %1442 = vbcast.lane.b32.xlu0 %v1440, 256
        %v1443 = vpop.permute.xlu0 %1442
        %s1445 = sor.u32 256, 8
        %1446 = vbcast.lane.b32.xlu0 %v1440, %s1445
        %v1447 = vpop.permute.xlu0 %1446
        %v1448 = vlaneseq
        %v1449 = vshrl.u32 %v1448, 7
        %v1450 = vsub.s32 5, %v1449
        %v1451 = vrot.slane %v988, %v1450
        %1453 = vbcast.lane.b32.xlu0 %v1451, 256
        %v1454 = vpop.permute.xlu0 %1453
        %s1456 = sor.u32 256, 8
        %1457 = vbcast.lane.b32.xlu0 %v1451, %s1456
        %v1458 = vpop.permute.xlu0 %1457
        %v1459 = vlaneseq
        %v1460 = vshrl.u32 %v1459, 7
        %v1461 = vsub.s32 6, %v1460
        %v1462 = vrot.slane %v988, %v1461
        %1464 = vbcast.lane.b32.xlu0 %v1462, 256
        %v1465 = vpop.permute.xlu0 %1464
        %s1467 = sor.u32 256, 8
        %1468 = vbcast.lane.b32.xlu0 %v1462, %s1467
        %v1469 = vpop.permute.xlu0 %1468
        %v1470 = vlaneseq
        %v1471 = vshrl.u32 %v1470, 7
        %v1472 = vsub.s32 7, %v1471
        %v1473 = vrot.slane %v988, %v1472
        %1475 = vbcast.lane.b32.xlu0 %v1473, 256
        %v1476 = vpop.permute.xlu0 %1475
        %s1478 = sor.u32 256, 8
        %1479 = vbcast.lane.b32.xlu0 %v1473, %s1478
        %v1480 = vpop.permute.xlu0 %1479
        %vm1481 = vcmp.gt.f32.partialorder %v1311, 0.0
        %vm1482 = vcmp.gt.f32.partialorder %v1315, 0.0
        %vm1483 = vcmp.gt.f32.partialorder %v1322, 0.0
        %vm1484 = vcmp.gt.f32.partialorder %v1326, 0.0
        %vm1485 = vcmp.gt.f32.partialorder %v1333, 0.0
        %vm1486 = vcmp.gt.f32.partialorder %v1337, 0.0
        %vm1487 = vcmp.gt.f32.partialorder %v1344, 0.0
        %vm1488 = vcmp.gt.f32.partialorder %v1348, 0.0
        %vm1489 = vcmp.gt.f32.partialorder %v1355, 0.0
        %vm1490 = vcmp.gt.f32.partialorder %v1359, 0.0
        %vm1491 = vcmp.gt.f32.partialorder %v1366, 0.0
        %vm1492 = vcmp.gt.f32.partialorder %v1370, 0.0
        %vm1493 = vcmp.gt.f32.partialorder %v1377, 0.0
        %vm1494 = vcmp.gt.f32.partialorder %v1381, 0.0
        %vm1495 = vcmp.gt.f32.partialorder %v1388, 0.0
        %vm1496 = vcmp.gt.f32.partialorder %v1392, 0.0
        %vm1497 = vcmp.gt.f32.partialorder %v1399, 0.0
        %vm1498 = vcmp.gt.f32.partialorder %v1403, 0.0
        %vm1499 = vcmp.gt.f32.partialorder %v1410, 0.0
        %vm1500 = vcmp.gt.f32.partialorder %v1414, 0.0
        %vm1501 = vcmp.gt.f32.partialorder %v1421, 0.0
        %vm1502 = vcmp.gt.f32.partialorder %v1425, 0.0
        %vm1503 = vcmp.gt.f32.partialorder %v1432, 0.0
        %vm1504 = vcmp.gt.f32.partialorder %v1436, 0.0
        %vm1505 = vcmp.gt.f32.partialorder %v1443, 0.0
        %vm1506 = vcmp.gt.f32.partialorder %v1447, 0.0
        %vm1507 = vcmp.gt.f32.partialorder %v1454, 0.0
        %vm1508 = vcmp.gt.f32.partialorder %v1458, 0.0
        %vm1509 = vcmp.gt.f32.partialorder %v1465, 0.0
        %vm1510 = vcmp.gt.f32.partialorder %v1469, 0.0
        %vm1511 = vcmp.gt.f32.partialorder %v1476, 0.0
        %vm1512 = vcmp.gt.f32.partialorder %v1480, 0.0
        %v1513 = vsel %vm1481, 1, 0
        %v1514 = vsel %vm1482, 1, 0
        %v1515 = vsel %vm1483, 1, 0
        %v1516 = vsel %vm1484, 1, 0
        %v1517 = vsel %vm1485, 1, 0
        %v1518 = vsel %vm1486, 1, 0
        %v1519 = vsel %vm1487, 1, 0
        %v1520 = vsel %vm1488, 1, 0
        %v1521 = vsel %vm1489, 1, 0
        %v1522 = vsel %vm1490, 1, 0
        %v1523 = vsel %vm1491, 1, 0
        %v1524 = vsel %vm1492, 1, 0
        %v1525 = vsel %vm1493, 1, 0
        %v1526 = vsel %vm1494, 1, 0
        %v1527 = vsel %vm1495, 1, 0
        %v1528 = vsel %vm1496, 1, 0
        %v1529 = vsel %vm1497, 1, 0
        %v1530 = vsel %vm1498, 1, 0
        %v1531 = vsel %vm1499, 1, 0
        %v1532 = vsel %vm1500, 1, 0
        %v1533 = vsel %vm1501, 1, 0
        %v1534 = vsel %vm1502, 1, 0
        %v1535 = vsel %vm1503, 1, 0
        %v1536 = vsel %vm1504, 1, 0
        %v1537 = vsel %vm1505, 1, 0
        %v1538 = vsel %vm1506, 1, 0
        %v1539 = vsel %vm1507, 1, 0
        %v1540 = vsel %vm1508, 1, 0
        %v1541 = vsel %vm1509, 1, 0
        %v1542 = vsel %vm1510, 1, 0
        %v1543 = vsel %vm1511, 1, 0
        %v1544 = vsel %vm1512, 1, 0
        %vm1545 = vcmp.eq.s32.totalorder %v1513, 1
        %vm1546 = vcmp.eq.s32.totalorder %v1514, 1
        %vm1547 = vcmp.eq.s32.totalorder %v1515, 1
        %vm1548 = vcmp.eq.s32.totalorder %v1516, 1
        %vm1549 = vcmp.eq.s32.totalorder %v1517, 1
        %vm1550 = vcmp.eq.s32.totalorder %v1518, 1
        %vm1551 = vcmp.eq.s32.totalorder %v1519, 1
        %vm1552 = vcmp.eq.s32.totalorder %v1520, 1
        %vm1553 = vcmp.eq.s32.totalorder %v1521, 1
        %vm1554 = vcmp.eq.s32.totalorder %v1522, 1
        %vm1555 = vcmp.eq.s32.totalorder %v1523, 1
        %vm1556 = vcmp.eq.s32.totalorder %v1524, 1
        %vm1557 = vcmp.eq.s32.totalorder %v1525, 1
        %vm1558 = vcmp.eq.s32.totalorder %v1526, 1
        %vm1559 = vcmp.eq.s32.totalorder %v1527, 1
        %vm1560 = vcmp.eq.s32.totalorder %v1528, 1
        %vm1561 = vcmp.eq.s32.totalorder %v1529, 1
        %vm1562 = vcmp.eq.s32.totalorder %v1530, 1
        %vm1563 = vcmp.eq.s32.totalorder %v1531, 1
        %vm1564 = vcmp.eq.s32.totalorder %v1532, 1
        %vm1565 = vcmp.eq.s32.totalorder %v1533, 1
        %vm1566 = vcmp.eq.s32.totalorder %v1534, 1
        %vm1567 = vcmp.eq.s32.totalorder %v1535, 1
        %vm1568 = vcmp.eq.s32.totalorder %v1536, 1
        %vm1569 = vcmp.eq.s32.totalorder %v1537, 1
        %vm1570 = vcmp.eq.s32.totalorder %v1538, 1
        %vm1571 = vcmp.eq.s32.totalorder %v1539, 1
        %vm1572 = vcmp.eq.s32.totalorder %v1540, 1
        %vm1573 = vcmp.eq.s32.totalorder %v1541, 1
        %vm1574 = vcmp.eq.s32.totalorder %v1542, 1
        %vm1575 = vcmp.eq.s32.totalorder %v1543, 1
        %vm1576 = vcmp.eq.s32.totalorder %v1544, 1
        %v1577 = vsel %vm1545, %v1273, -1e+09
        %v1578 = vsel %vm1546, %v1274, -1e+09
        %v1579 = vsel %vm1547, %v1275, -1e+09
        %v1580 = vsel %vm1548, %v1276, -1e+09
        %v1581 = vsel %vm1549, %v1277, -1e+09
        %v1582 = vsel %vm1550, %v1278, -1e+09
        %v1583 = vsel %vm1551, %v1279, -1e+09
        %v1584 = vsel %vm1552, %v1280, -1e+09
        %v1585 = vsel %vm1553, %v1281, -1e+09
        %v1586 = vsel %vm1554, %v1282, -1e+09
        %v1587 = vsel %vm1555, %v1283, -1e+09
        %v1588 = vsel %vm1556, %v1284, -1e+09
        %v1589 = vsel %vm1557, %v1285, -1e+09
        %v1590 = vsel %vm1558, %v1286, -1e+09
        %v1591 = vsel %vm1559, %v1287, -1e+09
        %v1592 = vsel %vm1560, %v1288, -1e+09
        %v1593 = vsel %vm1561, %v1289, -1e+09
        %v1594 = vsel %vm1562, %v1290, -1e+09
        %v1595 = vsel %vm1563, %v1291, -1e+09
        %v1596 = vsel %vm1564, %v1292, -1e+09
        %v1597 = vsel %vm1565, %v1293, -1e+09
        %v1598 = vsel %vm1566, %v1294, -1e+09
        %v1599 = vsel %vm1567, %v1295, -1e+09
        %v1600 = vsel %vm1568, %v1296, -1e+09
        %v1601 = vsel %vm1569, %v1297, -1e+09
        %v1602 = vsel %vm1570, %v1298, -1e+09
        %v1603 = vsel %vm1571, %v1299, -1e+09
        %v1604 = vsel %vm1572, %v1300, -1e+09
        %v1605 = vsel %vm1573, %v1301, -1e+09
        %v1606 = vsel %vm1574, %v1302, -1e+09
        %v1607 = vsel %vm1575, %v1303, -1e+09
        %v1608 = vsel %vm1576, %v1304, -1e+09
        %vm1609 = vcmask 523264
        %v1610 = vsel %vm1609, %v1577, -inf
        %v1611 = vsel %vm1609, %v1578, -inf
        %v1612 = vmax.f32 %v1610, %v1611
        %v1613 = vrot.slane %v1612, 4
        %v1614 = vmax.f32 %v1612, %v1613
        %v1615 = vrot.slane %v1614, 2
        %v1616 = vmax.f32 %v1614, %v1615
        %v1617 = vrot.slane %v1616, 1
        %v1618 = vmax.f32 %v1616, %v1617
        %v1619 = vsel %vm1609, %v1579, -inf
        %v1620 = vsel %vm1609, %v1580, -inf
        %v1621 = vmax.f32 %v1619, %v1620
        %v1622 = vrot.slane %v1621, 4
        %v1623 = vmax.f32 %v1621, %v1622
        %v1624 = vrot.slane %v1623, 2
        %v1625 = vmax.f32 %v1623, %v1624
        %v1626 = vrot.slane %v1625, 1
        %v1627 = vmax.f32 %v1625, %v1626
        %v1628 = vsel %vm1609, %v1581, -inf
        %v1629 = vsel %vm1609, %v1582, -inf
        %v1630 = vmax.f32 %v1628, %v1629
        %v1631 = vrot.slane %v1630, 4
        %v1632 = vmax.f32 %v1630, %v1631
        %v1633 = vrot.slane %v1632, 2
        %v1634 = vmax.f32 %v1632, %v1633
        %v1635 = vrot.slane %v1634, 1
        %v1636 = vmax.f32 %v1634, %v1635
        %v1637 = vsel %vm1609, %v1583, -inf
        %v1638 = vsel %vm1609, %v1584, -inf
        %v1639 = vmax.f32 %v1637, %v1638
        %v1640 = vrot.slane %v1639, 4
        %v1641 = vmax.f32 %v1639, %v1640
        %v1642 = vrot.slane %v1641, 2
        %v1643 = vmax.f32 %v1641, %v1642
        %v1644 = vrot.slane %v1643, 1
        %v1645 = vmax.f32 %v1643, %v1644
        %v1646 = vsel %vm1609, %v1585, -inf
        %v1647 = vsel %vm1609, %v1586, -inf
        %v1648 = vmax.f32 %v1646, %v1647
        %v1649 = vrot.slane %v1648, 4
        %v1650 = vmax.f32 %v1648, %v1649
        %v1651 = vrot.slane %v1650, 2
        %v1652 = vmax.f32 %v1650, %v1651
        %v1653 = vrot.slane %v1652, 1
        %v1654 = vmax.f32 %v1652, %v1653
        %v1655 = vsel %vm1609, %v1587, -inf
        %v1656 = vsel %vm1609, %v1588, -inf
        %v1657 = vmax.f32 %v1655, %v1656
        %v1658 = vrot.slane %v1657, 4
        %v1659 = vmax.f32 %v1657, %v1658
        %v1660 = vrot.slane %v1659, 2
        %v1661 = vmax.f32 %v1659, %v1660
        %v1662 = vrot.slane %v1661, 1
        %v1663 = vmax.f32 %v1661, %v1662
        %v1664 = vsel %vm1609, %v1589, -inf
        %v1665 = vsel %vm1609, %v1590, -inf
        %v1666 = vmax.f32 %v1664, %v1665
        %v1667 = vrot.slane %v1666, 4
        %v1668 = vmax.f32 %v1666, %v1667
        %v1669 = vrot.slane %v1668, 2
        %v1670 = vmax.f32 %v1668, %v1669
        %v1671 = vrot.slane %v1670, 1
        %v1672 = vmax.f32 %v1670, %v1671
        %v1673 = vsel %vm1609, %v1591, -inf
        %v1674 = vsel %vm1609, %v1592, -inf
        %v1675 = vmax.f32 %v1673, %v1674
        %v1676 = vrot.slane %v1675, 4
        %v1677 = vmax.f32 %v1675, %v1676
        %v1678 = vrot.slane %v1677, 2
        %v1679 = vmax.f32 %v1677, %v1678
        %v1680 = vrot.slane %v1679, 1
        %v1681 = vmax.f32 %v1679, %v1680
        %v1682 = vsel %vm1609, %v1593, -inf
        %v1683 = vsel %vm1609, %v1594, -inf
        %v1684 = vmax.f32 %v1682, %v1683
        %v1685 = vrot.slane %v1684, 4
        %v1686 = vmax.f32 %v1684, %v1685
        %v1687 = vrot.slane %v1686, 2
        %v1688 = vmax.f32 %v1686, %v1687
        %v1689 = vrot.slane %v1688, 1
        %v1690 = vmax.f32 %v1688, %v1689
        %v1691 = vsel %vm1609, %v1595, -inf
        %v1692 = vsel %vm1609, %v1596, -inf
        %v1693 = vmax.f32 %v1691, %v1692
        %v1694 = vrot.slane %v1693, 4
        %v1695 = vmax.f32 %v1693, %v1694
        %v1696 = vrot.slane %v1695, 2
        %v1697 = vmax.f32 %v1695, %v1696
        %v1698 = vrot.slane %v1697, 1
        %v1699 = vmax.f32 %v1697, %v1698
        %v1700 = vsel %vm1609, %v1597, -inf
        %v1701 = vsel %vm1609, %v1598, -inf
        %v1702 = vmax.f32 %v1700, %v1701
        %v1703 = vrot.slane %v1702, 4
        %v1704 = vmax.f32 %v1702, %v1703
        %v1705 = vrot.slane %v1704, 2
        %v1706 = vmax.f32 %v1704, %v1705
        %v1707 = vrot.slane %v1706, 1
        %v1708 = vmax.f32 %v1706, %v1707
        %v1709 = vsel %vm1609, %v1599, -inf
        %v1710 = vsel %vm1609, %v1600, -inf
        %v1711 = vmax.f32 %v1709, %v1710
        %v1712 = vrot.slane %v1711, 4
        %v1713 = vmax.f32 %v1711, %v1712
        %v1714 = vrot.slane %v1713, 2
        %v1715 = vmax.f32 %v1713, %v1714
        %v1716 = vrot.slane %v1715, 1
        %v1717 = vmax.f32 %v1715, %v1716
        %v1718 = vsel %vm1609, %v1601, -inf
        %v1719 = vsel %vm1609, %v1602, -inf
        %v1720 = vmax.f32 %v1718, %v1719
        %v1721 = vrot.slane %v1720, 4
        %v1722 = vmax.f32 %v1720, %v1721
        %v1723 = vrot.slane %v1722, 2
        %v1724 = vmax.f32 %v1722, %v1723
        %v1725 = vrot.slane %v1724, 1
        %v1726 = vmax.f32 %v1724, %v1725
        %v1727 = vsel %vm1609, %v1603, -inf
        %v1728 = vsel %vm1609, %v1604, -inf
        %v1729 = vmax.f32 %v1727, %v1728
        %v1730 = vrot.slane %v1729, 4
        %v1731 = vmax.f32 %v1729, %v1730
        %v1732 = vrot.slane %v1731, 2
        %v1733 = vmax.f32 %v1731, %v1732
        %v1734 = vrot.slane %v1733, 1
        %v1735 = vmax.f32 %v1733, %v1734
        %v1736 = vsel %vm1609, %v1605, -inf
        %v1737 = vsel %vm1609, %v1606, -inf
        %v1738 = vmax.f32 %v1736, %v1737
        %v1739 = vrot.slane %v1738, 4
        %v1740 = vmax.f32 %v1738, %v1739
        %v1741 = vrot.slane %v1740, 2
        %v1742 = vmax.f32 %v1740, %v1741
        %v1743 = vrot.slane %v1742, 1
        %v1744 = vmax.f32 %v1742, %v1743
        %v1745 = vsel %vm1609, %v1607, -inf
        %v1746 = vsel %vm1609, %v1608, -inf
        %v1747 = vmax.f32 %v1745, %v1746
        %v1748 = vrot.slane %v1747, 4
        %v1749 = vmax.f32 %v1747, %v1748
        %v1750 = vrot.slane %v1749, 2
        %v1751 = vmax.f32 %v1749, %v1750
        %v1752 = vrot.slane %v1751, 1
        %v1753 = vmax.f32 %v1751, %v1752
        %v1754 = vsub.f32 %v1577, %v1618
        %v1755 = vsub.f32 %v1578, %v1618
        %v1756 = vsub.f32 %v1579, %v1627
        %v1757 = vsub.f32 %v1580, %v1627
        %v1758 = vsub.f32 %v1581, %v1636
        %v1759 = vsub.f32 %v1582, %v1636
        %v1760 = vsub.f32 %v1583, %v1645
        %v1761 = vsub.f32 %v1584, %v1645
        %v1762 = vsub.f32 %v1585, %v1654
        %v1763 = vsub.f32 %v1586, %v1654
        %v1764 = vsub.f32 %v1587, %v1663
        %v1765 = vsub.f32 %v1588, %v1663
        %v1766 = vsub.f32 %v1589, %v1672
        %v1767 = vsub.f32 %v1590, %v1672
        %v1768 = vsub.f32 %v1591, %v1681
        %v1769 = vsub.f32 %v1592, %v1681
        %v1770 = vsub.f32 %v1593, %v1690
        %v1771 = vsub.f32 %v1594, %v1690
        %v1772 = vsub.f32 %v1595, %v1699
        %v1773 = vsub.f32 %v1596, %v1699
        %v1774 = vsub.f32 %v1597, %v1708
        %v1775 = vsub.f32 %v1598, %v1708
        %v1776 = vsub.f32 %v1599, %v1717
        %v1777 = vsub.f32 %v1600, %v1717
        %v1778 = vsub.f32 %v1601, %v1726
        %v1779 = vsub.f32 %v1602, %v1726
        %v1780 = vsub.f32 %v1603, %v1735
        %v1781 = vsub.f32 %v1604, %v1735
        %v1782 = vsub.f32 %v1605, %v1744
        %v1783 = vsub.f32 %v1606, %v1744
        %v1784 = vsub.f32 %v1607, %v1753
        %v1785 = vsub.f32 %v1608, %v1753
        %v1786 = vmul.f32 %v1754, 1.442695
        %v1787 = vpow.pop %v1786
        %v1788 = vmul.f32 %v1755, 1.442695
        %v1789 = vpow.pop %v1788
        %v1790 = vmul.f32 %v1756, 1.442695
        %v1791 = vpow.pop %v1790
        %v1792 = vmul.f32 %v1757, 1.442695
        %v1793 = vpow.pop %v1792
        %v1794 = vmul.f32 %v1758, 1.442695
        %v1795 = vpow.pop %v1794
        %v1796 = vmul.f32 %v1759, 1.442695
        %v1797 = vpow.pop %v1796
        %v1798 = vmul.f32 %v1760, 1.442695
        %v1799 = vpow.pop %v1798
        %v1800 = vmul.f32 %v1761, 1.442695
        %v1801 = vpow.pop %v1800
        %v1802 = vmul.f32 %v1762, 1.442695
        %v1803 = vpow.pop %v1802
        %v1804 = vmul.f32 %v1763, 1.442695
        %v1805 = vpow.pop %v1804
        %v1806 = vmul.f32 %v1764, 1.442695
        %v1807 = vpow.pop %v1806
        %v1808 = vmul.f32 %v1765, 1.442695
        %v1809 = vpow.pop %v1808
        %v1810 = vmul.f32 %v1766, 1.442695
        %v1811 = vpow.pop %v1810
        %v1812 = vmul.f32 %v1767, 1.442695
        %v1813 = vpow.pop %v1812
        %v1814 = vmul.f32 %v1768, 1.442695
        %v1815 = vpow.pop %v1814
        %v1816 = vmul.f32 %v1769, 1.442695
        %v1817 = vpow.pop %v1816
        %v1818 = vmul.f32 %v1770, 1.442695
        %v1819 = vpow.pop %v1818
        %v1820 = vmul.f32 %v1771, 1.442695
        %v1821 = vpow.pop %v1820
        %v1822 = vmul.f32 %v1772, 1.442695
        %v1823 = vpow.pop %v1822
        %v1824 = vmul.f32 %v1773, 1.442695
        %v1825 = vpow.pop %v1824
        %v1826 = vmul.f32 %v1774, 1.442695
        %v1827 = vpow.pop %v1826
        %v1828 = vmul.f32 %v1775, 1.442695
        %v1829 = vpow.pop %v1828
        %v1830 = vmul.f32 %v1776, 1.442695
        %v1831 = vpow.pop %v1830
        %v1832 = vmul.f32 %v1777, 1.442695
        %v1833 = vpow.pop %v1832
        %v1834 = vmul.f32 %v1778, 1.442695
        %v1835 = vpow.pop %v1834
        %v1836 = vmul.f32 %v1779, 1.442695
        %v1837 = vpow.pop %v1836
        %v1838 = vmul.f32 %v1780, 1.442695
        %v1839 = vpow.pop %v1838
        %v1840 = vmul.f32 %v1781, 1.442695
        %v1841 = vpow.pop %v1840
        %v1842 = vmul.f32 %v1782, 1.442695
        %v1843 = vpow.pop %v1842
        %v1844 = vmul.f32 %v1783, 1.442695
        %v1845 = vpow.pop %v1844
        %v1846 = vmul.f32 %v1784, 1.442695
        %v1847 = vpow.pop %v1846
        %v1848 = vmul.f32 %v1785, 1.442695
        %v1849 = vpow.pop %v1848
        %v1850 = vmul.f32 %v1787, %v1311
        %v1851 = vmul.f32 %v1789, %v1315
        %v1852 = vmul.f32 %v1791, %v1322
        %v1853 = vmul.f32 %v1793, %v1326
        %v1854 = vmul.f32 %v1795, %v1333
        %v1855 = vmul.f32 %v1797, %v1337
        %v1856 = vmul.f32 %v1799, %v1344
        %v1857 = vmul.f32 %v1801, %v1348
        %v1858 = vmul.f32 %v1803, %v1355
        %v1859 = vmul.f32 %v1805, %v1359
        %v1860 = vmul.f32 %v1807, %v1366
        %v1861 = vmul.f32 %v1809, %v1370
        %v1862 = vmul.f32 %v1811, %v1377
        %v1863 = vmul.f32 %v1813, %v1381
        %v1864 = vmul.f32 %v1815, %v1388
        %v1865 = vmul.f32 %v1817, %v1392
        %v1866 = vmul.f32 %v1819, %v1399
        %v1867 = vmul.f32 %v1821, %v1403
        %v1868 = vmul.f32 %v1823, %v1410
        %v1869 = vmul.f32 %v1825, %v1414
        %v1870 = vmul.f32 %v1827, %v1421
        %v1871 = vmul.f32 %v1829, %v1425
        %v1872 = vmul.f32 %v1831, %v1432
        %v1873 = vmul.f32 %v1833, %v1436
        %v1874 = vmul.f32 %v1835, %v1443
        %v1875 = vmul.f32 %v1837, %v1447
        %v1876 = vmul.f32 %v1839, %v1454
        %v1877 = vmul.f32 %v1841, %v1458
        %v1878 = vmul.f32 %v1843, %v1465
        %v1879 = vmul.f32 %v1845, %v1469
        %v1880 = vmul.f32 %v1847, %v1476
        %v1881 = vmul.f32 %v1849, %v1480
        %v1882 = vsel %vm1609, %v1850, 0.0
        %v1883 = vsel %vm1609, %v1851, 0.0
        %v1884 = vadd.f32 %v1882, %v1883
        %v1885 = vrot.slane %v1884, 4
        %v1886 = vadd.f32 %v1884, %v1885
        %v1887 = vrot.slane %v1886, 2
        %v1888 = vadd.f32 %v1886, %v1887
        %v1889 = vrot.slane %v1888, 1
        %v1890 = vadd.f32 %v1888, %v1889
        %v1891 = vsel %vm1609, %v1852, 0.0
        %v1892 = vsel %vm1609, %v1853, 0.0
        %v1893 = vadd.f32 %v1891, %v1892
        %v1894 = vrot.slane %v1893, 4
        %v1895 = vadd.f32 %v1893, %v1894
        %v1896 = vrot.slane %v1895, 2
        %v1897 = vadd.f32 %v1895, %v1896
        %v1898 = vrot.slane %v1897, 1
        %v1899 = vadd.f32 %v1897, %v1898
        %v1900 = vsel %vm1609, %v1854, 0.0
        %v1901 = vsel %vm1609, %v1855, 0.0
        %v1902 = vadd.f32 %v1900, %v1901
        %v1903 = vrot.slane %v1902, 4
        %v1904 = vadd.f32 %v1902, %v1903
        %v1905 = vrot.slane %v1904, 2
        %v1906 = vadd.f32 %v1904, %v1905
        %v1907 = vrot.slane %v1906, 1
        %v1908 = vadd.f32 %v1906, %v1907
        %v1909 = vsel %vm1609, %v1856, 0.0
        %v1910 = vsel %vm1609, %v1857, 0.0
        %v1911 = vadd.f32 %v1909, %v1910
        %v1912 = vrot.slane %v1911, 4
        %v1913 = vadd.f32 %v1911, %v1912
        %v1914 = vrot.slane %v1913, 2
        %v1915 = vadd.f32 %v1913, %v1914
        %v1916 = vrot.slane %v1915, 1
        %v1917 = vadd.f32 %v1915, %v1916
        %v1918 = vsel %vm1609, %v1858, 0.0
        %v1919 = vsel %vm1609, %v1859, 0.0
        %v1920 = vadd.f32 %v1918, %v1919
        %v1921 = vrot.slane %v1920, 4
        %v1922 = vadd.f32 %v1920, %v1921
        %v1923 = vrot.slane %v1922, 2
        %v1924 = vadd.f32 %v1922, %v1923
        %v1925 = vrot.slane %v1924, 1
        %v1926 = vadd.f32 %v1924, %v1925
        %v1927 = vsel %vm1609, %v1860, 0.0
        %v1928 = vsel %vm1609, %v1861, 0.0
        %v1929 = vadd.f32 %v1927, %v1928
        %v1930 = vrot.slane %v1929, 4
        %v1931 = vadd.f32 %v1929, %v1930
        %v1932 = vrot.slane %v1931, 2
        %v1933 = vadd.f32 %v1931, %v1932
        %v1934 = vrot.slane %v1933, 1
        %v1935 = vadd.f32 %v1933, %v1934
        %v1936 = vsel %vm1609, %v1862, 0.0
        %v1937 = vsel %vm1609, %v1863, 0.0
        %v1938 = vadd.f32 %v1936, %v1937
        %v1939 = vrot.slane %v1938, 4
        %v1940 = vadd.f32 %v1938, %v1939
        %v1941 = vrot.slane %v1940, 2
        %v1942 = vadd.f32 %v1940, %v1941
        %v1943 = vrot.slane %v1942, 1
        %v1944 = vadd.f32 %v1942, %v1943
        %v1945 = vsel %vm1609, %v1864, 0.0
        %v1946 = vsel %vm1609, %v1865, 0.0
        %v1947 = vadd.f32 %v1945, %v1946
        %v1948 = vrot.slane %v1947, 4
        %v1949 = vadd.f32 %v1947, %v1948
        %v1950 = vrot.slane %v1949, 2
        %v1951 = vadd.f32 %v1949, %v1950
        %v1952 = vrot.slane %v1951, 1
        %v1953 = vadd.f32 %v1951, %v1952
        %v1954 = vsel %vm1609, %v1866, 0.0
        %v1955 = vsel %vm1609, %v1867, 0.0
        %v1956 = vadd.f32 %v1954, %v1955
        %v1957 = vrot.slane %v1956, 4
        %v1958 = vadd.f32 %v1956, %v1957
        %v1959 = vrot.slane %v1958, 2
        %v1960 = vadd.f32 %v1958, %v1959
        %v1961 = vrot.slane %v1960, 1
        %v1962 = vadd.f32 %v1960, %v1961
        %v1963 = vsel %vm1609, %v1868, 0.0
        %v1964 = vsel %vm1609, %v1869, 0.0
        %v1965 = vadd.f32 %v1963, %v1964
        %v1966 = vrot.slane %v1965, 4
        %v1967 = vadd.f32 %v1965, %v1966
        %v1968 = vrot.slane %v1967, 2
        %v1969 = vadd.f32 %v1967, %v1968
        %v1970 = vrot.slane %v1969, 1
        %v1971 = vadd.f32 %v1969, %v1970
        %v1972 = vsel %vm1609, %v1870, 0.0
        %v1973 = vsel %vm1609, %v1871, 0.0
        %v1974 = vadd.f32 %v1972, %v1973
        %v1975 = vrot.slane %v1974, 4
        %v1976 = vadd.f32 %v1974, %v1975
        %v1977 = vrot.slane %v1976, 2
        %v1978 = vadd.f32 %v1976, %v1977
        %v1979 = vrot.slane %v1978, 1
        %v1980 = vadd.f32 %v1978, %v1979
        %v1981 = vsel %vm1609, %v1872, 0.0
        %v1982 = vsel %vm1609, %v1873, 0.0
        %v1983 = vadd.f32 %v1981, %v1982
        %v1984 = vrot.slane %v1983, 4
        %v1985 = vadd.f32 %v1983, %v1984
        %v1986 = vrot.slane %v1985, 2
        %v1987 = vadd.f32 %v1985, %v1986
        %v1988 = vrot.slane %v1987, 1
        %v1989 = vadd.f32 %v1987, %v1988
        %v1990 = vsel %vm1609, %v1874, 0.0
        %v1991 = vsel %vm1609, %v1875, 0.0
        %v1992 = vadd.f32 %v1990, %v1991
        %v1993 = vrot.slane %v1992, 4
        %v1994 = vadd.f32 %v1992, %v1993
        %v1995 = vrot.slane %v1994, 2
        %v1996 = vadd.f32 %v1994, %v1995
        %v1997 = vrot.slane %v1996, 1
        %v1998 = vadd.f32 %v1996, %v1997
        %v1999 = vsel %vm1609, %v1876, 0.0
        %v2000 = vsel %vm1609, %v1877, 0.0
        %v2001 = vadd.f32 %v1999, %v2000
        %v2002 = vrot.slane %v2001, 4
        %v2003 = vadd.f32 %v2001, %v2002
        %v2004 = vrot.slane %v2003, 2
        %v2005 = vadd.f32 %v2003, %v2004
        %v2006 = vrot.slane %v2005, 1
        %v2007 = vadd.f32 %v2005, %v2006
        %v2008 = vsel %vm1609, %v1878, 0.0
        %v2009 = vsel %vm1609, %v1879, 0.0
        %v2010 = vadd.f32 %v2008, %v2009
        %v2011 = vrot.slane %v2010, 4
        %v2012 = vadd.f32 %v2010, %v2011
        %v2013 = vrot.slane %v2012, 2
        %v2014 = vadd.f32 %v2012, %v2013
        %v2015 = vrot.slane %v2014, 1
        %v2016 = vadd.f32 %v2014, %v2015
        %v2017 = vsel %vm1609, %v1880, 0.0
        %v2018 = vsel %vm1609, %v1881, 0.0
        %v2019 = vadd.f32 %v2017, %v2018
        %v2020 = vrot.slane %v2019, 4
        %v2021 = vadd.f32 %v2019, %v2020
        %v2022 = vrot.slane %v2021, 2
        %v2023 = vadd.f32 %v2021, %v2022
        %v2024 = vrot.slane %v2023, 1
        %v2025 = vadd.f32 %v2023, %v2024
        %v2026 = vmax.f32 %v1890, 1e-12
        %v2027 = vmax.f32 %v1899, 1e-12
        %v2028 = vmax.f32 %v1908, 1e-12
        %v2029 = vmax.f32 %v1917, 1e-12
        %v2030 = vmax.f32 %v1926, 1e-12
        %v2031 = vmax.f32 %v1935, 1e-12
        %v2032 = vmax.f32 %v1944, 1e-12
        %v2033 = vmax.f32 %v1953, 1e-12
        %v2034 = vmax.f32 %v1962, 1e-12
        %v2035 = vmax.f32 %v1971, 1e-12
        %v2036 = vmax.f32 %v1980, 1e-12
        %v2037 = vmax.f32 %v1989, 1e-12
        %v2038 = vmax.f32 %v1998, 1e-12
        %v2039 = vmax.f32 %v2007, 1e-12
        %v2040 = vmax.f32 %v2016, 1e-12
        %v2041 = vmax.f32 %v2025, 1e-12
        %v2042 = vrcp.pop %v2026
        %v2043 = vrcp.pop %v2027
        %v2044 = vrcp.pop %v2028
        %v2045 = vrcp.pop %v2029
        %v2046 = vrcp.pop %v2030
        %v2047 = vrcp.pop %v2031
        %v2048 = vrcp.pop %v2032
        %v2049 = vrcp.pop %v2033
        %v2050 = vrcp.pop %v2034
        %v2051 = vrcp.pop %v2035
        %v2052 = vrcp.pop %v2036
        %v2053 = vrcp.pop %v2037
        %v2054 = vrcp.pop %v2038
        %v2055 = vrcp.pop %v2039
        %v2056 = vrcp.pop %v2040
        %v2057 = vrcp.pop %v2041
        %v2058 = vmul.f32 %v1850, %v2042
        %v2059 = vmul.f32 %v1851, %v2042
        %v2060 = vmul.f32 %v1852, %v2043
        %v2061 = vmul.f32 %v1853, %v2043
        %v2062 = vmul.f32 %v1854, %v2044
        %v2063 = vmul.f32 %v1855, %v2044
        %v2064 = vmul.f32 %v1856, %v2045
        %v2065 = vmul.f32 %v1857, %v2045
        %v2066 = vmul.f32 %v1858, %v2046
        %v2067 = vmul.f32 %v1859, %v2046
        %v2068 = vmul.f32 %v1860, %v2047
        %v2069 = vmul.f32 %v1861, %v2047
        %v2070 = vmul.f32 %v1862, %v2048
        %v2071 = vmul.f32 %v1863, %v2048
        %v2072 = vmul.f32 %v1864, %v2049
        %v2073 = vmul.f32 %v1865, %v2049
        %v2074 = vmul.f32 %v1866, %v2050
        %v2075 = vmul.f32 %v1867, %v2050
        %v2076 = vmul.f32 %v1868, %v2051
        %v2077 = vmul.f32 %v1869, %v2051
        %v2078 = vmul.f32 %v1870, %v2052
        %v2079 = vmul.f32 %v1871, %v2052
        %v2080 = vmul.f32 %v1872, %v2053
        %v2081 = vmul.f32 %v1873, %v2053
        %v2082 = vmul.f32 %v1874, %v2054
        %v2083 = vmul.f32 %v1875, %v2054
        %v2084 = vmul.f32 %v1876, %v2055
        %v2085 = vmul.f32 %v1877, %v2055
        %v2086 = vmul.f32 %v1878, %v2056
        %v2087 = vmul.f32 %v1879, %v2056
        %v2088 = vmul.f32 %v1880, %v2057
        %v2089 = vmul.f32 %v1881, %v2057
        %2092 = vrot.lane.b32.xlu0 %v689, 64
        %v2093 = vpop.permute.xlu0 %2092
        %2094 = vrot.lane.b32.xlu0 %v695, 64
        %v2095 = vpop.permute.xlu0 %2094
        %v2098 = vmul.f32 %v2058, %v2093
        %v2099 = vmul.f32 %v2059, %v2095
        %v2100 = vmul.f32 %v2060, %v2093
        %v2101 = vmul.f32 %v2061, %v2095
        %v2102 = vmul.f32 %v2062, %v2093
        %v2103 = vmul.f32 %v2063, %v2095
        %v2104 = vmul.f32 %v2064, %v2093
        %v2105 = vmul.f32 %v2065, %v2095
        %v2106 = vmul.f32 %v2066, %v2093
        %v2107 = vmul.f32 %v2067, %v2095
        %v2108 = vmul.f32 %v2068, %v2093
        %v2109 = vmul.f32 %v2069, %v2095
        %v2110 = vmul.f32 %v2070, %v2093
        %v2111 = vmul.f32 %v2071, %v2095
        %v2112 = vmul.f32 %v2072, %v2093
        %v2113 = vmul.f32 %v2073, %v2095
        %v2114 = vmul.f32 %v2074, %v2093
        %v2115 = vmul.f32 %v2075, %v2095
        %v2116 = vmul.f32 %v2076, %v2093
        %v2117 = vmul.f32 %v2077, %v2095
        %v2118 = vmul.f32 %v2078, %v2093
        %v2119 = vmul.f32 %v2079, %v2095
        %v2120 = vmul.f32 %v2080, %v2093
        %v2121 = vmul.f32 %v2081, %v2095
        %v2122 = vmul.f32 %v2082, %v2093
        %v2123 = vmul.f32 %v2083, %v2095
        %v2124 = vmul.f32 %v2084, %v2093
        %v2125 = vmul.f32 %v2085, %v2095
        %v2126 = vmul.f32 %v2086, %v2093
        %v2127 = vmul.f32 %v2087, %v2095
        %v2128 = vmul.f32 %v2088, %v2093
        %v2129 = vmul.f32 %v2089, %v2095
        %v2130 = vsel %vm1609, %v2098, 0.0
        %v2131 = vsel %vm1609, %v2099, 0.0
        %v2132 = vadd.f32 %v2130, %v2131
        %v2133 = vrot.slane %v2132, 4
        %v2134 = vadd.f32 %v2132, %v2133
        %v2135 = vrot.slane %v2134, 2
        %v2136 = vadd.f32 %v2134, %v2135
        %v2137 = vrot.slane %v2136, 1
        %v2138 = vadd.f32 %v2136, %v2137
        %v2139 = vsel %vm1609, %v2100, 0.0
        %v2140 = vsel %vm1609, %v2101, 0.0
        %v2141 = vadd.f32 %v2139, %v2140
        %v2142 = vrot.slane %v2141, 4
        %v2143 = vadd.f32 %v2141, %v2142
        %v2144 = vrot.slane %v2143, 2
        %v2145 = vadd.f32 %v2143, %v2144
        %v2146 = vrot.slane %v2145, 1
        %v2147 = vadd.f32 %v2145, %v2146
        %v2148 = vsel %vm1609, %v2102, 0.0
        %v2149 = vsel %vm1609, %v2103, 0.0
        %v2150 = vadd.f32 %v2148, %v2149
        %v2151 = vrot.slane %v2150, 4
        %v2152 = vadd.f32 %v2150, %v2151
        %v2153 = vrot.slane %v2152, 2
        %v2154 = vadd.f32 %v2152, %v2153
        %v2155 = vrot.slane %v2154, 1
        %v2156 = vadd.f32 %v2154, %v2155
        %v2157 = vsel %vm1609, %v2104, 0.0
        %v2158 = vsel %vm1609, %v2105, 0.0
        %v2159 = vadd.f32 %v2157, %v2158
        %v2160 = vrot.slane %v2159, 4
        %v2161 = vadd.f32 %v2159, %v2160
        %v2162 = vrot.slane %v2161, 2
        %v2163 = vadd.f32 %v2161, %v2162
        %v2164 = vrot.slane %v2163, 1
        %v2165 = vadd.f32 %v2163, %v2164
        %v2166 = vsel %vm1609, %v2106, 0.0
        %v2167 = vsel %vm1609, %v2107, 0.0
        %v2168 = vadd.f32 %v2166, %v2167
        %v2169 = vrot.slane %v2168, 4
        %v2170 = vadd.f32 %v2168, %v2169
        %v2171 = vrot.slane %v2170, 2
        %v2172 = vadd.f32 %v2170, %v2171
        %v2173 = vrot.slane %v2172, 1
        %v2174 = vadd.f32 %v2172, %v2173
        %v2175 = vsel %vm1609, %v2108, 0.0
        %v2176 = vsel %vm1609, %v2109, 0.0
        %v2177 = vadd.f32 %v2175, %v2176
        %v2178 = vrot.slane %v2177, 4
        %v2179 = vadd.f32 %v2177, %v2178
        %v2180 = vrot.slane %v2179, 2
        %v2181 = vadd.f32 %v2179, %v2180
        %v2182 = vrot.slane %v2181, 1
        %v2183 = vadd.f32 %v2181, %v2182
        %v2184 = vsel %vm1609, %v2110, 0.0
        %v2185 = vsel %vm1609, %v2111, 0.0
        %v2186 = vadd.f32 %v2184, %v2185
        %v2187 = vrot.slane %v2186, 4
        %v2188 = vadd.f32 %v2186, %v2187
        %v2189 = vrot.slane %v2188, 2
        %v2190 = vadd.f32 %v2188, %v2189
        %v2191 = vrot.slane %v2190, 1
        %v2192 = vadd.f32 %v2190, %v2191
        %v2193 = vsel %vm1609, %v2112, 0.0
        %v2194 = vsel %vm1609, %v2113, 0.0
        %v2195 = vadd.f32 %v2193, %v2194
        %v2196 = vrot.slane %v2195, 4
        %v2197 = vadd.f32 %v2195, %v2196
        %v2198 = vrot.slane %v2197, 2
        %v2199 = vadd.f32 %v2197, %v2198
        %v2200 = vrot.slane %v2199, 1
        %v2201 = vadd.f32 %v2199, %v2200
        %v2202 = vsel %vm1609, %v2114, 0.0
        %v2203 = vsel %vm1609, %v2115, 0.0
        %v2204 = vadd.f32 %v2202, %v2203
        %v2205 = vrot.slane %v2204, 4
        %v2206 = vadd.f32 %v2204, %v2205
        %v2207 = vrot.slane %v2206, 2
        %v2208 = vadd.f32 %v2206, %v2207
        %v2209 = vrot.slane %v2208, 1
        %v2210 = vadd.f32 %v2208, %v2209
        %v2211 = vsel %vm1609, %v2116, 0.0
        %v2212 = vsel %vm1609, %v2117, 0.0
        %v2213 = vadd.f32 %v2211, %v2212
        %v2214 = vrot.slane %v2213, 4
        %v2215 = vadd.f32 %v2213, %v2214
        %v2216 = vrot.slane %v2215, 2
        %v2217 = vadd.f32 %v2215, %v2216
        %v2218 = vrot.slane %v2217, 1
        %v2219 = vadd.f32 %v2217, %v2218
        %v2220 = vsel %vm1609, %v2118, 0.0
        %v2221 = vsel %vm1609, %v2119, 0.0
        %v2222 = vadd.f32 %v2220, %v2221
        %v2223 = vrot.slane %v2222, 4
        %v2224 = vadd.f32 %v2222, %v2223
        %v2225 = vrot.slane %v2224, 2
        %v2226 = vadd.f32 %v2224, %v2225
        %v2227 = vrot.slane %v2226, 1
        %v2228 = vadd.f32 %v2226, %v2227
        %v2229 = vsel %vm1609, %v2120, 0.0
        %v2230 = vsel %vm1609, %v2121, 0.0
        %v2231 = vadd.f32 %v2229, %v2230
        %v2232 = vrot.slane %v2231, 4
        %v2233 = vadd.f32 %v2231, %v2232
        %v2234 = vrot.slane %v2233, 2
        %v2235 = vadd.f32 %v2233, %v2234
        %v2236 = vrot.slane %v2235, 1
        %v2237 = vadd.f32 %v2235, %v2236
        %v2238 = vsel %vm1609, %v2122, 0.0
        %v2239 = vsel %vm1609, %v2123, 0.0
        %v2240 = vadd.f32 %v2238, %v2239
        %v2241 = vrot.slane %v2240, 4
        %v2242 = vadd.f32 %v2240, %v2241
        %v2243 = vrot.slane %v2242, 2
        %v2244 = vadd.f32 %v2242, %v2243
        %v2245 = vrot.slane %v2244, 1
        %v2246 = vadd.f32 %v2244, %v2245
        %v2247 = vsel %vm1609, %v2124, 0.0
        %v2248 = vsel %vm1609, %v2125, 0.0
        %v2249 = vadd.f32 %v2247, %v2248
        %v2250 = vrot.slane %v2249, 4
        %v2251 = vadd.f32 %v2249, %v2250
        %v2252 = vrot.slane %v2251, 2
        %v2253 = vadd.f32 %v2251, %v2252
        %v2254 = vrot.slane %v2253, 1
        %v2255 = vadd.f32 %v2253, %v2254
        %v2256 = vsel %vm1609, %v2126, 0.0
        %v2257 = vsel %vm1609, %v2127, 0.0
        %v2258 = vadd.f32 %v2256, %v2257
        %v2259 = vrot.slane %v2258, 4
        %v2260 = vadd.f32 %v2258, %v2259
        %v2261 = vrot.slane %v2260, 2
        %v2262 = vadd.f32 %v2260, %v2261
        %v2263 = vrot.slane %v2262, 1
        %v2264 = vadd.f32 %v2262, %v2263
        %v2265 = vsel %vm1609, %v2128, 0.0
        %v2266 = vsel %vm1609, %v2129, 0.0
        %v2267 = vadd.f32 %v2265, %v2266
        %v2268 = vrot.slane %v2267, 4
        %v2269 = vadd.f32 %v2267, %v2268
        %v2270 = vrot.slane %v2269, 2
        %v2271 = vadd.f32 %v2269, %v2270
        %v2272 = vrot.slane %v2271, 1
        %v2273 = vadd.f32 %v2271, %v2272
        %v2274 = vld [vmem:[%s483] sm:$0xff]
        %v2275 = vld [vmem:[%s483 + $0x8] sm:$0xff]
        %2280 = vrot.lane.b32.xlu0 %v882, 32
        %v2281 = vpop.permute.xlu0 %2280
        %2282 = vrot.lane.b32.xlu0 %v888, 32
        %v2283 = vpop.permute.xlu0 %2282
        %2284 = vrot.lane.b32.xlu0 %v894, 32
        %v2285 = vpop.permute.xlu0 %2284
        %2286 = vrot.lane.b32.xlu0 %v900, 32
        %v2287 = vpop.permute.xlu0 %2286
        %v2292 = vadd.f32 %v1092, %v2281
        %v2293 = vadd.f32 %v1092, %v2283
        %v2294 = vadd.f32 %v1092, %v2285
        %v2295 = vadd.f32 %v1092, %v2287
        %v2296 = vadd.f32 %v1096, %v2281
        %v2297 = vadd.f32 %v1096, %v2283
        %v2298 = vadd.f32 %v1096, %v2285
        %v2299 = vadd.f32 %v1096, %v2287
        %v2300 = vadd.f32 %v1100, %v2281
        %v2301 = vadd.f32 %v1100, %v2283
        %v2302 = vadd.f32 %v1100, %v2285
        %v2303 = vadd.f32 %v1100, %v2287
        %v2304 = vadd.f32 %v1104, %v2281
        %v2305 = vadd.f32 %v1104, %v2283
        %v2306 = vadd.f32 %v1104, %v2285
        %v2307 = vadd.f32 %v1104, %v2287
        %v2308 = vadd.f32 %v1108, %v2281
        %v2309 = vadd.f32 %v1108, %v2283
        %v2310 = vadd.f32 %v1108, %v2285
        %v2311 = vadd.f32 %v1108, %v2287
        %v2312 = vadd.f32 %v1112, %v2281
        %v2313 = vadd.f32 %v1112, %v2283
        %v2314 = vadd.f32 %v1112, %v2285
        %v2315 = vadd.f32 %v1112, %v2287
        %v2316 = vadd.f32 %v1116, %v2281
        %v2317 = vadd.f32 %v1116, %v2283
        %v2318 = vadd.f32 %v1116, %v2285
        %v2319 = vadd.f32 %v1116, %v2287
        %v2320 = vadd.f32 %v1120, %v2281
        %v2321 = vadd.f32 %v1120, %v2283
        %v2322 = vadd.f32 %v1120, %v2285
        %v2323 = vadd.f32 %v1120, %v2287
        %v2324 = vadd.f32 %v1124, %v2281
        %v2325 = vadd.f32 %v1124, %v2283
        %v2326 = vadd.f32 %v1124, %v2285
        %v2327 = vadd.f32 %v1124, %v2287
        %v2328 = vadd.f32 %v1128, %v2281
        %v2329 = vadd.f32 %v1128, %v2283
        %v2330 = vadd.f32 %v1128, %v2285
        %v2331 = vadd.f32 %v1128, %v2287
        %v2332 = vadd.f32 %v1132, %v2281
        %v2333 = vadd.f32 %v1132, %v2283
        %v2334 = vadd.f32 %v1132, %v2285
        %v2335 = vadd.f32 %v1132, %v2287
        %v2336 = vadd.f32 %v1136, %v2281
        %v2337 = vadd.f32 %v1136, %v2283
        %v2338 = vadd.f32 %v1136, %v2285
        %v2339 = vadd.f32 %v1136, %v2287
        %v2340 = vadd.f32 %v1140, %v2281
        %v2341 = vadd.f32 %v1140, %v2283
        %v2342 = vadd.f32 %v1140, %v2285
        %v2343 = vadd.f32 %v1140, %v2287
        %v2344 = vadd.f32 %v1144, %v2281
        %v2345 = vadd.f32 %v1144, %v2283
        %v2346 = vadd.f32 %v1144, %v2285
        %v2347 = vadd.f32 %v1144, %v2287
        %v2348 = vadd.f32 %v1148, %v2281
        %v2349 = vadd.f32 %v1148, %v2283
        %v2350 = vadd.f32 %v1148, %v2285
        %v2351 = vadd.f32 %v1148, %v2287
        %v2352 = vadd.f32 %v1152, %v2281
        %v2353 = vadd.f32 %v1152, %v2283
        %v2354 = vadd.f32 %v1152, %v2285
        %v2355 = vadd.f32 %v1152, %v2287
        %vm2356 = vcmp.gt.f32.partialorder %v2292, 0.0
        %vm2357 = vcmp.gt.f32.partialorder %v2293, 0.0
        %vm2358 = vcmp.gt.f32.partialorder %v2294, 0.0
        %vm2359 = vcmp.gt.f32.partialorder %v2295, 0.0
        %vm2360 = vcmp.gt.f32.partialorder %v2296, 0.0
        %vm2361 = vcmp.gt.f32.partialorder %v2297, 0.0
        %vm2362 = vcmp.gt.f32.partialorder %v2298, 0.0
        %vm2363 = vcmp.gt.f32.partialorder %v2299, 0.0
        %vm2364 = vcmp.gt.f32.partialorder %v2300, 0.0
        %vm2365 = vcmp.gt.f32.partialorder %v2301, 0.0
        %vm2366 = vcmp.gt.f32.partialorder %v2302, 0.0
        %vm2367 = vcmp.gt.f32.partialorder %v2303, 0.0
        %vm2368 = vcmp.gt.f32.partialorder %v2304, 0.0
        %vm2369 = vcmp.gt.f32.partialorder %v2305, 0.0
        %vm2370 = vcmp.gt.f32.partialorder %v2306, 0.0
        %vm2371 = vcmp.gt.f32.partialorder %v2307, 0.0
        %vm2372 = vcmp.gt.f32.partialorder %v2308, 0.0
        %vm2373 = vcmp.gt.f32.partialorder %v2309, 0.0
        %vm2374 = vcmp.gt.f32.partialorder %v2310, 0.0
        %vm2375 = vcmp.gt.f32.partialorder %v2311, 0.0
        %vm2376 = vcmp.gt.f32.partialorder %v2312, 0.0
        %vm2377 = vcmp.gt.f32.partialorder %v2313, 0.0
        %vm2378 = vcmp.gt.f32.partialorder %v2314, 0.0
        %vm2379 = vcmp.gt.f32.partialorder %v2315, 0.0
        %vm2380 = vcmp.gt.f32.partialorder %v2316, 0.0
        %vm2381 = vcmp.gt.f32.partialorder %v2317, 0.0
        %vm2382 = vcmp.gt.f32.partialorder %v2318, 0.0
        %vm2383 = vcmp.gt.f32.partialorder %v2319, 0.0
        %vm2384 = vcmp.gt.f32.partialorder %v2320, 0.0
        %vm2385 = vcmp.gt.f32.partialorder %v2321, 0.0
        %vm2386 = vcmp.gt.f32.partialorder %v2322, 0.0
        %vm2387 = vcmp.gt.f32.partialorder %v2323, 0.0
        %vm2388 = vcmp.gt.f32.partialorder %v2324, 0.0
        %vm2389 = vcmp.gt.f32.partialorder %v2325, 0.0
        %vm2390 = vcmp.gt.f32.partialorder %v2326, 0.0
        %vm2391 = vcmp.gt.f32.partialorder %v2327, 0.0
        %vm2392 = vcmp.gt.f32.partialorder %v2328, 0.0
        %vm2393 = vcmp.gt.f32.partialorder %v2329, 0.0
        %vm2394 = vcmp.gt.f32.partialorder %v2330, 0.0
        %vm2395 = vcmp.gt.f32.partialorder %v2331, 0.0
        %vm2396 = vcmp.gt.f32.partialorder %v2332, 0.0
        %vm2397 = vcmp.gt.f32.partialorder %v2333, 0.0
        %vm2398 = vcmp.gt.f32.partialorder %v2334, 0.0
        %vm2399 = vcmp.gt.f32.partialorder %v2335, 0.0
        %vm2400 = vcmp.gt.f32.partialorder %v2336, 0.0
        %vm2401 = vcmp.gt.f32.partialorder %v2337, 0.0
        %vm2402 = vcmp.gt.f32.partialorder %v2338, 0.0
        %vm2403 = vcmp.gt.f32.partialorder %v2339, 0.0
        %vm2404 = vcmp.gt.f32.partialorder %v2340, 0.0
        %vm2405 = vcmp.gt.f32.partialorder %v2341, 0.0
        %vm2406 = vcmp.gt.f32.partialorder %v2342, 0.0
        %vm2407 = vcmp.gt.f32.partialorder %v2343, 0.0
        %vm2408 = vcmp.gt.f32.partialorder %v2344, 0.0
        %vm2409 = vcmp.gt.f32.partialorder %v2345, 0.0
        %vm2410 = vcmp.gt.f32.partialorder %v2346, 0.0
        %vm2411 = vcmp.gt.f32.partialorder %v2347, 0.0
        %vm2412 = vcmp.gt.f32.partialorder %v2348, 0.0
        %vm2413 = vcmp.gt.f32.partialorder %v2349, 0.0
        %vm2414 = vcmp.gt.f32.partialorder %v2350, 0.0
        %vm2415 = vcmp.gt.f32.partialorder %v2351, 0.0
        %vm2416 = vcmp.gt.f32.partialorder %v2352, 0.0
        %vm2417 = vcmp.gt.f32.partialorder %v2353, 0.0
        %vm2418 = vcmp.gt.f32.partialorder %v2354, 0.0
        %vm2419 = vcmp.gt.f32.partialorder %v2355, 0.0
        %v2420 = vmul.f32 %v2292, 0.2
        %v2421 = vmul.f32 %v2293, 0.2
        %v2422 = vmul.f32 %v2294, 0.2
        %v2423 = vmul.f32 %v2295, 0.2
        %v2424 = vmul.f32 %v2296, 0.2
        %v2425 = vmul.f32 %v2297, 0.2
        %v2426 = vmul.f32 %v2298, 0.2
        %v2427 = vmul.f32 %v2299, 0.2
        %v2428 = vmul.f32 %v2300, 0.2
        %v2429 = vmul.f32 %v2301, 0.2
        %v2430 = vmul.f32 %v2302, 0.2
        %v2431 = vmul.f32 %v2303, 0.2
        %v2432 = vmul.f32 %v2304, 0.2
        %v2433 = vmul.f32 %v2305, 0.2
        %v2434 = vmul.f32 %v2306, 0.2
        %v2435 = vmul.f32 %v2307, 0.2
        %v2436 = vmul.f32 %v2308, 0.2
        %v2437 = vmul.f32 %v2309, 0.2
        %v2438 = vmul.f32 %v2310, 0.2
        %v2439 = vmul.f32 %v2311, 0.2
        %v2440 = vmul.f32 %v2312, 0.2
        %v2441 = vmul.f32 %v2313, 0.2
        %v2442 = vmul.f32 %v2314, 0.2
        %v2443 = vmul.f32 %v2315, 0.2
        %v2444 = vmul.f32 %v2316, 0.2
        %v2445 = vmul.f32 %v2317, 0.2
        %v2446 = vmul.f32 %v2318, 0.2
        %v2447 = vmul.f32 %v2319, 0.2
        %v2448 = vmul.f32 %v2320, 0.2
        %v2449 = vmul.f32 %v2321, 0.2
        %v2450 = vmul.f32 %v2322, 0.2
        %v2451 = vmul.f32 %v2323, 0.2
        %v2452 = vmul.f32 %v2324, 0.2
        %v2453 = vmul.f32 %v2325, 0.2
        %v2454 = vmul.f32 %v2326, 0.2
        %v2455 = vmul.f32 %v2327, 0.2
        %v2456 = vmul.f32 %v2328, 0.2
        %v2457 = vmul.f32 %v2329, 0.2
        %v2458 = vmul.f32 %v2330, 0.2
        %v2459 = vmul.f32 %v2331, 0.2
        %v2460 = vmul.f32 %v2332, 0.2
        %v2461 = vmul.f32 %v2333, 0.2
        %v2462 = vmul.f32 %v2334, 0.2
        %v2463 = vmul.f32 %v2335, 0.2
        %v2464 = vmul.f32 %v2336, 0.2
        %v2465 = vmul.f32 %v2337, 0.2
        %v2466 = vmul.f32 %v2338, 0.2
        %v2467 = vmul.f32 %v2339, 0.2
        %v2468 = vmul.f32 %v2340, 0.2
        %v2469 = vmul.f32 %v2341, 0.2
        %v2470 = vmul.f32 %v2342, 0.2
        %v2471 = vmul.f32 %v2343, 0.2
        %v2472 = vmul.f32 %v2344, 0.2
        %v2473 = vmul.f32 %v2345, 0.2
        %v2474 = vmul.f32 %v2346, 0.2
        %v2475 = vmul.f32 %v2347, 0.2
        %v2476 = vmul.f32 %v2348, 0.2
        %v2477 = vmul.f32 %v2349, 0.2
        %v2478 = vmul.f32 %v2350, 0.2
        %v2479 = vmul.f32 %v2351, 0.2
        %v2480 = vmul.f32 %v2352, 0.2
        %v2481 = vmul.f32 %v2353, 0.2
        %v2482 = vmul.f32 %v2354, 0.2
        %v2483 = vmul.f32 %v2355, 0.2
        %v2484 = vsel %vm2356, %v2292, %v2420
        %v2485 = vsel %vm2357, %v2293, %v2421
        %v2486 = vsel %vm2358, %v2294, %v2422
        %v2487 = vsel %vm2359, %v2295, %v2423
        %v2488 = vsel %vm2360, %v2296, %v2424
        %v2489 = vsel %vm2361, %v2297, %v2425
        %v2490 = vsel %vm2362, %v2298, %v2426
        %v2491 = vsel %vm2363, %v2299, %v2427
        %v2492 = vsel %vm2364, %v2300, %v2428
        %v2493 = vsel %vm2365, %v2301, %v2429
        %v2494 = vsel %vm2366, %v2302, %v2430
        %v2495 = vsel %vm2367, %v2303, %v2431
        %v2496 = vsel %vm2368, %v2304, %v2432
        %v2497 = vsel %vm2369, %v2305, %v2433
        %v2498 = vsel %vm2370, %v2306, %v2434
        %v2499 = vsel %vm2371, %v2307, %v2435
        %v2500 = vsel %vm2372, %v2308, %v2436
        %v2501 = vsel %vm2373, %v2309, %v2437
        %v2502 = vsel %vm2374, %v2310, %v2438
        %v2503 = vsel %vm2375, %v2311, %v2439
        %v2504 = vsel %vm2376, %v2312, %v2440
        %v2505 = vsel %vm2377, %v2313, %v2441
        %v2506 = vsel %vm2378, %v2314, %v2442
        %v2507 = vsel %vm2379, %v2315, %v2443
        %v2508 = vsel %vm2380, %v2316, %v2444
        %v2509 = vsel %vm2381, %v2317, %v2445
        %v2510 = vsel %vm2382, %v2318, %v2446
        %v2511 = vsel %vm2383, %v2319, %v2447
        %v2512 = vsel %vm2384, %v2320, %v2448
        %v2513 = vsel %vm2385, %v2321, %v2449
        %v2514 = vsel %vm2386, %v2322, %v2450
        %v2515 = vsel %vm2387, %v2323, %v2451
        %v2516 = vsel %vm2388, %v2324, %v2452
        %v2517 = vsel %vm2389, %v2325, %v2453
        %v2518 = vsel %vm2390, %v2326, %v2454
        %v2519 = vsel %vm2391, %v2327, %v2455
        %v2520 = vsel %vm2392, %v2328, %v2456
        %v2521 = vsel %vm2393, %v2329, %v2457
        %v2522 = vsel %vm2394, %v2330, %v2458
        %v2523 = vsel %vm2395, %v2331, %v2459
        %v2524 = vsel %vm2396, %v2332, %v2460
        %v2525 = vsel %vm2397, %v2333, %v2461
        %v2526 = vsel %vm2398, %v2334, %v2462
        %v2527 = vsel %vm2399, %v2335, %v2463
        %v2528 = vsel %vm2400, %v2336, %v2464
        %v2529 = vsel %vm2401, %v2337, %v2465
        %v2530 = vsel %vm2402, %v2338, %v2466
        %v2531 = vsel %vm2403, %v2339, %v2467
        %v2532 = vsel %vm2404, %v2340, %v2468
        %v2533 = vsel %vm2405, %v2341, %v2469
        %v2534 = vsel %vm2406, %v2342, %v2470
        %v2535 = vsel %vm2407, %v2343, %v2471
        %v2536 = vsel %vm2408, %v2344, %v2472
        %v2537 = vsel %vm2409, %v2345, %v2473
        %v2538 = vsel %vm2410, %v2346, %v2474
        %v2539 = vsel %vm2411, %v2347, %v2475
        %v2540 = vsel %vm2412, %v2348, %v2476
        %v2541 = vsel %vm2413, %v2349, %v2477
        %v2542 = vsel %vm2414, %v2350, %v2478
        %v2543 = vsel %vm2415, %v2351, %v2479
        %v2544 = vsel %vm2416, %v2352, %v2480
        %v2545 = vsel %vm2417, %v2353, %v2481
        %v2546 = vsel %vm2418, %v2354, %v2482
        %v2547 = vsel %vm2419, %v2355, %v2483
        %v2548 = vlaneseq
        %v2549 = vshrl.u32 %v2548, 7
        %v2550 = vsub.s32 0, %v2549
        %v2551 = vrot.slane %v2274, %v2550
        %2553 = vbcast.lane.b32.xlu0 %v2551, 256
        %v2554 = vpop.permute.xlu0 %2553
        %s2556 = sor.u32 256, 8
        %2557 = vbcast.lane.b32.xlu0 %v2551, %s2556
        %v2558 = vpop.permute.xlu0 %2557
        %s2560 = sor.u32 256, 16
        %2561 = vbcast.lane.b32.xlu0 %v2551, %s2560
        %v2562 = vpop.permute.xlu0 %2561
        %s2564 = sor.u32 256, 24
        %2565 = vbcast.lane.b32.xlu0 %v2551, %s2564
        %v2566 = vpop.permute.xlu0 %2565
        %v2567 = vlaneseq
        %v2568 = vshrl.u32 %v2567, 7
        %v2569 = vsub.s32 1, %v2568
        %v2570 = vrot.slane %v2274, %v2569
        %2572 = vbcast.lane.b32.xlu0 %v2570, 256
        %v2573 = vpop.permute.xlu0 %2572
        %s2575 = sor.u32 256, 8
        %2576 = vbcast.lane.b32.xlu0 %v2570, %s2575
        %v2577 = vpop.permute.xlu0 %2576
        %s2579 = sor.u32 256, 16
        %2580 = vbcast.lane.b32.xlu0 %v2570, %s2579
        %v2581 = vpop.permute.xlu0 %2580
        %s2583 = sor.u32 256, 24
        %2584 = vbcast.lane.b32.xlu0 %v2570, %s2583
        %v2585 = vpop.permute.xlu0 %2584
        %v2586 = vlaneseq
        %v2587 = vshrl.u32 %v2586, 7
        %v2588 = vsub.s32 2, %v2587
        %v2589 = vrot.slane %v2274, %v2588
        %2591 = vbcast.lane.b32.xlu0 %v2589, 256
        %v2592 = vpop.permute.xlu0 %2591
        %s2594 = sor.u32 256, 8
        %2595 = vbcast.lane.b32.xlu0 %v2589, %s2594
        %v2596 = vpop.permute.xlu0 %2595
        %s2598 = sor.u32 256, 16
        %2599 = vbcast.lane.b32.xlu0 %v2589, %s2598
        %v2600 = vpop.permute.xlu0 %2599
        %s2602 = sor.u32 256, 24
        %2603 = vbcast.lane.b32.xlu0 %v2589, %s2602
        %v2604 = vpop.permute.xlu0 %2603
        %v2605 = vlaneseq
        %v2606 = vshrl.u32 %v2605, 7
        %v2607 = vsub.s32 3, %v2606
        %v2608 = vrot.slane %v2274, %v2607
        %2610 = vbcast.lane.b32.xlu0 %v2608, 256
        %v2611 = vpop.permute.xlu0 %2610
        %s2613 = sor.u32 256, 8
        %2614 = vbcast.lane.b32.xlu0 %v2608, %s2613
        %v2615 = vpop.permute.xlu0 %2614
        %s2617 = sor.u32 256, 16
        %2618 = vbcast.lane.b32.xlu0 %v2608, %s2617
        %v2619 = vpop.permute.xlu0 %2618
        %s2621 = sor.u32 256, 24
        %2622 = vbcast.lane.b32.xlu0 %v2608, %s2621
        %v2623 = vpop.permute.xlu0 %2622
        %v2624 = vlaneseq
        %v2625 = vshrl.u32 %v2624, 7
        %v2626 = vsub.s32 4, %v2625
        %v2627 = vrot.slane %v2274, %v2626
        %2629 = vbcast.lane.b32.xlu0 %v2627, 256
        %v2630 = vpop.permute.xlu0 %2629
        %s2632 = sor.u32 256, 8
        %2633 = vbcast.lane.b32.xlu0 %v2627, %s2632
        %v2634 = vpop.permute.xlu0 %2633
        %s2636 = sor.u32 256, 16
        %2637 = vbcast.lane.b32.xlu0 %v2627, %s2636
        %v2638 = vpop.permute.xlu0 %2637
        %s2640 = sor.u32 256, 24
        %2641 = vbcast.lane.b32.xlu0 %v2627, %s2640
        %v2642 = vpop.permute.xlu0 %2641
        %v2643 = vlaneseq
        %v2644 = vshrl.u32 %v2643, 7
        %v2645 = vsub.s32 5, %v2644
        %v2646 = vrot.slane %v2274, %v2645
        %2648 = vbcast.lane.b32.xlu0 %v2646, 256
        %v2649 = vpop.permute.xlu0 %2648
        %s2651 = sor.u32 256, 8
        %2652 = vbcast.lane.b32.xlu0 %v2646, %s2651
        %v2653 = vpop.permute.xlu0 %2652
        %s2655 = sor.u32 256, 16
        %2656 = vbcast.lane.b32.xlu0 %v2646, %s2655
        %v2657 = vpop.permute.xlu0 %2656
        %s2659 = sor.u32 256, 24
        %2660 = vbcast.lane.b32.xlu0 %v2646, %s2659
        %v2661 = vpop.permute.xlu0 %2660
        %v2662 = vlaneseq
        %v2663 = vshrl.u32 %v2662, 7
        %v2664 = vsub.s32 6, %v2663
        %v2665 = vrot.slane %v2274, %v2664
        %2667 = vbcast.lane.b32.xlu0 %v2665, 256
        %v2668 = vpop.permute.xlu0 %2667
        %s2670 = sor.u32 256, 8
        %2671 = vbcast.lane.b32.xlu0 %v2665, %s2670
        %v2672 = vpop.permute.xlu0 %2671
        %s2674 = sor.u32 256, 16
        %2675 = vbcast.lane.b32.xlu0 %v2665, %s2674
        %v2676 = vpop.permute.xlu0 %2675
        %s2678 = sor.u32 256, 24
        %2679 = vbcast.lane.b32.xlu0 %v2665, %s2678
        %v2680 = vpop.permute.xlu0 %2679
        %v2681 = vlaneseq
        %v2682 = vshrl.u32 %v2681, 7
        %v2683 = vsub.s32 7, %v2682
        %v2684 = vrot.slane %v2274, %v2683
        %2686 = vbcast.lane.b32.xlu0 %v2684, 256
        %v2687 = vpop.permute.xlu0 %2686
        %s2689 = sor.u32 256, 8
        %2690 = vbcast.lane.b32.xlu0 %v2684, %s2689
        %v2691 = vpop.permute.xlu0 %2690
        %s2693 = sor.u32 256, 16
        %2694 = vbcast.lane.b32.xlu0 %v2684, %s2693
        %v2695 = vpop.permute.xlu0 %2694
        %s2697 = sor.u32 256, 24
        %2698 = vbcast.lane.b32.xlu0 %v2684, %s2697
        %v2699 = vpop.permute.xlu0 %2698
        %v2700 = vlaneseq
        %v2701 = vshrl.u32 %v2700, 7
        %v2702 = vsub.s32 0, %v2701
        %v2703 = vrot.slane %v2275, %v2702
        %2705 = vbcast.lane.b32.xlu0 %v2703, 256
        %v2706 = vpop.permute.xlu0 %2705
        %s2708 = sor.u32 256, 8
        %2709 = vbcast.lane.b32.xlu0 %v2703, %s2708
        %v2710 = vpop.permute.xlu0 %2709
        %s2712 = sor.u32 256, 16
        %2713 = vbcast.lane.b32.xlu0 %v2703, %s2712
        %v2714 = vpop.permute.xlu0 %2713
        %s2716 = sor.u32 256, 24
        %2717 = vbcast.lane.b32.xlu0 %v2703, %s2716
        %v2718 = vpop.permute.xlu0 %2717
        %v2719 = vlaneseq
        %v2720 = vshrl.u32 %v2719, 7
        %v2721 = vsub.s32 1, %v2720
        %v2722 = vrot.slane %v2275, %v2721
        %2724 = vbcast.lane.b32.xlu0 %v2722, 256
        %v2725 = vpop.permute.xlu0 %2724
        %s2727 = sor.u32 256, 8
        %2728 = vbcast.lane.b32.xlu0 %v2722, %s2727
        %v2729 = vpop.permute.xlu0 %2728
        %s2731 = sor.u32 256, 16
        %2732 = vbcast.lane.b32.xlu0 %v2722, %s2731
        %v2733 = vpop.permute.xlu0 %2732
        %s2735 = sor.u32 256, 24
        %2736 = vbcast.lane.b32.xlu0 %v2722, %s2735
        %v2737 = vpop.permute.xlu0 %2736
        %v2738 = vlaneseq
        %v2739 = vshrl.u32 %v2738, 7
        %v2740 = vsub.s32 2, %v2739
        %v2741 = vrot.slane %v2275, %v2740
        %2743 = vbcast.lane.b32.xlu0 %v2741, 256
        %v2744 = vpop.permute.xlu0 %2743
        %s2746 = sor.u32 256, 8
        %2747 = vbcast.lane.b32.xlu0 %v2741, %s2746
        %v2748 = vpop.permute.xlu0 %2747
        %s2750 = sor.u32 256, 16
        %2751 = vbcast.lane.b32.xlu0 %v2741, %s2750
        %v2752 = vpop.permute.xlu0 %2751
        %s2754 = sor.u32 256, 24
        %2755 = vbcast.lane.b32.xlu0 %v2741, %s2754
        %v2756 = vpop.permute.xlu0 %2755
        %v2757 = vlaneseq
        %v2758 = vshrl.u32 %v2757, 7
        %v2759 = vsub.s32 3, %v2758
        %v2760 = vrot.slane %v2275, %v2759
        %2762 = vbcast.lane.b32.xlu0 %v2760, 256
        %v2763 = vpop.permute.xlu0 %2762
        %s2765 = sor.u32 256, 8
        %2766 = vbcast.lane.b32.xlu0 %v2760, %s2765
        %v2767 = vpop.permute.xlu0 %2766
        %s2769 = sor.u32 256, 16
        %2770 = vbcast.lane.b32.xlu0 %v2760, %s2769
        %v2771 = vpop.permute.xlu0 %2770
        %s2773 = sor.u32 256, 24
        %2774 = vbcast.lane.b32.xlu0 %v2760, %s2773
        %v2775 = vpop.permute.xlu0 %2774
        %v2776 = vlaneseq
        %v2777 = vshrl.u32 %v2776, 7
        %v2778 = vsub.s32 4, %v2777
        %v2779 = vrot.slane %v2275, %v2778
        %2781 = vbcast.lane.b32.xlu0 %v2779, 256
        %v2782 = vpop.permute.xlu0 %2781
        %s2784 = sor.u32 256, 8
        %2785 = vbcast.lane.b32.xlu0 %v2779, %s2784
        %v2786 = vpop.permute.xlu0 %2785
        %s2788 = sor.u32 256, 16
        %2789 = vbcast.lane.b32.xlu0 %v2779, %s2788
        %v2790 = vpop.permute.xlu0 %2789
        %s2792 = sor.u32 256, 24
        %2793 = vbcast.lane.b32.xlu0 %v2779, %s2792
        %v2794 = vpop.permute.xlu0 %2793
        %v2795 = vlaneseq
        %v2796 = vshrl.u32 %v2795, 7
        %v2797 = vsub.s32 5, %v2796
        %v2798 = vrot.slane %v2275, %v2797
        %2800 = vbcast.lane.b32.xlu0 %v2798, 256
        %v2801 = vpop.permute.xlu0 %2800
        %s2803 = sor.u32 256, 8
        %2804 = vbcast.lane.b32.xlu0 %v2798, %s2803
        %v2805 = vpop.permute.xlu0 %2804
        %s2807 = sor.u32 256, 16
        %2808 = vbcast.lane.b32.xlu0 %v2798, %s2807
        %v2809 = vpop.permute.xlu0 %2808
        %s2811 = sor.u32 256, 24
        %2812 = vbcast.lane.b32.xlu0 %v2798, %s2811
        %v2813 = vpop.permute.xlu0 %2812
        %v2814 = vlaneseq
        %v2815 = vshrl.u32 %v2814, 7
        %v2816 = vsub.s32 6, %v2815
        %v2817 = vrot.slane %v2275, %v2816
        %2819 = vbcast.lane.b32.xlu0 %v2817, 256
        %v2820 = vpop.permute.xlu0 %2819
        %s2822 = sor.u32 256, 8
        %2823 = vbcast.lane.b32.xlu0 %v2817, %s2822
        %v2824 = vpop.permute.xlu0 %2823
        %s2826 = sor.u32 256, 16
        %2827 = vbcast.lane.b32.xlu0 %v2817, %s2826
        %v2828 = vpop.permute.xlu0 %2827
        %s2830 = sor.u32 256, 24
        %2831 = vbcast.lane.b32.xlu0 %v2817, %s2830
        %v2832 = vpop.permute.xlu0 %2831
        %v2833 = vlaneseq
        %v2834 = vshrl.u32 %v2833, 7
        %v2835 = vsub.s32 7, %v2834
        %v2836 = vrot.slane %v2275, %v2835
        %2838 = vbcast.lane.b32.xlu0 %v2836, 256
        %v2839 = vpop.permute.xlu0 %2838
        %s2841 = sor.u32 256, 8
        %2842 = vbcast.lane.b32.xlu0 %v2836, %s2841
        %v2843 = vpop.permute.xlu0 %2842
        %s2845 = sor.u32 256, 16
        %2846 = vbcast.lane.b32.xlu0 %v2836, %s2845
        %v2847 = vpop.permute.xlu0 %2846
        %s2849 = sor.u32 256, 24
        %2850 = vbcast.lane.b32.xlu0 %v2836, %s2849
        %v2851 = vpop.permute.xlu0 %2850
        %vm2852 = vcmp.gt.f32.partialorder %v2554, 0.0
        %vm2853 = vcmp.gt.f32.partialorder %v2558, 0.0
        %vm2854 = vcmp.gt.f32.partialorder %v2562, 0.0
        %vm2855 = vcmp.gt.f32.partialorder %v2566, 0.0
        %vm2856 = vcmp.gt.f32.partialorder %v2573, 0.0
        %vm2857 = vcmp.gt.f32.partialorder %v2577, 0.0
        %vm2858 = vcmp.gt.f32.partialorder %v2581, 0.0
        %vm2859 = vcmp.gt.f32.partialorder %v2585, 0.0
        %vm2860 = vcmp.gt.f32.partialorder %v2592, 0.0
        %vm2861 = vcmp.gt.f32.partialorder %v2596, 0.0
        %vm2862 = vcmp.gt.f32.partialorder %v2600, 0.0
        %vm2863 = vcmp.gt.f32.partialorder %v2604, 0.0
        %vm2864 = vcmp.gt.f32.partialorder %v2611, 0.0
        %vm2865 = vcmp.gt.f32.partialorder %v2615, 0.0
        %vm2866 = vcmp.gt.f32.partialorder %v2619, 0.0
        %vm2867 = vcmp.gt.f32.partialorder %v2623, 0.0
        %vm2868 = vcmp.gt.f32.partialorder %v2630, 0.0
        %vm2869 = vcmp.gt.f32.partialorder %v2634, 0.0
        %vm2870 = vcmp.gt.f32.partialorder %v2638, 0.0
        %vm2871 = vcmp.gt.f32.partialorder %v2642, 0.0
        %vm2872 = vcmp.gt.f32.partialorder %v2649, 0.0
        %vm2873 = vcmp.gt.f32.partialorder %v2653, 0.0
        %vm2874 = vcmp.gt.f32.partialorder %v2657, 0.0
        %vm2875 = vcmp.gt.f32.partialorder %v2661, 0.0
        %vm2876 = vcmp.gt.f32.partialorder %v2668, 0.0
        %vm2877 = vcmp.gt.f32.partialorder %v2672, 0.0
        %vm2878 = vcmp.gt.f32.partialorder %v2676, 0.0
        %vm2879 = vcmp.gt.f32.partialorder %v2680, 0.0
        %vm2880 = vcmp.gt.f32.partialorder %v2687, 0.0
        %vm2881 = vcmp.gt.f32.partialorder %v2691, 0.0
        %vm2882 = vcmp.gt.f32.partialorder %v2695, 0.0
        %vm2883 = vcmp.gt.f32.partialorder %v2699, 0.0
        %vm2884 = vcmp.gt.f32.partialorder %v2706, 0.0
        %vm2885 = vcmp.gt.f32.partialorder %v2710, 0.0
        %vm2886 = vcmp.gt.f32.partialorder %v2714, 0.0
        %vm2887 = vcmp.gt.f32.partialorder %v2718, 0.0
        %vm2888 = vcmp.gt.f32.partialorder %v2725, 0.0
        %vm2889 = vcmp.gt.f32.partialorder %v2729, 0.0
        %vm2890 = vcmp.gt.f32.partialorder %v2733, 0.0
        %vm2891 = vcmp.gt.f32.partialorder %v2737, 0.0
        %vm2892 = vcmp.gt.f32.partialorder %v2744, 0.0
        %vm2893 = vcmp.gt.f32.partialorder %v2748, 0.0
        %vm2894 = vcmp.gt.f32.partialorder %v2752, 0.0
        %vm2895 = vcmp.gt.f32.partialorder %v2756, 0.0
        %vm2896 = vcmp.gt.f32.partialorder %v2763, 0.0
        %vm2897 = vcmp.gt.f32.partialorder %v2767, 0.0
        %vm2898 = vcmp.gt.f32.partialorder %v2771, 0.0
        %vm2899 = vcmp.gt.f32.partialorder %v2775, 0.0
        %vm2900 = vcmp.gt.f32.partialorder %v2782, 0.0
        %vm2901 = vcmp.gt.f32.partialorder %v2786, 0.0
        %vm2902 = vcmp.gt.f32.partialorder %v2790, 0.0
        %vm2903 = vcmp.gt.f32.partialorder %v2794, 0.0
        %vm2904 = vcmp.gt.f32.partialorder %v2801, 0.0
        %vm2905 = vcmp.gt.f32.partialorder %v2805, 0.0
        %vm2906 = vcmp.gt.f32.partialorder %v2809, 0.0
        %vm2907 = vcmp.gt.f32.partialorder %v2813, 0.0
        %vm2908 = vcmp.gt.f32.partialorder %v2820, 0.0
        %vm2909 = vcmp.gt.f32.partialorder %v2824, 0.0
        %vm2910 = vcmp.gt.f32.partialorder %v2828, 0.0
        %vm2911 = vcmp.gt.f32.partialorder %v2832, 0.0
        %vm2912 = vcmp.gt.f32.partialorder %v2839, 0.0
        %vm2913 = vcmp.gt.f32.partialorder %v2843, 0.0
        %vm2914 = vcmp.gt.f32.partialorder %v2847, 0.0
        %vm2915 = vcmp.gt.f32.partialorder %v2851, 0.0
        %v2916 = vsel %vm2852, 1, 0
        %v2917 = vsel %vm2853, 1, 0
        %v2918 = vsel %vm2854, 1, 0
        %v2919 = vsel %vm2855, 1, 0
        %v2920 = vsel %vm2856, 1, 0
        %v2921 = vsel %vm2857, 1, 0
        %v2922 = vsel %vm2858, 1, 0
        %v2923 = vsel %vm2859, 1, 0
        %v2924 = vsel %vm2860, 1, 0
        %v2925 = vsel %vm2861, 1, 0
        %v2926 = vsel %vm2862, 1, 0
        %v2927 = vsel %vm2863, 1, 0
        %v2928 = vsel %vm2864, 1, 0
        %v2929 = vsel %vm2865, 1, 0
        %v2930 = vsel %vm2866, 1, 0
        %v2931 = vsel %vm2867, 1, 0
        %v2932 = vsel %vm2868, 1, 0
        %v2933 = vsel %vm2869, 1, 0
        %v2934 = vsel %vm2870, 1, 0
        %v2935 = vsel %vm2871, 1, 0
        %v2936 = vsel %vm2872, 1, 0
        %v2937 = vsel %vm2873, 1, 0
        %v2938 = vsel %vm2874, 1, 0
        %v2939 = vsel %vm2875, 1, 0
        %v2940 = vsel %vm2876, 1, 0
        %v2941 = vsel %vm2877, 1, 0
        %v2942 = vsel %vm2878, 1, 0
        %v2943 = vsel %vm2879, 1, 0
        %v2944 = vsel %vm2880, 1, 0
        %v2945 = vsel %vm2881, 1, 0
        %v2946 = vsel %vm2882, 1, 0
        %v2947 = vsel %vm2883, 1, 0
        %v2948 = vsel %vm2884, 1, 0
        %v2949 = vsel %vm2885, 1, 0
        %v2950 = vsel %vm2886, 1, 0
        %v2951 = vsel %vm2887, 1, 0
        %v2952 = vsel %vm2888, 1, 0
        %v2953 = vsel %vm2889, 1, 0
        %v2954 = vsel %vm2890, 1, 0
        %v2955 = vsel %vm2891, 1, 0
        %v2956 = vsel %vm2892, 1, 0
        %v2957 = vsel %vm2893, 1, 0
        %v2958 = vsel %vm2894, 1, 0
        %v2959 = vsel %vm2895, 1, 0
        %v2960 = vsel %vm2896, 1, 0
        %v2961 = vsel %vm2897, 1, 0
        %v2962 = vsel %vm2898, 1, 0
        %v2963 = vsel %vm2899, 1, 0
        %v2964 = vsel %vm2900, 1, 0
        %v2965 = vsel %vm2901, 1, 0
        %v2966 = vsel %vm2902, 1, 0
        %v2967 = vsel %vm2903, 1, 0
        %v2968 = vsel %vm2904, 1, 0
        %v2969 = vsel %vm2905, 1, 0
        %v2970 = vsel %vm2906, 1, 0
        %v2971 = vsel %vm2907, 1, 0
        %v2972 = vsel %vm2908, 1, 0
        %v2973 = vsel %vm2909, 1, 0
        %v2974 = vsel %vm2910, 1, 0
        %v2975 = vsel %vm2911, 1, 0
        %v2976 = vsel %vm2912, 1, 0
        %v2977 = vsel %vm2913, 1, 0
        %v2978 = vsel %vm2914, 1, 0
        %v2979 = vsel %vm2915, 1, 0
        %vm2980 = vcmp.eq.s32.totalorder %v2916, 1
        %vm2981 = vcmp.eq.s32.totalorder %v2917, 1
        %vm2982 = vcmp.eq.s32.totalorder %v2918, 1
        %vm2983 = vcmp.eq.s32.totalorder %v2919, 1
        %vm2984 = vcmp.eq.s32.totalorder %v2920, 1
        %vm2985 = vcmp.eq.s32.totalorder %v2921, 1
        %vm2986 = vcmp.eq.s32.totalorder %v2922, 1
        %vm2987 = vcmp.eq.s32.totalorder %v2923, 1
        %vm2988 = vcmp.eq.s32.totalorder %v2924, 1
        %vm2989 = vcmp.eq.s32.totalorder %v2925, 1
        %vm2990 = vcmp.eq.s32.totalorder %v2926, 1
        %vm2991 = vcmp.eq.s32.totalorder %v2927, 1
        %vm2992 = vcmp.eq.s32.totalorder %v2928, 1
        %vm2993 = vcmp.eq.s32.totalorder %v2929, 1
        %vm2994 = vcmp.eq.s32.totalorder %v2930, 1
        %vm2995 = vcmp.eq.s32.totalorder %v2931, 1
        %vm2996 = vcmp.eq.s32.totalorder %v2932, 1
        %vm2997 = vcmp.eq.s32.totalorder %v2933, 1
        %vm2998 = vcmp.eq.s32.totalorder %v2934, 1
        %vm2999 = vcmp.eq.s32.totalorder %v2935, 1
        %vm3000 = vcmp.eq.s32.totalorder %v2936, 1
        %vm3001 = vcmp.eq.s32.totalorder %v2937, 1
        %vm3002 = vcmp.eq.s32.totalorder %v2938, 1
        %vm3003 = vcmp.eq.s32.totalorder %v2939, 1
        %vm3004 = vcmp.eq.s32.totalorder %v2940, 1
        %vm3005 = vcmp.eq.s32.totalorder %v2941, 1
        %vm3006 = vcmp.eq.s32.totalorder %v2942, 1
        %vm3007 = vcmp.eq.s32.totalorder %v2943, 1
        %vm3008 = vcmp.eq.s32.totalorder %v2944, 1
        %vm3009 = vcmp.eq.s32.totalorder %v2945, 1
        %vm3010 = vcmp.eq.s32.totalorder %v2946, 1
        %vm3011 = vcmp.eq.s32.totalorder %v2947, 1
        %vm3012 = vcmp.eq.s32.totalorder %v2948, 1
        %vm3013 = vcmp.eq.s32.totalorder %v2949, 1
        %vm3014 = vcmp.eq.s32.totalorder %v2950, 1
        %vm3015 = vcmp.eq.s32.totalorder %v2951, 1
        %vm3016 = vcmp.eq.s32.totalorder %v2952, 1
        %vm3017 = vcmp.eq.s32.totalorder %v2953, 1
        %vm3018 = vcmp.eq.s32.totalorder %v2954, 1
        %vm3019 = vcmp.eq.s32.totalorder %v2955, 1
        %vm3020 = vcmp.eq.s32.totalorder %v2956, 1
        %vm3021 = vcmp.eq.s32.totalorder %v2957, 1
        %vm3022 = vcmp.eq.s32.totalorder %v2958, 1
        %vm3023 = vcmp.eq.s32.totalorder %v2959, 1
        %vm3024 = vcmp.eq.s32.totalorder %v2960, 1
        %vm3025 = vcmp.eq.s32.totalorder %v2961, 1
        %vm3026 = vcmp.eq.s32.totalorder %v2962, 1
        %vm3027 = vcmp.eq.s32.totalorder %v2963, 1
        %vm3028 = vcmp.eq.s32.totalorder %v2964, 1
        %vm3029 = vcmp.eq.s32.totalorder %v2965, 1
        %vm3030 = vcmp.eq.s32.totalorder %v2966, 1
        %vm3031 = vcmp.eq.s32.totalorder %v2967, 1
        %vm3032 = vcmp.eq.s32.totalorder %v2968, 1
        %vm3033 = vcmp.eq.s32.totalorder %v2969, 1
        %vm3034 = vcmp.eq.s32.totalorder %v2970, 1
        %vm3035 = vcmp.eq.s32.totalorder %v2971, 1
        %vm3036 = vcmp.eq.s32.totalorder %v2972, 1
        %vm3037 = vcmp.eq.s32.totalorder %v2973, 1
        %vm3038 = vcmp.eq.s32.totalorder %v2974, 1
        %vm3039 = vcmp.eq.s32.totalorder %v2975, 1
        %vm3040 = vcmp.eq.s32.totalorder %v2976, 1
        %vm3041 = vcmp.eq.s32.totalorder %v2977, 1
        %vm3042 = vcmp.eq.s32.totalorder %v2978, 1
        %vm3043 = vcmp.eq.s32.totalorder %v2979, 1
        %v3044 = vsel %vm2980, %v2484, -1e+09
        %v3045 = vsel %vm2981, %v2485, -1e+09
        %v3046 = vsel %vm2982, %v2486, -1e+09
        %v3047 = vsel %vm2983, %v2487, -1e+09
        %v3048 = vsel %vm2984, %v2488, -1e+09
        %v3049 = vsel %vm2985, %v2489, -1e+09
        %v3050 = vsel %vm2986, %v2490, -1e+09
        %v3051 = vsel %vm2987, %v2491, -1e+09
        %v3052 = vsel %vm2988, %v2492, -1e+09
        %v3053 = vsel %vm2989, %v2493, -1e+09
        %v3054 = vsel %vm2990, %v2494, -1e+09
        %v3055 = vsel %vm2991, %v2495, -1e+09
        %v3056 = vsel %vm2992, %v2496, -1e+09
        %v3057 = vsel %vm2993, %v2497, -1e+09
        %v3058 = vsel %vm2994, %v2498, -1e+09
        %v3059 = vsel %vm2995, %v2499, -1e+09
        %v3060 = vsel %vm2996, %v2500, -1e+09
        %v3061 = vsel %vm2997, %v2501, -1e+09
        %v3062 = vsel %vm2998, %v2502, -1e+09
        %v3063 = vsel %vm2999, %v2503, -1e+09
        %v3064 = vsel %vm3000, %v2504, -1e+09
        %v3065 = vsel %vm3001, %v2505, -1e+09
        %v3066 = vsel %vm3002, %v2506, -1e+09
        %v3067 = vsel %vm3003, %v2507, -1e+09
        %v3068 = vsel %vm3004, %v2508, -1e+09
        %v3069 = vsel %vm3005, %v2509, -1e+09
        %v3070 = vsel %vm3006, %v2510, -1e+09
        %v3071 = vsel %vm3007, %v2511, -1e+09
        %v3072 = vsel %vm3008, %v2512, -1e+09
        %v3073 = vsel %vm3009, %v2513, -1e+09
        %v3074 = vsel %vm3010, %v2514, -1e+09
        %v3075 = vsel %vm3011, %v2515, -1e+09
        %v3076 = vsel %vm3012, %v2516, -1e+09
        %v3077 = vsel %vm3013, %v2517, -1e+09
        %v3078 = vsel %vm3014, %v2518, -1e+09
        %v3079 = vsel %vm3015, %v2519, -1e+09
        %v3080 = vsel %vm3016, %v2520, -1e+09
        %v3081 = vsel %vm3017, %v2521, -1e+09
        %v3082 = vsel %vm3018, %v2522, -1e+09
        %v3083 = vsel %vm3019, %v2523, -1e+09
        %v3084 = vsel %vm3020, %v2524, -1e+09
        %v3085 = vsel %vm3021, %v2525, -1e+09
        %v3086 = vsel %vm3022, %v2526, -1e+09
        %v3087 = vsel %vm3023, %v2527, -1e+09
        %v3088 = vsel %vm3024, %v2528, -1e+09
        %v3089 = vsel %vm3025, %v2529, -1e+09
        %v3090 = vsel %vm3026, %v2530, -1e+09
        %v3091 = vsel %vm3027, %v2531, -1e+09
        %v3092 = vsel %vm3028, %v2532, -1e+09
        %v3093 = vsel %vm3029, %v2533, -1e+09
        %v3094 = vsel %vm3030, %v2534, -1e+09
        %v3095 = vsel %vm3031, %v2535, -1e+09
        %v3096 = vsel %vm3032, %v2536, -1e+09
        %v3097 = vsel %vm3033, %v2537, -1e+09
        %v3098 = vsel %vm3034, %v2538, -1e+09
        %v3099 = vsel %vm3035, %v2539, -1e+09
        %v3100 = vsel %vm3036, %v2540, -1e+09
        %v3101 = vsel %vm3037, %v2541, -1e+09
        %v3102 = vsel %vm3038, %v2542, -1e+09
        %v3103 = vsel %vm3039, %v2543, -1e+09
        %v3104 = vsel %vm3040, %v2544, -1e+09
        %v3105 = vsel %vm3041, %v2545, -1e+09
        %v3106 = vsel %vm3042, %v2546, -1e+09
        %v3107 = vsel %vm3043, %v2547, -1e+09
        %vm3108 = vcmask 1048064
        %v3109 = vsel %vm3108, %v3044, -inf
        %v3110 = vsel %vm3108, %v3045, -inf
        %v3111 = vmax.f32 %v3109, %v3110
        %v3112 = vsel %vm3108, %v3046, -inf
        %v3113 = vmax.f32 %v3111, %v3112
        %v3114 = vsel %vm3108, %v3047, -inf
        %v3115 = vmax.f32 %v3113, %v3114
        %v3116 = vrot.slane %v3115, 4
        %v3117 = vmax.f32 %v3115, %v3116
        %v3118 = vrot.slane %v3117, 2
        %v3119 = vmax.f32 %v3117, %v3118
        %v3120 = vrot.slane %v3119, 1
        %v3121 = vmax.f32 %v3119, %v3120
        %v3122 = vsel %vm3108, %v3048, -inf
        %v3123 = vsel %vm3108, %v3049, -inf
        %v3124 = vmax.f32 %v3122, %v3123
        %v3125 = vsel %vm3108, %v3050, -inf
        %v3126 = vmax.f32 %v3124, %v3125
        %v3127 = vsel %vm3108, %v3051, -inf
        %v3128 = vmax.f32 %v3126, %v3127
        %v3129 = vrot.slane %v3128, 4
        %v3130 = vmax.f32 %v3128, %v3129
        %v3131 = vrot.slane %v3130, 2
        %v3132 = vmax.f32 %v3130, %v3131
        %v3133 = vrot.slane %v3132, 1
        %v3134 = vmax.f32 %v3132, %v3133
        %v3135 = vsel %vm3108, %v3052, -inf
        %v3136 = vsel %vm3108, %v3053, -inf
        %v3137 = vmax.f32 %v3135, %v3136
        %v3138 = vsel %vm3108, %v3054, -inf
        %v3139 = vmax.f32 %v3137, %v3138
        %v3140 = vsel %vm3108, %v3055, -inf
        %v3141 = vmax.f32 %v3139, %v3140
        %v3142 = vrot.slane %v3141, 4
        %v3143 = vmax.f32 %v3141, %v3142
        %v3144 = vrot.slane %v3143, 2
        %v3145 = vmax.f32 %v3143, %v3144
        %v3146 = vrot.slane %v3145, 1
        %v3147 = vmax.f32 %v3145, %v3146
        %v3148 = vsel %vm3108, %v3056, -inf
        %v3149 = vsel %vm3108, %v3057, -inf
        %v3150 = vmax.f32 %v3148, %v3149
        %v3151 = vsel %vm3108, %v3058, -inf
        %v3152 = vmax.f32 %v3150, %v3151
        %v3153 = vsel %vm3108, %v3059, -inf
        %v3154 = vmax.f32 %v3152, %v3153
        %v3155 = vrot.slane %v3154, 4
        %v3156 = vmax.f32 %v3154, %v3155
        %v3157 = vrot.slane %v3156, 2
        %v3158 = vmax.f32 %v3156, %v3157
        %v3159 = vrot.slane %v3158, 1
        %v3160 = vmax.f32 %v3158, %v3159
        %v3161 = vsel %vm3108, %v3060, -inf
        %v3162 = vsel %vm3108, %v3061, -inf
        %v3163 = vmax.f32 %v3161, %v3162
        %v3164 = vsel %vm3108, %v3062, -inf
        %v3165 = vmax.f32 %v3163, %v3164
        %v3166 = vsel %vm3108, %v3063, -inf
        %v3167 = vmax.f32 %v3165, %v3166
        %v3168 = vrot.slane %v3167, 4
        %v3169 = vmax.f32 %v3167, %v3168
        %v3170 = vrot.slane %v3169, 2
        %v3171 = vmax.f32 %v3169, %v3170
        %v3172 = vrot.slane %v3171, 1
        %v3173 = vmax.f32 %v3171, %v3172
        %v3174 = vsel %vm3108, %v3064, -inf
        %v3175 = vsel %vm3108, %v3065, -inf
        %v3176 = vmax.f32 %v3174, %v3175
        %v3177 = vsel %vm3108, %v3066, -inf
        %v3178 = vmax.f32 %v3176, %v3177
        %v3179 = vsel %vm3108, %v3067, -inf
        %v3180 = vmax.f32 %v3178, %v3179
        %v3181 = vrot.slane %v3180, 4
        %v3182 = vmax.f32 %v3180, %v3181
        %v3183 = vrot.slane %v3182, 2
        %v3184 = vmax.f32 %v3182, %v3183
        %v3185 = vrot.slane %v3184, 1
        %v3186 = vmax.f32 %v3184, %v3185
        %v3187 = vsel %vm3108, %v3068, -inf
        %v3188 = vsel %vm3108, %v3069, -inf
        %v3189 = vmax.f32 %v3187, %v3188
        %v3190 = vsel %vm3108, %v3070, -inf
        %v3191 = vmax.f32 %v3189, %v3190
        %v3192 = vsel %vm3108, %v3071, -inf
        %v3193 = vmax.f32 %v3191, %v3192
        %v3194 = vrot.slane %v3193, 4
        %v3195 = vmax.f32 %v3193, %v3194
        %v3196 = vrot.slane %v3195, 2
        %v3197 = vmax.f32 %v3195, %v3196
        %v3198 = vrot.slane %v3197, 1
        %v3199 = vmax.f32 %v3197, %v3198
        %v3200 = vsel %vm3108, %v3072, -inf
        %v3201 = vsel %vm3108, %v3073, -inf
        %v3202 = vmax.f32 %v3200, %v3201
        %v3203 = vsel %vm3108, %v3074, -inf
        %v3204 = vmax.f32 %v3202, %v3203
        %v3205 = vsel %vm3108, %v3075, -inf
        %v3206 = vmax.f32 %v3204, %v3205
        %v3207 = vrot.slane %v3206, 4
        %v3208 = vmax.f32 %v3206, %v3207
        %v3209 = vrot.slane %v3208, 2
        %v3210 = vmax.f32 %v3208, %v3209
        %v3211 = vrot.slane %v3210, 1
        %v3212 = vmax.f32 %v3210, %v3211
        %v3213 = vsel %vm3108, %v3076, -inf
        %v3214 = vsel %vm3108, %v3077, -inf
        %v3215 = vmax.f32 %v3213, %v3214
        %v3216 = vsel %vm3108, %v3078, -inf
        %v3217 = vmax.f32 %v3215, %v3216
        %v3218 = vsel %vm3108, %v3079, -inf
        %v3219 = vmax.f32 %v3217, %v3218
        %v3220 = vrot.slane %v3219, 4
        %v3221 = vmax.f32 %v3219, %v3220
        %v3222 = vrot.slane %v3221, 2
        %v3223 = vmax.f32 %v3221, %v3222
        %v3224 = vrot.slane %v3223, 1
        %v3225 = vmax.f32 %v3223, %v3224
        %v3226 = vsel %vm3108, %v3080, -inf
        %v3227 = vsel %vm3108, %v3081, -inf
        %v3228 = vmax.f32 %v3226, %v3227
        %v3229 = vsel %vm3108, %v3082, -inf
        %v3230 = vmax.f32 %v3228, %v3229
        %v3231 = vsel %vm3108, %v3083, -inf
        %v3232 = vmax.f32 %v3230, %v3231
        %v3233 = vrot.slane %v3232, 4
        %v3234 = vmax.f32 %v3232, %v3233
        %v3235 = vrot.slane %v3234, 2
        %v3236 = vmax.f32 %v3234, %v3235
        %v3237 = vrot.slane %v3236, 1
        %v3238 = vmax.f32 %v3236, %v3237
        %v3239 = vsel %vm3108, %v3084, -inf
        %v3240 = vsel %vm3108, %v3085, -inf
        %v3241 = vmax.f32 %v3239, %v3240
        %v3242 = vsel %vm3108, %v3086, -inf
        %v3243 = vmax.f32 %v3241, %v3242
        %v3244 = vsel %vm3108, %v3087, -inf
        %v3245 = vmax.f32 %v3243, %v3244
        %v3246 = vrot.slane %v3245, 4
        %v3247 = vmax.f32 %v3245, %v3246
        %v3248 = vrot.slane %v3247, 2
        %v3249 = vmax.f32 %v3247, %v3248
        %v3250 = vrot.slane %v3249, 1
        %v3251 = vmax.f32 %v3249, %v3250
        %v3252 = vsel %vm3108, %v3088, -inf
        %v3253 = vsel %vm3108, %v3089, -inf
        %v3254 = vmax.f32 %v3252, %v3253
        %v3255 = vsel %vm3108, %v3090, -inf
        %v3256 = vmax.f32 %v3254, %v3255
        %v3257 = vsel %vm3108, %v3091, -inf
        %v3258 = vmax.f32 %v3256, %v3257
        %v3259 = vrot.slane %v3258, 4
        %v3260 = vmax.f32 %v3258, %v3259
        %v3261 = vrot.slane %v3260, 2
        %v3262 = vmax.f32 %v3260, %v3261
        %v3263 = vrot.slane %v3262, 1
        %v3264 = vmax.f32 %v3262, %v3263
        %v3265 = vsel %vm3108, %v3092, -inf
        %v3266 = vsel %vm3108, %v3093, -inf
        %v3267 = vmax.f32 %v3265, %v3266
        %v3268 = vsel %vm3108, %v3094, -inf
        %v3269 = vmax.f32 %v3267, %v3268
        %v3270 = vsel %vm3108, %v3095, -inf
        %v3271 = vmax.f32 %v3269, %v3270
        %v3272 = vrot.slane %v3271, 4
        %v3273 = vmax.f32 %v3271, %v3272
        %v3274 = vrot.slane %v3273, 2
        %v3275 = vmax.f32 %v3273, %v3274
        %v3276 = vrot.slane %v3275, 1
        %v3277 = vmax.f32 %v3275, %v3276
        %v3278 = vsel %vm3108, %v3096, -inf
        %v3279 = vsel %vm3108, %v3097, -inf
        %v3280 = vmax.f32 %v3278, %v3279
        %v3281 = vsel %vm3108, %v3098, -inf
        %v3282 = vmax.f32 %v3280, %v3281
        %v3283 = vsel %vm3108, %v3099, -inf
        %v3284 = vmax.f32 %v3282, %v3283
        %v3285 = vrot.slane %v3284, 4
        %v3286 = vmax.f32 %v3284, %v3285
        %v3287 = vrot.slane %v3286, 2
        %v3288 = vmax.f32 %v3286, %v3287
        %v3289 = vrot.slane %v3288, 1
        %v3290 = vmax.f32 %v3288, %v3289
        %v3291 = vsel %vm3108, %v3100, -inf
        %v3292 = vsel %vm3108, %v3101, -inf
        %v3293 = vmax.f32 %v3291, %v3292
        %v3294 = vsel %vm3108, %v3102, -inf
        %v3295 = vmax.f32 %v3293, %v3294
        %v3296 = vsel %vm3108, %v3103, -inf
        %v3297 = vmax.f32 %v3295, %v3296
        %v3298 = vrot.slane %v3297, 4
        %v3299 = vmax.f32 %v3297, %v3298
        %v3300 = vrot.slane %v3299, 2
        %v3301 = vmax.f32 %v3299, %v3300
        %v3302 = vrot.slane %v3301, 1
        %v3303 = vmax.f32 %v3301, %v3302
        %v3304 = vsel %vm3108, %v3104, -inf
        %v3305 = vsel %vm3108, %v3105, -inf
        %v3306 = vmax.f32 %v3304, %v3305
        %v3307 = vsel %vm3108, %v3106, -inf
        %v3308 = vmax.f32 %v3306, %v3307
        %v3309 = vsel %vm3108, %v3107, -inf
        %v3310 = vmax.f32 %v3308, %v3309
        %v3311 = vrot.slane %v3310, 4
        %v3312 = vmax.f32 %v3310, %v3311
        %v3313 = vrot.slane %v3312, 2
        %v3314 = vmax.f32 %v3312, %v3313
        %v3315 = vrot.slane %v3314, 1
        %v3316 = vmax.f32 %v3314, %v3315
        %v3317 = vsub.f32 %v3044, %v3121
        %v3318 = vsub.f32 %v3045, %v3121
        %v3319 = vsub.f32 %v3046, %v3121
        %v3320 = vsub.f32 %v3047, %v3121
        %v3321 = vsub.f32 %v3048, %v3134
        %v3322 = vsub.f32 %v3049, %v3134
        %v3323 = vsub.f32 %v3050, %v3134
        %v3324 = vsub.f32 %v3051, %v3134
        %v3325 = vsub.f32 %v3052, %v3147
        %v3326 = vsub.f32 %v3053, %v3147
        %v3327 = vsub.f32 %v3054, %v3147
        %v3328 = vsub.f32 %v3055, %v3147
        %v3329 = vsub.f32 %v3056, %v3160
        %v3330 = vsub.f32 %v3057, %v3160
        %v3331 = vsub.f32 %v3058, %v3160
        %v3332 = vsub.f32 %v3059, %v3160
        %v3333 = vsub.f32 %v3060, %v3173
        %v3334 = vsub.f32 %v3061, %v3173
        %v3335 = vsub.f32 %v3062, %v3173
        %v3336 = vsub.f32 %v3063, %v3173
        %v3337 = vsub.f32 %v3064, %v3186
        %v3338 = vsub.f32 %v3065, %v3186
        %v3339 = vsub.f32 %v3066, %v3186
        %v3340 = vsub.f32 %v3067, %v3186
        %v3341 = vsub.f32 %v3068, %v3199
        %v3342 = vsub.f32 %v3069, %v3199
        %v3343 = vsub.f32 %v3070, %v3199
        %v3344 = vsub.f32 %v3071, %v3199
        %v3345 = vsub.f32 %v3072, %v3212
        %v3346 = vsub.f32 %v3073, %v3212
        %v3347 = vsub.f32 %v3074, %v3212
        %v3348 = vsub.f32 %v3075, %v3212
        %v3349 = vsub.f32 %v3076, %v3225
        %v3350 = vsub.f32 %v3077, %v3225
        %v3351 = vsub.f32 %v3078, %v3225
        %v3352 = vsub.f32 %v3079, %v3225
        %v3353 = vsub.f32 %v3080, %v3238
        %v3354 = vsub.f32 %v3081, %v3238
        %v3355 = vsub.f32 %v3082, %v3238
        %v3356 = vsub.f32 %v3083, %v3238
        %v3357 = vsub.f32 %v3084, %v3251
        %v3358 = vsub.f32 %v3085, %v3251
        %v3359 = vsub.f32 %v3086, %v3251
        %v3360 = vsub.f32 %v3087, %v3251
        %v3361 = vsub.f32 %v3088, %v3264
        %v3362 = vsub.f32 %v3089, %v3264
        %v3363 = vsub.f32 %v3090, %v3264
        %v3364 = vsub.f32 %v3091, %v3264
        %v3365 = vsub.f32 %v3092, %v3277
        %v3366 = vsub.f32 %v3093, %v3277
        %v3367 = vsub.f32 %v3094, %v3277
        %v3368 = vsub.f32 %v3095, %v3277
        %v3369 = vsub.f32 %v3096, %v3290
        %v3370 = vsub.f32 %v3097, %v3290
        %v3371 = vsub.f32 %v3098, %v3290
        %v3372 = vsub.f32 %v3099, %v3290
        %v3373 = vsub.f32 %v3100, %v3303
        %v3374 = vsub.f32 %v3101, %v3303
        %v3375 = vsub.f32 %v3102, %v3303
        %v3376 = vsub.f32 %v3103, %v3303
        %v3377 = vsub.f32 %v3104, %v3316
        %v3378 = vsub.f32 %v3105, %v3316
        %v3379 = vsub.f32 %v3106, %v3316
        %v3380 = vsub.f32 %v3107, %v3316
        %v3381 = vmul.f32 %v3317, 1.442695
        %v3382 = vpow.pop %v3381
        %v3383 = vmul.f32 %v3318, 1.442695
        %v3384 = vpow.pop %v3383
        %v3385 = vmul.f32 %v3319, 1.442695
        %v3386 = vpow.pop %v3385
        %v3387 = vmul.f32 %v3320, 1.442695
        %v3388 = vpow.pop %v3387
        %v3389 = vmul.f32 %v3321, 1.442695
        %v3390 = vpow.pop %v3389
        %v3391 = vmul.f32 %v3322, 1.442695
        %v3392 = vpow.pop %v3391
        %v3393 = vmul.f32 %v3323, 1.442695
        %v3394 = vpow.pop %v3393
        %v3395 = vmul.f32 %v3324, 1.442695
        %v3396 = vpow.pop %v3395
        %v3397 = vmul.f32 %v3325, 1.442695
        %v3398 = vpow.pop %v3397
        %v3399 = vmul.f32 %v3326, 1.442695
        %v3400 = vpow.pop %v3399
        %v3401 = vmul.f32 %v3327, 1.442695
        %v3402 = vpow.pop %v3401
        %v3403 = vmul.f32 %v3328, 1.442695
        %v3404 = vpow.pop %v3403
        %v3405 = vmul.f32 %v3329, 1.442695
        %v3406 = vpow.pop %v3405
        %v3407 = vmul.f32 %v3330, 1.442695
        %v3408 = vpow.pop %v3407
        %v3409 = vmul.f32 %v3331, 1.442695
        %v3410 = vpow.pop %v3409
        %v3411 = vmul.f32 %v3332, 1.442695
        %v3412 = vpow.pop %v3411
        %v3413 = vmul.f32 %v3333, 1.442695
        %v3414 = vpow.pop %v3413
        %v3415 = vmul.f32 %v3334, 1.442695
        %v3416 = vpow.pop %v3415
        %v3417 = vmul.f32 %v3335, 1.442695
        %v3418 = vpow.pop %v3417
        %v3419 = vmul.f32 %v3336, 1.442695
        %v3420 = vpow.pop %v3419
        %v3421 = vmul.f32 %v3337, 1.442695
        %v3422 = vpow.pop %v3421
        %v3423 = vmul.f32 %v3338, 1.442695
        %v3424 = vpow.pop %v3423
        %v3425 = vmul.f32 %v3339, 1.442695
        %v3426 = vpow.pop %v3425
        %v3427 = vmul.f32 %v3340, 1.442695
        %v3428 = vpow.pop %v3427
        %v3429 = vmul.f32 %v3341, 1.442695
        %v3430 = vpow.pop %v3429
        %v3431 = vmul.f32 %v3342, 1.442695
        %v3432 = vpow.pop %v3431
        %v3433 = vmul.f32 %v3343, 1.442695
        %v3434 = vpow.pop %v3433
        %v3435 = vmul.f32 %v3344, 1.442695
        %v3436 = vpow.pop %v3435
        %v3437 = vmul.f32 %v3345, 1.442695
        %v3438 = vpow.pop %v3437
        %v3439 = vmul.f32 %v3346, 1.442695
        %v3440 = vpow.pop %v3439
        %v3441 = vmul.f32 %v3347, 1.442695
        %v3442 = vpow.pop %v3441
        %v3443 = vmul.f32 %v3348, 1.442695
        %v3444 = vpow.pop %v3443
        %v3445 = vmul.f32 %v3349, 1.442695
        %v3446 = vpow.pop %v3445
        %v3447 = vmul.f32 %v3350, 1.442695
        %v3448 = vpow.pop %v3447
        %v3449 = vmul.f32 %v3351, 1.442695
        %v3450 = vpow.pop %v3449
        %v3451 = vmul.f32 %v3352, 1.442695
        %v3452 = vpow.pop %v3451
        %v3453 = vmul.f32 %v3353, 1.442695
        %v3454 = vpow.pop %v3453
        %v3455 = vmul.f32 %v3354, 1.442695
        %v3456 = vpow.pop %v3455
        %v3457 = vmul.f32 %v3355, 1.442695
        %v3458 = vpow.pop %v3457
        %v3459 = vmul.f32 %v3356, 1.442695
        %v3460 = vpow.pop %v3459
        %v3461 = vmul.f32 %v3357, 1.442695
        %v3462 = vpow.pop %v3461
        %v3463 = vmul.f32 %v3358, 1.442695
        %v3464 = vpow.pop %v3463
        %v3465 = vmul.f32 %v3359, 1.442695
        %v3466 = vpow.pop %v3465
        %v3467 = vmul.f32 %v3360, 1.442695
        %v3468 = vpow.pop %v3467
        %v3469 = vmul.f32 %v3361, 1.442695
        %v3470 = vpow.pop %v3469
        %v3471 = vmul.f32 %v3362, 1.442695
        %v3472 = vpow.pop %v3471
        %v3473 = vmul.f32 %v3363, 1.442695
        %v3474 = vpow.pop %v3473
        %v3475 = vmul.f32 %v3364, 1.442695
        %v3476 = vpow.pop %v3475
        %v3477 = vmul.f32 %v3365, 1.442695
        %v3478 = vpow.pop %v3477
        %v3479 = vmul.f32 %v3366, 1.442695
        %v3480 = vpow.pop %v3479
        %v3481 = vmul.f32 %v3367, 1.442695
        %v3482 = vpow.pop %v3481
        %v3483 = vmul.f32 %v3368, 1.442695
        %v3484 = vpow.pop %v3483
        %v3485 = vmul.f32 %v3369, 1.442695
        %v3486 = vpow.pop %v3485
        %v3487 = vmul.f32 %v3370, 1.442695
        %v3488 = vpow.pop %v3487
        %v3489 = vmul.f32 %v3371, 1.442695
        %v3490 = vpow.pop %v3489
        %v3491 = vmul.f32 %v3372, 1.442695
        %v3492 = vpow.pop %v3491
        %v3493 = vmul.f32 %v3373, 1.442695
        %v3494 = vpow.pop %v3493
        %v3495 = vmul.f32 %v3374, 1.442695
        %v3496 = vpow.pop %v3495
        %v3497 = vmul.f32 %v3375, 1.442695
        %v3498 = vpow.pop %v3497
        %v3499 = vmul.f32 %v3376, 1.442695
        %v3500 = vpow.pop %v3499
        %v3501 = vmul.f32 %v3377, 1.442695
        %v3502 = vpow.pop %v3501
        %v3503 = vmul.f32 %v3378, 1.442695
        %v3504 = vpow.pop %v3503
        %v3505 = vmul.f32 %v3379, 1.442695
        %v3506 = vpow.pop %v3505
        %v3507 = vmul.f32 %v3380, 1.442695
        %v3508 = vpow.pop %v3507
        %v3509 = vmul.f32 %v3382, %v2554
        %v3510 = vmul.f32 %v3384, %v2558
        %v3511 = vmul.f32 %v3386, %v2562
        %v3512 = vmul.f32 %v3388, %v2566
        %v3513 = vmul.f32 %v3390, %v2573
        %v3514 = vmul.f32 %v3392, %v2577
        %v3515 = vmul.f32 %v3394, %v2581
        %v3516 = vmul.f32 %v3396, %v2585
        %v3517 = vmul.f32 %v3398, %v2592
        %v3518 = vmul.f32 %v3400, %v2596
        %v3519 = vmul.f32 %v3402, %v2600
        %v3520 = vmul.f32 %v3404, %v2604
        %v3521 = vmul.f32 %v3406, %v2611
        %v3522 = vmul.f32 %v3408, %v2615
        %v3523 = vmul.f32 %v3410, %v2619
        %v3524 = vmul.f32 %v3412, %v2623
        %v3525 = vmul.f32 %v3414, %v2630
        %v3526 = vmul.f32 %v3416, %v2634
        %v3527 = vmul.f32 %v3418, %v2638
        %v3528 = vmul.f32 %v3420, %v2642
        %v3529 = vmul.f32 %v3422, %v2649
        %v3530 = vmul.f32 %v3424, %v2653
        %v3531 = vmul.f32 %v3426, %v2657
        %v3532 = vmul.f32 %v3428, %v2661
        %v3533 = vmul.f32 %v3430, %v2668
        %v3534 = vmul.f32 %v3432, %v2672
        %v3535 = vmul.f32 %v3434, %v2676
        %v3536 = vmul.f32 %v3436, %v2680
        %v3537 = vmul.f32 %v3438, %v2687
        %v3538 = vmul.f32 %v3440, %v2691
        %v3539 = vmul.f32 %v3442, %v2695
        %v3540 = vmul.f32 %v3444, %v2699
        %v3541 = vmul.f32 %v3446, %v2706
        %v3542 = vmul.f32 %v3448, %v2710
        %v3543 = vmul.f32 %v3450, %v2714
        %v3544 = vmul.f32 %v3452, %v2718
        %v3545 = vmul.f32 %v3454, %v2725
        %v3546 = vmul.f32 %v3456, %v2729
        %v3547 = vmul.f32 %v3458, %v2733
        %v3548 = vmul.f32 %v3460, %v2737
        %v3549 = vmul.f32 %v3462, %v2744
        %v3550 = vmul.f32 %v3464, %v2748
        %v3551 = vmul.f32 %v3466, %v2752
        %v3552 = vmul.f32 %v3468, %v2756
        %v3553 = vmul.f32 %v3470, %v2763
        %v3554 = vmul.f32 %v3472, %v2767
        %v3555 = vmul.f32 %v3474, %v2771
        %v3556 = vmul.f32 %v3476, %v2775
        %v3557 = vmul.f32 %v3478, %v2782
        %v3558 = vmul.f32 %v3480, %v2786
        %v3559 = vmul.f32 %v3482, %v2790
        %v3560 = vmul.f32 %v3484, %v2794
        %v3561 = vmul.f32 %v3486, %v2801
        %v3562 = vmul.f32 %v3488, %v2805
        %v3563 = vmul.f32 %v3490, %v2809
        %v3564 = vmul.f32 %v3492, %v2813
        %v3565 = vmul.f32 %v3494, %v2820
        %v3566 = vmul.f32 %v3496, %v2824
        %v3567 = vmul.f32 %v3498, %v2828
        %v3568 = vmul.f32 %v3500, %v2832
        %v3569 = vmul.f32 %v3502, %v2839
        %v3570 = vmul.f32 %v3504, %v2843
        %v3571 = vmul.f32 %v3506, %v2847
        %v3572 = vmul.f32 %v3508, %v2851
        %v3573 = vsel %vm3108, %v3509, 0.0
        %v3574 = vsel %vm3108, %v3510, 0.0
        %v3575 = vadd.f32 %v3573, %v3574
        %v3576 = vsel %vm3108, %v3511, 0.0
        %v3577 = vadd.f32 %v3575, %v3576
        %v3578 = vsel %vm3108, %v3512, 0.0
        %v3579 = vadd.f32 %v3577, %v3578
        %v3580 = vrot.slane %v3579, 4
        %v3581 = vadd.f32 %v3579, %v3580
        %v3582 = vrot.slane %v3581, 2
        %v3583 = vadd.f32 %v3581, %v3582
        %v3584 = vrot.slane %v3583, 1
        %v3585 = vadd.f32 %v3583, %v3584
        %v3586 = vsel %vm3108, %v3513, 0.0
        %v3587 = vsel %vm3108, %v3514, 0.0
        %v3588 = vadd.f32 %v3586, %v3587
        %v3589 = vsel %vm3108, %v3515, 0.0
        %v3590 = vadd.f32 %v3588, %v3589
        %v3591 = vsel %vm3108, %v3516, 0.0
        %v3592 = vadd.f32 %v3590, %v3591
        %v3593 = vrot.slane %v3592, 4
        %v3594 = vadd.f32 %v3592, %v3593
        %v3595 = vrot.slane %v3594, 2
        %v3596 = vadd.f32 %v3594, %v3595
        %v3597 = vrot.slane %v3596, 1
        %v3598 = vadd.f32 %v3596, %v3597
        %v3599 = vsel %vm3108, %v3517, 0.0
        %v3600 = vsel %vm3108, %v3518, 0.0
        %v3601 = vadd.f32 %v3599, %v3600
        %v3602 = vsel %vm3108, %v3519, 0.0
        %v3603 = vadd.f32 %v3601, %v3602
        %v3604 = vsel %vm3108, %v3520, 0.0
        %v3605 = vadd.f32 %v3603, %v3604
        %v3606 = vrot.slane %v3605, 4
        %v3607 = vadd.f32 %v3605, %v3606
        %v3608 = vrot.slane %v3607, 2
        %v3609 = vadd.f32 %v3607, %v3608
        %v3610 = vrot.slane %v3609, 1
        %v3611 = vadd.f32 %v3609, %v3610
        %v3612 = vsel %vm3108, %v3521, 0.0
        %v3613 = vsel %vm3108, %v3522, 0.0
        %v3614 = vadd.f32 %v3612, %v3613
        %v3615 = vsel %vm3108, %v3523, 0.0
        %v3616 = vadd.f32 %v3614, %v3615
        %v3617 = vsel %vm3108, %v3524, 0.0
        %v3618 = vadd.f32 %v3616, %v3617
        %v3619 = vrot.slane %v3618, 4
        %v3620 = vadd.f32 %v3618, %v3619
        %v3621 = vrot.slane %v3620, 2
        %v3622 = vadd.f32 %v3620, %v3621
        %v3623 = vrot.slane %v3622, 1
        %v3624 = vadd.f32 %v3622, %v3623
        %v3625 = vsel %vm3108, %v3525, 0.0
        %v3626 = vsel %vm3108, %v3526, 0.0
        %v3627 = vadd.f32 %v3625, %v3626
        %v3628 = vsel %vm3108, %v3527, 0.0
        %v3629 = vadd.f32 %v3627, %v3628
        %v3630 = vsel %vm3108, %v3528, 0.0
        %v3631 = vadd.f32 %v3629, %v3630
        %v3632 = vrot.slane %v3631, 4
        %v3633 = vadd.f32 %v3631, %v3632
        %v3634 = vrot.slane %v3633, 2
        %v3635 = vadd.f32 %v3633, %v3634
        %v3636 = vrot.slane %v3635, 1
        %v3637 = vadd.f32 %v3635, %v3636
        %v3638 = vsel %vm3108, %v3529, 0.0
        %v3639 = vsel %vm3108, %v3530, 0.0
        %v3640 = vadd.f32 %v3638, %v3639
        %v3641 = vsel %vm3108, %v3531, 0.0
        %v3642 = vadd.f32 %v3640, %v3641
        %v3643 = vsel %vm3108, %v3532, 0.0
        %v3644 = vadd.f32 %v3642, %v3643
        %v3645 = vrot.slane %v3644, 4
        %v3646 = vadd.f32 %v3644, %v3645
        %v3647 = vrot.slane %v3646, 2
        %v3648 = vadd.f32 %v3646, %v3647
        %v3649 = vrot.slane %v3648, 1
        %v3650 = vadd.f32 %v3648, %v3649
        %v3651 = vsel %vm3108, %v3533, 0.0
        %v3652 = vsel %vm3108, %v3534, 0.0
        %v3653 = vadd.f32 %v3651, %v3652
        %v3654 = vsel %vm3108, %v3535, 0.0
        %v3655 = vadd.f32 %v3653, %v3654
        %v3656 = vsel %vm3108, %v3536, 0.0
        %v3657 = vadd.f32 %v3655, %v3656
        %v3658 = vrot.slane %v3657, 4
        %v3659 = vadd.f32 %v3657, %v3658
        %v3660 = vrot.slane %v3659, 2
        %v3661 = vadd.f32 %v3659, %v3660
        %v3662 = vrot.slane %v3661, 1
        %v3663 = vadd.f32 %v3661, %v3662
        %v3664 = vsel %vm3108, %v3537, 0.0
        %v3665 = vsel %vm3108, %v3538, 0.0
        %v3666 = vadd.f32 %v3664, %v3665
        %v3667 = vsel %vm3108, %v3539, 0.0
        %v3668 = vadd.f32 %v3666, %v3667
        %v3669 = vsel %vm3108, %v3540, 0.0
        %v3670 = vadd.f32 %v3668, %v3669
        %v3671 = vrot.slane %v3670, 4
        %v3672 = vadd.f32 %v3670, %v3671
        %v3673 = vrot.slane %v3672, 2
        %v3674 = vadd.f32 %v3672, %v3673
        %v3675 = vrot.slane %v3674, 1
        %v3676 = vadd.f32 %v3674, %v3675
        %v3677 = vsel %vm3108, %v3541, 0.0
        %v3678 = vsel %vm3108, %v3542, 0.0
        %v3679 = vadd.f32 %v3677, %v3678
        %v3680 = vsel %vm3108, %v3543, 0.0
        %v3681 = vadd.f32 %v3679, %v3680
        %v3682 = vsel %vm3108, %v3544, 0.0
        %v3683 = vadd.f32 %v3681, %v3682
        %v3684 = vrot.slane %v3683, 4
        %v3685 = vadd.f32 %v3683, %v3684
        %v3686 = vrot.slane %v3685, 2
        %v3687 = vadd.f32 %v3685, %v3686
        %v3688 = vrot.slane %v3687, 1
        %v3689 = vadd.f32 %v3687, %v3688
        %v3690 = vsel %vm3108, %v3545, 0.0
        %v3691 = vsel %vm3108, %v3546, 0.0
        %v3692 = vadd.f32 %v3690, %v3691
        %v3693 = vsel %vm3108, %v3547, 0.0
        %v3694 = vadd.f32 %v3692, %v3693
        %v3695 = vsel %vm3108, %v3548, 0.0
        %v3696 = vadd.f32 %v3694, %v3695
        %v3697 = vrot.slane %v3696, 4
        %v3698 = vadd.f32 %v3696, %v3697
        %v3699 = vrot.slane %v3698, 2
        %v3700 = vadd.f32 %v3698, %v3699
        %v3701 = vrot.slane %v3700, 1
        %v3702 = vadd.f32 %v3700, %v3701
        %v3703 = vsel %vm3108, %v3549, 0.0
        %v3704 = vsel %vm3108, %v3550, 0.0
        %v3705 = vadd.f32 %v3703, %v3704
        %v3706 = vsel %vm3108, %v3551, 0.0
        %v3707 = vadd.f32 %v3705, %v3706
        %v3708 = vsel %vm3108, %v3552, 0.0
        %v3709 = vadd.f32 %v3707, %v3708
        %v3710 = vrot.slane %v3709, 4
        %v3711 = vadd.f32 %v3709, %v3710
        %v3712 = vrot.slane %v3711, 2
        %v3713 = vadd.f32 %v3711, %v3712
        %v3714 = vrot.slane %v3713, 1
        %v3715 = vadd.f32 %v3713, %v3714
        %v3716 = vsel %vm3108, %v3553, 0.0
        %v3717 = vsel %vm3108, %v3554, 0.0
        %v3718 = vadd.f32 %v3716, %v3717
        %v3719 = vsel %vm3108, %v3555, 0.0
        %v3720 = vadd.f32 %v3718, %v3719
        %v3721 = vsel %vm3108, %v3556, 0.0
        %v3722 = vadd.f32 %v3720, %v3721
        %v3723 = vrot.slane %v3722, 4
        %v3724 = vadd.f32 %v3722, %v3723
        %v3725 = vrot.slane %v3724, 2
        %v3726 = vadd.f32 %v3724, %v3725
        %v3727 = vrot.slane %v3726, 1
        %v3728 = vadd.f32 %v3726, %v3727
        %v3729 = vsel %vm3108, %v3557, 0.0
        %v3730 = vsel %vm3108, %v3558, 0.0
        %v3731 = vadd.f32 %v3729, %v3730
        %v3732 = vsel %vm3108, %v3559, 0.0
        %v3733 = vadd.f32 %v3731, %v3732
        %v3734 = vsel %vm3108, %v3560, 0.0
        %v3735 = vadd.f32 %v3733, %v3734
        %v3736 = vrot.slane %v3735, 4
        %v3737 = vadd.f32 %v3735, %v3736
        %v3738 = vrot.slane %v3737, 2
        %v3739 = vadd.f32 %v3737, %v3738
        %v3740 = vrot.slane %v3739, 1
        %v3741 = vadd.f32 %v3739, %v3740
        %v3742 = vsel %vm3108, %v3561, 0.0
        %v3743 = vsel %vm3108, %v3562, 0.0
        %v3744 = vadd.f32 %v3742, %v3743
        %v3745 = vsel %vm3108, %v3563, 0.0
        %v3746 = vadd.f32 %v3744, %v3745
        %v3747 = vsel %vm3108, %v3564, 0.0
        %v3748 = vadd.f32 %v3746, %v3747
        %v3749 = vrot.slane %v3748, 4
        %v3750 = vadd.f32 %v3748, %v3749
        %v3751 = vrot.slane %v3750, 2
        %v3752 = vadd.f32 %v3750, %v3751
        %v3753 = vrot.slane %v3752, 1
        %v3754 = vadd.f32 %v3752, %v3753
        %v3755 = vsel %vm3108, %v3565, 0.0
        %v3756 = vsel %vm3108, %v3566, 0.0
        %v3757 = vadd.f32 %v3755, %v3756
        %v3758 = vsel %vm3108, %v3567, 0.0
        %v3759 = vadd.f32 %v3757, %v3758
        %v3760 = vsel %vm3108, %v3568, 0.0
        %v3761 = vadd.f32 %v3759, %v3760
        %v3762 = vrot.slane %v3761, 4
        %v3763 = vadd.f32 %v3761, %v3762
        %v3764 = vrot.slane %v3763, 2
        %v3765 = vadd.f32 %v3763, %v3764
        %v3766 = vrot.slane %v3765, 1
        %v3767 = vadd.f32 %v3765, %v3766
        %v3768 = vsel %vm3108, %v3569, 0.0
        %v3769 = vsel %vm3108, %v3570, 0.0
        %v3770 = vadd.f32 %v3768, %v3769
        %v3771 = vsel %vm3108, %v3571, 0.0
        %v3772 = vadd.f32 %v3770, %v3771
        %v3773 = vsel %vm3108, %v3572, 0.0
        %v3774 = vadd.f32 %v3772, %v3773
        %v3775 = vrot.slane %v3774, 4
        %v3776 = vadd.f32 %v3774, %v3775
        %v3777 = vrot.slane %v3776, 2
        %v3778 = vadd.f32 %v3776, %v3777
        %v3779 = vrot.slane %v3778, 1
        %v3780 = vadd.f32 %v3778, %v3779
        %v3781 = vmax.f32 %v3585, 1e-12
        %v3782 = vmax.f32 %v3598, 1e-12
        %v3783 = vmax.f32 %v3611, 1e-12
        %v3784 = vmax.f32 %v3624, 1e-12
        %v3785 = vmax.f32 %v3637, 1e-12
        %v3786 = vmax.f32 %v3650, 1e-12
        %v3787 = vmax.f32 %v3663, 1e-12
        %v3788 = vmax.f32 %v3676, 1e-12
        %v3789 = vmax.f32 %v3689, 1e-12
        %v3790 = vmax.f32 %v3702, 1e-12
        %v3791 = vmax.f32 %v3715, 1e-12
        %v3792 = vmax.f32 %v3728, 1e-12
        %v3793 = vmax.f32 %v3741, 1e-12
        %v3794 = vmax.f32 %v3754, 1e-12
        %v3795 = vmax.f32 %v3767, 1e-12
        %v3796 = vmax.f32 %v3780, 1e-12
        %v3797 = vrcp.pop %v3781
        %v3798 = vrcp.pop %v3782
        %v3799 = vrcp.pop %v3783
        %v3800 = vrcp.pop %v3784
        %v3801 = vrcp.pop %v3785
        %v3802 = vrcp.pop %v3786
        %v3803 = vrcp.pop %v3787
        %v3804 = vrcp.pop %v3788
        %v3805 = vrcp.pop %v3789
        %v3806 = vrcp.pop %v3790
        %v3807 = vrcp.pop %v3791
        %v3808 = vrcp.pop %v3792
        %v3809 = vrcp.pop %v3793
        %v3810 = vrcp.pop %v3794
        %v3811 = vrcp.pop %v3795
        %v3812 = vrcp.pop %v3796
        %v3813 = vmul.f32 %v3509, %v3797
        %v3814 = vmul.f32 %v3510, %v3797
        %v3815 = vmul.f32 %v3511, %v3797
        %v3816 = vmul.f32 %v3512, %v3797
        %v3817 = vmul.f32 %v3513, %v3798
        %v3818 = vmul.f32 %v3514, %v3798
        %v3819 = vmul.f32 %v3515, %v3798
        %v3820 = vmul.f32 %v3516, %v3798
        %v3821 = vmul.f32 %v3517, %v3799
        %v3822 = vmul.f32 %v3518, %v3799
        %v3823 = vmul.f32 %v3519, %v3799
        %v3824 = vmul.f32 %v3520, %v3799
        %v3825 = vmul.f32 %v3521, %v3800
        %v3826 = vmul.f32 %v3522, %v3800
        %v3827 = vmul.f32 %v3523, %v3800
        %v3828 = vmul.f32 %v3524, %v3800
        %v3829 = vmul.f32 %v3525, %v3801
        %v3830 = vmul.f32 %v3526, %v3801
        %v3831 = vmul.f32 %v3527, %v3801
        %v3832 = vmul.f32 %v3528, %v3801
        %v3833 = vmul.f32 %v3529, %v3802
        %v3834 = vmul.f32 %v3530, %v3802
        %v3835 = vmul.f32 %v3531, %v3802
        %v3836 = vmul.f32 %v3532, %v3802
        %v3837 = vmul.f32 %v3533, %v3803
        %v3838 = vmul.f32 %v3534, %v3803
        %v3839 = vmul.f32 %v3535, %v3803
        %v3840 = vmul.f32 %v3536, %v3803
        %v3841 = vmul.f32 %v3537, %v3804
        %v3842 = vmul.f32 %v3538, %v3804
        %v3843 = vmul.f32 %v3539, %v3804
        %v3844 = vmul.f32 %v3540, %v3804
        %v3845 = vmul.f32 %v3541, %v3805
        %v3846 = vmul.f32 %v3542, %v3805
        %v3847 = vmul.f32 %v3543, %v3805
        %v3848 = vmul.f32 %v3544, %v3805
        %v3849 = vmul.f32 %v3545, %v3806
        %v3850 = vmul.f32 %v3546, %v3806
        %v3851 = vmul.f32 %v3547, %v3806
        %v3852 = vmul.f32 %v3548, %v3806
        %v3853 = vmul.f32 %v3549, %v3807
        %v3854 = vmul.f32 %v3550, %v3807
        %v3855 = vmul.f32 %v3551, %v3807
        %v3856 = vmul.f32 %v3552, %v3807
        %v3857 = vmul.f32 %v3553, %v3808
        %v3858 = vmul.f32 %v3554, %v3808
        %v3859 = vmul.f32 %v3555, %v3808
        %v3860 = vmul.f32 %v3556, %v3808
        %v3861 = vmul.f32 %v3557, %v3809
        %v3862 = vmul.f32 %v3558, %v3809
        %v3863 = vmul.f32 %v3559, %v3809
        %v3864 = vmul.f32 %v3560, %v3809
        %v3865 = vmul.f32 %v3561, %v3810
        %v3866 = vmul.f32 %v3562, %v3810
        %v3867 = vmul.f32 %v3563, %v3810
        %v3868 = vmul.f32 %v3564, %v3810
        %v3869 = vmul.f32 %v3565, %v3811
        %v3870 = vmul.f32 %v3566, %v3811
        %v3871 = vmul.f32 %v3567, %v3811
        %v3872 = vmul.f32 %v3568, %v3811
        %v3873 = vmul.f32 %v3569, %v3812
        %v3874 = vmul.f32 %v3570, %v3812
        %v3875 = vmul.f32 %v3571, %v3812
        %v3876 = vmul.f32 %v3572, %v3812
        %3881 = vrot.lane.b32.xlu0 %v880, 32
        %v3882 = vpop.permute.xlu0 %3881
        %3883 = vrot.lane.b32.xlu0 %v886, 32
        %v3884 = vpop.permute.xlu0 %3883
        %3885 = vrot.lane.b32.xlu0 %v892, 32
        %v3886 = vpop.permute.xlu0 %3885
        %3887 = vrot.lane.b32.xlu0 %v898, 32
        %v3888 = vpop.permute.xlu0 %3887
        %v3893 = vmul.f32 %v3813, %v3882
        %v3894 = vmul.f32 %v3814, %v3884
        %v3895 = vmul.f32 %v3815, %v3886
        %v3896 = vmul.f32 %v3816, %v3888
        %v3897 = vmul.f32 %v3817, %v3882
        %v3898 = vmul.f32 %v3818, %v3884
        %v3899 = vmul.f32 %v3819, %v3886
        %v3900 = vmul.f32 %v3820, %v3888
        %v3901 = vmul.f32 %v3821, %v3882
        %v3902 = vmul.f32 %v3822, %v3884
        %v3903 = vmul.f32 %v3823, %v3886
        %v3904 = vmul.f32 %v3824, %v3888
        %v3905 = vmul.f32 %v3825, %v3882
        %v3906 = vmul.f32 %v3826, %v3884
        %v3907 = vmul.f32 %v3827, %v3886
        %v3908 = vmul.f32 %v3828, %v3888
        %v3909 = vmul.f32 %v3829, %v3882
        %v3910 = vmul.f32 %v3830, %v3884
        %v3911 = vmul.f32 %v3831, %v3886
        %v3912 = vmul.f32 %v3832, %v3888
        %v3913 = vmul.f32 %v3833, %v3882
        %v3914 = vmul.f32 %v3834, %v3884
        %v3915 = vmul.f32 %v3835, %v3886
        %v3916 = vmul.f32 %v3836, %v3888
        %v3917 = vmul.f32 %v3837, %v3882
        %v3918 = vmul.f32 %v3838, %v3884
        %v3919 = vmul.f32 %v3839, %v3886
        %v3920 = vmul.f32 %v3840, %v3888
        %v3921 = vmul.f32 %v3841, %v3882
        %v3922 = vmul.f32 %v3842, %v3884
        %v3923 = vmul.f32 %v3843, %v3886
        %v3924 = vmul.f32 %v3844, %v3888
        %v3925 = vmul.f32 %v3845, %v3882
        %v3926 = vmul.f32 %v3846, %v3884
        %v3927 = vmul.f32 %v3847, %v3886
        %v3928 = vmul.f32 %v3848, %v3888
        %v3929 = vmul.f32 %v3849, %v3882
        %v3930 = vmul.f32 %v3850, %v3884
        %v3931 = vmul.f32 %v3851, %v3886
        %v3932 = vmul.f32 %v3852, %v3888
        %v3933 = vmul.f32 %v3853, %v3882
        %v3934 = vmul.f32 %v3854, %v3884
        %v3935 = vmul.f32 %v3855, %v3886
        %v3936 = vmul.f32 %v3856, %v3888
        %v3937 = vmul.f32 %v3857, %v3882
        %v3938 = vmul.f32 %v3858, %v3884
        %v3939 = vmul.f32 %v3859, %v3886
        %v3940 = vmul.f32 %v3860, %v3888
        %v3941 = vmul.f32 %v3861, %v3882
        %v3942 = vmul.f32 %v3862, %v3884
        %v3943 = vmul.f32 %v3863, %v3886
        %v3944 = vmul.f32 %v3864, %v3888
        %v3945 = vmul.f32 %v3865, %v3882
        %v3946 = vmul.f32 %v3866, %v3884
        %v3947 = vmul.f32 %v3867, %v3886
        %v3948 = vmul.f32 %v3868, %v3888
        %v3949 = vmul.f32 %v3869, %v3882
        %v3950 = vmul.f32 %v3870, %v3884
        %v3951 = vmul.f32 %v3871, %v3886
        %v3952 = vmul.f32 %v3872, %v3888
        %v3953 = vmul.f32 %v3873, %v3882
        %v3954 = vmul.f32 %v3874, %v3884
        %v3955 = vmul.f32 %v3875, %v3886
        %v3956 = vmul.f32 %v3876, %v3888
        %v3957 = vsel %vm3108, %v3893, 0.0
        %v3958 = vsel %vm3108, %v3894, 0.0
        %v3959 = vadd.f32 %v3957, %v3958
        %v3960 = vsel %vm3108, %v3895, 0.0
        %v3961 = vadd.f32 %v3959, %v3960
        %v3962 = vsel %vm3108, %v3896, 0.0
        %v3963 = vadd.f32 %v3961, %v3962
        %v3964 = vrot.slane %v3963, 4
        %v3965 = vadd.f32 %v3963, %v3964
        %v3966 = vrot.slane %v3965, 2
        %v3967 = vadd.f32 %v3965, %v3966
        %v3968 = vrot.slane %v3967, 1
        %v3969 = vadd.f32 %v3967, %v3968
        %v3970 = vsel %vm3108, %v3897, 0.0
        %v3971 = vsel %vm3108, %v3898, 0.0
        %v3972 = vadd.f32 %v3970, %v3971
        %v3973 = vsel %vm3108, %v3899, 0.0
        %v3974 = vadd.f32 %v3972, %v3973
        %v3975 = vsel %vm3108, %v3900, 0.0
        %v3976 = vadd.f32 %v3974, %v3975
        %v3977 = vrot.slane %v3976, 4
        %v3978 = vadd.f32 %v3976, %v3977
        %v3979 = vrot.slane %v3978, 2
        %v3980 = vadd.f32 %v3978, %v3979
        %v3981 = vrot.slane %v3980, 1
        %v3982 = vadd.f32 %v3980, %v3981
        %v3983 = vsel %vm3108, %v3901, 0.0
        %v3984 = vsel %vm3108, %v3902, 0.0
        %v3985 = vadd.f32 %v3983, %v3984
        %v3986 = vsel %vm3108, %v3903, 0.0
        %v3987 = vadd.f32 %v3985, %v3986
        %v3988 = vsel %vm3108, %v3904, 0.0
        %v3989 = vadd.f32 %v3987, %v3988
        %v3990 = vrot.slane %v3989, 4
        %v3991 = vadd.f32 %v3989, %v3990
        %v3992 = vrot.slane %v3991, 2
        %v3993 = vadd.f32 %v3991, %v3992
        %v3994 = vrot.slane %v3993, 1
        %v3995 = vadd.f32 %v3993, %v3994
        %v3996 = vsel %vm3108, %v3905, 0.0
        %v3997 = vsel %vm3108, %v3906, 0.0
        %v3998 = vadd.f32 %v3996, %v3997
        %v3999 = vsel %vm3108, %v3907, 0.0
        %v4000 = vadd.f32 %v3998, %v3999
        %v4001 = vsel %vm3108, %v3908, 0.0
        %v4002 = vadd.f32 %v4000, %v4001
        %v4003 = vrot.slane %v4002, 4
        %v4004 = vadd.f32 %v4002, %v4003
        %v4005 = vrot.slane %v4004, 2
        %v4006 = vadd.f32 %v4004, %v4005
        %v4007 = vrot.slane %v4006, 1
        %v4008 = vadd.f32 %v4006, %v4007
        %v4009 = vsel %vm3108, %v3909, 0.0
        %v4010 = vsel %vm3108, %v3910, 0.0
        %v4011 = vadd.f32 %v4009, %v4010
        %v4012 = vsel %vm3108, %v3911, 0.0
        %v4013 = vadd.f32 %v4011, %v4012
        %v4014 = vsel %vm3108, %v3912, 0.0
        %v4015 = vadd.f32 %v4013, %v4014
        %v4016 = vrot.slane %v4015, 4
        %v4017 = vadd.f32 %v4015, %v4016
        %v4018 = vrot.slane %v4017, 2
        %v4019 = vadd.f32 %v4017, %v4018
        %v4020 = vrot.slane %v4019, 1
        %v4021 = vadd.f32 %v4019, %v4020
        %v4022 = vsel %vm3108, %v3913, 0.0
        %v4023 = vsel %vm3108, %v3914, 0.0
        %v4024 = vadd.f32 %v4022, %v4023
        %v4025 = vsel %vm3108, %v3915, 0.0
        %v4026 = vadd.f32 %v4024, %v4025
        %v4027 = vsel %vm3108, %v3916, 0.0
        %v4028 = vadd.f32 %v4026, %v4027
        %v4029 = vrot.slane %v4028, 4
        %v4030 = vadd.f32 %v4028, %v4029
        %v4031 = vrot.slane %v4030, 2
        %v4032 = vadd.f32 %v4030, %v4031
        %v4033 = vrot.slane %v4032, 1
        %v4034 = vadd.f32 %v4032, %v4033
        %v4035 = vsel %vm3108, %v3917, 0.0
        %v4036 = vsel %vm3108, %v3918, 0.0
        %v4037 = vadd.f32 %v4035, %v4036
        %v4038 = vsel %vm3108, %v3919, 0.0
        %v4039 = vadd.f32 %v4037, %v4038
        %v4040 = vsel %vm3108, %v3920, 0.0
        %v4041 = vadd.f32 %v4039, %v4040
        %v4042 = vrot.slane %v4041, 4
        %v4043 = vadd.f32 %v4041, %v4042
        %v4044 = vrot.slane %v4043, 2
        %v4045 = vadd.f32 %v4043, %v4044
        %v4046 = vrot.slane %v4045, 1
        %v4047 = vadd.f32 %v4045, %v4046
        %v4048 = vsel %vm3108, %v3921, 0.0
        %v4049 = vsel %vm3108, %v3922, 0.0
        %v4050 = vadd.f32 %v4048, %v4049
        %v4051 = vsel %vm3108, %v3923, 0.0
        %v4052 = vadd.f32 %v4050, %v4051
        %v4053 = vsel %vm3108, %v3924, 0.0
        %v4054 = vadd.f32 %v4052, %v4053
        %v4055 = vrot.slane %v4054, 4
        %v4056 = vadd.f32 %v4054, %v4055
        %v4057 = vrot.slane %v4056, 2
        %v4058 = vadd.f32 %v4056, %v4057
        %v4059 = vrot.slane %v4058, 1
        %v4060 = vadd.f32 %v4058, %v4059
        %v4061 = vsel %vm3108, %v3925, 0.0
        %v4062 = vsel %vm3108, %v3926, 0.0
        %v4063 = vadd.f32 %v4061, %v4062
        %v4064 = vsel %vm3108, %v3927, 0.0
        %v4065 = vadd.f32 %v4063, %v4064
        %v4066 = vsel %vm3108, %v3928, 0.0
        %v4067 = vadd.f32 %v4065, %v4066
        %v4068 = vrot.slane %v4067, 4
        %v4069 = vadd.f32 %v4067, %v4068
        %v4070 = vrot.slane %v4069, 2
        %v4071 = vadd.f32 %v4069, %v4070
        %v4072 = vrot.slane %v4071, 1
        %v4073 = vadd.f32 %v4071, %v4072
        %v4074 = vsel %vm3108, %v3929, 0.0
        %v4075 = vsel %vm3108, %v3930, 0.0
        %v4076 = vadd.f32 %v4074, %v4075
        %v4077 = vsel %vm3108, %v3931, 0.0
        %v4078 = vadd.f32 %v4076, %v4077
        %v4079 = vsel %vm3108, %v3932, 0.0
        %v4080 = vadd.f32 %v4078, %v4079
        %v4081 = vrot.slane %v4080, 4
        %v4082 = vadd.f32 %v4080, %v4081
        %v4083 = vrot.slane %v4082, 2
        %v4084 = vadd.f32 %v4082, %v4083
        %v4085 = vrot.slane %v4084, 1
        %v4086 = vadd.f32 %v4084, %v4085
        %v4087 = vsel %vm3108, %v3933, 0.0
        %v4088 = vsel %vm3108, %v3934, 0.0
        %v4089 = vadd.f32 %v4087, %v4088
        %v4090 = vsel %vm3108, %v3935, 0.0
        %v4091 = vadd.f32 %v4089, %v4090
        %v4092 = vsel %vm3108, %v3936, 0.0
        %v4093 = vadd.f32 %v4091, %v4092
        %v4094 = vrot.slane %v4093, 4
        %v4095 = vadd.f32 %v4093, %v4094
        %v4096 = vrot.slane %v4095, 2
        %v4097 = vadd.f32 %v4095, %v4096
        %v4098 = vrot.slane %v4097, 1
        %v4099 = vadd.f32 %v4097, %v4098
        %v4100 = vsel %vm3108, %v3937, 0.0
        %v4101 = vsel %vm3108, %v3938, 0.0
        %v4102 = vadd.f32 %v4100, %v4101
        %v4103 = vsel %vm3108, %v3939, 0.0
        %v4104 = vadd.f32 %v4102, %v4103
        %v4105 = vsel %vm3108, %v3940, 0.0
        %v4106 = vadd.f32 %v4104, %v4105
        %v4107 = vrot.slane %v4106, 4
        %v4108 = vadd.f32 %v4106, %v4107
        %v4109 = vrot.slane %v4108, 2
        %v4110 = vadd.f32 %v4108, %v4109
        %v4111 = vrot.slane %v4110, 1
        %v4112 = vadd.f32 %v4110, %v4111
        %v4113 = vsel %vm3108, %v3941, 0.0
        %v4114 = vsel %vm3108, %v3942, 0.0
        %v4115 = vadd.f32 %v4113, %v4114
        %v4116 = vsel %vm3108, %v3943, 0.0
        %v4117 = vadd.f32 %v4115, %v4116
        %v4118 = vsel %vm3108, %v3944, 0.0
        %v4119 = vadd.f32 %v4117, %v4118
        %v4120 = vrot.slane %v4119, 4
        %v4121 = vadd.f32 %v4119, %v4120
        %v4122 = vrot.slane %v4121, 2
        %v4123 = vadd.f32 %v4121, %v4122
        %v4124 = vrot.slane %v4123, 1
        %v4125 = vadd.f32 %v4123, %v4124
        %v4126 = vsel %vm3108, %v3945, 0.0
        %v4127 = vsel %vm3108, %v3946, 0.0
        %v4128 = vadd.f32 %v4126, %v4127
        %v4129 = vsel %vm3108, %v3947, 0.0
        %v4130 = vadd.f32 %v4128, %v4129
        %v4131 = vsel %vm3108, %v3948, 0.0
        %v4132 = vadd.f32 %v4130, %v4131
        %v4133 = vrot.slane %v4132, 4
        %v4134 = vadd.f32 %v4132, %v4133
        %v4135 = vrot.slane %v4134, 2
        %v4136 = vadd.f32 %v4134, %v4135
        %v4137 = vrot.slane %v4136, 1
        %v4138 = vadd.f32 %v4136, %v4137
        %v4139 = vsel %vm3108, %v3949, 0.0
        %v4140 = vsel %vm3108, %v3950, 0.0
        %v4141 = vadd.f32 %v4139, %v4140
        %v4142 = vsel %vm3108, %v3951, 0.0
        %v4143 = vadd.f32 %v4141, %v4142
        %v4144 = vsel %vm3108, %v3952, 0.0
        %v4145 = vadd.f32 %v4143, %v4144
        %v4146 = vrot.slane %v4145, 4
        %v4147 = vadd.f32 %v4145, %v4146
        %v4148 = vrot.slane %v4147, 2
        %v4149 = vadd.f32 %v4147, %v4148
        %v4150 = vrot.slane %v4149, 1
        %v4151 = vadd.f32 %v4149, %v4150
        %v4152 = vsel %vm3108, %v3953, 0.0
        %v4153 = vsel %vm3108, %v3954, 0.0
        %v4154 = vadd.f32 %v4152, %v4153
        %v4155 = vsel %vm3108, %v3955, 0.0
        %v4156 = vadd.f32 %v4154, %v4155
        %v4157 = vsel %vm3108, %v3956, 0.0
        %v4158 = vadd.f32 %v4156, %v4157
        %v4159 = vrot.slane %v4158, 4
        %v4160 = vadd.f32 %v4158, %v4159
        %v4161 = vrot.slane %v4160, 2
        %v4162 = vadd.f32 %v4160, %v4161
        %v4163 = vrot.slane %v4162, 1
        %v4164 = vadd.f32 %v4162, %v4163
        %v4165 = vld [vmem:[%s572] sm:$0xff]
        %v4166 = vld [vmem:[%s572 + $0x8] sm:$0xff]
        %v4167 = vld [vmem:[%s572 + $0x10] sm:$0xff]
        %v4168 = vld [vmem:[%s572 + $0x18] sm:$0xff]
        %v4169 = vcombine.high %v882, %v882
        %v4171 = vunpack.c.l.s4 1966171168
        %v4172 = vunpack.c.0.s8 %v4171
        %v4173 = vlaneseq
        %v4174 = vshrl.u32 %v4173, 7
        %v4175 = vsub.s32 %v4172, %v4174
        %v4176 = vrot.slane %v882, %v4175
        %v4178 = vunpack.c.l.s4 1966171168
        %v4179 = vunpack.c.0.s8 %v4178
        %v4180 = vlaneseq
        %v4181 = vshrl.u32 %v4180, 7
        %v4182 = vsub.s32 %v4179, %v4181
        %v4183 = vrot.slane %v4169, %v4182
        %v4184 = vcombine.high %v4176, %v4176
        %v4185 = vcombine.high %v4183, %v4183
        %v4187 = vunpack.c.l.s4 1966171168
        %v4188 = vunpack.c.0.s8 %v4187
        %v4189 = vlaneseq
        %v4190 = vshrl.u32 %v4189, 7
        %v4191 = vsub.s32 %v4188, %v4190
        %v4192 = vrot.slane %v4176, %v4191
        %v4194 = vunpack.c.l.s4 1966171168
        %v4195 = vunpack.c.0.s8 %v4194
        %v4196 = vlaneseq
        %v4197 = vshrl.u32 %v4196, 7
        %v4198 = vsub.s32 %v4195, %v4197
        %v4199 = vrot.slane %v4183, %v4198
        %v4201 = vunpack.c.l.s4 1966171168
        %v4202 = vunpack.c.0.s8 %v4201
        %v4203 = vlaneseq
        %v4204 = vshrl.u32 %v4203, 7
        %v4205 = vsub.s32 %v4202, %v4204
        %v4206 = vrot.slane %v4184, %v4205
        %v4208 = vunpack.c.l.s4 1966171168
        %v4209 = vunpack.c.0.s8 %v4208
        %v4210 = vlaneseq
        %v4211 = vshrl.u32 %v4210, 7
        %v4212 = vsub.s32 %v4209, %v4211
        %v4213 = vrot.slane %v4185, %v4212
        %v4214 = vcombine.high %v4192, %v4192
        %v4215 = vcombine.high %v4199, %v4199
        %v4216 = vcombine.high %v4206, %v4206
        %v4217 = vcombine.high %v4213, %v4213
        %v4218 = vcombine.high %v888, %v888
        %v4220 = vunpack.c.l.s4 1966171168
        %v4221 = vunpack.c.0.s8 %v4220
        %v4222 = vlaneseq
        %v4223 = vshrl.u32 %v4222, 7
        %v4224 = vsub.s32 %v4221, %v4223
        %v4225 = vrot.slane %v888, %v4224
        %v4227 = vunpack.c.l.s4 1966171168
        %v4228 = vunpack.c.0.s8 %v4227
        %v4229 = vlaneseq
        %v4230 = vshrl.u32 %v4229, 7
        %v4231 = vsub.s32 %v4228, %v4230
        %v4232 = vrot.slane %v4218, %v4231
        %v4233 = vcombine.high %v4225, %v4225
        %v4234 = vcombine.high %v4232, %v4232
        %v4236 = vunpack.c.l.s4 1966171168
        %v4237 = vunpack.c.0.s8 %v4236
        %v4238 = vlaneseq
        %v4239 = vshrl.u32 %v4238, 7
        %v4240 = vsub.s32 %v4237, %v4239
        %v4241 = vrot.slane %v4225, %v4240
        %v4243 = vunpack.c.l.s4 1966171168
        %v4244 = vunpack.c.0.s8 %v4243
        %v4245 = vlaneseq
        %v4246 = vshrl.u32 %v4245, 7
        %v4247 = vsub.s32 %v4244, %v4246
        %v4248 = vrot.slane %v4232, %v4247
        %v4250 = vunpack.c.l.s4 1966171168
        %v4251 = vunpack.c.0.s8 %v4250
        %v4252 = vlaneseq
        %v4253 = vshrl.u32 %v4252, 7
        %v4254 = vsub.s32 %v4251, %v4253
        %v4255 = vrot.slane %v4233, %v4254
        %v4257 = vunpack.c.l.s4 1966171168
        %v4258 = vunpack.c.0.s8 %v4257
        %v4259 = vlaneseq
        %v4260 = vshrl.u32 %v4259, 7
        %v4261 = vsub.s32 %v4258, %v4260
        %v4262 = vrot.slane %v4234, %v4261
        %v4263 = vcombine.high %v4241, %v4241
        %v4264 = vcombine.high %v4248, %v4248
        %v4265 = vcombine.high %v4255, %v4255
        %v4266 = vcombine.high %v4262, %v4262
        %v4267 = vcombine.high %v894, %v894
        %v4269 = vunpack.c.l.s4 1966171168
        %v4270 = vunpack.c.0.s8 %v4269
        %v4271 = vlaneseq
        %v4272 = vshrl.u32 %v4271, 7
        %v4273 = vsub.s32 %v4270, %v4272
        %v4274 = vrot.slane %v894, %v4273
        %v4276 = vunpack.c.l.s4 1966171168
        %v4277 = vunpack.c.0.s8 %v4276
        %v4278 = vlaneseq
        %v4279 = vshrl.u32 %v4278, 7
        %v4280 = vsub.s32 %v4277, %v4279
        %v4281 = vrot.slane %v4267, %v4280
        %v4282 = vcombine.high %v4274, %v4274
        %v4283 = vcombine.high %v4281, %v4281
        %v4285 = vunpack.c.l.s4 1966171168
        %v4286 = vunpack.c.0.s8 %v4285
        %v4287 = vlaneseq
        %v4288 = vshrl.u32 %v4287, 7
        %v4289 = vsub.s32 %v4286, %v4288
        %v4290 = vrot.slane %v4274, %v4289
        %v4292 = vunpack.c.l.s4 1966171168
        %v4293 = vunpack.c.0.s8 %v4292
        %v4294 = vlaneseq
        %v4295 = vshrl.u32 %v4294, 7
        %v4296 = vsub.s32 %v4293, %v4295
        %v4297 = vrot.slane %v4281, %v4296
        %v4299 = vunpack.c.l.s4 1966171168
        %v4300 = vunpack.c.0.s8 %v4299
        %v4301 = vlaneseq
        %v4302 = vshrl.u32 %v4301, 7
        %v4303 = vsub.s32 %v4300, %v4302
        %v4304 = vrot.slane %v4282, %v4303
        %v4306 = vunpack.c.l.s4 1966171168
        %v4307 = vunpack.c.0.s8 %v4306
        %v4308 = vlaneseq
        %v4309 = vshrl.u32 %v4308, 7
        %v4310 = vsub.s32 %v4307, %v4309
        %v4311 = vrot.slane %v4283, %v4310
        %v4312 = vcombine.high %v4290, %v4290
        %v4313 = vcombine.high %v4297, %v4297
        %v4314 = vcombine.high %v4304, %v4304
        %v4315 = vcombine.high %v4311, %v4311
        %v4316 = vcombine.high %v900, %v900
        %v4318 = vunpack.c.l.s4 1966171168
        %v4319 = vunpack.c.0.s8 %v4318
        %v4320 = vlaneseq
        %v4321 = vshrl.u32 %v4320, 7
        %v4322 = vsub.s32 %v4319, %v4321
        %v4323 = vrot.slane %v900, %v4322
        %v4325 = vunpack.c.l.s4 1966171168
        %v4326 = vunpack.c.0.s8 %v4325
        %v4327 = vlaneseq
        %v4328 = vshrl.u32 %v4327, 7
        %v4329 = vsub.s32 %v4326, %v4328
        %v4330 = vrot.slane %v4316, %v4329
        %v4331 = vcombine.high %v4323, %v4323
        %v4332 = vcombine.high %v4330, %v4330
        %v4334 = vunpack.c.l.s4 1966171168
        %v4335 = vunpack.c.0.s8 %v4334
        %v4336 = vlaneseq
        %v4337 = vshrl.u32 %v4336, 7
        %v4338 = vsub.s32 %v4335, %v4337
        %v4339 = vrot.slane %v4323, %v4338
        %v4341 = vunpack.c.l.s4 1966171168
        %v4342 = vunpack.c.0.s8 %v4341
        %v4343 = vlaneseq
        %v4344 = vshrl.u32 %v4343, 7
        %v4345 = vsub.s32 %v4342, %v4344
        %v4346 = vrot.slane %v4330, %v4345
        %v4348 = vunpack.c.l.s4 1966171168
        %v4349 = vunpack.c.0.s8 %v4348
        %v4350 = vlaneseq
        %v4351 = vshrl.u32 %v4350, 7
        %v4352 = vsub.s32 %v4349, %v4351
        %v4353 = vrot.slane %v4331, %v4352
        %v4355 = vunpack.c.l.s4 1966171168
        %v4356 = vunpack.c.0.s8 %v4355
        %v4357 = vlaneseq
        %v4358 = vshrl.u32 %v4357, 7
        %v4359 = vsub.s32 %v4356, %v4358
        %v4360 = vrot.slane %v4332, %v4359
        %v4361 = vcombine.high %v4339, %v4339
        %v4362 = vcombine.high %v4346, %v4346
        %v4363 = vcombine.high %v4353, %v4353
        %v4364 = vcombine.high %v4360, %v4360
        %v4365 = vlaneseq
        %v4366 = vshrl.u32 %v4365, 7
        %v4367 = vsub.s32 0, %v4366
        %v4368 = vrot.slane %v4192, %v4367
        %v4369 = vlaneseq
        %v4370 = vshrl.u32 %v4369, 7
        %v4371 = vsub.s32 0, %v4370
        %v4372 = vrot.slane %v4206, %v4371
        %v4373 = vlaneseq
        %v4374 = vshrl.u32 %v4373, 7
        %v4375 = vsub.s32 0, %v4374
        %v4376 = vrot.slane %v4214, %v4375
        %v4377 = vlaneseq
        %v4378 = vshrl.u32 %v4377, 7
        %v4379 = vsub.s32 0, %v4378
        %v4380 = vrot.slane %v4216, %v4379
        %v4381 = vlaneseq
        %v4382 = vshrl.u32 %v4381, 7
        %v4383 = vsub.s32 0, %v4382
        %v4384 = vrot.slane %v4199, %v4383
        %v4385 = vlaneseq
        %v4386 = vshrl.u32 %v4385, 7
        %v4387 = vsub.s32 0, %v4386
        %v4388 = vrot.slane %v4213, %v4387
        %v4389 = vlaneseq
        %v4390 = vshrl.u32 %v4389, 7
        %v4391 = vsub.s32 0, %v4390
        %v4392 = vrot.slane %v4215, %v4391
        %v4393 = vlaneseq
        %v4394 = vshrl.u32 %v4393, 7
        %v4395 = vsub.s32 0, %v4394
        %v4396 = vrot.slane %v4217, %v4395
        %v4397 = vlaneseq
        %v4398 = vshrl.u32 %v4397, 7
        %v4399 = vsub.s32 0, %v4398
        %v4400 = vrot.slane %v4241, %v4399
        %v4401 = vlaneseq
        %v4402 = vshrl.u32 %v4401, 7
        %v4403 = vsub.s32 0, %v4402
        %v4404 = vrot.slane %v4255, %v4403
        %v4405 = vlaneseq
        %v4406 = vshrl.u32 %v4405, 7
        %v4407 = vsub.s32 0, %v4406
        %v4408 = vrot.slane %v4263, %v4407
        %v4409 = vlaneseq
        %v4410 = vshrl.u32 %v4409, 7
        %v4411 = vsub.s32 0, %v4410
        %v4412 = vrot.slane %v4265, %v4411
        %v4413 = vlaneseq
        %v4414 = vshrl.u32 %v4413, 7
        %v4415 = vsub.s32 0, %v4414
        %v4416 = vrot.slane %v4248, %v4415
        %v4417 = vlaneseq
        %v4418 = vshrl.u32 %v4417, 7
        %v4419 = vsub.s32 0, %v4418
        %v4420 = vrot.slane %v4262, %v4419
        %v4421 = vlaneseq
        %v4422 = vshrl.u32 %v4421, 7
        %v4423 = vsub.s32 0, %v4422
        %v4424 = vrot.slane %v4264, %v4423
        %v4425 = vlaneseq
        %v4426 = vshrl.u32 %v4425, 7
        %v4427 = vsub.s32 0, %v4426
        %v4428 = vrot.slane %v4266, %v4427
        %v4429 = vlaneseq
        %v4430 = vshrl.u32 %v4429, 7
        %v4431 = vsub.s32 0, %v4430
        %v4432 = vrot.slane %v4290, %v4431
        %v4433 = vlaneseq
        %v4434 = vshrl.u32 %v4433, 7
        %v4435 = vsub.s32 0, %v4434
        %v4436 = vrot.slane %v4304, %v4435
        %v4437 = vlaneseq
        %v4438 = vshrl.u32 %v4437, 7
        %v4439 = vsub.s32 0, %v4438
        %v4440 = vrot.slane %v4312, %v4439
        %v4441 = vlaneseq
        %v4442 = vshrl.u32 %v4441, 7
        %v4443 = vsub.s32 0, %v4442
        %v4444 = vrot.slane %v4314, %v4443
        %v4445 = vlaneseq
        %v4446 = vshrl.u32 %v4445, 7
        %v4447 = vsub.s32 0, %v4446
        %v4448 = vrot.slane %v4297, %v4447
        %v4449 = vlaneseq
        %v4450 = vshrl.u32 %v4449, 7
        %v4451 = vsub.s32 0, %v4450
        %v4452 = vrot.slane %v4311, %v4451
        %v4453 = vlaneseq
        %v4454 = vshrl.u32 %v4453, 7
        %v4455 = vsub.s32 0, %v4454
        %v4456 = vrot.slane %v4313, %v4455
        %v4457 = vlaneseq
        %v4458 = vshrl.u32 %v4457, 7
        %v4459 = vsub.s32 0, %v4458
        %v4460 = vrot.slane %v4315, %v4459
        %v4461 = vlaneseq
        %v4462 = vshrl.u32 %v4461, 7
        %v4463 = vsub.s32 0, %v4462
        %v4464 = vrot.slane %v4339, %v4463
        %v4465 = vlaneseq
        %v4466 = vshrl.u32 %v4465, 7
        %v4467 = vsub.s32 0, %v4466
        %v4468 = vrot.slane %v4353, %v4467
        %v4469 = vlaneseq
        %v4470 = vshrl.u32 %v4469, 7
        %v4471 = vsub.s32 0, %v4470
        %v4472 = vrot.slane %v4361, %v4471
        %v4473 = vlaneseq
        %v4474 = vshrl.u32 %v4473, 7
        %v4475 = vsub.s32 0, %v4474
        %v4476 = vrot.slane %v4363, %v4475
        %v4477 = vlaneseq
        %v4478 = vshrl.u32 %v4477, 7
        %v4479 = vsub.s32 0, %v4478
        %v4480 = vrot.slane %v4346, %v4479
        %v4481 = vlaneseq
        %v4482 = vshrl.u32 %v4481, 7
        %v4483 = vsub.s32 0, %v4482
        %v4484 = vrot.slane %v4360, %v4483
        %v4485 = vlaneseq
        %v4486 = vshrl.u32 %v4485, 7
        %v4487 = vsub.s32 0, %v4486
        %v4488 = vrot.slane %v4362, %v4487
        %v4489 = vlaneseq
        %v4490 = vshrl.u32 %v4489, 7
        %v4491 = vsub.s32 0, %v4490
        %v4492 = vrot.slane %v4364, %v4491
        %4525 = vrot.lane.b32.xlu0 %v691, 32
        %v4526 = vpop.permute.xlu0 %4525
        %4527 = vrot.lane.b32.xlu0 %v697, 32
        %v4528 = vpop.permute.xlu0 %4527
        %v4531 = vadd.f32 %v4368, %v4526
        %v4532 = vadd.f32 %v4368, %v4528
        %v4533 = vadd.f32 %v4372, %v4526
        %v4534 = vadd.f32 %v4372, %v4528
        %v4535 = vadd.f32 %v4376, %v4526
        %v4536 = vadd.f32 %v4376, %v4528
        %v4537 = vadd.f32 %v4380, %v4526
        %v4538 = vadd.f32 %v4380, %v4528
        %v4539 = vadd.f32 %v4384, %v4526
        %v4540 = vadd.f32 %v4384, %v4528
        %v4541 = vadd.f32 %v4388, %v4526
        %v4542 = vadd.f32 %v4388, %v4528
        %v4543 = vadd.f32 %v4392, %v4526
        %v4544 = vadd.f32 %v4392, %v4528
        %v4545 = vadd.f32 %v4396, %v4526
        %v4546 = vadd.f32 %v4396, %v4528
        %v4547 = vadd.f32 %v4400, %v4526
        %v4548 = vadd.f32 %v4400, %v4528
        %v4549 = vadd.f32 %v4404, %v4526
        %v4550 = vadd.f32 %v4404, %v4528
        %v4551 = vadd.f32 %v4408, %v4526
        %v4552 = vadd.f32 %v4408, %v4528
        %v4553 = vadd.f32 %v4412, %v4526
        %v4554 = vadd.f32 %v4412, %v4528
        %v4555 = vadd.f32 %v4416, %v4526
        %v4556 = vadd.f32 %v4416, %v4528
        %v4557 = vadd.f32 %v4420, %v4526
        %v4558 = vadd.f32 %v4420, %v4528
        %v4559 = vadd.f32 %v4424, %v4526
        %v4560 = vadd.f32 %v4424, %v4528
        %v4561 = vadd.f32 %v4428, %v4526
        %v4562 = vadd.f32 %v4428, %v4528
        %v4563 = vadd.f32 %v4432, %v4526
        %v4564 = vadd.f32 %v4432, %v4528
        %v4565 = vadd.f32 %v4436, %v4526
        %v4566 = vadd.f32 %v4436, %v4528
        %v4567 = vadd.f32 %v4440, %v4526
        %v4568 = vadd.f32 %v4440, %v4528
        %v4569 = vadd.f32 %v4444, %v4526
        %v4570 = vadd.f32 %v4444, %v4528
        %v4571 = vadd.f32 %v4448, %v4526
        %v4572 = vadd.f32 %v4448, %v4528
        %v4573 = vadd.f32 %v4452, %v4526
        %v4574 = vadd.f32 %v4452, %v4528
        %v4575 = vadd.f32 %v4456, %v4526
        %v4576 = vadd.f32 %v4456, %v4528
        %v4577 = vadd.f32 %v4460, %v4526
        %v4578 = vadd.f32 %v4460, %v4528
        %v4579 = vadd.f32 %v4464, %v4526
        %v4580 = vadd.f32 %v4464, %v4528
        %v4581 = vadd.f32 %v4468, %v4526
        %v4582 = vadd.f32 %v4468, %v4528
        %v4583 = vadd.f32 %v4472, %v4526
        %v4584 = vadd.f32 %v4472, %v4528
        %v4585 = vadd.f32 %v4476, %v4526
        %v4586 = vadd.f32 %v4476, %v4528
        %v4587 = vadd.f32 %v4480, %v4526
        %v4588 = vadd.f32 %v4480, %v4528
        %v4589 = vadd.f32 %v4484, %v4526
        %v4590 = vadd.f32 %v4484, %v4528
        %v4591 = vadd.f32 %v4488, %v4526
        %v4592 = vadd.f32 %v4488, %v4528
        %v4593 = vadd.f32 %v4492, %v4526
        %v4594 = vadd.f32 %v4492, %v4528
        %vm4595 = vcmp.gt.f32.partialorder %v4531, 0.0
        %vm4596 = vcmp.gt.f32.partialorder %v4532, 0.0
        %vm4597 = vcmp.gt.f32.partialorder %v4533, 0.0
        %vm4598 = vcmp.gt.f32.partialorder %v4534, 0.0
        %vm4599 = vcmp.gt.f32.partialorder %v4535, 0.0
        %vm4600 = vcmp.gt.f32.partialorder %v4536, 0.0
        %vm4601 = vcmp.gt.f32.partialorder %v4537, 0.0
        %vm4602 = vcmp.gt.f32.partialorder %v4538, 0.0
        %vm4603 = vcmp.gt.f32.partialorder %v4539, 0.0
        %vm4604 = vcmp.gt.f32.partialorder %v4540, 0.0
        %vm4605 = vcmp.gt.f32.partialorder %v4541, 0.0
        %vm4606 = vcmp.gt.f32.partialorder %v4542, 0.0
        %vm4607 = vcmp.gt.f32.partialorder %v4543, 0.0
        %vm4608 = vcmp.gt.f32.partialorder %v4544, 0.0
        %vm4609 = vcmp.gt.f32.partialorder %v4545, 0.0
        %vm4610 = vcmp.gt.f32.partialorder %v4546, 0.0
        %vm4611 = vcmp.gt.f32.partialorder %v4547, 0.0
        %vm4612 = vcmp.gt.f32.partialorder %v4548, 0.0
        %vm4613 = vcmp.gt.f32.partialorder %v4549, 0.0
        %vm4614 = vcmp.gt.f32.partialorder %v4550, 0.0
        %vm4615 = vcmp.gt.f32.partialorder %v4551, 0.0
        %vm4616 = vcmp.gt.f32.partialorder %v4552, 0.0
        %vm4617 = vcmp.gt.f32.partialorder %v4553, 0.0
        %vm4618 = vcmp.gt.f32.partialorder %v4554, 0.0
        %vm4619 = vcmp.gt.f32.partialorder %v4555, 0.0
        %vm4620 = vcmp.gt.f32.partialorder %v4556, 0.0
        %vm4621 = vcmp.gt.f32.partialorder %v4557, 0.0
        %vm4622 = vcmp.gt.f32.partialorder %v4558, 0.0
        %vm4623 = vcmp.gt.f32.partialorder %v4559, 0.0
        %vm4624 = vcmp.gt.f32.partialorder %v4560, 0.0
        %vm4625 = vcmp.gt.f32.partialorder %v4561, 0.0
        %vm4626 = vcmp.gt.f32.partialorder %v4562, 0.0
        %vm4627 = vcmp.gt.f32.partialorder %v4563, 0.0
        %vm4628 = vcmp.gt.f32.partialorder %v4564, 0.0
        %vm4629 = vcmp.gt.f32.partialorder %v4565, 0.0
        %vm4630 = vcmp.gt.f32.partialorder %v4566, 0.0
        %vm4631 = vcmp.gt.f32.partialorder %v4567, 0.0
        %vm4632 = vcmp.gt.f32.partialorder %v4568, 0.0
        %vm4633 = vcmp.gt.f32.partialorder %v4569, 0.0
        %vm4634 = vcmp.gt.f32.partialorder %v4570, 0.0
        %vm4635 = vcmp.gt.f32.partialorder %v4571, 0.0
        %vm4636 = vcmp.gt.f32.partialorder %v4572, 0.0
        %vm4637 = vcmp.gt.f32.partialorder %v4573, 0.0
        %vm4638 = vcmp.gt.f32.partialorder %v4574, 0.0
        %vm4639 = vcmp.gt.f32.partialorder %v4575, 0.0
        %vm4640 = vcmp.gt.f32.partialorder %v4576, 0.0
        %vm4641 = vcmp.gt.f32.partialorder %v4577, 0.0
        %vm4642 = vcmp.gt.f32.partialorder %v4578, 0.0
        %vm4643 = vcmp.gt.f32.partialorder %v4579, 0.0
        %vm4644 = vcmp.gt.f32.partialorder %v4580, 0.0
        %vm4645 = vcmp.gt.f32.partialorder %v4581, 0.0
        %vm4646 = vcmp.gt.f32.partialorder %v4582, 0.0
        %vm4647 = vcmp.gt.f32.partialorder %v4583, 0.0
        %vm4648 = vcmp.gt.f32.partialorder %v4584, 0.0
        %vm4649 = vcmp.gt.f32.partialorder %v4585, 0.0
        %vm4650 = vcmp.gt.f32.partialorder %v4586, 0.0
        %vm4651 = vcmp.gt.f32.partialorder %v4587, 0.0
        %vm4652 = vcmp.gt.f32.partialorder %v4588, 0.0
        %vm4653 = vcmp.gt.f32.partialorder %v4589, 0.0
        %vm4654 = vcmp.gt.f32.partialorder %v4590, 0.0
        %vm4655 = vcmp.gt.f32.partialorder %v4591, 0.0
        %vm4656 = vcmp.gt.f32.partialorder %v4592, 0.0
        %vm4657 = vcmp.gt.f32.partialorder %v4593, 0.0
        %vm4658 = vcmp.gt.f32.partialorder %v4594, 0.0
        %v4659 = vmul.f32 %v4531, 0.2
        %v4660 = vmul.f32 %v4532, 0.2
        %v4661 = vmul.f32 %v4533, 0.2
        %v4662 = vmul.f32 %v4534, 0.2
        %v4663 = vmul.f32 %v4535, 0.2
        %v4664 = vmul.f32 %v4536, 0.2
        %v4665 = vmul.f32 %v4537, 0.2
        %v4666 = vmul.f32 %v4538, 0.2
        %v4667 = vmul.f32 %v4539, 0.2
        %v4668 = vmul.f32 %v4540, 0.2
        %v4669 = vmul.f32 %v4541, 0.2
        %v4670 = vmul.f32 %v4542, 0.2
        %v4671 = vmul.f32 %v4543, 0.2
        %v4672 = vmul.f32 %v4544, 0.2
        %v4673 = vmul.f32 %v4545, 0.2
        %v4674 = vmul.f32 %v4546, 0.2
        %v4675 = vmul.f32 %v4547, 0.2
        %v4676 = vmul.f32 %v4548, 0.2
        %v4677 = vmul.f32 %v4549, 0.2
        %v4678 = vmul.f32 %v4550, 0.2
        %v4679 = vmul.f32 %v4551, 0.2
        %v4680 = vmul.f32 %v4552, 0.2
        %v4681 = vmul.f32 %v4553, 0.2
        %v4682 = vmul.f32 %v4554, 0.2
        %v4683 = vmul.f32 %v4555, 0.2
        %v4684 = vmul.f32 %v4556, 0.2
        %v4685 = vmul.f32 %v4557, 0.2
        %v4686 = vmul.f32 %v4558, 0.2
        %v4687 = vmul.f32 %v4559, 0.2
        %v4688 = vmul.f32 %v4560, 0.2
        %v4689 = vmul.f32 %v4561, 0.2
        %v4690 = vmul.f32 %v4562, 0.2
        %v4691 = vmul.f32 %v4563, 0.2
        %v4692 = vmul.f32 %v4564, 0.2
        %v4693 = vmul.f32 %v4565, 0.2
        %v4694 = vmul.f32 %v4566, 0.2
        %v4695 = vmul.f32 %v4567, 0.2
        %v4696 = vmul.f32 %v4568, 0.2
        %v4697 = vmul.f32 %v4569, 0.2
        %v4698 = vmul.f32 %v4570, 0.2
        %v4699 = vmul.f32 %v4571, 0.2
        %v4700 = vmul.f32 %v4572, 0.2
        %v4701 = vmul.f32 %v4573, 0.2
        %v4702 = vmul.f32 %v4574, 0.2
        %v4703 = vmul.f32 %v4575, 0.2
        %v4704 = vmul.f32 %v4576, 0.2
        %v4705 = vmul.f32 %v4577, 0.2
        %v4706 = vmul.f32 %v4578, 0.2
        %v4707 = vmul.f32 %v4579, 0.2
        %v4708 = vmul.f32 %v4580, 0.2
        %v4709 = vmul.f32 %v4581, 0.2
        %v4710 = vmul.f32 %v4582, 0.2
        %v4711 = vmul.f32 %v4583, 0.2
        %v4712 = vmul.f32 %v4584, 0.2
        %v4713 = vmul.f32 %v4585, 0.2
        %v4714 = vmul.f32 %v4586, 0.2
        %v4715 = vmul.f32 %v4587, 0.2
        %v4716 = vmul.f32 %v4588, 0.2
        %v4717 = vmul.f32 %v4589, 0.2
        %v4718 = vmul.f32 %v4590, 0.2
        %v4719 = vmul.f32 %v4591, 0.2
        %v4720 = vmul.f32 %v4592, 0.2
        %v4721 = vmul.f32 %v4593, 0.2
        %v4722 = vmul.f32 %v4594, 0.2
        %v4723 = vsel %vm4595, %v4531, %v4659
        %v4724 = vsel %vm4596, %v4532, %v4660
        %v4725 = vsel %vm4597, %v4533, %v4661
        %v4726 = vsel %vm4598, %v4534, %v4662
        %v4727 = vsel %vm4599, %v4535, %v4663
        %v4728 = vsel %vm4600, %v4536, %v4664
        %v4729 = vsel %vm4601, %v4537, %v4665
        %v4730 = vsel %vm4602, %v4538, %v4666
        %v4731 = vsel %vm4603, %v4539, %v4667
        %v4732 = vsel %vm4604, %v4540, %v4668
        %v4733 = vsel %vm4605, %v4541, %v4669
        %v4734 = vsel %vm4606, %v4542, %v4670
        %v4735 = vsel %vm4607, %v4543, %v4671
        %v4736 = vsel %vm4608, %v4544, %v4672
        %v4737 = vsel %vm4609, %v4545, %v4673
        %v4738 = vsel %vm4610, %v4546, %v4674
        %v4739 = vsel %vm4611, %v4547, %v4675
        %v4740 = vsel %vm4612, %v4548, %v4676
        %v4741 = vsel %vm4613, %v4549, %v4677
        %v4742 = vsel %vm4614, %v4550, %v4678
        %v4743 = vsel %vm4615, %v4551, %v4679
        %v4744 = vsel %vm4616, %v4552, %v4680
        %v4745 = vsel %vm4617, %v4553, %v4681
        %v4746 = vsel %vm4618, %v4554, %v4682
        %v4747 = vsel %vm4619, %v4555, %v4683
        %v4748 = vsel %vm4620, %v4556, %v4684
        %v4749 = vsel %vm4621, %v4557, %v4685
        %v4750 = vsel %vm4622, %v4558, %v4686
        %v4751 = vsel %vm4623, %v4559, %v4687
        %v4752 = vsel %vm4624, %v4560, %v4688
        %v4753 = vsel %vm4625, %v4561, %v4689
        %v4754 = vsel %vm4626, %v4562, %v4690
        %v4755 = vsel %vm4627, %v4563, %v4691
        %v4756 = vsel %vm4628, %v4564, %v4692
        %v4757 = vsel %vm4629, %v4565, %v4693
        %v4758 = vsel %vm4630, %v4566, %v4694
        %v4759 = vsel %vm4631, %v4567, %v4695
        %v4760 = vsel %vm4632, %v4568, %v4696
        %v4761 = vsel %vm4633, %v4569, %v4697
        %v4762 = vsel %vm4634, %v4570, %v4698
        %v4763 = vsel %vm4635, %v4571, %v4699
        %v4764 = vsel %vm4636, %v4572, %v4700
        %v4765 = vsel %vm4637, %v4573, %v4701
        %v4766 = vsel %vm4638, %v4574, %v4702
        %v4767 = vsel %vm4639, %v4575, %v4703
        %v4768 = vsel %vm4640, %v4576, %v4704
        %v4769 = vsel %vm4641, %v4577, %v4705
        %v4770 = vsel %vm4642, %v4578, %v4706
        %v4771 = vsel %vm4643, %v4579, %v4707
        %v4772 = vsel %vm4644, %v4580, %v4708
        %v4773 = vsel %vm4645, %v4581, %v4709
        %v4774 = vsel %vm4646, %v4582, %v4710
        %v4775 = vsel %vm4647, %v4583, %v4711
        %v4776 = vsel %vm4648, %v4584, %v4712
        %v4777 = vsel %vm4649, %v4585, %v4713
        %v4778 = vsel %vm4650, %v4586, %v4714
        %v4779 = vsel %vm4651, %v4587, %v4715
        %v4780 = vsel %vm4652, %v4588, %v4716
        %v4781 = vsel %vm4653, %v4589, %v4717
        %v4782 = vsel %vm4654, %v4590, %v4718
        %v4783 = vsel %vm4655, %v4591, %v4719
        %v4784 = vsel %vm4656, %v4592, %v4720
        %v4785 = vsel %vm4657, %v4593, %v4721
        %v4786 = vsel %vm4658, %v4594, %v4722
        %v4787 = vlaneseq
        %v4788 = vshrl.u32 %v4787, 7
        %v4789 = vsub.s32 0, %v4788
        %v4790 = vrot.slane %v4165, %v4789
        %4792 = vbcast.lane.b32.xlu0 %v4790, 256
        %v4793 = vpop.permute.xlu0 %4792
        %s4795 = sor.u32 256, 8
        %4796 = vbcast.lane.b32.xlu0 %v4790, %s4795
        %v4797 = vpop.permute.xlu0 %4796
        %v4798 = vlaneseq
        %v4799 = vshrl.u32 %v4798, 7
        %v4800 = vsub.s32 1, %v4799
        %v4801 = vrot.slane %v4165, %v4800
        %4803 = vbcast.lane.b32.xlu0 %v4801, 256
        %v4804 = vpop.permute.xlu0 %4803
        %s4806 = sor.u32 256, 8
        %4807 = vbcast.lane.b32.xlu0 %v4801, %s4806
        %v4808 = vpop.permute.xlu0 %4807
        %v4809 = vlaneseq
        %v4810 = vshrl.u32 %v4809, 7
        %v4811 = vsub.s32 2, %v4810
        %v4812 = vrot.slane %v4165, %v4811
        %4814 = vbcast.lane.b32.xlu0 %v4812, 256
        %v4815 = vpop.permute.xlu0 %4814
        %s4817 = sor.u32 256, 8
        %4818 = vbcast.lane.b32.xlu0 %v4812, %s4817
        %v4819 = vpop.permute.xlu0 %4818
        %v4820 = vlaneseq
        %v4821 = vshrl.u32 %v4820, 7
        %v4822 = vsub.s32 3, %v4821
        %v4823 = vrot.slane %v4165, %v4822
        %4825 = vbcast.lane.b32.xlu0 %v4823, 256
        %v4826 = vpop.permute.xlu0 %4825
        %s4828 = sor.u32 256, 8
        %4829 = vbcast.lane.b32.xlu0 %v4823, %s4828
        %v4830 = vpop.permute.xlu0 %4829
        %v4831 = vlaneseq
        %v4832 = vshrl.u32 %v4831, 7
        %v4833 = vsub.s32 4, %v4832
        %v4834 = vrot.slane %v4165, %v4833
        %4836 = vbcast.lane.b32.xlu0 %v4834, 256
        %v4837 = vpop.permute.xlu0 %4836
        %s4839 = sor.u32 256, 8
        %4840 = vbcast.lane.b32.xlu0 %v4834, %s4839
        %v4841 = vpop.permute.xlu0 %4840
        %v4842 = vlaneseq
        %v4843 = vshrl.u32 %v4842, 7
        %v4844 = vsub.s32 5, %v4843
        %v4845 = vrot.slane %v4165, %v4844
        %4847 = vbcast.lane.b32.xlu0 %v4845, 256
        %v4848 = vpop.permute.xlu0 %4847
        %s4850 = sor.u32 256, 8
        %4851 = vbcast.lane.b32.xlu0 %v4845, %s4850
        %v4852 = vpop.permute.xlu0 %4851
        %v4853 = vlaneseq
        %v4854 = vshrl.u32 %v4853, 7
        %v4855 = vsub.s32 6, %v4854
        %v4856 = vrot.slane %v4165, %v4855
        %4858 = vbcast.lane.b32.xlu0 %v4856, 256
        %v4859 = vpop.permute.xlu0 %4858
        %s4861 = sor.u32 256, 8
        %4862 = vbcast.lane.b32.xlu0 %v4856, %s4861
        %v4863 = vpop.permute.xlu0 %4862
        %v4864 = vlaneseq
        %v4865 = vshrl.u32 %v4864, 7
        %v4866 = vsub.s32 7, %v4865
        %v4867 = vrot.slane %v4165, %v4866
        %4869 = vbcast.lane.b32.xlu0 %v4867, 256
        %v4870 = vpop.permute.xlu0 %4869
        %s4872 = sor.u32 256, 8
        %4873 = vbcast.lane.b32.xlu0 %v4867, %s4872
        %v4874 = vpop.permute.xlu0 %4873
        %v4875 = vlaneseq
        %v4876 = vshrl.u32 %v4875, 7
        %v4877 = vsub.s32 0, %v4876
        %v4878 = vrot.slane %v4166, %v4877
        %4880 = vbcast.lane.b32.xlu0 %v4878, 256
        %v4881 = vpop.permute.xlu0 %4880
        %s4883 = sor.u32 256, 8
        %4884 = vbcast.lane.b32.xlu0 %v4878, %s4883
        %v4885 = vpop.permute.xlu0 %4884
        %v4886 = vlaneseq
        %v4887 = vshrl.u32 %v4886, 7
        %v4888 = vsub.s32 1, %v4887
        %v4889 = vrot.slane %v4166, %v4888
        %4891 = vbcast.lane.b32.xlu0 %v4889, 256
        %v4892 = vpop.permute.xlu0 %4891
        %s4894 = sor.u32 256, 8
        %4895 = vbcast.lane.b32.xlu0 %v4889, %s4894
        %v4896 = vpop.permute.xlu0 %4895
        %v4897 = vlaneseq
        %v4898 = vshrl.u32 %v4897, 7
        %v4899 = vsub.s32 2, %v4898
        %v4900 = vrot.slane %v4166, %v4899
        %4902 = vbcast.lane.b32.xlu0 %v4900, 256
        %v4903 = vpop.permute.xlu0 %4902
        %s4905 = sor.u32 256, 8
        %4906 = vbcast.lane.b32.xlu0 %v4900, %s4905
        %v4907 = vpop.permute.xlu0 %4906
        %v4908 = vlaneseq
        %v4909 = vshrl.u32 %v4908, 7
        %v4910 = vsub.s32 3, %v4909
        %v4911 = vrot.slane %v4166, %v4910
        %4913 = vbcast.lane.b32.xlu0 %v4911, 256
        %v4914 = vpop.permute.xlu0 %4913
        %s4916 = sor.u32 256, 8
        %4917 = vbcast.lane.b32.xlu0 %v4911, %s4916
        %v4918 = vpop.permute.xlu0 %4917
        %v4919 = vlaneseq
        %v4920 = vshrl.u32 %v4919, 7
        %v4921 = vsub.s32 4, %v4920
        %v4922 = vrot.slane %v4166, %v4921
        %4924 = vbcast.lane.b32.xlu0 %v4922, 256
        %v4925 = vpop.permute.xlu0 %4924
        %s4927 = sor.u32 256, 8
        %4928 = vbcast.lane.b32.xlu0 %v4922, %s4927
        %v4929 = vpop.permute.xlu0 %4928
        %v4930 = vlaneseq
        %v4931 = vshrl.u32 %v4930, 7
        %v4932 = vsub.s32 5, %v4931
        %v4933 = vrot.slane %v4166, %v4932
        %4935 = vbcast.lane.b32.xlu0 %v4933, 256
        %v4936 = vpop.permute.xlu0 %4935
        %s4938 = sor.u32 256, 8
        %4939 = vbcast.lane.b32.xlu0 %v4933, %s4938
        %v4940 = vpop.permute.xlu0 %4939
        %v4941 = vlaneseq
        %v4942 = vshrl.u32 %v4941, 7
        %v4943 = vsub.s32 6, %v4942
        %v4944 = vrot.slane %v4166, %v4943
        %4946 = vbcast.lane.b32.xlu0 %v4944, 256
        %v4947 = vpop.permute.xlu0 %4946
        %s4949 = sor.u32 256, 8
        %4950 = vbcast.lane.b32.xlu0 %v4944, %s4949
        %v4951 = vpop.permute.xlu0 %4950
        %v4952 = vlaneseq
        %v4953 = vshrl.u32 %v4952, 7
        %v4954 = vsub.s32 7, %v4953
        %v4955 = vrot.slane %v4166, %v4954
        %4957 = vbcast.lane.b32.xlu0 %v4955, 256
        %v4958 = vpop.permute.xlu0 %4957
        %s4960 = sor.u32 256, 8
        %4961 = vbcast.lane.b32.xlu0 %v4955, %s4960
        %v4962 = vpop.permute.xlu0 %4961
        %v4963 = vlaneseq
        %v4964 = vshrl.u32 %v4963, 7
        %v4965 = vsub.s32 0, %v4964
        %v4966 = vrot.slane %v4167, %v4965
        %4968 = vbcast.lane.b32.xlu0 %v4966, 256
        %v4969 = vpop.permute.xlu0 %4968
        %s4971 = sor.u32 256, 8
        %4972 = vbcast.lane.b32.xlu0 %v4966, %s4971
        %v4973 = vpop.permute.xlu0 %4972
        %v4974 = vlaneseq
        %v4975 = vshrl.u32 %v4974, 7
        %v4976 = vsub.s32 1, %v4975
        %v4977 = vrot.slane %v4167, %v4976
        %4979 = vbcast.lane.b32.xlu0 %v4977, 256
        %v4980 = vpop.permute.xlu0 %4979
        %s4982 = sor.u32 256, 8
        %4983 = vbcast.lane.b32.xlu0 %v4977, %s4982
        %v4984 = vpop.permute.xlu0 %4983
        %v4985 = vlaneseq
        %v4986 = vshrl.u32 %v4985, 7
        %v4987 = vsub.s32 2, %v4986
        %v4988 = vrot.slane %v4167, %v4987
        %4990 = vbcast.lane.b32.xlu0 %v4988, 256
        %v4991 = vpop.permute.xlu0 %4990
        %s4993 = sor.u32 256, 8
        %4994 = vbcast.lane.b32.xlu0 %v4988, %s4993
        %v4995 = vpop.permute.xlu0 %4994
        %v4996 = vlaneseq
        %v4997 = vshrl.u32 %v4996, 7
        %v4998 = vsub.s32 3, %v4997
        %v4999 = vrot.slane %v4167, %v4998
        %5001 = vbcast.lane.b32.xlu0 %v4999, 256
        %v5002 = vpop.permute.xlu0 %5001
        %s5004 = sor.u32 256, 8
        %5005 = vbcast.lane.b32.xlu0 %v4999, %s5004
        %v5006 = vpop.permute.xlu0 %5005
        %v5007 = vlaneseq
        %v5008 = vshrl.u32 %v5007, 7
        %v5009 = vsub.s32 4, %v5008
        %v5010 = vrot.slane %v4167, %v5009
        %5012 = vbcast.lane.b32.xlu0 %v5010, 256
        %v5013 = vpop.permute.xlu0 %5012
        %s5015 = sor.u32 256, 8
        %5016 = vbcast.lane.b32.xlu0 %v5010, %s5015
        %v5017 = vpop.permute.xlu0 %5016
        %v5018 = vlaneseq
        %v5019 = vshrl.u32 %v5018, 7
        %v5020 = vsub.s32 5, %v5019
        %v5021 = vrot.slane %v4167, %v5020
        %5023 = vbcast.lane.b32.xlu0 %v5021, 256
        %v5024 = vpop.permute.xlu0 %5023
        %s5026 = sor.u32 256, 8
        %5027 = vbcast.lane.b32.xlu0 %v5021, %s5026
        %v5028 = vpop.permute.xlu0 %5027
        %v5029 = vlaneseq
        %v5030 = vshrl.u32 %v5029, 7
        %v5031 = vsub.s32 6, %v5030
        %v5032 = vrot.slane %v4167, %v5031
        %5034 = vbcast.lane.b32.xlu0 %v5032, 256
        %v5035 = vpop.permute.xlu0 %5034
        %s5037 = sor.u32 256, 8
        %5038 = vbcast.lane.b32.xlu0 %v5032, %s5037
        %v5039 = vpop.permute.xlu0 %5038
        %v5040 = vlaneseq
        %v5041 = vshrl.u32 %v5040, 7
        %v5042 = vsub.s32 7, %v5041
        %v5043 = vrot.slane %v4167, %v5042
        %5045 = vbcast.lane.b32.xlu0 %v5043, 256
        %v5046 = vpop.permute.xlu0 %5045
        %s5048 = sor.u32 256, 8
        %5049 = vbcast.lane.b32.xlu0 %v5043, %s5048
        %v5050 = vpop.permute.xlu0 %5049
        %v5051 = vlaneseq
        %v5052 = vshrl.u32 %v5051, 7
        %v5053 = vsub.s32 0, %v5052
        %v5054 = vrot.slane %v4168, %v5053
        %5056 = vbcast.lane.b32.xlu0 %v5054, 256
        %v5057 = vpop.permute.xlu0 %5056
        %s5059 = sor.u32 256, 8
        %5060 = vbcast.lane.b32.xlu0 %v5054, %s5059
        %v5061 = vpop.permute.xlu0 %5060
        %v5062 = vlaneseq
        %v5063 = vshrl.u32 %v5062, 7
        %v5064 = vsub.s32 1, %v5063
        %v5065 = vrot.slane %v4168, %v5064
        %5067 = vbcast.lane.b32.xlu0 %v5065, 256
        %v5068 = vpop.permute.xlu0 %5067
        %s5070 = sor.u32 256, 8
        %5071 = vbcast.lane.b32.xlu0 %v5065, %s5070
        %v5072 = vpop.permute.xlu0 %5071
        %v5073 = vlaneseq
        %v5074 = vshrl.u32 %v5073, 7
        %v5075 = vsub.s32 2, %v5074
        %v5076 = vrot.slane %v4168, %v5075
        %5078 = vbcast.lane.b32.xlu0 %v5076, 256
        %v5079 = vpop.permute.xlu0 %5078
        %s5081 = sor.u32 256, 8
        %5082 = vbcast.lane.b32.xlu0 %v5076, %s5081
        %v5083 = vpop.permute.xlu0 %5082
        %v5084 = vlaneseq
        %v5085 = vshrl.u32 %v5084, 7
        %v5086 = vsub.s32 3, %v5085
        %v5087 = vrot.slane %v4168, %v5086
        %5089 = vbcast.lane.b32.xlu0 %v5087, 256
        %v5090 = vpop.permute.xlu0 %5089
        %s5092 = sor.u32 256, 8
        %5093 = vbcast.lane.b32.xlu0 %v5087, %s5092
        %v5094 = vpop.permute.xlu0 %5093
        %v5095 = vlaneseq
        %v5096 = vshrl.u32 %v5095, 7
        %v5097 = vsub.s32 4, %v5096
        %v5098 = vrot.slane %v4168, %v5097
        %5100 = vbcast.lane.b32.xlu0 %v5098, 256
        %v5101 = vpop.permute.xlu0 %5100
        %s5103 = sor.u32 256, 8
        %5104 = vbcast.lane.b32.xlu0 %v5098, %s5103
        %v5105 = vpop.permute.xlu0 %5104
        %v5106 = vlaneseq
        %v5107 = vshrl.u32 %v5106, 7
        %v5108 = vsub.s32 5, %v5107
        %v5109 = vrot.slane %v4168, %v5108
        %5111 = vbcast.lane.b32.xlu0 %v5109, 256
        %v5112 = vpop.permute.xlu0 %5111
        %s5114 = sor.u32 256, 8
        %5115 = vbcast.lane.b32.xlu0 %v5109, %s5114
        %v5116 = vpop.permute.xlu0 %5115
        %v5117 = vlaneseq
        %v5118 = vshrl.u32 %v5117, 7
        %v5119 = vsub.s32 6, %v5118
        %v5120 = vrot.slane %v4168, %v5119
        %5122 = vbcast.lane.b32.xlu0 %v5120, 256
        %v5123 = vpop.permute.xlu0 %5122
        %s5125 = sor.u32 256, 8
        %5126 = vbcast.lane.b32.xlu0 %v5120, %s5125
        %v5127 = vpop.permute.xlu0 %5126
        %v5128 = vlaneseq
        %v5129 = vshrl.u32 %v5128, 7
        %v5130 = vsub.s32 7, %v5129
        %v5131 = vrot.slane %v4168, %v5130
        %5133 = vbcast.lane.b32.xlu0 %v5131, 256
        %v5134 = vpop.permute.xlu0 %5133
        %s5136 = sor.u32 256, 8
        %5137 = vbcast.lane.b32.xlu0 %v5131, %s5136
        %v5138 = vpop.permute.xlu0 %5137
        %vm5139 = vcmp.gt.f32.partialorder %v4793, 0.0
        %vm5140 = vcmp.gt.f32.partialorder %v4797, 0.0
        %vm5141 = vcmp.gt.f32.partialorder %v4804, 0.0
        %vm5142 = vcmp.gt.f32.partialorder %v4808, 0.0
        %vm5143 = vcmp.gt.f32.partialorder %v4815, 0.0
        %vm5144 = vcmp.gt.f32.partialorder %v4819, 0.0
        %vm5145 = vcmp.gt.f32.partialorder %v4826, 0.0
        %vm5146 = vcmp.gt.f32.partialorder %v4830, 0.0
        %vm5147 = vcmp.gt.f32.partialorder %v4837, 0.0
        %vm5148 = vcmp.gt.f32.partialorder %v4841, 0.0
        %vm5149 = vcmp.gt.f32.partialorder %v4848, 0.0
        %vm5150 = vcmp.gt.f32.partialorder %v4852, 0.0
        %vm5151 = vcmp.gt.f32.partialorder %v4859, 0.0
        %vm5152 = vcmp.gt.f32.partialorder %v4863, 0.0
        %vm5153 = vcmp.gt.f32.partialorder %v4870, 0.0
        %vm5154 = vcmp.gt.f32.partialorder %v4874, 0.0
        %vm5155 = vcmp.gt.f32.partialorder %v4881, 0.0
        %vm5156 = vcmp.gt.f32.partialorder %v4885, 0.0
        %vm5157 = vcmp.gt.f32.partialorder %v4892, 0.0
        %vm5158 = vcmp.gt.f32.partialorder %v4896, 0.0
        %vm5159 = vcmp.gt.f32.partialorder %v4903, 0.0
        %vm5160 = vcmp.gt.f32.partialorder %v4907, 0.0
        %vm5161 = vcmp.gt.f32.partialorder %v4914, 0.0
        %vm5162 = vcmp.gt.f32.partialorder %v4918, 0.0
        %vm5163 = vcmp.gt.f32.partialorder %v4925, 0.0
        %vm5164 = vcmp.gt.f32.partialorder %v4929, 0.0
        %vm5165 = vcmp.gt.f32.partialorder %v4936, 0.0
        %vm5166 = vcmp.gt.f32.partialorder %v4940, 0.0
        %vm5167 = vcmp.gt.f32.partialorder %v4947, 0.0
        %vm5168 = vcmp.gt.f32.partialorder %v4951, 0.0
        %vm5169 = vcmp.gt.f32.partialorder %v4958, 0.0
        %vm5170 = vcmp.gt.f32.partialorder %v4962, 0.0
        %vm5171 = vcmp.gt.f32.partialorder %v4969, 0.0
        %vm5172 = vcmp.gt.f32.partialorder %v4973, 0.0
        %vm5173 = vcmp.gt.f32.partialorder %v4980, 0.0
        %vm5174 = vcmp.gt.f32.partialorder %v4984, 0.0
        %vm5175 = vcmp.gt.f32.partialorder %v4991, 0.0
        %vm5176 = vcmp.gt.f32.partialorder %v4995, 0.0
        %vm5177 = vcmp.gt.f32.partialorder %v5002, 0.0
        %vm5178 = vcmp.gt.f32.partialorder %v5006, 0.0
        %vm5179 = vcmp.gt.f32.partialorder %v5013, 0.0
        %vm5180 = vcmp.gt.f32.partialorder %v5017, 0.0
        %vm5181 = vcmp.gt.f32.partialorder %v5024, 0.0
        %vm5182 = vcmp.gt.f32.partialorder %v5028, 0.0
        %vm5183 = vcmp.gt.f32.partialorder %v5035, 0.0
        %vm5184 = vcmp.gt.f32.partialorder %v5039, 0.0
        %vm5185 = vcmp.gt.f32.partialorder %v5046, 0.0
        %vm5186 = vcmp.gt.f32.partialorder %v5050, 0.0
        %vm5187 = vcmp.gt.f32.partialorder %v5057, 0.0
        %vm5188 = vcmp.gt.f32.partialorder %v5061, 0.0
        %vm5189 = vcmp.gt.f32.partialorder %v5068, 0.0
        %vm5190 = vcmp.gt.f32.partialorder %v5072, 0.0
        %vm5191 = vcmp.gt.f32.partialorder %v5079, 0.0
        %vm5192 = vcmp.gt.f32.partialorder %v5083, 0.0
        %vm5193 = vcmp.gt.f32.partialorder %v5090, 0.0
        %vm5194 = vcmp.gt.f32.partialorder %v5094, 0.0
        %vm5195 = vcmp.gt.f32.partialorder %v5101, 0.0
        %vm5196 = vcmp.gt.f32.partialorder %v5105, 0.0
        %vm5197 = vcmp.gt.f32.partialorder %v5112, 0.0
        %vm5198 = vcmp.gt.f32.partialorder %v5116, 0.0
        %vm5199 = vcmp.gt.f32.partialorder %v5123, 0.0
        %vm5200 = vcmp.gt.f32.partialorder %v5127, 0.0
        %vm5201 = vcmp.gt.f32.partialorder %v5134, 0.0
        %vm5202 = vcmp.gt.f32.partialorder %v5138, 0.0
        %v5203 = vsel %vm5139, 1, 0
        %v5204 = vsel %vm5140, 1, 0
        %v5205 = vsel %vm5141, 1, 0
        %v5206 = vsel %vm5142, 1, 0
        %v5207 = vsel %vm5143, 1, 0
        %v5208 = vsel %vm5144, 1, 0
        %v5209 = vsel %vm5145, 1, 0
        %v5210 = vsel %vm5146, 1, 0
        %v5211 = vsel %vm5147, 1, 0
        %v5212 = vsel %vm5148, 1, 0
        %v5213 = vsel %vm5149, 1, 0
        %v5214 = vsel %vm5150, 1, 0
        %v5215 = vsel %vm5151, 1, 0
        %v5216 = vsel %vm5152, 1, 0
        %v5217 = vsel %vm5153, 1, 0
        %v5218 = vsel %vm5154, 1, 0
        %v5219 = vsel %vm5155, 1, 0
        %v5220 = vsel %vm5156, 1, 0
        %v5221 = vsel %vm5157, 1, 0
        %v5222 = vsel %vm5158, 1, 0
        %v5223 = vsel %vm5159, 1, 0
        %v5224 = vsel %vm5160, 1, 0
        %v5225 = vsel %vm5161, 1, 0
        %v5226 = vsel %vm5162, 1, 0
        %v5227 = vsel %vm5163, 1, 0
        %v5228 = vsel %vm5164, 1, 0
        %v5229 = vsel %vm5165, 1, 0
        %v5230 = vsel %vm5166, 1, 0
        %v5231 = vsel %vm5167, 1, 0
        %v5232 = vsel %vm5168, 1, 0
        %v5233 = vsel %vm5169, 1, 0
        %v5234 = vsel %vm5170, 1, 0
        %v5235 = vsel %vm5171, 1, 0
        %v5236 = vsel %vm5172, 1, 0
        %v5237 = vsel %vm5173, 1, 0
        %v5238 = vsel %vm5174, 1, 0
        %v5239 = vsel %vm5175, 1, 0
        %v5240 = vsel %vm5176, 1, 0
        %v5241 = vsel %vm5177, 1, 0
        %v5242 = vsel %vm5178, 1, 0
        %v5243 = vsel %vm5179, 1, 0
        %v5244 = vsel %vm5180, 1, 0
        %v5245 = vsel %vm5181, 1, 0
        %v5246 = vsel %vm5182, 1, 0
        %v5247 = vsel %vm5183, 1, 0
        %v5248 = vsel %vm5184, 1, 0
        %v5249 = vsel %vm5185, 1, 0
        %v5250 = vsel %vm5186, 1, 0
        %v5251 = vsel %vm5187, 1, 0
        %v5252 = vsel %vm5188, 1, 0
        %v5253 = vsel %vm5189, 1, 0
        %v5254 = vsel %vm5190, 1, 0
        %v5255 = vsel %vm5191, 1, 0
        %v5256 = vsel %vm5192, 1, 0
        %v5257 = vsel %vm5193, 1, 0
        %v5258 = vsel %vm5194, 1, 0
        %v5259 = vsel %vm5195, 1, 0
        %v5260 = vsel %vm5196, 1, 0
        %v5261 = vsel %vm5197, 1, 0
        %v5262 = vsel %vm5198, 1, 0
        %v5263 = vsel %vm5199, 1, 0
        %v5264 = vsel %vm5200, 1, 0
        %v5265 = vsel %vm5201, 1, 0
        %v5266 = vsel %vm5202, 1, 0
        %vm5267 = vcmp.eq.s32.totalorder %v5203, 1
        %vm5268 = vcmp.eq.s32.totalorder %v5204, 1
        %vm5269 = vcmp.eq.s32.totalorder %v5205, 1
        %vm5270 = vcmp.eq.s32.totalorder %v5206, 1
        %vm5271 = vcmp.eq.s32.totalorder %v5207, 1
        %vm5272 = vcmp.eq.s32.totalorder %v5208, 1
        %vm5273 = vcmp.eq.s32.totalorder %v5209, 1
        %vm5274 = vcmp.eq.s32.totalorder %v5210, 1
        %vm5275 = vcmp.eq.s32.totalorder %v5211, 1
        %vm5276 = vcmp.eq.s32.totalorder %v5212, 1
        %vm5277 = vcmp.eq.s32.totalorder %v5213, 1
        %vm5278 = vcmp.eq.s32.totalorder %v5214, 1
        %vm5279 = vcmp.eq.s32.totalorder %v5215, 1
        %vm5280 = vcmp.eq.s32.totalorder %v5216, 1
        %vm5281 = vcmp.eq.s32.totalorder %v5217, 1
        %vm5282 = vcmp.eq.s32.totalorder %v5218, 1
        %vm5283 = vcmp.eq.s32.totalorder %v5219, 1
        %vm5284 = vcmp.eq.s32.totalorder %v5220, 1
        %vm5285 = vcmp.eq.s32.totalorder %v5221, 1
        %vm5286 = vcmp.eq.s32.totalorder %v5222, 1
        %vm5287 = vcmp.eq.s32.totalorder %v5223, 1
        %vm5288 = vcmp.eq.s32.totalorder %v5224, 1
        %vm5289 = vcmp.eq.s32.totalorder %v5225, 1
        %vm5290 = vcmp.eq.s32.totalorder %v5226, 1
        %vm5291 = vcmp.eq.s32.totalorder %v5227, 1
        %vm5292 = vcmp.eq.s32.totalorder %v5228, 1
        %vm5293 = vcmp.eq.s32.totalorder %v5229, 1
        %vm5294 = vcmp.eq.s32.totalorder %v5230, 1
        %vm5295 = vcmp.eq.s32.totalorder %v5231, 1
        %vm5296 = vcmp.eq.s32.totalorder %v5232, 1
        %vm5297 = vcmp.eq.s32.totalorder %v5233, 1
        %vm5298 = vcmp.eq.s32.totalorder %v5234, 1
        %vm5299 = vcmp.eq.s32.totalorder %v5235, 1
        %vm5300 = vcmp.eq.s32.totalorder %v5236, 1
        %vm5301 = vcmp.eq.s32.totalorder %v5237, 1
        %vm5302 = vcmp.eq.s32.totalorder %v5238, 1
        %vm5303 = vcmp.eq.s32.totalorder %v5239, 1
        %vm5304 = vcmp.eq.s32.totalorder %v5240, 1
        %vm5305 = vcmp.eq.s32.totalorder %v5241, 1
        %vm5306 = vcmp.eq.s32.totalorder %v5242, 1
        %vm5307 = vcmp.eq.s32.totalorder %v5243, 1
        %vm5308 = vcmp.eq.s32.totalorder %v5244, 1
        %vm5309 = vcmp.eq.s32.totalorder %v5245, 1
        %vm5310 = vcmp.eq.s32.totalorder %v5246, 1
        %vm5311 = vcmp.eq.s32.totalorder %v5247, 1
        %vm5312 = vcmp.eq.s32.totalorder %v5248, 1
        %vm5313 = vcmp.eq.s32.totalorder %v5249, 1
        %vm5314 = vcmp.eq.s32.totalorder %v5250, 1
        %vm5315 = vcmp.eq.s32.totalorder %v5251, 1
        %vm5316 = vcmp.eq.s32.totalorder %v5252, 1
        %vm5317 = vcmp.eq.s32.totalorder %v5253, 1
        %vm5318 = vcmp.eq.s32.totalorder %v5254, 1
        %vm5319 = vcmp.eq.s32.totalorder %v5255, 1
        %vm5320 = vcmp.eq.s32.totalorder %v5256, 1
        %vm5321 = vcmp.eq.s32.totalorder %v5257, 1
        %vm5322 = vcmp.eq.s32.totalorder %v5258, 1
        %vm5323 = vcmp.eq.s32.totalorder %v5259, 1
        %vm5324 = vcmp.eq.s32.totalorder %v5260, 1
        %vm5325 = vcmp.eq.s32.totalorder %v5261, 1
        %vm5326 = vcmp.eq.s32.totalorder %v5262, 1
        %vm5327 = vcmp.eq.s32.totalorder %v5263, 1
        %vm5328 = vcmp.eq.s32.totalorder %v5264, 1
        %vm5329 = vcmp.eq.s32.totalorder %v5265, 1
        %vm5330 = vcmp.eq.s32.totalorder %v5266, 1
        %v5331 = vsel %vm5267, %v4723, -1e+09
        %v5332 = vsel %vm5268, %v4724, -1e+09
        %v5333 = vsel %vm5269, %v4725, -1e+09
        %v5334 = vsel %vm5270, %v4726, -1e+09
        %v5335 = vsel %vm5271, %v4727, -1e+09
        %v5336 = vsel %vm5272, %v4728, -1e+09
        %v5337 = vsel %vm5273, %v4729, -1e+09
        %v5338 = vsel %vm5274, %v4730, -1e+09
        %v5339 = vsel %vm5275, %v4731, -1e+09
        %v5340 = vsel %vm5276, %v4732, -1e+09
        %v5341 = vsel %vm5277, %v4733, -1e+09
        %v5342 = vsel %vm5278, %v4734, -1e+09
        %v5343 = vsel %vm5279, %v4735, -1e+09
        %v5344 = vsel %vm5280, %v4736, -1e+09
        %v5345 = vsel %vm5281, %v4737, -1e+09
        %v5346 = vsel %vm5282, %v4738, -1e+09
        %v5347 = vsel %vm5283, %v4739, -1e+09
        %v5348 = vsel %vm5284, %v4740, -1e+09
        %v5349 = vsel %vm5285, %v4741, -1e+09
        %v5350 = vsel %vm5286, %v4742, -1e+09
        %v5351 = vsel %vm5287, %v4743, -1e+09
        %v5352 = vsel %vm5288, %v4744, -1e+09
        %v5353 = vsel %vm5289, %v4745, -1e+09
        %v5354 = vsel %vm5290, %v4746, -1e+09
        %v5355 = vsel %vm5291, %v4747, -1e+09
        %v5356 = vsel %vm5292, %v4748, -1e+09
        %v5357 = vsel %vm5293, %v4749, -1e+09
        %v5358 = vsel %vm5294, %v4750, -1e+09
        %v5359 = vsel %vm5295, %v4751, -1e+09
        %v5360 = vsel %vm5296, %v4752, -1e+09
        %v5361 = vsel %vm5297, %v4753, -1e+09
        %v5362 = vsel %vm5298, %v4754, -1e+09
        %v5363 = vsel %vm5299, %v4755, -1e+09
        %v5364 = vsel %vm5300, %v4756, -1e+09
        %v5365 = vsel %vm5301, %v4757, -1e+09
        %v5366 = vsel %vm5302, %v4758, -1e+09
        %v5367 = vsel %vm5303, %v4759, -1e+09
        %v5368 = vsel %vm5304, %v4760, -1e+09
        %v5369 = vsel %vm5305, %v4761, -1e+09
        %v5370 = vsel %vm5306, %v4762, -1e+09
        %v5371 = vsel %vm5307, %v4763, -1e+09
        %v5372 = vsel %vm5308, %v4764, -1e+09
        %v5373 = vsel %vm5309, %v4765, -1e+09
        %v5374 = vsel %vm5310, %v4766, -1e+09
        %v5375 = vsel %vm5311, %v4767, -1e+09
        %v5376 = vsel %vm5312, %v4768, -1e+09
        %v5377 = vsel %vm5313, %v4769, -1e+09
        %v5378 = vsel %vm5314, %v4770, -1e+09
        %v5379 = vsel %vm5315, %v4771, -1e+09
        %v5380 = vsel %vm5316, %v4772, -1e+09
        %v5381 = vsel %vm5317, %v4773, -1e+09
        %v5382 = vsel %vm5318, %v4774, -1e+09
        %v5383 = vsel %vm5319, %v4775, -1e+09
        %v5384 = vsel %vm5320, %v4776, -1e+09
        %v5385 = vsel %vm5321, %v4777, -1e+09
        %v5386 = vsel %vm5322, %v4778, -1e+09
        %v5387 = vsel %vm5323, %v4779, -1e+09
        %v5388 = vsel %vm5324, %v4780, -1e+09
        %v5389 = vsel %vm5325, %v4781, -1e+09
        %v5390 = vsel %vm5326, %v4782, -1e+09
        %v5391 = vsel %vm5327, %v4783, -1e+09
        %v5392 = vsel %vm5328, %v4784, -1e+09
        %v5393 = vsel %vm5329, %v4785, -1e+09
        %v5394 = vsel %vm5330, %v4786, -1e+09
        %v5395 = vsel %vm615, %v5331, -inf
        %v5396 = vsel %vm615, %v5332, -inf
        %v5397 = vmax.f32 %v5395, %v5396
        %v5398 = vrot.slane %v5397, 4
        %v5399 = vmax.f32 %v5397, %v5398
        %v5400 = vrot.slane %v5399, 2
        %v5401 = vmax.f32 %v5399, %v5400
        %v5402 = vrot.slane %v5401, 1
        %v5403 = vmax.f32 %v5401, %v5402
        %v5404 = vsel %vm615, %v5333, -inf
        %v5405 = vsel %vm615, %v5334, -inf
        %v5406 = vmax.f32 %v5404, %v5405
        %v5407 = vrot.slane %v5406, 4
        %v5408 = vmax.f32 %v5406, %v5407
        %v5409 = vrot.slane %v5408, 2
        %v5410 = vmax.f32 %v5408, %v5409
        %v5411 = vrot.slane %v5410, 1
        %v5412 = vmax.f32 %v5410, %v5411
        %v5413 = vsel %vm615, %v5335, -inf
        %v5414 = vsel %vm615, %v5336, -inf
        %v5415 = vmax.f32 %v5413, %v5414
        %v5416 = vrot.slane %v5415, 4
        %v5417 = vmax.f32 %v5415, %v5416
        %v5418 = vrot.slane %v5417, 2
        %v5419 = vmax.f32 %v5417, %v5418
        %v5420 = vrot.slane %v5419, 1
        %v5421 = vmax.f32 %v5419, %v5420
        %v5422 = vsel %vm615, %v5337, -inf
        %v5423 = vsel %vm615, %v5338, -inf
        %v5424 = vmax.f32 %v5422, %v5423
        %v5425 = vrot.slane %v5424, 4
        %v5426 = vmax.f32 %v5424, %v5425
        %v5427 = vrot.slane %v5426, 2
        %v5428 = vmax.f32 %v5426, %v5427
        %v5429 = vrot.slane %v5428, 1
        %v5430 = vmax.f32 %v5428, %v5429
        %v5431 = vsel %vm615, %v5339, -inf
        %v5432 = vsel %vm615, %v5340, -inf
        %v5433 = vmax.f32 %v5431, %v5432
        %v5434 = vrot.slane %v5433, 4
        %v5435 = vmax.f32 %v5433, %v5434
        %v5436 = vrot.slane %v5435, 2
        %v5437 = vmax.f32 %v5435, %v5436
        %v5438 = vrot.slane %v5437, 1
        %v5439 = vmax.f32 %v5437, %v5438
        %v5440 = vsel %vm615, %v5341, -inf
        %v5441 = vsel %vm615, %v5342, -inf
        %v5442 = vmax.f32 %v5440, %v5441
        %v5443 = vrot.slane %v5442, 4
        %v5444 = vmax.f32 %v5442, %v5443
        %v5445 = vrot.slane %v5444, 2
        %v5446 = vmax.f32 %v5444, %v5445
        %v5447 = vrot.slane %v5446, 1
        %v5448 = vmax.f32 %v5446, %v5447
        %v5449 = vsel %vm615, %v5343, -inf
        %v5450 = vsel %vm615, %v5344, -inf
        %v5451 = vmax.f32 %v5449, %v5450
        %v5452 = vrot.slane %v5451, 4
        %v5453 = vmax.f32 %v5451, %v5452
        %v5454 = vrot.slane %v5453, 2
        %v5455 = vmax.f32 %v5453, %v5454
        %v5456 = vrot.slane %v5455, 1
        %v5457 = vmax.f32 %v5455, %v5456
        %v5458 = vsel %vm615, %v5345, -inf
        %v5459 = vsel %vm615, %v5346, -inf
        %v5460 = vmax.f32 %v5458, %v5459
        %v5461 = vrot.slane %v5460, 4
        %v5462 = vmax.f32 %v5460, %v5461
        %v5463 = vrot.slane %v5462, 2
        %v5464 = vmax.f32 %v5462, %v5463
        %v5465 = vrot.slane %v5464, 1
        %v5466 = vmax.f32 %v5464, %v5465
        %v5467 = vsel %vm615, %v5347, -inf
        %v5468 = vsel %vm615, %v5348, -inf
        %v5469 = vmax.f32 %v5467, %v5468
        %v5470 = vrot.slane %v5469, 4
        %v5471 = vmax.f32 %v5469, %v5470
        %v5472 = vrot.slane %v5471, 2
        %v5473 = vmax.f32 %v5471, %v5472
        %v5474 = vrot.slane %v5473, 1
        %v5475 = vmax.f32 %v5473, %v5474
        %v5476 = vsel %vm615, %v5349, -inf
        %v5477 = vsel %vm615, %v5350, -inf
        %v5478 = vmax.f32 %v5476, %v5477
        %v5479 = vrot.slane %v5478, 4
        %v5480 = vmax.f32 %v5478, %v5479
        %v5481 = vrot.slane %v5480, 2
        %v5482 = vmax.f32 %v5480, %v5481
        %v5483 = vrot.slane %v5482, 1
        %v5484 = vmax.f32 %v5482, %v5483
        %v5485 = vsel %vm615, %v5351, -inf
        %v5486 = vsel %vm615, %v5352, -inf
        %v5487 = vmax.f32 %v5485, %v5486
        %v5488 = vrot.slane %v5487, 4
        %v5489 = vmax.f32 %v5487, %v5488
        %v5490 = vrot.slane %v5489, 2
        %v5491 = vmax.f32 %v5489, %v5490
        %v5492 = vrot.slane %v5491, 1
        %v5493 = vmax.f32 %v5491, %v5492
        %v5494 = vsel %vm615, %v5353, -inf
        %v5495 = vsel %vm615, %v5354, -inf
        %v5496 = vmax.f32 %v5494, %v5495
        %v5497 = vrot.slane %v5496, 4
        %v5498 = vmax.f32 %v5496, %v5497
        %v5499 = vrot.slane %v5498, 2
        %v5500 = vmax.f32 %v5498, %v5499
        %v5501 = vrot.slane %v5500, 1
        %v5502 = vmax.f32 %v5500, %v5501
        %v5503 = vsel %vm615, %v5355, -inf
        %v5504 = vsel %vm615, %v5356, -inf
        %v5505 = vmax.f32 %v5503, %v5504
        %v5506 = vrot.slane %v5505, 4
        %v5507 = vmax.f32 %v5505, %v5506
        %v5508 = vrot.slane %v5507, 2
        %v5509 = vmax.f32 %v5507, %v5508
        %v5510 = vrot.slane %v5509, 1
        %v5511 = vmax.f32 %v5509, %v5510
        %v5512 = vsel %vm615, %v5357, -inf
        %v5513 = vsel %vm615, %v5358, -inf
        %v5514 = vmax.f32 %v5512, %v5513
        %v5515 = vrot.slane %v5514, 4
        %v5516 = vmax.f32 %v5514, %v5515
        %v5517 = vrot.slane %v5516, 2
        %v5518 = vmax.f32 %v5516, %v5517
        %v5519 = vrot.slane %v5518, 1
        %v5520 = vmax.f32 %v5518, %v5519
        %v5521 = vsel %vm615, %v5359, -inf
        %v5522 = vsel %vm615, %v5360, -inf
        %v5523 = vmax.f32 %v5521, %v5522
        %v5524 = vrot.slane %v5523, 4
        %v5525 = vmax.f32 %v5523, %v5524
        %v5526 = vrot.slane %v5525, 2
        %v5527 = vmax.f32 %v5525, %v5526
        %v5528 = vrot.slane %v5527, 1
        %v5529 = vmax.f32 %v5527, %v5528
        %v5530 = vsel %vm615, %v5361, -inf
        %v5531 = vsel %vm615, %v5362, -inf
        %v5532 = vmax.f32 %v5530, %v5531
        %v5533 = vrot.slane %v5532, 4
        %v5534 = vmax.f32 %v5532, %v5533
        %v5535 = vrot.slane %v5534, 2
        %v5536 = vmax.f32 %v5534, %v5535
        %v5537 = vrot.slane %v5536, 1
        %v5538 = vmax.f32 %v5536, %v5537
        %v5539 = vsel %vm615, %v5363, -inf
        %v5540 = vsel %vm615, %v5364, -inf
        %v5541 = vmax.f32 %v5539, %v5540
        %v5542 = vrot.slane %v5541, 4
        %v5543 = vmax.f32 %v5541, %v5542
        %v5544 = vrot.slane %v5543, 2
        %v5545 = vmax.f32 %v5543, %v5544
        %v5546 = vrot.slane %v5545, 1
        %v5547 = vmax.f32 %v5545, %v5546
        %v5548 = vsel %vm615, %v5365, -inf
        %v5549 = vsel %vm615, %v5366, -inf
        %v5550 = vmax.f32 %v5548, %v5549
        %v5551 = vrot.slane %v5550, 4
        %v5552 = vmax.f32 %v5550, %v5551
        %v5553 = vrot.slane %v5552, 2
        %v5554 = vmax.f32 %v5552, %v5553
        %v5555 = vrot.slane %v5554, 1
        %v5556 = vmax.f32 %v5554, %v5555
        %v5557 = vsel %vm615, %v5367, -inf
        %v5558 = vsel %vm615, %v5368, -inf
        %v5559 = vmax.f32 %v5557, %v5558
        %v5560 = vrot.slane %v5559, 4
        %v5561 = vmax.f32 %v5559, %v5560
        %v5562 = vrot.slane %v5561, 2
        %v5563 = vmax.f32 %v5561, %v5562
        %v5564 = vrot.slane %v5563, 1
        %v5565 = vmax.f32 %v5563, %v5564
        %v5566 = vsel %vm615, %v5369, -inf
        %v5567 = vsel %vm615, %v5370, -inf
        %v5568 = vmax.f32 %v5566, %v5567
        %v5569 = vrot.slane %v5568, 4
        %v5570 = vmax.f32 %v5568, %v5569
        %v5571 = vrot.slane %v5570, 2
        %v5572 = vmax.f32 %v5570, %v5571
        %v5573 = vrot.slane %v5572, 1
        %v5574 = vmax.f32 %v5572, %v5573
        %v5575 = vsel %vm615, %v5371, -inf
        %v5576 = vsel %vm615, %v5372, -inf
        %v5577 = vmax.f32 %v5575, %v5576
        %v5578 = vrot.slane %v5577, 4
        %v5579 = vmax.f32 %v5577, %v5578
        %v5580 = vrot.slane %v5579, 2
        %v5581 = vmax.f32 %v5579, %v5580
        %v5582 = vrot.slane %v5581, 1
        %v5583 = vmax.f32 %v5581, %v5582
        %v5584 = vsel %vm615, %v5373, -inf
        %v5585 = vsel %vm615, %v5374, -inf
        %v5586 = vmax.f32 %v5584, %v5585
        %v5587 = vrot.slane %v5586, 4
        %v5588 = vmax.f32 %v5586, %v5587
        %v5589 = vrot.slane %v5588, 2
        %v5590 = vmax.f32 %v5588, %v5589
        %v5591 = vrot.slane %v5590, 1
        %v5592 = vmax.f32 %v5590, %v5591
        %v5593 = vsel %vm615, %v5375, -inf
        %v5594 = vsel %vm615, %v5376, -inf
        %v5595 = vmax.f32 %v5593, %v5594
        %v5596 = vrot.slane %v5595, 4
        %v5597 = vmax.f32 %v5595, %v5596
        %v5598 = vrot.slane %v5597, 2
        %v5599 = vmax.f32 %v5597, %v5598
        %v5600 = vrot.slane %v5599, 1
        %v5601 = vmax.f32 %v5599, %v5600
        %v5602 = vsel %vm615, %v5377, -inf
        %v5603 = vsel %vm615, %v5378, -inf
        %v5604 = vmax.f32 %v5602, %v5603
        %v5605 = vrot.slane %v5604, 4
        %v5606 = vmax.f32 %v5604, %v5605
        %v5607 = vrot.slane %v5606, 2
        %v5608 = vmax.f32 %v5606, %v5607
        %v5609 = vrot.slane %v5608, 1
        %v5610 = vmax.f32 %v5608, %v5609
        %v5611 = vsel %vm615, %v5379, -inf
        %v5612 = vsel %vm615, %v5380, -inf
        %v5613 = vmax.f32 %v5611, %v5612
        %v5614 = vrot.slane %v5613, 4
        %v5615 = vmax.f32 %v5613, %v5614
        %v5616 = vrot.slane %v5615, 2
        %v5617 = vmax.f32 %v5615, %v5616
        %v5618 = vrot.slane %v5617, 1
        %v5619 = vmax.f32 %v5617, %v5618
        %v5620 = vsel %vm615, %v5381, -inf
        %v5621 = vsel %vm615, %v5382, -inf
        %v5622 = vmax.f32 %v5620, %v5621
        %v5623 = vrot.slane %v5622, 4
        %v5624 = vmax.f32 %v5622, %v5623
        %v5625 = vrot.slane %v5624, 2
        %v5626 = vmax.f32 %v5624, %v5625
        %v5627 = vrot.slane %v5626, 1
        %v5628 = vmax.f32 %v5626, %v5627
        %v5629 = vsel %vm615, %v5383, -inf
        %v5630 = vsel %vm615, %v5384, -inf
        %v5631 = vmax.f32 %v5629, %v5630
        %v5632 = vrot.slane %v5631, 4
        %v5633 = vmax.f32 %v5631, %v5632
        %v5634 = vrot.slane %v5633, 2
        %v5635 = vmax.f32 %v5633, %v5634
        %v5636 = vrot.slane %v5635, 1
        %v5637 = vmax.f32 %v5635, %v5636
        %v5638 = vsel %vm615, %v5385, -inf
        %v5639 = vsel %vm615, %v5386, -inf
        %v5640 = vmax.f32 %v5638, %v5639
        %v5641 = vrot.slane %v5640, 4
        %v5642 = vmax.f32 %v5640, %v5641
        %v5643 = vrot.slane %v5642, 2
        %v5644 = vmax.f32 %v5642, %v5643
        %v5645 = vrot.slane %v5644, 1
        %v5646 = vmax.f32 %v5644, %v5645
        %v5647 = vsel %vm615, %v5387, -inf
        %v5648 = vsel %vm615, %v5388, -inf
        %v5649 = vmax.f32 %v5647, %v5648
        %v5650 = vrot.slane %v5649, 4
        %v5651 = vmax.f32 %v5649, %v5650
        %v5652 = vrot.slane %v5651, 2
        %v5653 = vmax.f32 %v5651, %v5652
        %v5654 = vrot.slane %v5653, 1
        %v5655 = vmax.f32 %v5653, %v5654
        %v5656 = vsel %vm615, %v5389, -inf
        %v5657 = vsel %vm615, %v5390, -inf
        %v5658 = vmax.f32 %v5656, %v5657
        %v5659 = vrot.slane %v5658, 4
        %v5660 = vmax.f32 %v5658, %v5659
        %v5661 = vrot.slane %v5660, 2
        %v5662 = vmax.f32 %v5660, %v5661
        %v5663 = vrot.slane %v5662, 1
        %v5664 = vmax.f32 %v5662, %v5663
        %v5665 = vsel %vm615, %v5391, -inf
        %v5666 = vsel %vm615, %v5392, -inf
        %v5667 = vmax.f32 %v5665, %v5666
        %v5668 = vrot.slane %v5667, 4
        %v5669 = vmax.f32 %v5667, %v5668
        %v5670 = vrot.slane %v5669, 2
        %v5671 = vmax.f32 %v5669, %v5670
        %v5672 = vrot.slane %v5671, 1
        %v5673 = vmax.f32 %v5671, %v5672
        %v5674 = vsel %vm615, %v5393, -inf
        %v5675 = vsel %vm615, %v5394, -inf
        %v5676 = vmax.f32 %v5674, %v5675
        %v5677 = vrot.slane %v5676, 4
        %v5678 = vmax.f32 %v5676, %v5677
        %v5679 = vrot.slane %v5678, 2
        %v5680 = vmax.f32 %v5678, %v5679
        %v5681 = vrot.slane %v5680, 1
        %v5682 = vmax.f32 %v5680, %v5681
        %v5683 = vsub.f32 %v5331, %v5403
        %v5684 = vsub.f32 %v5332, %v5403
        %v5685 = vsub.f32 %v5333, %v5412
        %v5686 = vsub.f32 %v5334, %v5412
        %v5687 = vsub.f32 %v5335, %v5421
        %v5688 = vsub.f32 %v5336, %v5421
        %v5689 = vsub.f32 %v5337, %v5430
        %v5690 = vsub.f32 %v5338, %v5430
        %v5691 = vsub.f32 %v5339, %v5439
        %v5692 = vsub.f32 %v5340, %v5439
        %v5693 = vsub.f32 %v5341, %v5448
        %v5694 = vsub.f32 %v5342, %v5448
        %v5695 = vsub.f32 %v5343, %v5457
        %v5696 = vsub.f32 %v5344, %v5457
        %v5697 = vsub.f32 %v5345, %v5466
        %v5698 = vsub.f32 %v5346, %v5466
        %v5699 = vsub.f32 %v5347, %v5475
        %v5700 = vsub.f32 %v5348, %v5475
        %v5701 = vsub.f32 %v5349, %v5484
        %v5702 = vsub.f32 %v5350, %v5484
        %v5703 = vsub.f32 %v5351, %v5493
        %v5704 = vsub.f32 %v5352, %v5493
        %v5705 = vsub.f32 %v5353, %v5502
        %v5706 = vsub.f32 %v5354, %v5502
        %v5707 = vsub.f32 %v5355, %v5511
        %v5708 = vsub.f32 %v5356, %v5511
        %v5709 = vsub.f32 %v5357, %v5520
        %v5710 = vsub.f32 %v5358, %v5520
        %v5711 = vsub.f32 %v5359, %v5529
        %v5712 = vsub.f32 %v5360, %v5529
        %v5713 = vsub.f32 %v5361, %v5538
        %v5714 = vsub.f32 %v5362, %v5538
        %v5715 = vsub.f32 %v5363, %v5547
        %v5716 = vsub.f32 %v5364, %v5547
        %v5717 = vsub.f32 %v5365, %v5556
        %v5718 = vsub.f32 %v5366, %v5556
        %v5719 = vsub.f32 %v5367, %v5565
        %v5720 = vsub.f32 %v5368, %v5565
        %v5721 = vsub.f32 %v5369, %v5574
        %v5722 = vsub.f32 %v5370, %v5574
        %v5723 = vsub.f32 %v5371, %v5583
        %v5724 = vsub.f32 %v5372, %v5583
        %v5725 = vsub.f32 %v5373, %v5592
        %v5726 = vsub.f32 %v5374, %v5592
        %v5727 = vsub.f32 %v5375, %v5601
        %v5728 = vsub.f32 %v5376, %v5601
        %v5729 = vsub.f32 %v5377, %v5610
        %v5730 = vsub.f32 %v5378, %v5610
        %v5731 = vsub.f32 %v5379, %v5619
        %v5732 = vsub.f32 %v5380, %v5619
        %v5733 = vsub.f32 %v5381, %v5628
        %v5734 = vsub.f32 %v5382, %v5628
        %v5735 = vsub.f32 %v5383, %v5637
        %v5736 = vsub.f32 %v5384, %v5637
        %v5737 = vsub.f32 %v5385, %v5646
        %v5738 = vsub.f32 %v5386, %v5646
        %v5739 = vsub.f32 %v5387, %v5655
        %v5740 = vsub.f32 %v5388, %v5655
        %v5741 = vsub.f32 %v5389, %v5664
        %v5742 = vsub.f32 %v5390, %v5664
        %v5743 = vsub.f32 %v5391, %v5673
        %v5744 = vsub.f32 %v5392, %v5673
        %v5745 = vsub.f32 %v5393, %v5682
        %v5746 = vsub.f32 %v5394, %v5682
        %v5747 = vmul.f32 %v5683, 1.442695
        %v5748 = vpow.pop %v5747
        %v5749 = vmul.f32 %v5684, 1.442695
        %v5750 = vpow.pop %v5749
        %v5751 = vmul.f32 %v5685, 1.442695
        %v5752 = vpow.pop %v5751
        %v5753 = vmul.f32 %v5686, 1.442695
        %v5754 = vpow.pop %v5753
        %v5755 = vmul.f32 %v5687, 1.442695
        %v5756 = vpow.pop %v5755
        %v5757 = vmul.f32 %v5688, 1.442695
        %v5758 = vpow.pop %v5757
        %v5759 = vmul.f32 %v5689, 1.442695
        %v5760 = vpow.pop %v5759
        %v5761 = vmul.f32 %v5690, 1.442695
        %v5762 = vpow.pop %v5761
        %v5763 = vmul.f32 %v5691, 1.442695
        %v5764 = vpow.pop %v5763
        %v5765 = vmul.f32 %v5692, 1.442695
        %v5766 = vpow.pop %v5765
        %v5767 = vmul.f32 %v5693, 1.442695
        %v5768 = vpow.pop %v5767
        %v5769 = vmul.f32 %v5694, 1.442695
        %v5770 = vpow.pop %v5769
        %v5771 = vmul.f32 %v5695, 1.442695
        %v5772 = vpow.pop %v5771
        %v5773 = vmul.f32 %v5696, 1.442695
        %v5774 = vpow.pop %v5773
        %v5775 = vmul.f32 %v5697, 1.442695
        %v5776 = vpow.pop %v5775
        %v5777 = vmul.f32 %v5698, 1.442695
        %v5778 = vpow.pop %v5777
        %v5779 = vmul.f32 %v5699, 1.442695
        %v5780 = vpow.pop %v5779
        %v5781 = vmul.f32 %v5700, 1.442695
        %v5782 = vpow.pop %v5781
        %v5783 = vmul.f32 %v5701, 1.442695
        %v5784 = vpow.pop %v5783
        %v5785 = vmul.f32 %v5702, 1.442695
        %v5786 = vpow.pop %v5785
        %v5787 = vmul.f32 %v5703, 1.442695
        %v5788 = vpow.pop %v5787
        %v5789 = vmul.f32 %v5704, 1.442695
        %v5790 = vpow.pop %v5789
        %v5791 = vmul.f32 %v5705, 1.442695
        %v5792 = vpow.pop %v5791
        %v5793 = vmul.f32 %v5706, 1.442695
        %v5794 = vpow.pop %v5793
        %v5795 = vmul.f32 %v5707, 1.442695
        %v5796 = vpow.pop %v5795
        %v5797 = vmul.f32 %v5708, 1.442695
        %v5798 = vpow.pop %v5797
        %v5799 = vmul.f32 %v5709, 1.442695
        %v5800 = vpow.pop %v5799
        %v5801 = vmul.f32 %v5710, 1.442695
        %v5802 = vpow.pop %v5801
        %v5803 = vmul.f32 %v5711, 1.442695
        %v5804 = vpow.pop %v5803
        %v5805 = vmul.f32 %v5712, 1.442695
        %v5806 = vpow.pop %v5805
        %v5807 = vmul.f32 %v5713, 1.442695
        %v5808 = vpow.pop %v5807
        %v5809 = vmul.f32 %v5714, 1.442695
        %v5810 = vpow.pop %v5809
        %v5811 = vmul.f32 %v5715, 1.442695
        %v5812 = vpow.pop %v5811
        %v5813 = vmul.f32 %v5716, 1.442695
        %v5814 = vpow.pop %v5813
        %v5815 = vmul.f32 %v5717, 1.442695
        %v5816 = vpow.pop %v5815
        %v5817 = vmul.f32 %v5718, 1.442695
        %v5818 = vpow.pop %v5817
        %v5819 = vmul.f32 %v5719, 1.442695
        %v5820 = vpow.pop %v5819
        %v5821 = vmul.f32 %v5720, 1.442695
        %v5822 = vpow.pop %v5821
        %v5823 = vmul.f32 %v5721, 1.442695
        %v5824 = vpow.pop %v5823
        %v5825 = vmul.f32 %v5722, 1.442695
        %v5826 = vpow.pop %v5825
        %v5827 = vmul.f32 %v5723, 1.442695
        %v5828 = vpow.pop %v5827
        %v5829 = vmul.f32 %v5724, 1.442695
        %v5830 = vpow.pop %v5829
        %v5831 = vmul.f32 %v5725, 1.442695
        %v5832 = vpow.pop %v5831
        %v5833 = vmul.f32 %v5726, 1.442695
        %v5834 = vpow.pop %v5833
        %v5835 = vmul.f32 %v5727, 1.442695
        %v5836 = vpow.pop %v5835
        %v5837 = vmul.f32 %v5728, 1.442695
        %v5838 = vpow.pop %v5837
        %v5839 = vmul.f32 %v5729, 1.442695
        %v5840 = vpow.pop %v5839
        %v5841 = vmul.f32 %v5730, 1.442695
        %v5842 = vpow.pop %v5841
        %v5843 = vmul.f32 %v5731, 1.442695
        %v5844 = vpow.pop %v5843
        %v5845 = vmul.f32 %v5732, 1.442695
        %v5846 = vpow.pop %v5845
        %v5847 = vmul.f32 %v5733, 1.442695
        %v5848 = vpow.pop %v5847
        %v5849 = vmul.f32 %v5734, 1.442695
        %v5850 = vpow.pop %v5849
        %v5851 = vmul.f32 %v5735, 1.442695
        %v5852 = vpow.pop %v5851
        %v5853 = vmul.f32 %v5736, 1.442695
        %v5854 = vpow.pop %v5853
        %v5855 = vmul.f32 %v5737, 1.442695
        %v5856 = vpow.pop %v5855
        %v5857 = vmul.f32 %v5738, 1.442695
        %v5858 = vpow.pop %v5857
        %v5859 = vmul.f32 %v5739, 1.442695
        %v5860 = vpow.pop %v5859
        %v5861 = vmul.f32 %v5740, 1.442695
        %v5862 = vpow.pop %v5861
        %v5863 = vmul.f32 %v5741, 1.442695
        %v5864 = vpow.pop %v5863
        %v5865 = vmul.f32 %v5742, 1.442695
        %v5866 = vpow.pop %v5865
        %v5867 = vmul.f32 %v5743, 1.442695
        %v5868 = vpow.pop %v5867
        %v5869 = vmul.f32 %v5744, 1.442695
        %v5870 = vpow.pop %v5869
        %v5871 = vmul.f32 %v5745, 1.442695
        %v5872 = vpow.pop %v5871
        %v5873 = vmul.f32 %v5746, 1.442695
        %v5874 = vpow.pop %v5873
        %v5875 = vmul.f32 %v5748, %v4793
        %v5876 = vmul.f32 %v5750, %v4797
        %v5877 = vmul.f32 %v5752, %v4804
        %v5878 = vmul.f32 %v5754, %v4808
        %v5879 = vmul.f32 %v5756, %v4815
        %v5880 = vmul.f32 %v5758, %v4819
        %v5881 = vmul.f32 %v5760, %v4826
        %v5882 = vmul.f32 %v5762, %v4830
        %v5883 = vmul.f32 %v5764, %v4837
        %v5884 = vmul.f32 %v5766, %v4841
        %v5885 = vmul.f32 %v5768, %v4848
        %v5886 = vmul.f32 %v5770, %v4852
        %v5887 = vmul.f32 %v5772, %v4859
        %v5888 = vmul.f32 %v5774, %v4863
        %v5889 = vmul.f32 %v5776, %v4870
        %v5890 = vmul.f32 %v5778, %v4874
        %v5891 = vmul.f32 %v5780, %v4881
        %v5892 = vmul.f32 %v5782, %v4885
        %v5893 = vmul.f32 %v5784, %v4892
        %v5894 = vmul.f32 %v5786, %v4896
        %v5895 = vmul.f32 %v5788, %v4903
        %v5896 = vmul.f32 %v5790, %v4907
        %v5897 = vmul.f32 %v5792, %v4914
        %v5898 = vmul.f32 %v5794, %v4918
        %v5899 = vmul.f32 %v5796, %v4925
        %v5900 = vmul.f32 %v5798, %v4929
        %v5901 = vmul.f32 %v5800, %v4936
        %v5902 = vmul.f32 %v5802, %v4940
        %v5903 = vmul.f32 %v5804, %v4947
        %v5904 = vmul.f32 %v5806, %v4951
        %v5905 = vmul.f32 %v5808, %v4958
        %v5906 = vmul.f32 %v5810, %v4962
        %v5907 = vmul.f32 %v5812, %v4969
        %v5908 = vmul.f32 %v5814, %v4973
        %v5909 = vmul.f32 %v5816, %v4980
        %v5910 = vmul.f32 %v5818, %v4984
        %v5911 = vmul.f32 %v5820, %v4991
        %v5912 = vmul.f32 %v5822, %v4995
        %v5913 = vmul.f32 %v5824, %v5002
        %v5914 = vmul.f32 %v5826, %v5006
        %v5915 = vmul.f32 %v5828, %v5013
        %v5916 = vmul.f32 %v5830, %v5017
        %v5917 = vmul.f32 %v5832, %v5024
        %v5918 = vmul.f32 %v5834, %v5028
        %v5919 = vmul.f32 %v5836, %v5035
        %v5920 = vmul.f32 %v5838, %v5039
        %v5921 = vmul.f32 %v5840, %v5046
        %v5922 = vmul.f32 %v5842, %v5050
        %v5923 = vmul.f32 %v5844, %v5057
        %v5924 = vmul.f32 %v5846, %v5061
        %v5925 = vmul.f32 %v5848, %v5068
        %v5926 = vmul.f32 %v5850, %v5072
        %v5927 = vmul.f32 %v5852, %v5079
        %v5928 = vmul.f32 %v5854, %v5083
        %v5929 = vmul.f32 %v5856, %v5090
        %v5930 = vmul.f32 %v5858, %v5094
        %v5931 = vmul.f32 %v5860, %v5101
        %v5932 = vmul.f32 %v5862, %v5105
        %v5933 = vmul.f32 %v5864, %v5112
        %v5934 = vmul.f32 %v5866, %v5116
        %v5935 = vmul.f32 %v5868, %v5123
        %v5936 = vmul.f32 %v5870, %v5127
        %v5937 = vmul.f32 %v5872, %v5134
        %v5938 = vmul.f32 %v5874, %v5138
        %v5939 = vsel %vm615, %v5875, 0.0
        %v5940 = vsel %vm615, %v5876, 0.0
        %v5941 = vadd.f32 %v5939, %v5940
        %v5942 = vrot.slane %v5941, 4
        %v5943 = vadd.f32 %v5941, %v5942
        %v5944 = vrot.slane %v5943, 2
        %v5945 = vadd.f32 %v5943, %v5944
        %v5946 = vrot.slane %v5945, 1
        %v5947 = vadd.f32 %v5945, %v5946
        %v5948 = vsel %vm615, %v5877, 0.0
        %v5949 = vsel %vm615, %v5878, 0.0
        %v5950 = vadd.f32 %v5948, %v5949
        %v5951 = vrot.slane %v5950, 4
        %v5952 = vadd.f32 %v5950, %v5951
        %v5953 = vrot.slane %v5952, 2
        %v5954 = vadd.f32 %v5952, %v5953
        %v5955 = vrot.slane %v5954, 1
        %v5956 = vadd.f32 %v5954, %v5955
        %v5957 = vsel %vm615, %v5879, 0.0
        %v5958 = vsel %vm615, %v5880, 0.0
        %v5959 = vadd.f32 %v5957, %v5958
        %v5960 = vrot.slane %v5959, 4
        %v5961 = vadd.f32 %v5959, %v5960
        %v5962 = vrot.slane %v5961, 2
        %v5963 = vadd.f32 %v5961, %v5962
        %v5964 = vrot.slane %v5963, 1
        %v5965 = vadd.f32 %v5963, %v5964
        %v5966 = vsel %vm615, %v5881, 0.0
        %v5967 = vsel %vm615, %v5882, 0.0
        %v5968 = vadd.f32 %v5966, %v5967
        %v5969 = vrot.slane %v5968, 4
        %v5970 = vadd.f32 %v5968, %v5969
        %v5971 = vrot.slane %v5970, 2
        %v5972 = vadd.f32 %v5970, %v5971
        %v5973 = vrot.slane %v5972, 1
        %v5974 = vadd.f32 %v5972, %v5973
        %v5975 = vsel %vm615, %v5883, 0.0
        %v5976 = vsel %vm615, %v5884, 0.0
        %v5977 = vadd.f32 %v5975, %v5976
        %v5978 = vrot.slane %v5977, 4
        %v5979 = vadd.f32 %v5977, %v5978
        %v5980 = vrot.slane %v5979, 2
        %v5981 = vadd.f32 %v5979, %v5980
        %v5982 = vrot.slane %v5981, 1
        %v5983 = vadd.f32 %v5981, %v5982
        %v5984 = vsel %vm615, %v5885, 0.0
        %v5985 = vsel %vm615, %v5886, 0.0
        %v5986 = vadd.f32 %v5984, %v5985
        %v5987 = vrot.slane %v5986, 4
        %v5988 = vadd.f32 %v5986, %v5987
        %v5989 = vrot.slane %v5988, 2
        %v5990 = vadd.f32 %v5988, %v5989
        %v5991 = vrot.slane %v5990, 1
        %v5992 = vadd.f32 %v5990, %v5991
        %v5993 = vsel %vm615, %v5887, 0.0
        %v5994 = vsel %vm615, %v5888, 0.0
        %v5995 = vadd.f32 %v5993, %v5994
        %v5996 = vrot.slane %v5995, 4
        %v5997 = vadd.f32 %v5995, %v5996
        %v5998 = vrot.slane %v5997, 2
        %v5999 = vadd.f32 %v5997, %v5998
        %v6000 = vrot.slane %v5999, 1
        %v6001 = vadd.f32 %v5999, %v6000
        %v6002 = vsel %vm615, %v5889, 0.0
        %v6003 = vsel %vm615, %v5890, 0.0
        %v6004 = vadd.f32 %v6002, %v6003
        %v6005 = vrot.slane %v6004, 4
        %v6006 = vadd.f32 %v6004, %v6005
        %v6007 = vrot.slane %v6006, 2
        %v6008 = vadd.f32 %v6006, %v6007
        %v6009 = vrot.slane %v6008, 1
        %v6010 = vadd.f32 %v6008, %v6009
        %v6011 = vsel %vm615, %v5891, 0.0
        %v6012 = vsel %vm615, %v5892, 0.0
        %v6013 = vadd.f32 %v6011, %v6012
        %v6014 = vrot.slane %v6013, 4
        %v6015 = vadd.f32 %v6013, %v6014
        %v6016 = vrot.slane %v6015, 2
        %v6017 = vadd.f32 %v6015, %v6016
        %v6018 = vrot.slane %v6017, 1
        %v6019 = vadd.f32 %v6017, %v6018
        %v6020 = vsel %vm615, %v5893, 0.0
        %v6021 = vsel %vm615, %v5894, 0.0
        %v6022 = vadd.f32 %v6020, %v6021
        %v6023 = vrot.slane %v6022, 4
        %v6024 = vadd.f32 %v6022, %v6023
        %v6025 = vrot.slane %v6024, 2
        %v6026 = vadd.f32 %v6024, %v6025
        %v6027 = vrot.slane %v6026, 1
        %v6028 = vadd.f32 %v6026, %v6027
        %v6029 = vsel %vm615, %v5895, 0.0
        %v6030 = vsel %vm615, %v5896, 0.0
        %v6031 = vadd.f32 %v6029, %v6030
        %v6032 = vrot.slane %v6031, 4
        %v6033 = vadd.f32 %v6031, %v6032
        %v6034 = vrot.slane %v6033, 2
        %v6035 = vadd.f32 %v6033, %v6034
        %v6036 = vrot.slane %v6035, 1
        %v6037 = vadd.f32 %v6035, %v6036
        %v6038 = vsel %vm615, %v5897, 0.0
        %v6039 = vsel %vm615, %v5898, 0.0
        %v6040 = vadd.f32 %v6038, %v6039
        %v6041 = vrot.slane %v6040, 4
        %v6042 = vadd.f32 %v6040, %v6041
        %v6043 = vrot.slane %v6042, 2
        %v6044 = vadd.f32 %v6042, %v6043
        %v6045 = vrot.slane %v6044, 1
        %v6046 = vadd.f32 %v6044, %v6045
        %v6047 = vsel %vm615, %v5899, 0.0
        %v6048 = vsel %vm615, %v5900, 0.0
        %v6049 = vadd.f32 %v6047, %v6048
        %v6050 = vrot.slane %v6049, 4
        %v6051 = vadd.f32 %v6049, %v6050
        %v6052 = vrot.slane %v6051, 2
        %v6053 = vadd.f32 %v6051, %v6052
        %v6054 = vrot.slane %v6053, 1
        %v6055 = vadd.f32 %v6053, %v6054
        %v6056 = vsel %vm615, %v5901, 0.0
        %v6057 = vsel %vm615, %v5902, 0.0
        %v6058 = vadd.f32 %v6056, %v6057
        %v6059 = vrot.slane %v6058, 4
        %v6060 = vadd.f32 %v6058, %v6059
        %v6061 = vrot.slane %v6060, 2
        %v6062 = vadd.f32 %v6060, %v6061
        %v6063 = vrot.slane %v6062, 1
        %v6064 = vadd.f32 %v6062, %v6063
        %v6065 = vsel %vm615, %v5903, 0.0
        %v6066 = vsel %vm615, %v5904, 0.0
        %v6067 = vadd.f32 %v6065, %v6066
        %v6068 = vrot.slane %v6067, 4
        %v6069 = vadd.f32 %v6067, %v6068
        %v6070 = vrot.slane %v6069, 2
        %v6071 = vadd.f32 %v6069, %v6070
        %v6072 = vrot.slane %v6071, 1
        %v6073 = vadd.f32 %v6071, %v6072
        %v6074 = vsel %vm615, %v5905, 0.0
        %v6075 = vsel %vm615, %v5906, 0.0
        %v6076 = vadd.f32 %v6074, %v6075
        %v6077 = vrot.slane %v6076, 4
        %v6078 = vadd.f32 %v6076, %v6077
        %v6079 = vrot.slane %v6078, 2
        %v6080 = vadd.f32 %v6078, %v6079
        %v6081 = vrot.slane %v6080, 1
        %v6082 = vadd.f32 %v6080, %v6081
        %v6083 = vsel %vm615, %v5907, 0.0
        %v6084 = vsel %vm615, %v5908, 0.0
        %v6085 = vadd.f32 %v6083, %v6084
        %v6086 = vrot.slane %v6085, 4
        %v6087 = vadd.f32 %v6085, %v6086
        %v6088 = vrot.slane %v6087, 2
        %v6089 = vadd.f32 %v6087, %v6088
        %v6090 = vrot.slane %v6089, 1
        %v6091 = vadd.f32 %v6089, %v6090
        %v6092 = vsel %vm615, %v5909, 0.0
        %v6093 = vsel %vm615, %v5910, 0.0
        %v6094 = vadd.f32 %v6092, %v6093
        %v6095 = vrot.slane %v6094, 4
        %v6096 = vadd.f32 %v6094, %v6095
        %v6097 = vrot.slane %v6096, 2
        %v6098 = vadd.f32 %v6096, %v6097
        %v6099 = vrot.slane %v6098, 1
        %v6100 = vadd.f32 %v6098, %v6099
        %v6101 = vsel %vm615, %v5911, 0.0
        %v6102 = vsel %vm615, %v5912, 0.0
        %v6103 = vadd.f32 %v6101, %v6102
        %v6104 = vrot.slane %v6103, 4
        %v6105 = vadd.f32 %v6103, %v6104
        %v6106 = vrot.slane %v6105, 2
        %v6107 = vadd.f32 %v6105, %v6106
        %v6108 = vrot.slane %v6107, 1
        %v6109 = vadd.f32 %v6107, %v6108
        %v6110 = vsel %vm615, %v5913, 0.0
        %v6111 = vsel %vm615, %v5914, 0.0
        %v6112 = vadd.f32 %v6110, %v6111
        %v6113 = vrot.slane %v6112, 4
        %v6114 = vadd.f32 %v6112, %v6113
        %v6115 = vrot.slane %v6114, 2
        %v6116 = vadd.f32 %v6114, %v6115
        %v6117 = vrot.slane %v6116, 1
        %v6118 = vadd.f32 %v6116, %v6117
        %v6119 = vsel %vm615, %v5915, 0.0
        %v6120 = vsel %vm615, %v5916, 0.0
        %v6121 = vadd.f32 %v6119, %v6120
        %v6122 = vrot.slane %v6121, 4
        %v6123 = vadd.f32 %v6121, %v6122
        %v6124 = vrot.slane %v6123, 2
        %v6125 = vadd.f32 %v6123, %v6124
        %v6126 = vrot.slane %v6125, 1
        %v6127 = vadd.f32 %v6125, %v6126
        %v6128 = vsel %vm615, %v5917, 0.0
        %v6129 = vsel %vm615, %v5918, 0.0
        %v6130 = vadd.f32 %v6128, %v6129
        %v6131 = vrot.slane %v6130, 4
        %v6132 = vadd.f32 %v6130, %v6131
        %v6133 = vrot.slane %v6132, 2
        %v6134 = vadd.f32 %v6132, %v6133
        %v6135 = vrot.slane %v6134, 1
        %v6136 = vadd.f32 %v6134, %v6135
        %v6137 = vsel %vm615, %v5919, 0.0
        %v6138 = vsel %vm615, %v5920, 0.0
        %v6139 = vadd.f32 %v6137, %v6138
        %v6140 = vrot.slane %v6139, 4
        %v6141 = vadd.f32 %v6139, %v6140
        %v6142 = vrot.slane %v6141, 2
        %v6143 = vadd.f32 %v6141, %v6142
        %v6144 = vrot.slane %v6143, 1
        %v6145 = vadd.f32 %v6143, %v6144
        %v6146 = vsel %vm615, %v5921, 0.0
        %v6147 = vsel %vm615, %v5922, 0.0
        %v6148 = vadd.f32 %v6146, %v6147
        %v6149 = vrot.slane %v6148, 4
        %v6150 = vadd.f32 %v6148, %v6149
        %v6151 = vrot.slane %v6150, 2
        %v6152 = vadd.f32 %v6150, %v6151
        %v6153 = vrot.slane %v6152, 1
        %v6154 = vadd.f32 %v6152, %v6153
        %v6155 = vsel %vm615, %v5923, 0.0
        %v6156 = vsel %vm615, %v5924, 0.0
        %v6157 = vadd.f32 %v6155, %v6156
        %v6158 = vrot.slane %v6157, 4
        %v6159 = vadd.f32 %v6157, %v6158
        %v6160 = vrot.slane %v6159, 2
        %v6161 = vadd.f32 %v6159, %v6160
        %v6162 = vrot.slane %v6161, 1
        %v6163 = vadd.f32 %v6161, %v6162
        %v6164 = vsel %vm615, %v5925, 0.0
        %v6165 = vsel %vm615, %v5926, 0.0
        %v6166 = vadd.f32 %v6164, %v6165
        %v6167 = vrot.slane %v6166, 4
        %v6168 = vadd.f32 %v6166, %v6167
        %v6169 = vrot.slane %v6168, 2
        %v6170 = vadd.f32 %v6168, %v6169
        %v6171 = vrot.slane %v6170, 1
        %v6172 = vadd.f32 %v6170, %v6171
        %v6173 = vsel %vm615, %v5927, 0.0
        %v6174 = vsel %vm615, %v5928, 0.0
        %v6175 = vadd.f32 %v6173, %v6174
        %v6176 = vrot.slane %v6175, 4
        %v6177 = vadd.f32 %v6175, %v6176
        %v6178 = vrot.slane %v6177, 2
        %v6179 = vadd.f32 %v6177, %v6178
        %v6180 = vrot.slane %v6179, 1
        %v6181 = vadd.f32 %v6179, %v6180
        %v6182 = vsel %vm615, %v5929, 0.0
        %v6183 = vsel %vm615, %v5930, 0.0
        %v6184 = vadd.f32 %v6182, %v6183
        %v6185 = vrot.slane %v6184, 4
        %v6186 = vadd.f32 %v6184, %v6185
        %v6187 = vrot.slane %v6186, 2
        %v6188 = vadd.f32 %v6186, %v6187
        %v6189 = vrot.slane %v6188, 1
        %v6190 = vadd.f32 %v6188, %v6189
        %v6191 = vsel %vm615, %v5931, 0.0
        %v6192 = vsel %vm615, %v5932, 0.0
        %v6193 = vadd.f32 %v6191, %v6192
        %v6194 = vrot.slane %v6193, 4
        %v6195 = vadd.f32 %v6193, %v6194
        %v6196 = vrot.slane %v6195, 2
        %v6197 = vadd.f32 %v6195, %v6196
        %v6198 = vrot.slane %v6197, 1
        %v6199 = vadd.f32 %v6197, %v6198
        %v6200 = vsel %vm615, %v5933, 0.0
        %v6201 = vsel %vm615, %v5934, 0.0
        %v6202 = vadd.f32 %v6200, %v6201
        %v6203 = vrot.slane %v6202, 4
        %v6204 = vadd.f32 %v6202, %v6203
        %v6205 = vrot.slane %v6204, 2
        %v6206 = vadd.f32 %v6204, %v6205
        %v6207 = vrot.slane %v6206, 1
        %v6208 = vadd.f32 %v6206, %v6207
        %v6209 = vsel %vm615, %v5935, 0.0
        %v6210 = vsel %vm615, %v5936, 0.0
        %v6211 = vadd.f32 %v6209, %v6210
        %v6212 = vrot.slane %v6211, 4
        %v6213 = vadd.f32 %v6211, %v6212
        %v6214 = vrot.slane %v6213, 2
        %v6215 = vadd.f32 %v6213, %v6214
        %v6216 = vrot.slane %v6215, 1
        %v6217 = vadd.f32 %v6215, %v6216
        %v6218 = vsel %vm615, %v5937, 0.0
        %v6219 = vsel %vm615, %v5938, 0.0
        %v6220 = vadd.f32 %v6218, %v6219
        %v6221 = vrot.slane %v6220, 4
        %v6222 = vadd.f32 %v6220, %v6221
        %v6223 = vrot.slane %v6222, 2
        %v6224 = vadd.f32 %v6222, %v6223
        %v6225 = vrot.slane %v6224, 1
        %v6226 = vadd.f32 %v6224, %v6225
        %v6227 = vmax.f32 %v5947, 1e-12
        %v6228 = vmax.f32 %v5956, 1e-12
        %v6229 = vmax.f32 %v5965, 1e-12
        %v6230 = vmax.f32 %v5974, 1e-12
        %v6231 = vmax.f32 %v5983, 1e-12
        %v6232 = vmax.f32 %v5992, 1e-12
        %v6233 = vmax.f32 %v6001, 1e-12
        %v6234 = vmax.f32 %v6010, 1e-12
        %v6235 = vmax.f32 %v6019, 1e-12
        %v6236 = vmax.f32 %v6028, 1e-12
        %v6237 = vmax.f32 %v6037, 1e-12
        %v6238 = vmax.f32 %v6046, 1e-12
        %v6239 = vmax.f32 %v6055, 1e-12
        %v6240 = vmax.f32 %v6064, 1e-12
        %v6241 = vmax.f32 %v6073, 1e-12
        %v6242 = vmax.f32 %v6082, 1e-12
        %v6243 = vmax.f32 %v6091, 1e-12
        %v6244 = vmax.f32 %v6100, 1e-12
        %v6245 = vmax.f32 %v6109, 1e-12
        %v6246 = vmax.f32 %v6118, 1e-12
        %v6247 = vmax.f32 %v6127, 1e-12
        %v6248 = vmax.f32 %v6136, 1e-12
        %v6249 = vmax.f32 %v6145, 1e-12
        %v6250 = vmax.f32 %v6154, 1e-12
        %v6251 = vmax.f32 %v6163, 1e-12
        %v6252 = vmax.f32 %v6172, 1e-12
        %v6253 = vmax.f32 %v6181, 1e-12
        %v6254 = vmax.f32 %v6190, 1e-12
        %v6255 = vmax.f32 %v6199, 1e-12
        %v6256 = vmax.f32 %v6208, 1e-12
        %v6257 = vmax.f32 %v6217, 1e-12
        %v6258 = vmax.f32 %v6226, 1e-12
        %v6259 = vrcp.pop %v6227
        %v6260 = vrcp.pop %v6228
        %v6261 = vrcp.pop %v6229
        %v6262 = vrcp.pop %v6230
        %v6263 = vrcp.pop %v6231
        %v6264 = vrcp.pop %v6232
        %v6265 = vrcp.pop %v6233
        %v6266 = vrcp.pop %v6234
        %v6267 = vrcp.pop %v6235
        %v6268 = vrcp.pop %v6236
        %v6269 = vrcp.pop %v6237
        %v6270 = vrcp.pop %v6238
        %v6271 = vrcp.pop %v6239
        %v6272 = vrcp.pop %v6240
        %v6273 = vrcp.pop %v6241
        %v6274 = vrcp.pop %v6242
        %v6275 = vrcp.pop %v6243
        %v6276 = vrcp.pop %v6244
        %v6277 = vrcp.pop %v6245
        %v6278 = vrcp.pop %v6246
        %v6279 = vrcp.pop %v6247
        %v6280 = vrcp.pop %v6248
        %v6281 = vrcp.pop %v6249
        %v6282 = vrcp.pop %v6250
        %v6283 = vrcp.pop %v6251
        %v6284 = vrcp.pop %v6252
        %v6285 = vrcp.pop %v6253
        %v6286 = vrcp.pop %v6254
        %v6287 = vrcp.pop %v6255
        %v6288 = vrcp.pop %v6256
        %v6289 = vrcp.pop %v6257
        %v6290 = vrcp.pop %v6258
        %v6291 = vmul.f32 %v5875, %v6259
        %v6292 = vmul.f32 %v5876, %v6259
        %v6293 = vmul.f32 %v5877, %v6260
        %v6294 = vmul.f32 %v5878, %v6260
        %v6295 = vmul.f32 %v5879, %v6261
        %v6296 = vmul.f32 %v5880, %v6261
        %v6297 = vmul.f32 %v5881, %v6262
        %v6298 = vmul.f32 %v5882, %v6262
        %v6299 = vmul.f32 %v5883, %v6263
        %v6300 = vmul.f32 %v5884, %v6263
        %v6301 = vmul.f32 %v5885, %v6264
        %v6302 = vmul.f32 %v5886, %v6264
        %v6303 = vmul.f32 %v5887, %v6265
        %v6304 = vmul.f32 %v5888, %v6265
        %v6305 = vmul.f32 %v5889, %v6266
        %v6306 = vmul.f32 %v5890, %v6266
        %v6307 = vmul.f32 %v5891, %v6267
        %v6308 = vmul.f32 %v5892, %v6267
        %v6309 = vmul.f32 %v5893, %v6268
        %v6310 = vmul.f32 %v5894, %v6268
        %v6311 = vmul.f32 %v5895, %v6269
        %v6312 = vmul.f32 %v5896, %v6269
        %v6313 = vmul.f32 %v5897, %v6270
        %v6314 = vmul.f32 %v5898, %v6270
        %v6315 = vmul.f32 %v5899, %v6271
        %v6316 = vmul.f32 %v5900, %v6271
        %v6317 = vmul.f32 %v5901, %v6272
        %v6318 = vmul.f32 %v5902, %v6272
        %v6319 = vmul.f32 %v5903, %v6273
        %v6320 = vmul.f32 %v5904, %v6273
        %v6321 = vmul.f32 %v5905, %v6274
        %v6322 = vmul.f32 %v5906, %v6274
        %v6323 = vmul.f32 %v5907, %v6275
        %v6324 = vmul.f32 %v5908, %v6275
        %v6325 = vmul.f32 %v5909, %v6276
        %v6326 = vmul.f32 %v5910, %v6276
        %v6327 = vmul.f32 %v5911, %v6277
        %v6328 = vmul.f32 %v5912, %v6277
        %v6329 = vmul.f32 %v5913, %v6278
        %v6330 = vmul.f32 %v5914, %v6278
        %v6331 = vmul.f32 %v5915, %v6279
        %v6332 = vmul.f32 %v5916, %v6279
        %v6333 = vmul.f32 %v5917, %v6280
        %v6334 = vmul.f32 %v5918, %v6280
        %v6335 = vmul.f32 %v5919, %v6281
        %v6336 = vmul.f32 %v5920, %v6281
        %v6337 = vmul.f32 %v5921, %v6282
        %v6338 = vmul.f32 %v5922, %v6282
        %v6339 = vmul.f32 %v5923, %v6283
        %v6340 = vmul.f32 %v5924, %v6283
        %v6341 = vmul.f32 %v5925, %v6284
        %v6342 = vmul.f32 %v5926, %v6284
        %v6343 = vmul.f32 %v5927, %v6285
        %v6344 = vmul.f32 %v5928, %v6285
        %v6345 = vmul.f32 %v5929, %v6286
        %v6346 = vmul.f32 %v5930, %v6286
        %v6347 = vmul.f32 %v5931, %v6287
        %v6348 = vmul.f32 %v5932, %v6287
        %v6349 = vmul.f32 %v5933, %v6288
        %v6350 = vmul.f32 %v5934, %v6288
        %v6351 = vmul.f32 %v5935, %v6289
        %v6352 = vmul.f32 %v5936, %v6289
        %v6353 = vmul.f32 %v5937, %v6290
        %v6354 = vmul.f32 %v5938, %v6290
        %v6355 = vmul.f32 %v6291, %v691
        %v6356 = vmul.f32 %v6292, %v697
        %v6357 = vmul.f32 %v6293, %v691
        %v6358 = vmul.f32 %v6294, %v697
        %v6359 = vmul.f32 %v6295, %v691
        %v6360 = vmul.f32 %v6296, %v697
        %v6361 = vmul.f32 %v6297, %v691
        %v6362 = vmul.f32 %v6298, %v697
        %v6363 = vmul.f32 %v6299, %v691
        %v6364 = vmul.f32 %v6300, %v697
        %v6365 = vmul.f32 %v6301, %v691
        %v6366 = vmul.f32 %v6302, %v697
        %v6367 = vmul.f32 %v6303, %v691
        %v6368 = vmul.f32 %v6304, %v697
        %v6369 = vmul.f32 %v6305, %v691
        %v6370 = vmul.f32 %v6306, %v697
        %v6371 = vmul.f32 %v6307, %v691
        %v6372 = vmul.f32 %v6308, %v697
        %v6373 = vmul.f32 %v6309, %v691
        %v6374 = vmul.f32 %v6310, %v697
        %v6375 = vmul.f32 %v6311, %v691
        %v6376 = vmul.f32 %v6312, %v697
        %v6377 = vmul.f32 %v6313, %v691
        %v6378 = vmul.f32 %v6314, %v697
        %v6379 = vmul.f32 %v6315, %v691
        %v6380 = vmul.f32 %v6316, %v697
        %v6381 = vmul.f32 %v6317, %v691
        %v6382 = vmul.f32 %v6318, %v697
        %v6383 = vmul.f32 %v6319, %v691
        %v6384 = vmul.f32 %v6320, %v697
        %v6385 = vmul.f32 %v6321, %v691
        %v6386 = vmul.f32 %v6322, %v697
        %v6387 = vmul.f32 %v6323, %v691
        %v6388 = vmul.f32 %v6324, %v697
        %v6389 = vmul.f32 %v6325, %v691
        %v6390 = vmul.f32 %v6326, %v697
        %v6391 = vmul.f32 %v6327, %v691
        %v6392 = vmul.f32 %v6328, %v697
        %v6393 = vmul.f32 %v6329, %v691
        %v6394 = vmul.f32 %v6330, %v697
        %v6395 = vmul.f32 %v6331, %v691
        %v6396 = vmul.f32 %v6332, %v697
        %v6397 = vmul.f32 %v6333, %v691
        %v6398 = vmul.f32 %v6334, %v697
        %v6399 = vmul.f32 %v6335, %v691
        %v6400 = vmul.f32 %v6336, %v697
        %v6401 = vmul.f32 %v6337, %v691
        %v6402 = vmul.f32 %v6338, %v697
        %v6403 = vmul.f32 %v6339, %v691
        %v6404 = vmul.f32 %v6340, %v697
        %v6405 = vmul.f32 %v6341, %v691
        %v6406 = vmul.f32 %v6342, %v697
        %v6407 = vmul.f32 %v6343, %v691
        %v6408 = vmul.f32 %v6344, %v697
        %v6409 = vmul.f32 %v6345, %v691
        %v6410 = vmul.f32 %v6346, %v697
        %v6411 = vmul.f32 %v6347, %v691
        %v6412 = vmul.f32 %v6348, %v697
        %v6413 = vmul.f32 %v6349, %v691
        %v6414 = vmul.f32 %v6350, %v697
        %v6415 = vmul.f32 %v6351, %v691
        %v6416 = vmul.f32 %v6352, %v697
        %v6417 = vmul.f32 %v6353, %v691
        %v6418 = vmul.f32 %v6354, %v697
        %v6419 = vsel %vm615, %v6355, 0.0
        %v6420 = vsel %vm615, %v6356, 0.0
        %v6421 = vadd.f32 %v6419, %v6420
        %v6422 = vrot.slane %v6421, 4
        %v6423 = vadd.f32 %v6421, %v6422
        %v6424 = vrot.slane %v6423, 2
        %v6425 = vadd.f32 %v6423, %v6424
        %v6426 = vrot.slane %v6425, 1
        %v6427 = vadd.f32 %v6425, %v6426
        %v6428 = vsel %vm615, %v6357, 0.0
        %v6429 = vsel %vm615, %v6358, 0.0
        %v6430 = vadd.f32 %v6428, %v6429
        %v6431 = vrot.slane %v6430, 4
        %v6432 = vadd.f32 %v6430, %v6431
        %v6433 = vrot.slane %v6432, 2
        %v6434 = vadd.f32 %v6432, %v6433
        %v6435 = vrot.slane %v6434, 1
        %v6436 = vadd.f32 %v6434, %v6435
        %v6437 = vsel %vm615, %v6359, 0.0
        %v6438 = vsel %vm615, %v6360, 0.0
        %v6439 = vadd.f32 %v6437, %v6438
        %v6440 = vrot.slane %v6439, 4
        %v6441 = vadd.f32 %v6439, %v6440
        %v6442 = vrot.slane %v6441, 2
        %v6443 = vadd.f32 %v6441, %v6442
        %v6444 = vrot.slane %v6443, 1
        %v6445 = vadd.f32 %v6443, %v6444
        %v6446 = vsel %vm615, %v6361, 0.0
        %v6447 = vsel %vm615, %v6362, 0.0
        %v6448 = vadd.f32 %v6446, %v6447
        %v6449 = vrot.slane %v6448, 4
        %v6450 = vadd.f32 %v6448, %v6449
        %v6451 = vrot.slane %v6450, 2
        %v6452 = vadd.f32 %v6450, %v6451
        %v6453 = vrot.slane %v6452, 1
        %v6454 = vadd.f32 %v6452, %v6453
        %v6455 = vsel %vm615, %v6363, 0.0
        %v6456 = vsel %vm615, %v6364, 0.0
        %v6457 = vadd.f32 %v6455, %v6456
        %v6458 = vrot.slane %v6457, 4
        %v6459 = vadd.f32 %v6457, %v6458
        %v6460 = vrot.slane %v6459, 2
        %v6461 = vadd.f32 %v6459, %v6460
        %v6462 = vrot.slane %v6461, 1
        %v6463 = vadd.f32 %v6461, %v6462
        %v6464 = vsel %vm615, %v6365, 0.0
        %v6465 = vsel %vm615, %v6366, 0.0
        %v6466 = vadd.f32 %v6464, %v6465
        %v6467 = vrot.slane %v6466, 4
        %v6468 = vadd.f32 %v6466, %v6467
        %v6469 = vrot.slane %v6468, 2
        %v6470 = vadd.f32 %v6468, %v6469
        %v6471 = vrot.slane %v6470, 1
        %v6472 = vadd.f32 %v6470, %v6471
        %v6473 = vsel %vm615, %v6367, 0.0
        %v6474 = vsel %vm615, %v6368, 0.0
        %v6475 = vadd.f32 %v6473, %v6474
        %v6476 = vrot.slane %v6475, 4
        %v6477 = vadd.f32 %v6475, %v6476
        %v6478 = vrot.slane %v6477, 2
        %v6479 = vadd.f32 %v6477, %v6478
        %v6480 = vrot.slane %v6479, 1
        %v6481 = vadd.f32 %v6479, %v6480
        %v6482 = vsel %vm615, %v6369, 0.0
        %v6483 = vsel %vm615, %v6370, 0.0
        %v6484 = vadd.f32 %v6482, %v6483
        %v6485 = vrot.slane %v6484, 4
        %v6486 = vadd.f32 %v6484, %v6485
        %v6487 = vrot.slane %v6486, 2
        %v6488 = vadd.f32 %v6486, %v6487
        %v6489 = vrot.slane %v6488, 1
        %v6490 = vadd.f32 %v6488, %v6489
        %v6491 = vsel %vm615, %v6371, 0.0
        %v6492 = vsel %vm615, %v6372, 0.0
        %v6493 = vadd.f32 %v6491, %v6492
        %v6494 = vrot.slane %v6493, 4
        %v6495 = vadd.f32 %v6493, %v6494
        %v6496 = vrot.slane %v6495, 2
        %v6497 = vadd.f32 %v6495, %v6496
        %v6498 = vrot.slane %v6497, 1
        %v6499 = vadd.f32 %v6497, %v6498
        %v6500 = vsel %vm615, %v6373, 0.0
        %v6501 = vsel %vm615, %v6374, 0.0
        %v6502 = vadd.f32 %v6500, %v6501
        %v6503 = vrot.slane %v6502, 4
        %v6504 = vadd.f32 %v6502, %v6503
        %v6505 = vrot.slane %v6504, 2
        %v6506 = vadd.f32 %v6504, %v6505
        %v6507 = vrot.slane %v6506, 1
        %v6508 = vadd.f32 %v6506, %v6507
        %v6509 = vsel %vm615, %v6375, 0.0
        %v6510 = vsel %vm615, %v6376, 0.0
        %v6511 = vadd.f32 %v6509, %v6510
        %v6512 = vrot.slane %v6511, 4
        %v6513 = vadd.f32 %v6511, %v6512
        %v6514 = vrot.slane %v6513, 2
        %v6515 = vadd.f32 %v6513, %v6514
        %v6516 = vrot.slane %v6515, 1
        %v6517 = vadd.f32 %v6515, %v6516
        %v6518 = vsel %vm615, %v6377, 0.0
        %v6519 = vsel %vm615, %v6378, 0.0
        %v6520 = vadd.f32 %v6518, %v6519
        %v6521 = vrot.slane %v6520, 4
        %v6522 = vadd.f32 %v6520, %v6521
        %v6523 = vrot.slane %v6522, 2
        %v6524 = vadd.f32 %v6522, %v6523
        %v6525 = vrot.slane %v6524, 1
        %v6526 = vadd.f32 %v6524, %v6525
        %v6527 = vsel %vm615, %v6379, 0.0
        %v6528 = vsel %vm615, %v6380, 0.0
        %v6529 = vadd.f32 %v6527, %v6528
        %v6530 = vrot.slane %v6529, 4
        %v6531 = vadd.f32 %v6529, %v6530
        %v6532 = vrot.slane %v6531, 2
        %v6533 = vadd.f32 %v6531, %v6532
        %v6534 = vrot.slane %v6533, 1
        %v6535 = vadd.f32 %v6533, %v6534
        %v6536 = vsel %vm615, %v6381, 0.0
        %v6537 = vsel %vm615, %v6382, 0.0
        %v6538 = vadd.f32 %v6536, %v6537
        %v6539 = vrot.slane %v6538, 4
        %v6540 = vadd.f32 %v6538, %v6539
        %v6541 = vrot.slane %v6540, 2
        %v6542 = vadd.f32 %v6540, %v6541
        %v6543 = vrot.slane %v6542, 1
        %v6544 = vadd.f32 %v6542, %v6543
        %v6545 = vsel %vm615, %v6383, 0.0
        %v6546 = vsel %vm615, %v6384, 0.0
        %v6547 = vadd.f32 %v6545, %v6546
        %v6548 = vrot.slane %v6547, 4
        %v6549 = vadd.f32 %v6547, %v6548
        %v6550 = vrot.slane %v6549, 2
        %v6551 = vadd.f32 %v6549, %v6550
        %v6552 = vrot.slane %v6551, 1
        %v6553 = vadd.f32 %v6551, %v6552
        %v6554 = vsel %vm615, %v6385, 0.0
        %v6555 = vsel %vm615, %v6386, 0.0
        %v6556 = vadd.f32 %v6554, %v6555
        %v6557 = vrot.slane %v6556, 4
        %v6558 = vadd.f32 %v6556, %v6557
        %v6559 = vrot.slane %v6558, 2
        %v6560 = vadd.f32 %v6558, %v6559
        %v6561 = vrot.slane %v6560, 1
        %v6562 = vadd.f32 %v6560, %v6561
        %v6563 = vsel %vm615, %v6387, 0.0
        %v6564 = vsel %vm615, %v6388, 0.0
        %v6565 = vadd.f32 %v6563, %v6564
        %v6566 = vrot.slane %v6565, 4
        %v6567 = vadd.f32 %v6565, %v6566
        %v6568 = vrot.slane %v6567, 2
        %v6569 = vadd.f32 %v6567, %v6568
        %v6570 = vrot.slane %v6569, 1
        %v6571 = vadd.f32 %v6569, %v6570
        %v6572 = vsel %vm615, %v6389, 0.0
        %v6573 = vsel %vm615, %v6390, 0.0
        %v6574 = vadd.f32 %v6572, %v6573
        %v6575 = vrot.slane %v6574, 4
        %v6576 = vadd.f32 %v6574, %v6575
        %v6577 = vrot.slane %v6576, 2
        %v6578 = vadd.f32 %v6576, %v6577
        %v6579 = vrot.slane %v6578, 1
        %v6580 = vadd.f32 %v6578, %v6579
        %v6581 = vsel %vm615, %v6391, 0.0
        %v6582 = vsel %vm615, %v6392, 0.0
        %v6583 = vadd.f32 %v6581, %v6582
        %v6584 = vrot.slane %v6583, 4
        %v6585 = vadd.f32 %v6583, %v6584
        %v6586 = vrot.slane %v6585, 2
        %v6587 = vadd.f32 %v6585, %v6586
        %v6588 = vrot.slane %v6587, 1
        %v6589 = vadd.f32 %v6587, %v6588
        %v6590 = vsel %vm615, %v6393, 0.0
        %v6591 = vsel %vm615, %v6394, 0.0
        %v6592 = vadd.f32 %v6590, %v6591
        %v6593 = vrot.slane %v6592, 4
        %v6594 = vadd.f32 %v6592, %v6593
        %v6595 = vrot.slane %v6594, 2
        %v6596 = vadd.f32 %v6594, %v6595
        %v6597 = vrot.slane %v6596, 1
        %v6598 = vadd.f32 %v6596, %v6597
        %v6599 = vsel %vm615, %v6395, 0.0
        %v6600 = vsel %vm615, %v6396, 0.0
        %v6601 = vadd.f32 %v6599, %v6600
        %v6602 = vrot.slane %v6601, 4
        %v6603 = vadd.f32 %v6601, %v6602
        %v6604 = vrot.slane %v6603, 2
        %v6605 = vadd.f32 %v6603, %v6604
        %v6606 = vrot.slane %v6605, 1
        %v6607 = vadd.f32 %v6605, %v6606
        %v6608 = vsel %vm615, %v6397, 0.0
        %v6609 = vsel %vm615, %v6398, 0.0
        %v6610 = vadd.f32 %v6608, %v6609
        %v6611 = vrot.slane %v6610, 4
        %v6612 = vadd.f32 %v6610, %v6611
        %v6613 = vrot.slane %v6612, 2
        %v6614 = vadd.f32 %v6612, %v6613
        %v6615 = vrot.slane %v6614, 1
        %v6616 = vadd.f32 %v6614, %v6615
        %v6617 = vsel %vm615, %v6399, 0.0
        %v6618 = vsel %vm615, %v6400, 0.0
        %v6619 = vadd.f32 %v6617, %v6618
        %v6620 = vrot.slane %v6619, 4
        %v6621 = vadd.f32 %v6619, %v6620
        %v6622 = vrot.slane %v6621, 2
        %v6623 = vadd.f32 %v6621, %v6622
        %v6624 = vrot.slane %v6623, 1
        %v6625 = vadd.f32 %v6623, %v6624
        %v6626 = vsel %vm615, %v6401, 0.0
        %v6627 = vsel %vm615, %v6402, 0.0
        %v6628 = vadd.f32 %v6626, %v6627
        %v6629 = vrot.slane %v6628, 4
        %v6630 = vadd.f32 %v6628, %v6629
        %v6631 = vrot.slane %v6630, 2
        %v6632 = vadd.f32 %v6630, %v6631
        %v6633 = vrot.slane %v6632, 1
        %v6634 = vadd.f32 %v6632, %v6633
        %v6635 = vsel %vm615, %v6403, 0.0
        %v6636 = vsel %vm615, %v6404, 0.0
        %v6637 = vadd.f32 %v6635, %v6636
        %v6638 = vrot.slane %v6637, 4
        %v6639 = vadd.f32 %v6637, %v6638
        %v6640 = vrot.slane %v6639, 2
        %v6641 = vadd.f32 %v6639, %v6640
        %v6642 = vrot.slane %v6641, 1
        %v6643 = vadd.f32 %v6641, %v6642
        %v6644 = vsel %vm615, %v6405, 0.0
        %v6645 = vsel %vm615, %v6406, 0.0
        %v6646 = vadd.f32 %v6644, %v6645
        %v6647 = vrot.slane %v6646, 4
        %v6648 = vadd.f32 %v6646, %v6647
        %v6649 = vrot.slane %v6648, 2
        %v6650 = vadd.f32 %v6648, %v6649
        %v6651 = vrot.slane %v6650, 1
        %v6652 = vadd.f32 %v6650, %v6651
        %v6653 = vsel %vm615, %v6407, 0.0
        %v6654 = vsel %vm615, %v6408, 0.0
        %v6655 = vadd.f32 %v6653, %v6654
        %v6656 = vrot.slane %v6655, 4
        %v6657 = vadd.f32 %v6655, %v6656
        %v6658 = vrot.slane %v6657, 2
        %v6659 = vadd.f32 %v6657, %v6658
        %v6660 = vrot.slane %v6659, 1
        %v6661 = vadd.f32 %v6659, %v6660
        %v6662 = vsel %vm615, %v6409, 0.0
        %v6663 = vsel %vm615, %v6410, 0.0
        %v6664 = vadd.f32 %v6662, %v6663
        %v6665 = vrot.slane %v6664, 4
        %v6666 = vadd.f32 %v6664, %v6665
        %v6667 = vrot.slane %v6666, 2
        %v6668 = vadd.f32 %v6666, %v6667
        %v6669 = vrot.slane %v6668, 1
        %v6670 = vadd.f32 %v6668, %v6669
        %v6671 = vsel %vm615, %v6411, 0.0
        %v6672 = vsel %vm615, %v6412, 0.0
        %v6673 = vadd.f32 %v6671, %v6672
        %v6674 = vrot.slane %v6673, 4
        %v6675 = vadd.f32 %v6673, %v6674
        %v6676 = vrot.slane %v6675, 2
        %v6677 = vadd.f32 %v6675, %v6676
        %v6678 = vrot.slane %v6677, 1
        %v6679 = vadd.f32 %v6677, %v6678
        %v6680 = vsel %vm615, %v6413, 0.0
        %v6681 = vsel %vm615, %v6414, 0.0
        %v6682 = vadd.f32 %v6680, %v6681
        %v6683 = vrot.slane %v6682, 4
        %v6684 = vadd.f32 %v6682, %v6683
        %v6685 = vrot.slane %v6684, 2
        %v6686 = vadd.f32 %v6684, %v6685
        %v6687 = vrot.slane %v6686, 1
        %v6688 = vadd.f32 %v6686, %v6687
        %v6689 = vsel %vm615, %v6415, 0.0
        %v6690 = vsel %vm615, %v6416, 0.0
        %v6691 = vadd.f32 %v6689, %v6690
        %v6692 = vrot.slane %v6691, 4
        %v6693 = vadd.f32 %v6691, %v6692
        %v6694 = vrot.slane %v6693, 2
        %v6695 = vadd.f32 %v6693, %v6694
        %v6696 = vrot.slane %v6695, 1
        %v6697 = vadd.f32 %v6695, %v6696
        %v6698 = vsel %vm615, %v6417, 0.0
        %v6699 = vsel %vm615, %v6418, 0.0
        %v6700 = vadd.f32 %v6698, %v6699
        %v6701 = vrot.slane %v6700, 4
        %v6702 = vadd.f32 %v6700, %v6701
        %v6703 = vrot.slane %v6702, 2
        %v6704 = vadd.f32 %v6702, %v6703
        %v6705 = vrot.slane %v6704, 1
        %v6706 = vadd.f32 %v6704, %v6705
        %v6707 = vld [vmem:[%s492] sm:$0xff]
        %v6708 = vld [vmem:[%s492 + $0x8] sm:$0xff]
        %v6709 = vld [vmem:[%s492 + $0x10] sm:$0xff]
        %v6710 = vld [vmem:[%s492 + $0x18] sm:$0xff]
        %v6715 = vcombine.high %v969, %v969
        %v6717 = vunpack.c.l.s4 1966171168
        %v6718 = vunpack.c.0.s8 %v6717
        %v6719 = vlaneseq
        %v6720 = vshrl.u32 %v6719, 7
        %v6721 = vsub.s32 %v6718, %v6720
        %v6722 = vrot.slane %v969, %v6721
        %v6724 = vunpack.c.l.s4 1966171168
        %v6725 = vunpack.c.0.s8 %v6724
        %v6726 = vlaneseq
        %v6727 = vshrl.u32 %v6726, 7
        %v6728 = vsub.s32 %v6725, %v6727
        %v6729 = vrot.slane %v6715, %v6728
        %v6730 = vcombine.high %v6722, %v6722
        %v6731 = vcombine.high %v6729, %v6729
        %v6733 = vunpack.c.l.s4 1966171168
        %v6734 = vunpack.c.0.s8 %v6733
        %v6735 = vlaneseq
        %v6736 = vshrl.u32 %v6735, 7
        %v6737 = vsub.s32 %v6734, %v6736
        %v6738 = vrot.slane %v6722, %v6737
        %v6740 = vunpack.c.l.s4 1966171168
        %v6741 = vunpack.c.0.s8 %v6740
        %v6742 = vlaneseq
        %v6743 = vshrl.u32 %v6742, 7
        %v6744 = vsub.s32 %v6741, %v6743
        %v6745 = vrot.slane %v6729, %v6744
        %v6747 = vunpack.c.l.s4 1966171168
        %v6748 = vunpack.c.0.s8 %v6747
        %v6749 = vlaneseq
        %v6750 = vshrl.u32 %v6749, 7
        %v6751 = vsub.s32 %v6748, %v6750
        %v6752 = vrot.slane %v6730, %v6751
        %v6754 = vunpack.c.l.s4 1966171168
        %v6755 = vunpack.c.0.s8 %v6754
        %v6756 = vlaneseq
        %v6757 = vshrl.u32 %v6756, 7
        %v6758 = vsub.s32 %v6755, %v6757
        %v6759 = vrot.slane %v6731, %v6758
        %v6760 = vcombine.high %v6738, %v6738
        %v6761 = vcombine.high %v6745, %v6745
        %v6762 = vcombine.high %v6752, %v6752
        %v6763 = vcombine.high %v6759, %v6759
        %v6764 = vcombine.high %v974, %v974
        %v6766 = vunpack.c.l.s4 1966171168
        %v6767 = vunpack.c.0.s8 %v6766
        %v6768 = vlaneseq
        %v6769 = vshrl.u32 %v6768, 7
        %v6770 = vsub.s32 %v6767, %v6769
        %v6771 = vrot.slane %v974, %v6770
        %v6773 = vunpack.c.l.s4 1966171168
        %v6774 = vunpack.c.0.s8 %v6773
        %v6775 = vlaneseq
        %v6776 = vshrl.u32 %v6775, 7
        %v6777 = vsub.s32 %v6774, %v6776
        %v6778 = vrot.slane %v6764, %v6777
        %v6779 = vcombine.high %v6771, %v6771
        %v6780 = vcombine.high %v6778, %v6778
        %v6782 = vunpack.c.l.s4 1966171168
        %v6783 = vunpack.c.0.s8 %v6782
        %v6784 = vlaneseq
        %v6785 = vshrl.u32 %v6784, 7
        %v6786 = vsub.s32 %v6783, %v6785
        %v6787 = vrot.slane %v6771, %v6786
        %v6789 = vunpack.c.l.s4 1966171168
        %v6790 = vunpack.c.0.s8 %v6789
        %v6791 = vlaneseq
        %v6792 = vshrl.u32 %v6791, 7
        %v6793 = vsub.s32 %v6790, %v6792
        %v6794 = vrot.slane %v6778, %v6793
        %v6796 = vunpack.c.l.s4 1966171168
        %v6797 = vunpack.c.0.s8 %v6796
        %v6798 = vlaneseq
        %v6799 = vshrl.u32 %v6798, 7
        %v6800 = vsub.s32 %v6797, %v6799
        %v6801 = vrot.slane %v6779, %v6800
        %v6803 = vunpack.c.l.s4 1966171168
        %v6804 = vunpack.c.0.s8 %v6803
        %v6805 = vlaneseq
        %v6806 = vshrl.u32 %v6805, 7
        %v6807 = vsub.s32 %v6804, %v6806
        %v6808 = vrot.slane %v6780, %v6807
        %v6809 = vcombine.high %v6787, %v6787
        %v6810 = vcombine.high %v6794, %v6794
        %v6811 = vcombine.high %v6801, %v6801
        %v6812 = vcombine.high %v6808, %v6808
        %v6813 = vcombine.high %v979, %v979
        %v6815 = vunpack.c.l.s4 1966171168
        %v6816 = vunpack.c.0.s8 %v6815
        %v6817 = vlaneseq
        %v6818 = vshrl.u32 %v6817, 7
        %v6819 = vsub.s32 %v6816, %v6818
        %v6820 = vrot.slane %v979, %v6819
        %v6822 = vunpack.c.l.s4 1966171168
        %v6823 = vunpack.c.0.s8 %v6822
        %v6824 = vlaneseq
        %v6825 = vshrl.u32 %v6824, 7
        %v6826 = vsub.s32 %v6823, %v6825
        %v6827 = vrot.slane %v6813, %v6826
        %v6828 = vcombine.high %v6820, %v6820
        %v6829 = vcombine.high %v6827, %v6827
        %v6831 = vunpack.c.l.s4 1966171168
        %v6832 = vunpack.c.0.s8 %v6831
        %v6833 = vlaneseq
        %v6834 = vshrl.u32 %v6833, 7
        %v6835 = vsub.s32 %v6832, %v6834
        %v6836 = vrot.slane %v6820, %v6835
        %v6838 = vunpack.c.l.s4 1966171168
        %v6839 = vunpack.c.0.s8 %v6838
        %v6840 = vlaneseq
        %v6841 = vshrl.u32 %v6840, 7
        %v6842 = vsub.s32 %v6839, %v6841
        %v6843 = vrot.slane %v6827, %v6842
        %v6845 = vunpack.c.l.s4 1966171168
        %v6846 = vunpack.c.0.s8 %v6845
        %v6847 = vlaneseq
        %v6848 = vshrl.u32 %v6847, 7
        %v6849 = vsub.s32 %v6846, %v6848
        %v6850 = vrot.slane %v6828, %v6849
        %v6852 = vunpack.c.l.s4 1966171168
        %v6853 = vunpack.c.0.s8 %v6852
        %v6854 = vlaneseq
        %v6855 = vshrl.u32 %v6854, 7
        %v6856 = vsub.s32 %v6853, %v6855
        %v6857 = vrot.slane %v6829, %v6856
        %v6858 = vcombine.high %v6836, %v6836
        %v6859 = vcombine.high %v6843, %v6843
        %v6860 = vcombine.high %v6850, %v6850
        %v6861 = vcombine.high %v6857, %v6857
        %v6862 = vcombine.high %v984, %v984
        %v6864 = vunpack.c.l.s4 1966171168
        %v6865 = vunpack.c.0.s8 %v6864
        %v6866 = vlaneseq
        %v6867 = vshrl.u32 %v6866, 7
        %v6868 = vsub.s32 %v6865, %v6867
        %v6869 = vrot.slane %v984, %v6868
        %v6871 = vunpack.c.l.s4 1966171168
        %v6872 = vunpack.c.0.s8 %v6871
        %v6873 = vlaneseq
        %v6874 = vshrl.u32 %v6873, 7
        %v6875 = vsub.s32 %v6872, %v6874
        %v6876 = vrot.slane %v6862, %v6875
        %v6877 = vcombine.high %v6869, %v6869
        %v6878 = vcombine.high %v6876, %v6876
        %v6880 = vunpack.c.l.s4 1966171168
        %v6881 = vunpack.c.0.s8 %v6880
        %v6882 = vlaneseq
        %v6883 = vshrl.u32 %v6882, 7
        %v6884 = vsub.s32 %v6881, %v6883
        %v6885 = vrot.slane %v6869, %v6884
        %v6887 = vunpack.c.l.s4 1966171168
        %v6888 = vunpack.c.0.s8 %v6887
        %v6889 = vlaneseq
        %v6890 = vshrl.u32 %v6889, 7
        %v6891 = vsub.s32 %v6888, %v6890
        %v6892 = vrot.slane %v6876, %v6891
        %v6894 = vunpack.c.l.s4 1966171168
        %v6895 = vunpack.c.0.s8 %v6894
        %v6896 = vlaneseq
        %v6897 = vshrl.u32 %v6896, 7
        %v6898 = vsub.s32 %v6895, %v6897
        %v6899 = vrot.slane %v6877, %v6898
        %v6901 = vunpack.c.l.s4 1966171168
        %v6902 = vunpack.c.0.s8 %v6901
        %v6903 = vlaneseq
        %v6904 = vshrl.u32 %v6903, 7
        %v6905 = vsub.s32 %v6902, %v6904
        %v6906 = vrot.slane %v6878, %v6905
        %v6907 = vcombine.high %v6885, %v6885
        %v6908 = vcombine.high %v6892, %v6892
        %v6909 = vcombine.high %v6899, %v6899
        %v6910 = vcombine.high %v6906, %v6906
        %v6911 = vlaneseq
        %v6912 = vshrl.u32 %v6911, 7
        %v6913 = vsub.s32 0, %v6912
        %v6914 = vrot.slane %v6738, %v6913
        %v6915 = vlaneseq
        %v6916 = vshrl.u32 %v6915, 7
        %v6917 = vsub.s32 0, %v6916
        %v6918 = vrot.slane %v6752, %v6917
        %v6919 = vlaneseq
        %v6920 = vshrl.u32 %v6919, 7
        %v6921 = vsub.s32 0, %v6920
        %v6922 = vrot.slane %v6760, %v6921
        %v6923 = vlaneseq
        %v6924 = vshrl.u32 %v6923, 7
        %v6925 = vsub.s32 0, %v6924
        %v6926 = vrot.slane %v6762, %v6925
        %v6927 = vlaneseq
        %v6928 = vshrl.u32 %v6927, 7
        %v6929 = vsub.s32 0, %v6928
        %v6930 = vrot.slane %v6745, %v6929
        %v6931 = vlaneseq
        %v6932 = vshrl.u32 %v6931, 7
        %v6933 = vsub.s32 0, %v6932
        %v6934 = vrot.slane %v6759, %v6933
        %v6935 = vlaneseq
        %v6936 = vshrl.u32 %v6935, 7
        %v6937 = vsub.s32 0, %v6936
        %v6938 = vrot.slane %v6761, %v6937
        %v6939 = vlaneseq
        %v6940 = vshrl.u32 %v6939, 7
        %v6941 = vsub.s32 0, %v6940
        %v6942 = vrot.slane %v6763, %v6941
        %v6943 = vlaneseq
        %v6944 = vshrl.u32 %v6943, 7
        %v6945 = vsub.s32 0, %v6944
        %v6946 = vrot.slane %v6787, %v6945
        %v6947 = vlaneseq
        %v6948 = vshrl.u32 %v6947, 7
        %v6949 = vsub.s32 0, %v6948
        %v6950 = vrot.slane %v6801, %v6949
        %v6951 = vlaneseq
        %v6952 = vshrl.u32 %v6951, 7
        %v6953 = vsub.s32 0, %v6952
        %v6954 = vrot.slane %v6809, %v6953
        %v6955 = vlaneseq
        %v6956 = vshrl.u32 %v6955, 7
        %v6957 = vsub.s32 0, %v6956
        %v6958 = vrot.slane %v6811, %v6957
        %v6959 = vlaneseq
        %v6960 = vshrl.u32 %v6959, 7
        %v6961 = vsub.s32 0, %v6960
        %v6962 = vrot.slane %v6794, %v6961
        %v6963 = vlaneseq
        %v6964 = vshrl.u32 %v6963, 7
        %v6965 = vsub.s32 0, %v6964
        %v6966 = vrot.slane %v6808, %v6965
        %v6967 = vlaneseq
        %v6968 = vshrl.u32 %v6967, 7
        %v6969 = vsub.s32 0, %v6968
        %v6970 = vrot.slane %v6810, %v6969
        %v6971 = vlaneseq
        %v6972 = vshrl.u32 %v6971, 7
        %v6973 = vsub.s32 0, %v6972
        %v6974 = vrot.slane %v6812, %v6973
        %v6975 = vlaneseq
        %v6976 = vshrl.u32 %v6975, 7
        %v6977 = vsub.s32 0, %v6976
        %v6978 = vrot.slane %v6836, %v6977
        %v6979 = vlaneseq
        %v6980 = vshrl.u32 %v6979, 7
        %v6981 = vsub.s32 0, %v6980
        %v6982 = vrot.slane %v6850, %v6981
        %v6983 = vlaneseq
        %v6984 = vshrl.u32 %v6983, 7
        %v6985 = vsub.s32 0, %v6984
        %v6986 = vrot.slane %v6858, %v6985
        %v6987 = vlaneseq
        %v6988 = vshrl.u32 %v6987, 7
        %v6989 = vsub.s32 0, %v6988
        %v6990 = vrot.slane %v6860, %v6989
        %v6991 = vlaneseq
        %v6992 = vshrl.u32 %v6991, 7
        %v6993 = vsub.s32 0, %v6992
        %v6994 = vrot.slane %v6843, %v6993
        %v6995 = vlaneseq
        %v6996 = vshrl.u32 %v6995, 7
        %v6997 = vsub.s32 0, %v6996
        %v6998 = vrot.slane %v6857, %v6997
        %v6999 = vlaneseq
        %v7000 = vshrl.u32 %v6999, 7
        %v7001 = vsub.s32 0, %v7000
        %v7002 = vrot.slane %v6859, %v7001
        %v7003 = vlaneseq
        %v7004 = vshrl.u32 %v7003, 7
        %v7005 = vsub.s32 0, %v7004
        %v7006 = vrot.slane %v6861, %v7005
        %v7007 = vlaneseq
        %v7008 = vshrl.u32 %v7007, 7
        %v7009 = vsub.s32 0, %v7008
        %v7010 = vrot.slane %v6885, %v7009
        %v7011 = vlaneseq
        %v7012 = vshrl.u32 %v7011, 7
        %v7013 = vsub.s32 0, %v7012
        %v7014 = vrot.slane %v6899, %v7013
        %v7015 = vlaneseq
        %v7016 = vshrl.u32 %v7015, 7
        %v7017 = vsub.s32 0, %v7016
        %v7018 = vrot.slane %v6907, %v7017
        %v7019 = vlaneseq
        %v7020 = vshrl.u32 %v7019, 7
        %v7021 = vsub.s32 0, %v7020
        %v7022 = vrot.slane %v6909, %v7021
        %v7023 = vlaneseq
        %v7024 = vshrl.u32 %v7023, 7
        %v7025 = vsub.s32 0, %v7024
        %v7026 = vrot.slane %v6892, %v7025
        %v7027 = vlaneseq
        %v7028 = vshrl.u32 %v7027, 7
        %v7029 = vsub.s32 0, %v7028
        %v7030 = vrot.slane %v6906, %v7029
        %v7031 = vlaneseq
        %v7032 = vshrl.u32 %v7031, 7
        %v7033 = vsub.s32 0, %v7032
        %v7034 = vrot.slane %v6908, %v7033
        %v7035 = vlaneseq
        %v7036 = vshrl.u32 %v7035, 7
        %v7037 = vsub.s32 0, %v7036
        %v7038 = vrot.slane %v6910, %v7037
        %v7071 = vadd.f32 %v6914, %v2281
        %v7072 = vadd.f32 %v6914, %v2283
        %v7073 = vadd.f32 %v6914, %v2285
        %v7074 = vadd.f32 %v6914, %v2287
        %v7075 = vadd.f32 %v6918, %v2281
        %v7076 = vadd.f32 %v6918, %v2283
        %v7077 = vadd.f32 %v6918, %v2285
        %v7078 = vadd.f32 %v6918, %v2287
        %v7079 = vadd.f32 %v6922, %v2281
        %v7080 = vadd.f32 %v6922, %v2283
        %v7081 = vadd.f32 %v6922, %v2285
        %v7082 = vadd.f32 %v6922, %v2287
        %v7083 = vadd.f32 %v6926, %v2281
        %v7084 = vadd.f32 %v6926, %v2283
        %v7085 = vadd.f32 %v6926, %v2285
        %v7086 = vadd.f32 %v6926, %v2287
        %v7087 = vadd.f32 %v6930, %v2281
        %v7088 = vadd.f32 %v6930, %v2283
        %v7089 = vadd.f32 %v6930, %v2285
        %v7090 = vadd.f32 %v6930, %v2287
        %v7091 = vadd.f32 %v6934, %v2281
        %v7092 = vadd.f32 %v6934, %v2283
        %v7093 = vadd.f32 %v6934, %v2285
        %v7094 = vadd.f32 %v6934, %v2287
        %v7095 = vadd.f32 %v6938, %v2281
        %v7096 = vadd.f32 %v6938, %v2283
        %v7097 = vadd.f32 %v6938, %v2285
        %v7098 = vadd.f32 %v6938, %v2287
        %v7099 = vadd.f32 %v6942, %v2281
        %v7100 = vadd.f32 %v6942, %v2283
        %v7101 = vadd.f32 %v6942, %v2285
        %v7102 = vadd.f32 %v6942, %v2287
        %v7103 = vadd.f32 %v6946, %v2281
        %v7104 = vadd.f32 %v6946, %v2283
        %v7105 = vadd.f32 %v6946, %v2285
        %v7106 = vadd.f32 %v6946, %v2287
        %v7107 = vadd.f32 %v6950, %v2281
        %v7108 = vadd.f32 %v6950, %v2283
        %v7109 = vadd.f32 %v6950, %v2285
        %v7110 = vadd.f32 %v6950, %v2287
        %v7111 = vadd.f32 %v6954, %v2281
        %v7112 = vadd.f32 %v6954, %v2283
        %v7113 = vadd.f32 %v6954, %v2285
        %v7114 = vadd.f32 %v6954, %v2287
        %v7115 = vadd.f32 %v6958, %v2281
        %v7116 = vadd.f32 %v6958, %v2283
        %v7117 = vadd.f32 %v6958, %v2285
        %v7118 = vadd.f32 %v6958, %v2287
        %v7119 = vadd.f32 %v6962, %v2281
        %v7120 = vadd.f32 %v6962, %v2283
        %v7121 = vadd.f32 %v6962, %v2285
        %v7122 = vadd.f32 %v6962, %v2287
        %v7123 = vadd.f32 %v6966, %v2281
        %v7124 = vadd.f32 %v6966, %v2283
        %v7125 = vadd.f32 %v6966, %v2285
        %v7126 = vadd.f32 %v6966, %v2287
        %v7127 = vadd.f32 %v6970, %v2281
        %v7128 = vadd.f32 %v6970, %v2283
        %v7129 = vadd.f32 %v6970, %v2285
        %v7130 = vadd.f32 %v6970, %v2287
        %v7131 = vadd.f32 %v6974, %v2281
        %v7132 = vadd.f32 %v6974, %v2283
        %v7133 = vadd.f32 %v6974, %v2285
        %v7134 = vadd.f32 %v6974, %v2287
        %v7135 = vadd.f32 %v6978, %v2281
        %v7136 = vadd.f32 %v6978, %v2283
        %v7137 = vadd.f32 %v6978, %v2285
        %v7138 = vadd.f32 %v6978, %v2287
        %v7139 = vadd.f32 %v6982, %v2281
        %v7140 = vadd.f32 %v6982, %v2283
        %v7141 = vadd.f32 %v6982, %v2285
        %v7142 = vadd.f32 %v6982, %v2287
        %v7143 = vadd.f32 %v6986, %v2281
        %v7144 = vadd.f32 %v6986, %v2283
        %v7145 = vadd.f32 %v6986, %v2285
        %v7146 = vadd.f32 %v6986, %v2287
        %v7147 = vadd.f32 %v6990, %v2281
        %v7148 = vadd.f32 %v6990, %v2283
        %v7149 = vadd.f32 %v6990, %v2285
        %v7150 = vadd.f32 %v6990, %v2287
        %v7151 = vadd.f32 %v6994, %v2281
        %v7152 = vadd.f32 %v6994, %v2283
        %v7153 = vadd.f32 %v6994, %v2285
        %v7154 = vadd.f32 %v6994, %v2287
        %v7155 = vadd.f32 %v6998, %v2281
        %v7156 = vadd.f32 %v6998, %v2283
        %v7157 = vadd.f32 %v6998, %v2285
        %v7158 = vadd.f32 %v6998, %v2287
        %v7159 = vadd.f32 %v7002, %v2281
        %v7160 = vadd.f32 %v7002, %v2283
        %v7161 = vadd.f32 %v7002, %v2285
        %v7162 = vadd.f32 %v7002, %v2287
        %v7163 = vadd.f32 %v7006, %v2281
        %v7164 = vadd.f32 %v7006, %v2283
        %v7165 = vadd.f32 %v7006, %v2285
        %v7166 = vadd.f32 %v7006, %v2287
        %v7167 = vadd.f32 %v7010, %v2281
        %v7168 = vadd.f32 %v7010, %v2283
        %v7169 = vadd.f32 %v7010, %v2285
        %v7170 = vadd.f32 %v7010, %v2287
        %v7171 = vadd.f32 %v7014, %v2281
        %v7172 = vadd.f32 %v7014, %v2283
        %v7173 = vadd.f32 %v7014, %v2285
        %v7174 = vadd.f32 %v7014, %v2287
        %v7175 = vadd.f32 %v7018, %v2281
        %v7176 = vadd.f32 %v7018, %v2283
        %v7177 = vadd.f32 %v7018, %v2285
        %v7178 = vadd.f32 %v7018, %v2287
        %v7179 = vadd.f32 %v7022, %v2281
        %v7180 = vadd.f32 %v7022, %v2283
        %v7181 = vadd.f32 %v7022, %v2285
        %v7182 = vadd.f32 %v7022, %v2287
        %v7183 = vadd.f32 %v7026, %v2281
        %v7184 = vadd.f32 %v7026, %v2283
        %v7185 = vadd.f32 %v7026, %v2285
        %v7186 = vadd.f32 %v7026, %v2287
        %v7187 = vadd.f32 %v7030, %v2281
        %v7188 = vadd.f32 %v7030, %v2283
        %v7189 = vadd.f32 %v7030, %v2285
        %v7190 = vadd.f32 %v7030, %v2287
        %v7191 = vadd.f32 %v7034, %v2281
        %v7192 = vadd.f32 %v7034, %v2283
        %v7193 = vadd.f32 %v7034, %v2285
        %v7194 = vadd.f32 %v7034, %v2287
        %v7195 = vadd.f32 %v7038, %v2281
        %v7196 = vadd.f32 %v7038, %v2283
        %v7197 = vadd.f32 %v7038, %v2285
        %v7198 = vadd.f32 %v7038, %v2287
        %vm7199 = vcmp.gt.f32.partialorder %v7071, 0.0
        %vm7200 = vcmp.gt.f32.partialorder %v7072, 0.0
        %vm7201 = vcmp.gt.f32.partialorder %v7073, 0.0
        %vm7202 = vcmp.gt.f32.partialorder %v7074, 0.0
        %vm7203 = vcmp.gt.f32.partialorder %v7075, 0.0
        %vm7204 = vcmp.gt.f32.partialorder %v7076, 0.0
        %vm7205 = vcmp.gt.f32.partialorder %v7077, 0.0
        %vm7206 = vcmp.gt.f32.partialorder %v7078, 0.0
        %vm7207 = vcmp.gt.f32.partialorder %v7079, 0.0
        %vm7208 = vcmp.gt.f32.partialorder %v7080, 0.0
        %vm7209 = vcmp.gt.f32.partialorder %v7081, 0.0
        %vm7210 = vcmp.gt.f32.partialorder %v7082, 0.0
        %vm7211 = vcmp.gt.f32.partialorder %v7083, 0.0
        %vm7212 = vcmp.gt.f32.partialorder %v7084, 0.0
        %vm7213 = vcmp.gt.f32.partialorder %v7085, 0.0
        %vm7214 = vcmp.gt.f32.partialorder %v7086, 0.0
        %vm7215 = vcmp.gt.f32.partialorder %v7087, 0.0
        %vm7216 = vcmp.gt.f32.partialorder %v7088, 0.0
        %vm7217 = vcmp.gt.f32.partialorder %v7089, 0.0
        %vm7218 = vcmp.gt.f32.partialorder %v7090, 0.0
        %vm7219 = vcmp.gt.f32.partialorder %v7091, 0.0
        %vm7220 = vcmp.gt.f32.partialorder %v7092, 0.0
        %vm7221 = vcmp.gt.f32.partialorder %v7093, 0.0
        %vm7222 = vcmp.gt.f32.partialorder %v7094, 0.0
        %vm7223 = vcmp.gt.f32.partialorder %v7095, 0.0
        %vm7224 = vcmp.gt.f32.partialorder %v7096, 0.0
        %vm7225 = vcmp.gt.f32.partialorder %v7097, 0.0
        %vm7226 = vcmp.gt.f32.partialorder %v7098, 0.0
        %vm7227 = vcmp.gt.f32.partialorder %v7099, 0.0
        %vm7228 = vcmp.gt.f32.partialorder %v7100, 0.0
        %vm7229 = vcmp.gt.f32.partialorder %v7101, 0.0
        %vm7230 = vcmp.gt.f32.partialorder %v7102, 0.0
        %vm7231 = vcmp.gt.f32.partialorder %v7103, 0.0
        %vm7232 = vcmp.gt.f32.partialorder %v7104, 0.0
        %vm7233 = vcmp.gt.f32.partialorder %v7105, 0.0
        %vm7234 = vcmp.gt.f32.partialorder %v7106, 0.0
        %vm7235 = vcmp.gt.f32.partialorder %v7107, 0.0
        %vm7236 = vcmp.gt.f32.partialorder %v7108, 0.0
        %vm7237 = vcmp.gt.f32.partialorder %v7109, 0.0
        %vm7238 = vcmp.gt.f32.partialorder %v7110, 0.0
        %vm7239 = vcmp.gt.f32.partialorder %v7111, 0.0
        %vm7240 = vcmp.gt.f32.partialorder %v7112, 0.0
        %vm7241 = vcmp.gt.f32.partialorder %v7113, 0.0
        %vm7242 = vcmp.gt.f32.partialorder %v7114, 0.0
        %vm7243 = vcmp.gt.f32.partialorder %v7115, 0.0
        %vm7244 = vcmp.gt.f32.partialorder %v7116, 0.0
        %vm7245 = vcmp.gt.f32.partialorder %v7117, 0.0
        %vm7246 = vcmp.gt.f32.partialorder %v7118, 0.0
        %vm7247 = vcmp.gt.f32.partialorder %v7119, 0.0
        %vm7248 = vcmp.gt.f32.partialorder %v7120, 0.0
        %vm7249 = vcmp.gt.f32.partialorder %v7121, 0.0
        %vm7250 = vcmp.gt.f32.partialorder %v7122, 0.0
        %vm7251 = vcmp.gt.f32.partialorder %v7123, 0.0
        %vm7252 = vcmp.gt.f32.partialorder %v7124, 0.0
        %vm7253 = vcmp.gt.f32.partialorder %v7125, 0.0
        %vm7254 = vcmp.gt.f32.partialorder %v7126, 0.0
        %vm7255 = vcmp.gt.f32.partialorder %v7127, 0.0
        %vm7256 = vcmp.gt.f32.partialorder %v7128, 0.0
        %vm7257 = vcmp.gt.f32.partialorder %v7129, 0.0
        %vm7258 = vcmp.gt.f32.partialorder %v7130, 0.0
        %vm7259 = vcmp.gt.f32.partialorder %v7131, 0.0
        %vm7260 = vcmp.gt.f32.partialorder %v7132, 0.0
        %vm7261 = vcmp.gt.f32.partialorder %v7133, 0.0
        %vm7262 = vcmp.gt.f32.partialorder %v7134, 0.0
        %vm7263 = vcmp.gt.f32.partialorder %v7135, 0.0
        %vm7264 = vcmp.gt.f32.partialorder %v7136, 0.0
        %vm7265 = vcmp.gt.f32.partialorder %v7137, 0.0
        %vm7266 = vcmp.gt.f32.partialorder %v7138, 0.0
        %vm7267 = vcmp.gt.f32.partialorder %v7139, 0.0
        %vm7268 = vcmp.gt.f32.partialorder %v7140, 0.0
        %vm7269 = vcmp.gt.f32.partialorder %v7141, 0.0
        %vm7270 = vcmp.gt.f32.partialorder %v7142, 0.0
        %vm7271 = vcmp.gt.f32.partialorder %v7143, 0.0
        %vm7272 = vcmp.gt.f32.partialorder %v7144, 0.0
        %vm7273 = vcmp.gt.f32.partialorder %v7145, 0.0
        %vm7274 = vcmp.gt.f32.partialorder %v7146, 0.0
        %vm7275 = vcmp.gt.f32.partialorder %v7147, 0.0
        %vm7276 = vcmp.gt.f32.partialorder %v7148, 0.0
        %vm7277 = vcmp.gt.f32.partialorder %v7149, 0.0
        %vm7278 = vcmp.gt.f32.partialorder %v7150, 0.0
        %vm7279 = vcmp.gt.f32.partialorder %v7151, 0.0
        %vm7280 = vcmp.gt.f32.partialorder %v7152, 0.0
        %vm7281 = vcmp.gt.f32.partialorder %v7153, 0.0
        %vm7282 = vcmp.gt.f32.partialorder %v7154, 0.0
        %vm7283 = vcmp.gt.f32.partialorder %v7155, 0.0
        %vm7284 = vcmp.gt.f32.partialorder %v7156, 0.0
        %vm7285 = vcmp.gt.f32.partialorder %v7157, 0.0
        %vm7286 = vcmp.gt.f32.partialorder %v7158, 0.0
        %vm7287 = vcmp.gt.f32.partialorder %v7159, 0.0
        %vm7288 = vcmp.gt.f32.partialorder %v7160, 0.0
        %vm7289 = vcmp.gt.f32.partialorder %v7161, 0.0
        %vm7290 = vcmp.gt.f32.partialorder %v7162, 0.0
        %vm7291 = vcmp.gt.f32.partialorder %v7163, 0.0
        %vm7292 = vcmp.gt.f32.partialorder %v7164, 0.0
        %vm7293 = vcmp.gt.f32.partialorder %v7165, 0.0
        %vm7294 = vcmp.gt.f32.partialorder %v7166, 0.0
        %vm7295 = vcmp.gt.f32.partialorder %v7167, 0.0
        %vm7296 = vcmp.gt.f32.partialorder %v7168, 0.0
        %vm7297 = vcmp.gt.f32.partialorder %v7169, 0.0
        %vm7298 = vcmp.gt.f32.partialorder %v7170, 0.0
        %vm7299 = vcmp.gt.f32.partialorder %v7171, 0.0
        %vm7300 = vcmp.gt.f32.partialorder %v7172, 0.0
        %vm7301 = vcmp.gt.f32.partialorder %v7173, 0.0
        %vm7302 = vcmp.gt.f32.partialorder %v7174, 0.0
        %vm7303 = vcmp.gt.f32.partialorder %v7175, 0.0
        %vm7304 = vcmp.gt.f32.partialorder %v7176, 0.0
        %vm7305 = vcmp.gt.f32.partialorder %v7177, 0.0
        %vm7306 = vcmp.gt.f32.partialorder %v7178, 0.0
        %vm7307 = vcmp.gt.f32.partialorder %v7179, 0.0
        %vm7308 = vcmp.gt.f32.partialorder %v7180, 0.0
        %vm7309 = vcmp.gt.f32.partialorder %v7181, 0.0
        %vm7310 = vcmp.gt.f32.partialorder %v7182, 0.0
        %vm7311 = vcmp.gt.f32.partialorder %v7183, 0.0
        %vm7312 = vcmp.gt.f32.partialorder %v7184, 0.0
        %vm7313 = vcmp.gt.f32.partialorder %v7185, 0.0
        %vm7314 = vcmp.gt.f32.partialorder %v7186, 0.0
        %vm7315 = vcmp.gt.f32.partialorder %v7187, 0.0
        %vm7316 = vcmp.gt.f32.partialorder %v7188, 0.0
        %vm7317 = vcmp.gt.f32.partialorder %v7189, 0.0
        %vm7318 = vcmp.gt.f32.partialorder %v7190, 0.0
        %vm7319 = vcmp.gt.f32.partialorder %v7191, 0.0
        %vm7320 = vcmp.gt.f32.partialorder %v7192, 0.0
        %vm7321 = vcmp.gt.f32.partialorder %v7193, 0.0
        %vm7322 = vcmp.gt.f32.partialorder %v7194, 0.0
        %vm7323 = vcmp.gt.f32.partialorder %v7195, 0.0
        %vm7324 = vcmp.gt.f32.partialorder %v7196, 0.0
        %vm7325 = vcmp.gt.f32.partialorder %v7197, 0.0
        %vm7326 = vcmp.gt.f32.partialorder %v7198, 0.0
        %v7327 = vmul.f32 %v7071, 0.2
        %v7328 = vmul.f32 %v7072, 0.2
        %v7329 = vmul.f32 %v7073, 0.2
        %v7330 = vmul.f32 %v7074, 0.2
        %v7331 = vmul.f32 %v7075, 0.2
        %v7332 = vmul.f32 %v7076, 0.2
        %v7333 = vmul.f32 %v7077, 0.2
        %v7334 = vmul.f32 %v7078, 0.2
        %v7335 = vmul.f32 %v7079, 0.2
        %v7336 = vmul.f32 %v7080, 0.2
        %v7337 = vmul.f32 %v7081, 0.2
        %v7338 = vmul.f32 %v7082, 0.2
        %v7339 = vmul.f32 %v7083, 0.2
        %v7340 = vmul.f32 %v7084, 0.2
        %v7341 = vmul.f32 %v7085, 0.2
        %v7342 = vmul.f32 %v7086, 0.2
        %v7343 = vmul.f32 %v7087, 0.2
        %v7344 = vmul.f32 %v7088, 0.2
        %v7345 = vmul.f32 %v7089, 0.2
        %v7346 = vmul.f32 %v7090, 0.2
        %v7347 = vmul.f32 %v7091, 0.2
        %v7348 = vmul.f32 %v7092, 0.2
        %v7349 = vmul.f32 %v7093, 0.2
        %v7350 = vmul.f32 %v7094, 0.2
        %v7351 = vmul.f32 %v7095, 0.2
        %v7352 = vmul.f32 %v7096, 0.2
        %v7353 = vmul.f32 %v7097, 0.2
        %v7354 = vmul.f32 %v7098, 0.2
        %v7355 = vmul.f32 %v7099, 0.2
        %v7356 = vmul.f32 %v7100, 0.2
        %v7357 = vmul.f32 %v7101, 0.2
        %v7358 = vmul.f32 %v7102, 0.2
        %v7359 = vmul.f32 %v7103, 0.2
        %v7360 = vmul.f32 %v7104, 0.2
        %v7361 = vmul.f32 %v7105, 0.2
        %v7362 = vmul.f32 %v7106, 0.2
        %v7363 = vmul.f32 %v7107, 0.2
        %v7364 = vmul.f32 %v7108, 0.2
        %v7365 = vmul.f32 %v7109, 0.2
        %v7366 = vmul.f32 %v7110, 0.2
        %v7367 = vmul.f32 %v7111, 0.2
        %v7368 = vmul.f32 %v7112, 0.2
        %v7369 = vmul.f32 %v7113, 0.2
        %v7370 = vmul.f32 %v7114, 0.2
        %v7371 = vmul.f32 %v7115, 0.2
        %v7372 = vmul.f32 %v7116, 0.2
        %v7373 = vmul.f32 %v7117, 0.2
        %v7374 = vmul.f32 %v7118, 0.2
        %v7375 = vmul.f32 %v7119, 0.2
        %v7376 = vmul.f32 %v7120, 0.2
        %v7377 = vmul.f32 %v7121, 0.2
        %v7378 = vmul.f32 %v7122, 0.2
        %v7379 = vmul.f32 %v7123, 0.2
        %v7380 = vmul.f32 %v7124, 0.2
        %v7381 = vmul.f32 %v7125, 0.2
        %v7382 = vmul.f32 %v7126, 0.2
        %v7383 = vmul.f32 %v7127, 0.2
        %v7384 = vmul.f32 %v7128, 0.2
        %v7385 = vmul.f32 %v7129, 0.2
        %v7386 = vmul.f32 %v7130, 0.2
        %v7387 = vmul.f32 %v7131, 0.2
        %v7388 = vmul.f32 %v7132, 0.2
        %v7389 = vmul.f32 %v7133, 0.2
        %v7390 = vmul.f32 %v7134, 0.2
        %v7391 = vmul.f32 %v7135, 0.2
        %v7392 = vmul.f32 %v7136, 0.2
        %v7393 = vmul.f32 %v7137, 0.2
        %v7394 = vmul.f32 %v7138, 0.2
        %v7395 = vmul.f32 %v7139, 0.2
        %v7396 = vmul.f32 %v7140, 0.2
        %v7397 = vmul.f32 %v7141, 0.2
        %v7398 = vmul.f32 %v7142, 0.2
        %v7399 = vmul.f32 %v7143, 0.2
        %v7400 = vmul.f32 %v7144, 0.2
        %v7401 = vmul.f32 %v7145, 0.2
        %v7402 = vmul.f32 %v7146, 0.2
        %v7403 = vmul.f32 %v7147, 0.2
        %v7404 = vmul.f32 %v7148, 0.2
        %v7405 = vmul.f32 %v7149, 0.2
        %v7406 = vmul.f32 %v7150, 0.2
        %v7407 = vmul.f32 %v7151, 0.2
        %v7408 = vmul.f32 %v7152, 0.2
        %v7409 = vmul.f32 %v7153, 0.2
        %v7410 = vmul.f32 %v7154, 0.2
        %v7411 = vmul.f32 %v7155, 0.2
        %v7412 = vmul.f32 %v7156, 0.2
        %v7413 = vmul.f32 %v7157, 0.2
        %v7414 = vmul.f32 %v7158, 0.2
        %v7415 = vmul.f32 %v7159, 0.2
        %v7416 = vmul.f32 %v7160, 0.2
        %v7417 = vmul.f32 %v7161, 0.2
        %v7418 = vmul.f32 %v7162, 0.2
        %v7419 = vmul.f32 %v7163, 0.2
        %v7420 = vmul.f32 %v7164, 0.2
        %v7421 = vmul.f32 %v7165, 0.2
        %v7422 = vmul.f32 %v7166, 0.2
        %v7423 = vmul.f32 %v7167, 0.2
        %v7424 = vmul.f32 %v7168, 0.2
        %v7425 = vmul.f32 %v7169, 0.2
        %v7426 = vmul.f32 %v7170, 0.2
        %v7427 = vmul.f32 %v7171, 0.2
        %v7428 = vmul.f32 %v7172, 0.2
        %v7429 = vmul.f32 %v7173, 0.2
        %v7430 = vmul.f32 %v7174, 0.2
        %v7431 = vmul.f32 %v7175, 0.2
        %v7432 = vmul.f32 %v7176, 0.2
        %v7433 = vmul.f32 %v7177, 0.2
        %v7434 = vmul.f32 %v7178, 0.2
        %v7435 = vmul.f32 %v7179, 0.2
        %v7436 = vmul.f32 %v7180, 0.2
        %v7437 = vmul.f32 %v7181, 0.2
        %v7438 = vmul.f32 %v7182, 0.2
        %v7439 = vmul.f32 %v7183, 0.2
        %v7440 = vmul.f32 %v7184, 0.2
        %v7441 = vmul.f32 %v7185, 0.2
        %v7442 = vmul.f32 %v7186, 0.2
        %v7443 = vmul.f32 %v7187, 0.2
        %v7444 = vmul.f32 %v7188, 0.2
        %v7445 = vmul.f32 %v7189, 0.2
        %v7446 = vmul.f32 %v7190, 0.2
        %v7447 = vmul.f32 %v7191, 0.2
        %v7448 = vmul.f32 %v7192, 0.2
        %v7449 = vmul.f32 %v7193, 0.2
        %v7450 = vmul.f32 %v7194, 0.2
        %v7451 = vmul.f32 %v7195, 0.2
        %v7452 = vmul.f32 %v7196, 0.2
        %v7453 = vmul.f32 %v7197, 0.2
        %v7454 = vmul.f32 %v7198, 0.2
        %v7455 = vsel %vm7199, %v7071, %v7327
        %v7456 = vsel %vm7200, %v7072, %v7328
        %v7457 = vsel %vm7201, %v7073, %v7329
        %v7458 = vsel %vm7202, %v7074, %v7330
        %v7459 = vsel %vm7203, %v7075, %v7331
        %v7460 = vsel %vm7204, %v7076, %v7332
        %v7461 = vsel %vm7205, %v7077, %v7333
        %v7462 = vsel %vm7206, %v7078, %v7334
        %v7463 = vsel %vm7207, %v7079, %v7335
        %v7464 = vsel %vm7208, %v7080, %v7336
        %v7465 = vsel %vm7209, %v7081, %v7337
        %v7466 = vsel %vm7210, %v7082, %v7338
        %v7467 = vsel %vm7211, %v7083, %v7339
        %v7468 = vsel %vm7212, %v7084, %v7340
        %v7469 = vsel %vm7213, %v7085, %v7341
        %v7470 = vsel %vm7214, %v7086, %v7342
        %v7471 = vsel %vm7215, %v7087, %v7343
        %v7472 = vsel %vm7216, %v7088, %v7344
        %v7473 = vsel %vm7217, %v7089, %v7345
        %v7474 = vsel %vm7218, %v7090, %v7346
        %v7475 = vsel %vm7219, %v7091, %v7347
        %v7476 = vsel %vm7220, %v7092, %v7348
        %v7477 = vsel %vm7221, %v7093, %v7349
        %v7478 = vsel %vm7222, %v7094, %v7350
        %v7479 = vsel %vm7223, %v7095, %v7351
        %v7480 = vsel %vm7224, %v7096, %v7352
        %v7481 = vsel %vm7225, %v7097, %v7353
        %v7482 = vsel %vm7226, %v7098, %v7354
        %v7483 = vsel %vm7227, %v7099, %v7355
        %v7484 = vsel %vm7228, %v7100, %v7356
        %v7485 = vsel %vm7229, %v7101, %v7357
        %v7486 = vsel %vm7230, %v7102, %v7358
        %v7487 = vsel %vm7231, %v7103, %v7359
        %v7488 = vsel %vm7232, %v7104, %v7360
        %v7489 = vsel %vm7233, %v7105, %v7361
        %v7490 = vsel %vm7234, %v7106, %v7362
        %v7491 = vsel %vm7235, %v7107, %v7363
        %v7492 = vsel %vm7236, %v7108, %v7364
        %v7493 = vsel %vm7237, %v7109, %v7365
        %v7494 = vsel %vm7238, %v7110, %v7366
        %v7495 = vsel %vm7239, %v7111, %v7367
        %v7496 = vsel %vm7240, %v7112, %v7368
        %v7497 = vsel %vm7241, %v7113, %v7369
        %v7498 = vsel %vm7242, %v7114, %v7370
        %v7499 = vsel %vm7243, %v7115, %v7371
        %v7500 = vsel %vm7244, %v7116, %v7372
        %v7501 = vsel %vm7245, %v7117, %v7373
        %v7502 = vsel %vm7246, %v7118, %v7374
        %v7503 = vsel %vm7247, %v7119, %v7375
        %v7504 = vsel %vm7248, %v7120, %v7376
        %v7505 = vsel %vm7249, %v7121, %v7377
        %v7506 = vsel %vm7250, %v7122, %v7378
        %v7507 = vsel %vm7251, %v7123, %v7379
        %v7508 = vsel %vm7252, %v7124, %v7380
        %v7509 = vsel %vm7253, %v7125, %v7381
        %v7510 = vsel %vm7254, %v7126, %v7382
        %v7511 = vsel %vm7255, %v7127, %v7383
        %v7512 = vsel %vm7256, %v7128, %v7384
        %v7513 = vsel %vm7257, %v7129, %v7385
        %v7514 = vsel %vm7258, %v7130, %v7386
        %v7515 = vsel %vm7259, %v7131, %v7387
        %v7516 = vsel %vm7260, %v7132, %v7388
        %v7517 = vsel %vm7261, %v7133, %v7389
        %v7518 = vsel %vm7262, %v7134, %v7390
        %v7519 = vsel %vm7263, %v7135, %v7391
        %v7520 = vsel %vm7264, %v7136, %v7392
        %v7521 = vsel %vm7265, %v7137, %v7393
        %v7522 = vsel %vm7266, %v7138, %v7394
        %v7523 = vsel %vm7267, %v7139, %v7395
        %v7524 = vsel %vm7268, %v7140, %v7396
        %v7525 = vsel %vm7269, %v7141, %v7397
        %v7526 = vsel %vm7270, %v7142, %v7398
        %v7527 = vsel %vm7271, %v7143, %v7399
        %v7528 = vsel %vm7272, %v7144, %v7400
        %v7529 = vsel %vm7273, %v7145, %v7401
        %v7530 = vsel %vm7274, %v7146, %v7402
        %v7531 = vsel %vm7275, %v7147, %v7403
        %v7532 = vsel %vm7276, %v7148, %v7404
        %v7533 = vsel %vm7277, %v7149, %v7405
        %v7534 = vsel %vm7278, %v7150, %v7406
        %v7535 = vsel %vm7279, %v7151, %v7407
        %v7536 = vsel %vm7280, %v7152, %v7408
        %v7537 = vsel %vm7281, %v7153, %v7409
        %v7538 = vsel %vm7282, %v7154, %v7410
        %v7539 = vsel %vm7283, %v7155, %v7411
        %v7540 = vsel %vm7284, %v7156, %v7412
        %v7541 = vsel %vm7285, %v7157, %v7413
        %v7542 = vsel %vm7286, %v7158, %v7414
        %v7543 = vsel %vm7287, %v7159, %v7415
        %v7544 = vsel %vm7288, %v7160, %v7416
        %v7545 = vsel %vm7289, %v7161, %v7417
        %v7546 = vsel %vm7290, %v7162, %v7418
        %v7547 = vsel %vm7291, %v7163, %v7419
        %v7548 = vsel %vm7292, %v7164, %v7420
        %v7549 = vsel %vm7293, %v7165, %v7421
        %v7550 = vsel %vm7294, %v7166, %v7422
        %v7551 = vsel %vm7295, %v7167, %v7423
        %v7552 = vsel %vm7296, %v7168, %v7424
        %v7553 = vsel %vm7297, %v7169, %v7425
        %v7554 = vsel %vm7298, %v7170, %v7426
        %v7555 = vsel %vm7299, %v7171, %v7427
        %v7556 = vsel %vm7300, %v7172, %v7428
        %v7557 = vsel %vm7301, %v7173, %v7429
        %v7558 = vsel %vm7302, %v7174, %v7430
        %v7559 = vsel %vm7303, %v7175, %v7431
        %v7560 = vsel %vm7304, %v7176, %v7432
        %v7561 = vsel %vm7305, %v7177, %v7433
        %v7562 = vsel %vm7306, %v7178, %v7434
        %v7563 = vsel %vm7307, %v7179, %v7435
        %v7564 = vsel %vm7308, %v7180, %v7436
        %v7565 = vsel %vm7309, %v7181, %v7437
        %v7566 = vsel %vm7310, %v7182, %v7438
        %v7567 = vsel %vm7311, %v7183, %v7439
        %v7568 = vsel %vm7312, %v7184, %v7440
        %v7569 = vsel %vm7313, %v7185, %v7441
        %v7570 = vsel %vm7314, %v7186, %v7442
        %v7571 = vsel %vm7315, %v7187, %v7443
        %v7572 = vsel %vm7316, %v7188, %v7444
        %v7573 = vsel %vm7317, %v7189, %v7445
        %v7574 = vsel %vm7318, %v7190, %v7446
        %v7575 = vsel %vm7319, %v7191, %v7447
        %v7576 = vsel %vm7320, %v7192, %v7448
        %v7577 = vsel %vm7321, %v7193, %v7449
        %v7578 = vsel %vm7322, %v7194, %v7450
        %v7579 = vsel %vm7323, %v7195, %v7451
        %v7580 = vsel %vm7324, %v7196, %v7452
        %v7581 = vsel %vm7325, %v7197, %v7453
        %v7582 = vsel %vm7326, %v7198, %v7454
        %v7583 = vlaneseq
        %v7584 = vshrl.u32 %v7583, 7
        %v7585 = vsub.s32 0, %v7584
        %v7586 = vrot.slane %v6707, %v7585
        %7588 = vbcast.lane.b32.xlu0 %v7586, 256
        %v7589 = vpop.permute.xlu0 %7588
        %s7591 = sor.u32 256, 8
        %7592 = vbcast.lane.b32.xlu0 %v7586, %s7591
        %v7593 = vpop.permute.xlu0 %7592
        %s7595 = sor.u32 256, 16
        %7596 = vbcast.lane.b32.xlu0 %v7586, %s7595
        %v7597 = vpop.permute.xlu0 %7596
        %s7599 = sor.u32 256, 24
        %7600 = vbcast.lane.b32.xlu0 %v7586, %s7599
        %v7601 = vpop.permute.xlu0 %7600
        %v7602 = vlaneseq
        %v7603 = vshrl.u32 %v7602, 7
        %v7604 = vsub.s32 1, %v7603
        %v7605 = vrot.slane %v6707, %v7604
        %7607 = vbcast.lane.b32.xlu0 %v7605, 256
        %v7608 = vpop.permute.xlu0 %7607
        %s7610 = sor.u32 256, 8
        %7611 = vbcast.lane.b32.xlu0 %v7605, %s7610
        %v7612 = vpop.permute.xlu0 %7611
        %s7614 = sor.u32 256, 16
        %7615 = vbcast.lane.b32.xlu0 %v7605, %s7614
        %v7616 = vpop.permute.xlu0 %7615
        %s7618 = sor.u32 256, 24
        %7619 = vbcast.lane.b32.xlu0 %v7605, %s7618
        %v7620 = vpop.permute.xlu0 %7619
        %v7621 = vlaneseq
        %v7622 = vshrl.u32 %v7621, 7
        %v7623 = vsub.s32 2, %v7622
        %v7624 = vrot.slane %v6707, %v7623
        %7626 = vbcast.lane.b32.xlu0 %v7624, 256
        %v7627 = vpop.permute.xlu0 %7626
        %s7629 = sor.u32 256, 8
        %7630 = vbcast.lane.b32.xlu0 %v7624, %s7629
        %v7631 = vpop.permute.xlu0 %7630
        %s7633 = sor.u32 256, 16
        %7634 = vbcast.lane.b32.xlu0 %v7624, %s7633
        %v7635 = vpop.permute.xlu0 %7634
        %s7637 = sor.u32 256, 24
        %7638 = vbcast.lane.b32.xlu0 %v7624, %s7637
        %v7639 = vpop.permute.xlu0 %7638
        %v7640 = vlaneseq
        %v7641 = vshrl.u32 %v7640, 7
        %v7642 = vsub.s32 3, %v7641
        %v7643 = vrot.slane %v6707, %v7642
        %7645 = vbcast.lane.b32.xlu0 %v7643, 256
        %v7646 = vpop.permute.xlu0 %7645
        %s7648 = sor.u32 256, 8
        %7649 = vbcast.lane.b32.xlu0 %v7643, %s7648
        %v7650 = vpop.permute.xlu0 %7649
        %s7652 = sor.u32 256, 16
        %7653 = vbcast.lane.b32.xlu0 %v7643, %s7652
        %v7654 = vpop.permute.xlu0 %7653
        %s7656 = sor.u32 256, 24
        %7657 = vbcast.lane.b32.xlu0 %v7643, %s7656
        %v7658 = vpop.permute.xlu0 %7657
        %v7659 = vlaneseq
        %v7660 = vshrl.u32 %v7659, 7
        %v7661 = vsub.s32 4, %v7660
        %v7662 = vrot.slane %v6707, %v7661
        %7664 = vbcast.lane.b32.xlu0 %v7662, 256
        %v7665 = vpop.permute.xlu0 %7664
        %s7667 = sor.u32 256, 8
        %7668 = vbcast.lane.b32.xlu0 %v7662, %s7667
        %v7669 = vpop.permute.xlu0 %7668
        %s7671 = sor.u32 256, 16
        %7672 = vbcast.lane.b32.xlu0 %v7662, %s7671
        %v7673 = vpop.permute.xlu0 %7672
        %s7675 = sor.u32 256, 24
        %7676 = vbcast.lane.b32.xlu0 %v7662, %s7675
        %v7677 = vpop.permute.xlu0 %7676
        %v7678 = vlaneseq
        %v7679 = vshrl.u32 %v7678, 7
        %v7680 = vsub.s32 5, %v7679
        %v7681 = vrot.slane %v6707, %v7680
        %7683 = vbcast.lane.b32.xlu0 %v7681, 256
        %v7684 = vpop.permute.xlu0 %7683
        %s7686 = sor.u32 256, 8
        %7687 = vbcast.lane.b32.xlu0 %v7681, %s7686
        %v7688 = vpop.permute.xlu0 %7687
        %s7690 = sor.u32 256, 16
        %7691 = vbcast.lane.b32.xlu0 %v7681, %s7690
        %v7692 = vpop.permute.xlu0 %7691
        %s7694 = sor.u32 256, 24
        %7695 = vbcast.lane.b32.xlu0 %v7681, %s7694
        %v7696 = vpop.permute.xlu0 %7695
        %v7697 = vlaneseq
        %v7698 = vshrl.u32 %v7697, 7
        %v7699 = vsub.s32 6, %v7698
        %v7700 = vrot.slane %v6707, %v7699
        %7702 = vbcast.lane.b32.xlu0 %v7700, 256
        %v7703 = vpop.permute.xlu0 %7702
        %s7705 = sor.u32 256, 8
        %7706 = vbcast.lane.b32.xlu0 %v7700, %s7705
        %v7707 = vpop.permute.xlu0 %7706
        %s7709 = sor.u32 256, 16
        %7710 = vbcast.lane.b32.xlu0 %v7700, %s7709
        %v7711 = vpop.permute.xlu0 %7710
        %s7713 = sor.u32 256, 24
        %7714 = vbcast.lane.b32.xlu0 %v7700, %s7713
        %v7715 = vpop.permute.xlu0 %7714
        %v7716 = vlaneseq
        %v7717 = vshrl.u32 %v7716, 7
        %v7718 = vsub.s32 7, %v7717
        %v7719 = vrot.slane %v6707, %v7718
        %7721 = vbcast.lane.b32.xlu0 %v7719, 256
        %v7722 = vpop.permute.xlu0 %7721
        %s7724 = sor.u32 256, 8
        %7725 = vbcast.lane.b32.xlu0 %v7719, %s7724
        %v7726 = vpop.permute.xlu0 %7725
        %s7728 = sor.u32 256, 16
        %7729 = vbcast.lane.b32.xlu0 %v7719, %s7728
        %v7730 = vpop.permute.xlu0 %7729
        %s7732 = sor.u32 256, 24
        %7733 = vbcast.lane.b32.xlu0 %v7719, %s7732
        %v7734 = vpop.permute.xlu0 %7733
        %v7735 = vlaneseq
        %v7736 = vshrl.u32 %v7735, 7
        %v7737 = vsub.s32 0, %v7736
        %v7738 = vrot.slane %v6708, %v7737
        %7740 = vbcast.lane.b32.xlu0 %v7738, 256
        %v7741 = vpop.permute.xlu0 %7740
        %s7743 = sor.u32 256, 8
        %7744 = vbcast.lane.b32.xlu0 %v7738, %s7743
        %v7745 = vpop.permute.xlu0 %7744
        %s7747 = sor.u32 256, 16
        %7748 = vbcast.lane.b32.xlu0 %v7738, %s7747
        %v7749 = vpop.permute.xlu0 %7748
        %s7751 = sor.u32 256, 24
        %7752 = vbcast.lane.b32.xlu0 %v7738, %s7751
        %v7753 = vpop.permute.xlu0 %7752
        %v7754 = vlaneseq
        %v7755 = vshrl.u32 %v7754, 7
        %v7756 = vsub.s32 1, %v7755
        %v7757 = vrot.slane %v6708, %v7756
        %7759 = vbcast.lane.b32.xlu0 %v7757, 256
        %v7760 = vpop.permute.xlu0 %7759
        %s7762 = sor.u32 256, 8
        %7763 = vbcast.lane.b32.xlu0 %v7757, %s7762
        %v7764 = vpop.permute.xlu0 %7763
        %s7766 = sor.u32 256, 16
        %7767 = vbcast.lane.b32.xlu0 %v7757, %s7766
        %v7768 = vpop.permute.xlu0 %7767
        %s7770 = sor.u32 256, 24
        %7771 = vbcast.lane.b32.xlu0 %v7757, %s7770
        %v7772 = vpop.permute.xlu0 %7771
        %v7773 = vlaneseq
        %v7774 = vshrl.u32 %v7773, 7
        %v7775 = vsub.s32 2, %v7774
        %v7776 = vrot.slane %v6708, %v7775
        %7778 = vbcast.lane.b32.xlu0 %v7776, 256
        %v7779 = vpop.permute.xlu0 %7778
        %s7781 = sor.u32 256, 8
        %7782 = vbcast.lane.b32.xlu0 %v7776, %s7781
        %v7783 = vpop.permute.xlu0 %7782
        %s7785 = sor.u32 256, 16
        %7786 = vbcast.lane.b32.xlu0 %v7776, %s7785
        %v7787 = vpop.permute.xlu0 %7786
        %s7789 = sor.u32 256, 24
        %7790 = vbcast.lane.b32.xlu0 %v7776, %s7789
        %v7791 = vpop.permute.xlu0 %7790
        %v7792 = vlaneseq
        %v7793 = vshrl.u32 %v7792, 7
        %v7794 = vsub.s32 3, %v7793
        %v7795 = vrot.slane %v6708, %v7794
        %7797 = vbcast.lane.b32.xlu0 %v7795, 256
        %v7798 = vpop.permute.xlu0 %7797
        %s7800 = sor.u32 256, 8
        %7801 = vbcast.lane.b32.xlu0 %v7795, %s7800
        %v7802 = vpop.permute.xlu0 %7801
        %s7804 = sor.u32 256, 16
        %7805 = vbcast.lane.b32.xlu0 %v7795, %s7804
        %v7806 = vpop.permute.xlu0 %7805
        %s7808 = sor.u32 256, 24
        %7809 = vbcast.lane.b32.xlu0 %v7795, %s7808
        %v7810 = vpop.permute.xlu0 %7809
        %v7811 = vlaneseq
        %v7812 = vshrl.u32 %v7811, 7
        %v7813 = vsub.s32 4, %v7812
        %v7814 = vrot.slane %v6708, %v7813
        %7816 = vbcast.lane.b32.xlu0 %v7814, 256
        %v7817 = vpop.permute.xlu0 %7816
        %s7819 = sor.u32 256, 8
        %7820 = vbcast.lane.b32.xlu0 %v7814, %s7819
        %v7821 = vpop.permute.xlu0 %7820
        %s7823 = sor.u32 256, 16
        %7824 = vbcast.lane.b32.xlu0 %v7814, %s7823
        %v7825 = vpop.permute.xlu0 %7824
        %s7827 = sor.u32 256, 24
        %7828 = vbcast.lane.b32.xlu0 %v7814, %s7827
        %v7829 = vpop.permute.xlu0 %7828
        %v7830 = vlaneseq
        %v7831 = vshrl.u32 %v7830, 7
        %v7832 = vsub.s32 5, %v7831
        %v7833 = vrot.slane %v6708, %v7832
        %7835 = vbcast.lane.b32.xlu0 %v7833, 256
        %v7836 = vpop.permute.xlu0 %7835
        %s7838 = sor.u32 256, 8
        %7839 = vbcast.lane.b32.xlu0 %v7833, %s7838
        %v7840 = vpop.permute.xlu0 %7839
        %s7842 = sor.u32 256, 16
        %7843 = vbcast.lane.b32.xlu0 %v7833, %s7842
        %v7844 = vpop.permute.xlu0 %7843
        %s7846 = sor.u32 256, 24
        %7847 = vbcast.lane.b32.xlu0 %v7833, %s7846
        %v7848 = vpop.permute.xlu0 %7847
        %v7849 = vlaneseq
        %v7850 = vshrl.u32 %v7849, 7
        %v7851 = vsub.s32 6, %v7850
        %v7852 = vrot.slane %v6708, %v7851
        %7854 = vbcast.lane.b32.xlu0 %v7852, 256
        %v7855 = vpop.permute.xlu0 %7854
        %s7857 = sor.u32 256, 8
        %7858 = vbcast.lane.b32.xlu0 %v7852, %s7857
        %v7859 = vpop.permute.xlu0 %7858
        %s7861 = sor.u32 256, 16
        %7862 = vbcast.lane.b32.xlu0 %v7852, %s7861
        %v7863 = vpop.permute.xlu0 %7862
        %s7865 = sor.u32 256, 24
        %7866 = vbcast.lane.b32.xlu0 %v7852, %s7865
        %v7867 = vpop.permute.xlu0 %7866
        %v7868 = vlaneseq
        %v7869 = vshrl.u32 %v7868, 7
        %v7870 = vsub.s32 7, %v7869
        %v7871 = vrot.slane %v6708, %v7870
        %7873 = vbcast.lane.b32.xlu0 %v7871, 256
        %v7874 = vpop.permute.xlu0 %7873
        %s7876 = sor.u32 256, 8
        %7877 = vbcast.lane.b32.xlu0 %v7871, %s7876
        %v7878 = vpop.permute.xlu0 %7877
        %s7880 = sor.u32 256, 16
        %7881 = vbcast.lane.b32.xlu0 %v7871, %s7880
        %v7882 = vpop.permute.xlu0 %7881
        %s7884 = sor.u32 256, 24
        %7885 = vbcast.lane.b32.xlu0 %v7871, %s7884
        %v7886 = vpop.permute.xlu0 %7885
        %v7887 = vlaneseq
        %v7888 = vshrl.u32 %v7887, 7
        %v7889 = vsub.s32 0, %v7888
        %v7890 = vrot.slane %v6709, %v7889
        %7892 = vbcast.lane.b32.xlu0 %v7890, 256
        %v7893 = vpop.permute.xlu0 %7892
        %s7895 = sor.u32 256, 8
        %7896 = vbcast.lane.b32.xlu0 %v7890, %s7895
        %v7897 = vpop.permute.xlu0 %7896
        %s7899 = sor.u32 256, 16
        %7900 = vbcast.lane.b32.xlu0 %v7890, %s7899
        %v7901 = vpop.permute.xlu0 %7900
        %s7903 = sor.u32 256, 24
        %7904 = vbcast.lane.b32.xlu0 %v7890, %s7903
        %v7905 = vpop.permute.xlu0 %7904
        %v7906 = vlaneseq
        %v7907 = vshrl.u32 %v7906, 7
        %v7908 = vsub.s32 1, %v7907
        %v7909 = vrot.slane %v6709, %v7908
        %7911 = vbcast.lane.b32.xlu0 %v7909, 256
        %v7912 = vpop.permute.xlu0 %7911
        %s7914 = sor.u32 256, 8
        %7915 = vbcast.lane.b32.xlu0 %v7909, %s7914
        %v7916 = vpop.permute.xlu0 %7915
        %s7918 = sor.u32 256, 16
        %7919 = vbcast.lane.b32.xlu0 %v7909, %s7918
        %v7920 = vpop.permute.xlu0 %7919
        %s7922 = sor.u32 256, 24
        %7923 = vbcast.lane.b32.xlu0 %v7909, %s7922
        %v7924 = vpop.permute.xlu0 %7923
        %v7925 = vlaneseq
        %v7926 = vshrl.u32 %v7925, 7
        %v7927 = vsub.s32 2, %v7926
        %v7928 = vrot.slane %v6709, %v7927
        %7930 = vbcast.lane.b32.xlu0 %v7928, 256
        %v7931 = vpop.permute.xlu0 %7930
        %s7933 = sor.u32 256, 8
        %7934 = vbcast.lane.b32.xlu0 %v7928, %s7933
        %v7935 = vpop.permute.xlu0 %7934
        %s7937 = sor.u32 256, 16
        %7938 = vbcast.lane.b32.xlu0 %v7928, %s7937
        %v7939 = vpop.permute.xlu0 %7938
        %s7941 = sor.u32 256, 24
        %7942 = vbcast.lane.b32.xlu0 %v7928, %s7941
        %v7943 = vpop.permute.xlu0 %7942
        %v7944 = vlaneseq
        %v7945 = vshrl.u32 %v7944, 7
        %v7946 = vsub.s32 3, %v7945
        %v7947 = vrot.slane %v6709, %v7946
        %7949 = vbcast.lane.b32.xlu0 %v7947, 256
        %v7950 = vpop.permute.xlu0 %7949
        %s7952 = sor.u32 256, 8
        %7953 = vbcast.lane.b32.xlu0 %v7947, %s7952
        %v7954 = vpop.permute.xlu0 %7953
        %s7956 = sor.u32 256, 16
        %7957 = vbcast.lane.b32.xlu0 %v7947, %s7956
        %v7958 = vpop.permute.xlu0 %7957
        %s7960 = sor.u32 256, 24
        %7961 = vbcast.lane.b32.xlu0 %v7947, %s7960
        %v7962 = vpop.permute.xlu0 %7961
        %v7963 = vlaneseq
        %v7964 = vshrl.u32 %v7963, 7
        %v7965 = vsub.s32 4, %v7964
        %v7966 = vrot.slane %v6709, %v7965
        %7968 = vbcast.lane.b32.xlu0 %v7966, 256
        %v7969 = vpop.permute.xlu0 %7968
        %s7971 = sor.u32 256, 8
        %7972 = vbcast.lane.b32.xlu0 %v7966, %s7971
        %v7973 = vpop.permute.xlu0 %7972
        %s7975 = sor.u32 256, 16
        %7976 = vbcast.lane.b32.xlu0 %v7966, %s7975
        %v7977 = vpop.permute.xlu0 %7976
        %s7979 = sor.u32 256, 24
        %7980 = vbcast.lane.b32.xlu0 %v7966, %s7979
        %v7981 = vpop.permute.xlu0 %7980
        %v7982 = vlaneseq
        %v7983 = vshrl.u32 %v7982, 7
        %v7984 = vsub.s32 5, %v7983
        %v7985 = vrot.slane %v6709, %v7984
        %7987 = vbcast.lane.b32.xlu0 %v7985, 256
        %v7988 = vpop.permute.xlu0 %7987
        %s7990 = sor.u32 256, 8
        %7991 = vbcast.lane.b32.xlu0 %v7985, %s7990
        %v7992 = vpop.permute.xlu0 %7991
        %s7994 = sor.u32 256, 16
        %7995 = vbcast.lane.b32.xlu0 %v7985, %s7994
        %v7996 = vpop.permute.xlu0 %7995
        %s7998 = sor.u32 256, 24
        %7999 = vbcast.lane.b32.xlu0 %v7985, %s7998
        %v8000 = vpop.permute.xlu0 %7999
        %v8001 = vlaneseq
        %v8002 = vshrl.u32 %v8001, 7
        %v8003 = vsub.s32 6, %v8002
        %v8004 = vrot.slane %v6709, %v8003
        %8006 = vbcast.lane.b32.xlu0 %v8004, 256
        %v8007 = vpop.permute.xlu0 %8006
        %s8009 = sor.u32 256, 8
        %8010 = vbcast.lane.b32.xlu0 %v8004, %s8009
        %v8011 = vpop.permute.xlu0 %8010
        %s8013 = sor.u32 256, 16
        %8014 = vbcast.lane.b32.xlu0 %v8004, %s8013
        %v8015 = vpop.permute.xlu0 %8014
        %s8017 = sor.u32 256, 24
        %8018 = vbcast.lane.b32.xlu0 %v8004, %s8017
        %v8019 = vpop.permute.xlu0 %8018
        %v8020 = vlaneseq
        %v8021 = vshrl.u32 %v8020, 7
        %v8022 = vsub.s32 7, %v8021
        %v8023 = vrot.slane %v6709, %v8022
        %8025 = vbcast.lane.b32.xlu0 %v8023, 256
        %v8026 = vpop.permute.xlu0 %8025
        %s8028 = sor.u32 256, 8
        %8029 = vbcast.lane.b32.xlu0 %v8023, %s8028
        %v8030 = vpop.permute.xlu0 %8029
        %s8032 = sor.u32 256, 16
        %8033 = vbcast.lane.b32.xlu0 %v8023, %s8032
        %v8034 = vpop.permute.xlu0 %8033
        %s8036 = sor.u32 256, 24
        %8037 = vbcast.lane.b32.xlu0 %v8023, %s8036
        %v8038 = vpop.permute.xlu0 %8037
        %v8039 = vlaneseq
        %v8040 = vshrl.u32 %v8039, 7
        %v8041 = vsub.s32 0, %v8040
        %v8042 = vrot.slane %v6710, %v8041
        %8044 = vbcast.lane.b32.xlu0 %v8042, 256
        %v8045 = vpop.permute.xlu0 %8044
        %s8047 = sor.u32 256, 8
        %8048 = vbcast.lane.b32.xlu0 %v8042, %s8047
        %v8049 = vpop.permute.xlu0 %8048
        %s8051 = sor.u32 256, 16
        %8052 = vbcast.lane.b32.xlu0 %v8042, %s8051
        %v8053 = vpop.permute.xlu0 %8052
        %s8055 = sor.u32 256, 24
        %8056 = vbcast.lane.b32.xlu0 %v8042, %s8055
        %v8057 = vpop.permute.xlu0 %8056
        %v8058 = vlaneseq
        %v8059 = vshrl.u32 %v8058, 7
        %v8060 = vsub.s32 1, %v8059
        %v8061 = vrot.slane %v6710, %v8060
        %8063 = vbcast.lane.b32.xlu0 %v8061, 256
        %v8064 = vpop.permute.xlu0 %8063
        %s8066 = sor.u32 256, 8
        %8067 = vbcast.lane.b32.xlu0 %v8061, %s8066
        %v8068 = vpop.permute.xlu0 %8067
        %s8070 = sor.u32 256, 16
        %8071 = vbcast.lane.b32.xlu0 %v8061, %s8070
        %v8072 = vpop.permute.xlu0 %8071
        %s8074 = sor.u32 256, 24
        %8075 = vbcast.lane.b32.xlu0 %v8061, %s8074
        %v8076 = vpop.permute.xlu0 %8075
        %v8077 = vlaneseq
        %v8078 = vshrl.u32 %v8077, 7
        %v8079 = vsub.s32 2, %v8078
        %v8080 = vrot.slane %v6710, %v8079
        %8082 = vbcast.lane.b32.xlu0 %v8080, 256
        %v8083 = vpop.permute.xlu0 %8082
        %s8085 = sor.u32 256, 8
        %8086 = vbcast.lane.b32.xlu0 %v8080, %s8085
        %v8087 = vpop.permute.xlu0 %8086
        %s8089 = sor.u32 256, 16
        %8090 = vbcast.lane.b32.xlu0 %v8080, %s8089
        %v8091 = vpop.permute.xlu0 %8090
        %s8093 = sor.u32 256, 24
        %8094 = vbcast.lane.b32.xlu0 %v8080, %s8093
        %v8095 = vpop.permute.xlu0 %8094
        %v8096 = vlaneseq
        %v8097 = vshrl.u32 %v8096, 7
        %v8098 = vsub.s32 3, %v8097
        %v8099 = vrot.slane %v6710, %v8098
        %8101 = vbcast.lane.b32.xlu0 %v8099, 256
        %v8102 = vpop.permute.xlu0 %8101
        %s8104 = sor.u32 256, 8
        %8105 = vbcast.lane.b32.xlu0 %v8099, %s8104
        %v8106 = vpop.permute.xlu0 %8105
        %s8108 = sor.u32 256, 16
        %8109 = vbcast.lane.b32.xlu0 %v8099, %s8108
        %v8110 = vpop.permute.xlu0 %8109
        %s8112 = sor.u32 256, 24
        %8113 = vbcast.lane.b32.xlu0 %v8099, %s8112
        %v8114 = vpop.permute.xlu0 %8113
        %v8115 = vlaneseq
        %v8116 = vshrl.u32 %v8115, 7
        %v8117 = vsub.s32 4, %v8116
        %v8118 = vrot.slane %v6710, %v8117
        %8120 = vbcast.lane.b32.xlu0 %v8118, 256
        %v8121 = vpop.permute.xlu0 %8120
        %s8123 = sor.u32 256, 8
        %8124 = vbcast.lane.b32.xlu0 %v8118, %s8123
        %v8125 = vpop.permute.xlu0 %8124
        %s8127 = sor.u32 256, 16
        %8128 = vbcast.lane.b32.xlu0 %v8118, %s8127
        %v8129 = vpop.permute.xlu0 %8128
        %s8131 = sor.u32 256, 24
        %8132 = vbcast.lane.b32.xlu0 %v8118, %s8131
        %v8133 = vpop.permute.xlu0 %8132
        %v8134 = vlaneseq
        %v8135 = vshrl.u32 %v8134, 7
        %v8136 = vsub.s32 5, %v8135
        %v8137 = vrot.slane %v6710, %v8136
        %8139 = vbcast.lane.b32.xlu0 %v8137, 256
        %v8140 = vpop.permute.xlu0 %8139
        %s8142 = sor.u32 256, 8
        %8143 = vbcast.lane.b32.xlu0 %v8137, %s8142
        %v8144 = vpop.permute.xlu0 %8143
        %s8146 = sor.u32 256, 16
        %8147 = vbcast.lane.b32.xlu0 %v8137, %s8146
        %v8148 = vpop.permute.xlu0 %8147
        %s8150 = sor.u32 256, 24
        %8151 = vbcast.lane.b32.xlu0 %v8137, %s8150
        %v8152 = vpop.permute.xlu0 %8151
        %v8153 = vlaneseq
        %v8154 = vshrl.u32 %v8153, 7
        %v8155 = vsub.s32 6, %v8154
        %v8156 = vrot.slane %v6710, %v8155
        %8158 = vbcast.lane.b32.xlu0 %v8156, 256
        %v8159 = vpop.permute.xlu0 %8158
        %s8161 = sor.u32 256, 8
        %8162 = vbcast.lane.b32.xlu0 %v8156, %s8161
        %v8163 = vpop.permute.xlu0 %8162
        %s8165 = sor.u32 256, 16
        %8166 = vbcast.lane.b32.xlu0 %v8156, %s8165
        %v8167 = vpop.permute.xlu0 %8166
        %s8169 = sor.u32 256, 24
        %8170 = vbcast.lane.b32.xlu0 %v8156, %s8169
        %v8171 = vpop.permute.xlu0 %8170
        %v8172 = vlaneseq
        %v8173 = vshrl.u32 %v8172, 7
        %v8174 = vsub.s32 7, %v8173
        %v8175 = vrot.slane %v6710, %v8174
        %8177 = vbcast.lane.b32.xlu0 %v8175, 256
        %v8178 = vpop.permute.xlu0 %8177
        %s8180 = sor.u32 256, 8
        %8181 = vbcast.lane.b32.xlu0 %v8175, %s8180
        %v8182 = vpop.permute.xlu0 %8181
        %s8184 = sor.u32 256, 16
        %8185 = vbcast.lane.b32.xlu0 %v8175, %s8184
        %v8186 = vpop.permute.xlu0 %8185
        %s8188 = sor.u32 256, 24
        %8189 = vbcast.lane.b32.xlu0 %v8175, %s8188
        %v8190 = vpop.permute.xlu0 %8189
        %vm8191 = vcmp.gt.f32.partialorder %v7589, 0.0
        %vm8192 = vcmp.gt.f32.partialorder %v7593, 0.0
        %vm8193 = vcmp.gt.f32.partialorder %v7597, 0.0
        %vm8194 = vcmp.gt.f32.partialorder %v7601, 0.0
        %vm8195 = vcmp.gt.f32.partialorder %v7608, 0.0
        %vm8196 = vcmp.gt.f32.partialorder %v7612, 0.0
        %vm8197 = vcmp.gt.f32.partialorder %v7616, 0.0
        %vm8198 = vcmp.gt.f32.partialorder %v7620, 0.0
        %vm8199 = vcmp.gt.f32.partialorder %v7627, 0.0
        %vm8200 = vcmp.gt.f32.partialorder %v7631, 0.0
        %vm8201 = vcmp.gt.f32.partialorder %v7635, 0.0
        %vm8202 = vcmp.gt.f32.partialorder %v7639, 0.0
        %vm8203 = vcmp.gt.f32.partialorder %v7646, 0.0
        %vm8204 = vcmp.gt.f32.partialorder %v7650, 0.0
        %vm8205 = vcmp.gt.f32.partialorder %v7654, 0.0
        %vm8206 = vcmp.gt.f32.partialorder %v7658, 0.0
        %vm8207 = vcmp.gt.f32.partialorder %v7665, 0.0
        %vm8208 = vcmp.gt.f32.partialorder %v7669, 0.0
        %vm8209 = vcmp.gt.f32.partialorder %v7673, 0.0
        %vm8210 = vcmp.gt.f32.partialorder %v7677, 0.0
        %vm8211 = vcmp.gt.f32.partialorder %v7684, 0.0
        %vm8212 = vcmp.gt.f32.partialorder %v7688, 0.0
        %vm8213 = vcmp.gt.f32.partialorder %v7692, 0.0
        %vm8214 = vcmp.gt.f32.partialorder %v7696, 0.0
        %vm8215 = vcmp.gt.f32.partialorder %v7703, 0.0
        %vm8216 = vcmp.gt.f32.partialorder %v7707, 0.0
        %vm8217 = vcmp.gt.f32.partialorder %v7711, 0.0
        %vm8218 = vcmp.gt.f32.partialorder %v7715, 0.0
        %vm8219 = vcmp.gt.f32.partialorder %v7722, 0.0
        %vm8220 = vcmp.gt.f32.partialorder %v7726, 0.0
        %vm8221 = vcmp.gt.f32.partialorder %v7730, 0.0
        %vm8222 = vcmp.gt.f32.partialorder %v7734, 0.0
        %vm8223 = vcmp.gt.f32.partialorder %v7741, 0.0
        %vm8224 = vcmp.gt.f32.partialorder %v7745, 0.0
        %vm8225 = vcmp.gt.f32.partialorder %v7749, 0.0
        %vm8226 = vcmp.gt.f32.partialorder %v7753, 0.0
        %vm8227 = vcmp.gt.f32.partialorder %v7760, 0.0
        %vm8228 = vcmp.gt.f32.partialorder %v7764, 0.0
        %vm8229 = vcmp.gt.f32.partialorder %v7768, 0.0
        %vm8230 = vcmp.gt.f32.partialorder %v7772, 0.0
        %vm8231 = vcmp.gt.f32.partialorder %v7779, 0.0
        %vm8232 = vcmp.gt.f32.partialorder %v7783, 0.0
        %vm8233 = vcmp.gt.f32.partialorder %v7787, 0.0
        %vm8234 = vcmp.gt.f32.partialorder %v7791, 0.0
        %vm8235 = vcmp.gt.f32.partialorder %v7798, 0.0
        %vm8236 = vcmp.gt.f32.partialorder %v7802, 0.0
        %vm8237 = vcmp.gt.f32.partialorder %v7806, 0.0
        %vm8238 = vcmp.gt.f32.partialorder %v7810, 0.0
        %vm8239 = vcmp.gt.f32.partialorder %v7817, 0.0
        %vm8240 = vcmp.gt.f32.partialorder %v7821, 0.0
        %vm8241 = vcmp.gt.f32.partialorder %v7825, 0.0
        %vm8242 = vcmp.gt.f32.partialorder %v7829, 0.0
        %vm8243 = vcmp.gt.f32.partialorder %v7836, 0.0
        %vm8244 = vcmp.gt.f32.partialorder %v7840, 0.0
        %vm8245 = vcmp.gt.f32.partialorder %v7844, 0.0
        %vm8246 = vcmp.gt.f32.partialorder %v7848, 0.0
        %vm8247 = vcmp.gt.f32.partialorder %v7855, 0.0
        %vm8248 = vcmp.gt.f32.partialorder %v7859, 0.0
        %vm8249 = vcmp.gt.f32.partialorder %v7863, 0.0
        %vm8250 = vcmp.gt.f32.partialorder %v7867, 0.0
        %vm8251 = vcmp.gt.f32.partialorder %v7874, 0.0
        %vm8252 = vcmp.gt.f32.partialorder %v7878, 0.0
        %vm8253 = vcmp.gt.f32.partialorder %v7882, 0.0
        %vm8254 = vcmp.gt.f32.partialorder %v7886, 0.0
        %vm8255 = vcmp.gt.f32.partialorder %v7893, 0.0
        %vm8256 = vcmp.gt.f32.partialorder %v7897, 0.0
        %vm8257 = vcmp.gt.f32.partialorder %v7901, 0.0
        %vm8258 = vcmp.gt.f32.partialorder %v7905, 0.0
        %vm8259 = vcmp.gt.f32.partialorder %v7912, 0.0
        %vm8260 = vcmp.gt.f32.partialorder %v7916, 0.0
        %vm8261 = vcmp.gt.f32.partialorder %v7920, 0.0
        %vm8262 = vcmp.gt.f32.partialorder %v7924, 0.0
        %vm8263 = vcmp.gt.f32.partialorder %v7931, 0.0
        %vm8264 = vcmp.gt.f32.partialorder %v7935, 0.0
        %vm8265 = vcmp.gt.f32.partialorder %v7939, 0.0
        %vm8266 = vcmp.gt.f32.partialorder %v7943, 0.0
        %vm8267 = vcmp.gt.f32.partialorder %v7950, 0.0
        %vm8268 = vcmp.gt.f32.partialorder %v7954, 0.0
        %vm8269 = vcmp.gt.f32.partialorder %v7958, 0.0
        %vm8270 = vcmp.gt.f32.partialorder %v7962, 0.0
        %vm8271 = vcmp.gt.f32.partialorder %v7969, 0.0
        %vm8272 = vcmp.gt.f32.partialorder %v7973, 0.0
        %vm8273 = vcmp.gt.f32.partialorder %v7977, 0.0
        %vm8274 = vcmp.gt.f32.partialorder %v7981, 0.0
        %vm8275 = vcmp.gt.f32.partialorder %v7988, 0.0
        %vm8276 = vcmp.gt.f32.partialorder %v7992, 0.0
        %vm8277 = vcmp.gt.f32.partialorder %v7996, 0.0
        %vm8278 = vcmp.gt.f32.partialorder %v8000, 0.0
        %vm8279 = vcmp.gt.f32.partialorder %v8007, 0.0
        %vm8280 = vcmp.gt.f32.partialorder %v8011, 0.0
        %vm8281 = vcmp.gt.f32.partialorder %v8015, 0.0
        %vm8282 = vcmp.gt.f32.partialorder %v8019, 0.0
        %vm8283 = vcmp.gt.f32.partialorder %v8026, 0.0
        %vm8284 = vcmp.gt.f32.partialorder %v8030, 0.0
        %vm8285 = vcmp.gt.f32.partialorder %v8034, 0.0
        %vm8286 = vcmp.gt.f32.partialorder %v8038, 0.0
        %vm8287 = vcmp.gt.f32.partialorder %v8045, 0.0
        %vm8288 = vcmp.gt.f32.partialorder %v8049, 0.0
        %vm8289 = vcmp.gt.f32.partialorder %v8053, 0.0
        %vm8290 = vcmp.gt.f32.partialorder %v8057, 0.0
        %vm8291 = vcmp.gt.f32.partialorder %v8064, 0.0
        %vm8292 = vcmp.gt.f32.partialorder %v8068, 0.0
        %vm8293 = vcmp.gt.f32.partialorder %v8072, 0.0
        %vm8294 = vcmp.gt.f32.partialorder %v8076, 0.0
        %vm8295 = vcmp.gt.f32.partialorder %v8083, 0.0
        %vm8296 = vcmp.gt.f32.partialorder %v8087, 0.0
        %vm8297 = vcmp.gt.f32.partialorder %v8091, 0.0
        %vm8298 = vcmp.gt.f32.partialorder %v8095, 0.0
        %vm8299 = vcmp.gt.f32.partialorder %v8102, 0.0
        %vm8300 = vcmp.gt.f32.partialorder %v8106, 0.0
        %vm8301 = vcmp.gt.f32.partialorder %v8110, 0.0
        %vm8302 = vcmp.gt.f32.partialorder %v8114, 0.0
        %vm8303 = vcmp.gt.f32.partialorder %v8121, 0.0
        %vm8304 = vcmp.gt.f32.partialorder %v8125, 0.0
        %vm8305 = vcmp.gt.f32.partialorder %v8129, 0.0
        %vm8306 = vcmp.gt.f32.partialorder %v8133, 0.0
        %vm8307 = vcmp.gt.f32.partialorder %v8140, 0.0
        %vm8308 = vcmp.gt.f32.partialorder %v8144, 0.0
        %vm8309 = vcmp.gt.f32.partialorder %v8148, 0.0
        %vm8310 = vcmp.gt.f32.partialorder %v8152, 0.0
        %vm8311 = vcmp.gt.f32.partialorder %v8159, 0.0
        %vm8312 = vcmp.gt.f32.partialorder %v8163, 0.0
        %vm8313 = vcmp.gt.f32.partialorder %v8167, 0.0
        %vm8314 = vcmp.gt.f32.partialorder %v8171, 0.0
        %vm8315 = vcmp.gt.f32.partialorder %v8178, 0.0
        %vm8316 = vcmp.gt.f32.partialorder %v8182, 0.0
        %vm8317 = vcmp.gt.f32.partialorder %v8186, 0.0
        %vm8318 = vcmp.gt.f32.partialorder %v8190, 0.0
        %v8319 = vsel %vm8191, 1, 0
        %v8320 = vsel %vm8192, 1, 0
        %v8321 = vsel %vm8193, 1, 0
        %v8322 = vsel %vm8194, 1, 0
        %v8323 = vsel %vm8195, 1, 0
        %v8324 = vsel %vm8196, 1, 0
        %v8325 = vsel %vm8197, 1, 0
        %v8326 = vsel %vm8198, 1, 0
        %v8327 = vsel %vm8199, 1, 0
        %v8328 = vsel %vm8200, 1, 0
        %v8329 = vsel %vm8201, 1, 0
        %v8330 = vsel %vm8202, 1, 0
        %v8331 = vsel %vm8203, 1, 0
        %v8332 = vsel %vm8204, 1, 0
        %v8333 = vsel %vm8205, 1, 0
        %v8334 = vsel %vm8206, 1, 0
        %v8335 = vsel %vm8207, 1, 0
        %v8336 = vsel %vm8208, 1, 0
        %v8337 = vsel %vm8209, 1, 0
        %v8338 = vsel %vm8210, 1, 0
        %v8339 = vsel %vm8211, 1, 0
        %v8340 = vsel %vm8212, 1, 0
        %v8341 = vsel %vm8213, 1, 0
        %v8342 = vsel %vm8214, 1, 0
        %v8343 = vsel %vm8215, 1, 0
        %v8344 = vsel %vm8216, 1, 0
        %v8345 = vsel %vm8217, 1, 0
        %v8346 = vsel %vm8218, 1, 0
        %v8347 = vsel %vm8219, 1, 0
        %v8348 = vsel %vm8220, 1, 0
        %v8349 = vsel %vm8221, 1, 0
        %v8350 = vsel %vm8222, 1, 0
        %v8351 = vsel %vm8223, 1, 0
        %v8352 = vsel %vm8224, 1, 0
        %v8353 = vsel %vm8225, 1, 0
        %v8354 = vsel %vm8226, 1, 0
        %v8355 = vsel %vm8227, 1, 0
        %v8356 = vsel %vm8228, 1, 0
        %v8357 = vsel %vm8229, 1, 0
        %v8358 = vsel %vm8230, 1, 0
        %v8359 = vsel %vm8231, 1, 0
        %v8360 = vsel %vm8232, 1, 0
        %v8361 = vsel %vm8233, 1, 0
        %v8362 = vsel %vm8234, 1, 0
        %v8363 = vsel %vm8235, 1, 0
        %v8364 = vsel %vm8236, 1, 0
        %v8365 = vsel %vm8237, 1, 0
        %v8366 = vsel %vm8238, 1, 0
        %v8367 = vsel %vm8239, 1, 0
        %v8368 = vsel %vm8240, 1, 0
        %v8369 = vsel %vm8241, 1, 0
        %v8370 = vsel %vm8242, 1, 0
        %v8371 = vsel %vm8243, 1, 0
        %v8372 = vsel %vm8244, 1, 0
        %v8373 = vsel %vm8245, 1, 0
        %v8374 = vsel %vm8246, 1, 0
        %v8375 = vsel %vm8247, 1, 0
        %v8376 = vsel %vm8248, 1, 0
        %v8377 = vsel %vm8249, 1, 0
        %v8378 = vsel %vm8250, 1, 0
        %v8379 = vsel %vm8251, 1, 0
        %v8380 = vsel %vm8252, 1, 0
        %v8381 = vsel %vm8253, 1, 0
        %v8382 = vsel %vm8254, 1, 0
        %v8383 = vsel %vm8255, 1, 0
        %v8384 = vsel %vm8256, 1, 0
        %v8385 = vsel %vm8257, 1, 0
        %v8386 = vsel %vm8258, 1, 0
        %v8387 = vsel %vm8259, 1, 0
        %v8388 = vsel %vm8260, 1, 0
        %v8389 = vsel %vm8261, 1, 0
        %v8390 = vsel %vm8262, 1, 0
        %v8391 = vsel %vm8263, 1, 0
        %v8392 = vsel %vm8264, 1, 0
        %v8393 = vsel %vm8265, 1, 0
        %v8394 = vsel %vm8266, 1, 0
        %v8395 = vsel %vm8267, 1, 0
        %v8396 = vsel %vm8268, 1, 0
        %v8397 = vsel %vm8269, 1, 0
        %v8398 = vsel %vm8270, 1, 0
        %v8399 = vsel %vm8271, 1, 0
        %v8400 = vsel %vm8272, 1, 0
        %v8401 = vsel %vm8273, 1, 0
        %v8402 = vsel %vm8274, 1, 0
        %v8403 = vsel %vm8275, 1, 0
        %v8404 = vsel %vm8276, 1, 0
        %v8405 = vsel %vm8277, 1, 0
        %v8406 = vsel %vm8278, 1, 0
        %v8407 = vsel %vm8279, 1, 0
        %v8408 = vsel %vm8280, 1, 0
        %v8409 = vsel %vm8281, 1, 0
        %v8410 = vsel %vm8282, 1, 0
        %v8411 = vsel %vm8283, 1, 0
        %v8412 = vsel %vm8284, 1, 0
        %v8413 = vsel %vm8285, 1, 0
        %v8414 = vsel %vm8286, 1, 0
        %v8415 = vsel %vm8287, 1, 0
        %v8416 = vsel %vm8288, 1, 0
        %v8417 = vsel %vm8289, 1, 0
        %v8418 = vsel %vm8290, 1, 0
        %v8419 = vsel %vm8291, 1, 0
        %v8420 = vsel %vm8292, 1, 0
        %v8421 = vsel %vm8293, 1, 0
        %v8422 = vsel %vm8294, 1, 0
        %v8423 = vsel %vm8295, 1, 0
        %v8424 = vsel %vm8296, 1, 0
        %v8425 = vsel %vm8297, 1, 0
        %v8426 = vsel %vm8298, 1, 0
        %v8427 = vsel %vm8299, 1, 0
        %v8428 = vsel %vm8300, 1, 0
        %v8429 = vsel %vm8301, 1, 0
        %v8430 = vsel %vm8302, 1, 0
        %v8431 = vsel %vm8303, 1, 0
        %v8432 = vsel %vm8304, 1, 0
        %v8433 = vsel %vm8305, 1, 0
        %v8434 = vsel %vm8306, 1, 0
        %v8435 = vsel %vm8307, 1, 0
        %v8436 = vsel %vm8308, 1, 0
        %v8437 = vsel %vm8309, 1, 0
        %v8438 = vsel %vm8310, 1, 0
        %v8439 = vsel %vm8311, 1, 0
        %v8440 = vsel %vm8312, 1, 0
        %v8441 = vsel %vm8313, 1, 0
        %v8442 = vsel %vm8314, 1, 0
        %v8443 = vsel %vm8315, 1, 0
        %v8444 = vsel %vm8316, 1, 0
        %v8445 = vsel %vm8317, 1, 0
        %v8446 = vsel %vm8318, 1, 0
        %vm8447 = vcmp.eq.s32.totalorder %v8319, 1
        %vm8448 = vcmp.eq.s32.totalorder %v8320, 1
        %vm8449 = vcmp.eq.s32.totalorder %v8321, 1
        %vm8450 = vcmp.eq.s32.totalorder %v8322, 1
        %vm8451 = vcmp.eq.s32.totalorder %v8323, 1
        %vm8452 = vcmp.eq.s32.totalorder %v8324, 1
        %vm8453 = vcmp.eq.s32.totalorder %v8325, 1
        %vm8454 = vcmp.eq.s32.totalorder %v8326, 1
        %vm8455 = vcmp.eq.s32.totalorder %v8327, 1
        %vm8456 = vcmp.eq.s32.totalorder %v8328, 1
        %vm8457 = vcmp.eq.s32.totalorder %v8329, 1
        %vm8458 = vcmp.eq.s32.totalorder %v8330, 1
        %vm8459 = vcmp.eq.s32.totalorder %v8331, 1
        %vm8460 = vcmp.eq.s32.totalorder %v8332, 1
        %vm8461 = vcmp.eq.s32.totalorder %v8333, 1
        %vm8462 = vcmp.eq.s32.totalorder %v8334, 1
        %vm8463 = vcmp.eq.s32.totalorder %v8335, 1
        %vm8464 = vcmp.eq.s32.totalorder %v8336, 1
        %vm8465 = vcmp.eq.s32.totalorder %v8337, 1
        %vm8466 = vcmp.eq.s32.totalorder %v8338, 1
        %vm8467 = vcmp.eq.s32.totalorder %v8339, 1
        %vm8468 = vcmp.eq.s32.totalorder %v8340, 1
        %vm8469 = vcmp.eq.s32.totalorder %v8341, 1
        %vm8470 = vcmp.eq.s32.totalorder %v8342, 1
        %vm8471 = vcmp.eq.s32.totalorder %v8343, 1
        %vm8472 = vcmp.eq.s32.totalorder %v8344, 1
        %vm8473 = vcmp.eq.s32.totalorder %v8345, 1
        %vm8474 = vcmp.eq.s32.totalorder %v8346, 1
        %vm8475 = vcmp.eq.s32.totalorder %v8347, 1
        %vm8476 = vcmp.eq.s32.totalorder %v8348, 1
        %vm8477 = vcmp.eq.s32.totalorder %v8349, 1
        %vm8478 = vcmp.eq.s32.totalorder %v8350, 1
        %vm8479 = vcmp.eq.s32.totalorder %v8351, 1
        %vm8480 = vcmp.eq.s32.totalorder %v8352, 1
        %vm8481 = vcmp.eq.s32.totalorder %v8353, 1
        %vm8482 = vcmp.eq.s32.totalorder %v8354, 1
        %vm8483 = vcmp.eq.s32.totalorder %v8355, 1
        %vm8484 = vcmp.eq.s32.totalorder %v8356, 1
        %vm8485 = vcmp.eq.s32.totalorder %v8357, 1
        %vm8486 = vcmp.eq.s32.totalorder %v8358, 1
        %vm8487 = vcmp.eq.s32.totalorder %v8359, 1
        %vm8488 = vcmp.eq.s32.totalorder %v8360, 1
        %vm8489 = vcmp.eq.s32.totalorder %v8361, 1
        %vm8490 = vcmp.eq.s32.totalorder %v8362, 1
        %vm8491 = vcmp.eq.s32.totalorder %v8363, 1
        %vm8492 = vcmp.eq.s32.totalorder %v8364, 1
        %vm8493 = vcmp.eq.s32.totalorder %v8365, 1
        %vm8494 = vcmp.eq.s32.totalorder %v8366, 1
        %vm8495 = vcmp.eq.s32.totalorder %v8367, 1
        %vm8496 = vcmp.eq.s32.totalorder %v8368, 1
        %vm8497 = vcmp.eq.s32.totalorder %v8369, 1
        %vm8498 = vcmp.eq.s32.totalorder %v8370, 1
        %vm8499 = vcmp.eq.s32.totalorder %v8371, 1
        %vm8500 = vcmp.eq.s32.totalorder %v8372, 1
        %vm8501 = vcmp.eq.s32.totalorder %v8373, 1
        %vm8502 = vcmp.eq.s32.totalorder %v8374, 1
        %vm8503 = vcmp.eq.s32.totalorder %v8375, 1
        %vm8504 = vcmp.eq.s32.totalorder %v8376, 1
        %vm8505 = vcmp.eq.s32.totalorder %v8377, 1
        %vm8506 = vcmp.eq.s32.totalorder %v8378, 1
        %vm8507 = vcmp.eq.s32.totalorder %v8379, 1
        %vm8508 = vcmp.eq.s32.totalorder %v8380, 1
        %vm8509 = vcmp.eq.s32.totalorder %v8381, 1
        %vm8510 = vcmp.eq.s32.totalorder %v8382, 1
        %vm8511 = vcmp.eq.s32.totalorder %v8383, 1
        %vm8512 = vcmp.eq.s32.totalorder %v8384, 1
        %vm8513 = vcmp.eq.s32.totalorder %v8385, 1
        %vm8514 = vcmp.eq.s32.totalorder %v8386, 1
        %vm8515 = vcmp.eq.s32.totalorder %v8387, 1
        %vm8516 = vcmp.eq.s32.totalorder %v8388, 1
        %vm8517 = vcmp.eq.s32.totalorder %v8389, 1
        %vm8518 = vcmp.eq.s32.totalorder %v8390, 1
        %vm8519 = vcmp.eq.s32.totalorder %v8391, 1
        %vm8520 = vcmp.eq.s32.totalorder %v8392, 1
        %vm8521 = vcmp.eq.s32.totalorder %v8393, 1
        %vm8522 = vcmp.eq.s32.totalorder %v8394, 1
        %vm8523 = vcmp.eq.s32.totalorder %v8395, 1
        %vm8524 = vcmp.eq.s32.totalorder %v8396, 1
        %vm8525 = vcmp.eq.s32.totalorder %v8397, 1
        %vm8526 = vcmp.eq.s32.totalorder %v8398, 1
        %vm8527 = vcmp.eq.s32.totalorder %v8399, 1
        %vm8528 = vcmp.eq.s32.totalorder %v8400, 1
        %vm8529 = vcmp.eq.s32.totalorder %v8401, 1
        %vm8530 = vcmp.eq.s32.totalorder %v8402, 1
        %vm8531 = vcmp.eq.s32.totalorder %v8403, 1
        %vm8532 = vcmp.eq.s32.totalorder %v8404, 1
        %vm8533 = vcmp.eq.s32.totalorder %v8405, 1
        %vm8534 = vcmp.eq.s32.totalorder %v8406, 1
        %vm8535 = vcmp.eq.s32.totalorder %v8407, 1
        %vm8536 = vcmp.eq.s32.totalorder %v8408, 1
        %vm8537 = vcmp.eq.s32.totalorder %v8409, 1
        %vm8538 = vcmp.eq.s32.totalorder %v8410, 1
        %vm8539 = vcmp.eq.s32.totalorder %v8411, 1
        %vm8540 = vcmp.eq.s32.totalorder %v8412, 1
        %vm8541 = vcmp.eq.s32.totalorder %v8413, 1
        %vm8542 = vcmp.eq.s32.totalorder %v8414, 1
        %vm8543 = vcmp.eq.s32.totalorder %v8415, 1
        %vm8544 = vcmp.eq.s32.totalorder %v8416, 1
        %vm8545 = vcmp.eq.s32.totalorder %v8417, 1
        %vm8546 = vcmp.eq.s32.totalorder %v8418, 1
        %vm8547 = vcmp.eq.s32.totalorder %v8419, 1
        %vm8548 = vcmp.eq.s32.totalorder %v8420, 1
        %vm8549 = vcmp.eq.s32.totalorder %v8421, 1
        %vm8550 = vcmp.eq.s32.totalorder %v8422, 1
        %vm8551 = vcmp.eq.s32.totalorder %v8423, 1
        %vm8552 = vcmp.eq.s32.totalorder %v8424, 1
        %vm8553 = vcmp.eq.s32.totalorder %v8425, 1
        %vm8554 = vcmp.eq.s32.totalorder %v8426, 1
        %vm8555 = vcmp.eq.s32.totalorder %v8427, 1
        %vm8556 = vcmp.eq.s32.totalorder %v8428, 1
        %vm8557 = vcmp.eq.s32.totalorder %v8429, 1
        %vm8558 = vcmp.eq.s32.totalorder %v8430, 1
        %vm8559 = vcmp.eq.s32.totalorder %v8431, 1
        %vm8560 = vcmp.eq.s32.totalorder %v8432, 1
        %vm8561 = vcmp.eq.s32.totalorder %v8433, 1
        %vm8562 = vcmp.eq.s32.totalorder %v8434, 1
        %vm8563 = vcmp.eq.s32.totalorder %v8435, 1
        %vm8564 = vcmp.eq.s32.totalorder %v8436, 1
        %vm8565 = vcmp.eq.s32.totalorder %v8437, 1
        %vm8566 = vcmp.eq.s32.totalorder %v8438, 1
        %vm8567 = vcmp.eq.s32.totalorder %v8439, 1
        %vm8568 = vcmp.eq.s32.totalorder %v8440, 1
        %vm8569 = vcmp.eq.s32.totalorder %v8441, 1
        %vm8570 = vcmp.eq.s32.totalorder %v8442, 1
        %vm8571 = vcmp.eq.s32.totalorder %v8443, 1
        %vm8572 = vcmp.eq.s32.totalorder %v8444, 1
        %vm8573 = vcmp.eq.s32.totalorder %v8445, 1
        %vm8574 = vcmp.eq.s32.totalorder %v8446, 1
        %v8575 = vsel %vm8447, %v7455, -1e+09
        %v8576 = vsel %vm8448, %v7456, -1e+09
        %v8577 = vsel %vm8449, %v7457, -1e+09
        %v8578 = vsel %vm8450, %v7458, -1e+09
        %v8579 = vsel %vm8451, %v7459, -1e+09
        %v8580 = vsel %vm8452, %v7460, -1e+09
        %v8581 = vsel %vm8453, %v7461, -1e+09
        %v8582 = vsel %vm8454, %v7462, -1e+09
        %v8583 = vsel %vm8455, %v7463, -1e+09
        %v8584 = vsel %vm8456, %v7464, -1e+09
        %v8585 = vsel %vm8457, %v7465, -1e+09
        %v8586 = vsel %vm8458, %v7466, -1e+09
        %v8587 = vsel %vm8459, %v7467, -1e+09
        %v8588 = vsel %vm8460, %v7468, -1e+09
        %v8589 = vsel %vm8461, %v7469, -1e+09
        %v8590 = vsel %vm8462, %v7470, -1e+09
        %v8591 = vsel %vm8463, %v7471, -1e+09
        %v8592 = vsel %vm8464, %v7472, -1e+09
        %v8593 = vsel %vm8465, %v7473, -1e+09
        %v8594 = vsel %vm8466, %v7474, -1e+09
        %v8595 = vsel %vm8467, %v7475, -1e+09
        %v8596 = vsel %vm8468, %v7476, -1e+09
        %v8597 = vsel %vm8469, %v7477, -1e+09
        %v8598 = vsel %vm8470, %v7478, -1e+09
        %v8599 = vsel %vm8471, %v7479, -1e+09
        %v8600 = vsel %vm8472, %v7480, -1e+09
        %v8601 = vsel %vm8473, %v7481, -1e+09
        %v8602 = vsel %vm8474, %v7482, -1e+09
        %v8603 = vsel %vm8475, %v7483, -1e+09
        %v8604 = vsel %vm8476, %v7484, -1e+09
        %v8605 = vsel %vm8477, %v7485, -1e+09
        %v8606 = vsel %vm8478, %v7486, -1e+09
        %v8607 = vsel %vm8479, %v7487, -1e+09
        %v8608 = vsel %vm8480, %v7488, -1e+09
        %v8609 = vsel %vm8481, %v7489, -1e+09
        %v8610 = vsel %vm8482, %v7490, -1e+09
        %v8611 = vsel %vm8483, %v7491, -1e+09
        %v8612 = vsel %vm8484, %v7492, -1e+09
        %v8613 = vsel %vm8485, %v7493, -1e+09
        %v8614 = vsel %vm8486, %v7494, -1e+09
        %v8615 = vsel %vm8487, %v7495, -1e+09
        %v8616 = vsel %vm8488, %v7496, -1e+09
        %v8617 = vsel %vm8489, %v7497, -1e+09
        %v8618 = vsel %vm8490, %v7498, -1e+09
        %v8619 = vsel %vm8491, %v7499, -1e+09
        %v8620 = vsel %vm8492, %v7500, -1e+09
        %v8621 = vsel %vm8493, %v7501, -1e+09
        %v8622 = vsel %vm8494, %v7502, -1e+09
        %v8623 = vsel %vm8495, %v7503, -1e+09
        %v8624 = vsel %vm8496, %v7504, -1e+09
        %v8625 = vsel %vm8497, %v7505, -1e+09
        %v8626 = vsel %vm8498, %v7506, -1e+09
        %v8627 = vsel %vm8499, %v7507, -1e+09
        %v8628 = vsel %vm8500, %v7508, -1e+09
        %v8629 = vsel %vm8501, %v7509, -1e+09
        %v8630 = vsel %vm8502, %v7510, -1e+09
        %v8631 = vsel %vm8503, %v7511, -1e+09
        %v8632 = vsel %vm8504, %v7512, -1e+09
        %v8633 = vsel %vm8505, %v7513, -1e+09
        %v8634 = vsel %vm8506, %v7514, -1e+09
        %v8635 = vsel %vm8507, %v7515, -1e+09
        %v8636 = vsel %vm8508, %v7516, -1e+09
        %v8637 = vsel %vm8509, %v7517, -1e+09
        %v8638 = vsel %vm8510, %v7518, -1e+09
        %v8639 = vsel %vm8511, %v7519, -1e+09
        %v8640 = vsel %vm8512, %v7520, -1e+09
        %v8641 = vsel %vm8513, %v7521, -1e+09
        %v8642 = vsel %vm8514, %v7522, -1e+09
        %v8643 = vsel %vm8515, %v7523, -1e+09
        %v8644 = vsel %vm8516, %v7524, -1e+09
        %v8645 = vsel %vm8517, %v7525, -1e+09
        %v8646 = vsel %vm8518, %v7526, -1e+09
        %v8647 = vsel %vm8519, %v7527, -1e+09
        %v8648 = vsel %vm8520, %v7528, -1e+09
        %v8649 = vsel %vm8521, %v7529, -1e+09
        %v8650 = vsel %vm8522, %v7530, -1e+09
        %v8651 = vsel %vm8523, %v7531, -1e+09
        %v8652 = vsel %vm8524, %v7532, -1e+09
        %v8653 = vsel %vm8525, %v7533, -1e+09
        %v8654 = vsel %vm8526, %v7534, -1e+09
        %v8655 = vsel %vm8527, %v7535, -1e+09
        %v8656 = vsel %vm8528, %v7536, -1e+09
        %v8657 = vsel %vm8529, %v7537, -1e+09
        %v8658 = vsel %vm8530, %v7538, -1e+09
        %v8659 = vsel %vm8531, %v7539, -1e+09
        %v8660 = vsel %vm8532, %v7540, -1e+09
        %v8661 = vsel %vm8533, %v7541, -1e+09
        %v8662 = vsel %vm8534, %v7542, -1e+09
        %v8663 = vsel %vm8535, %v7543, -1e+09
        %v8664 = vsel %vm8536, %v7544, -1e+09
        %v8665 = vsel %vm8537, %v7545, -1e+09
        %v8666 = vsel %vm8538, %v7546, -1e+09
        %v8667 = vsel %vm8539, %v7547, -1e+09
        %v8668 = vsel %vm8540, %v7548, -1e+09
        %v8669 = vsel %vm8541, %v7549, -1e+09
        %v8670 = vsel %vm8542, %v7550, -1e+09
        %v8671 = vsel %vm8543, %v7551, -1e+09
        %v8672 = vsel %vm8544, %v7552, -1e+09
        %v8673 = vsel %vm8545, %v7553, -1e+09
        %v8674 = vsel %vm8546, %v7554, -1e+09
        %v8675 = vsel %vm8547, %v7555, -1e+09
        %v8676 = vsel %vm8548, %v7556, -1e+09
        %v8677 = vsel %vm8549, %v7557, -1e+09
        %v8678 = vsel %vm8550, %v7558, -1e+09
        %v8679 = vsel %vm8551, %v7559, -1e+09
        %v8680 = vsel %vm8552, %v7560, -1e+09
        %v8681 = vsel %vm8553, %v7561, -1e+09
        %v8682 = vsel %vm8554, %v7562, -1e+09
        %v8683 = vsel %vm8555, %v7563, -1e+09
        %v8684 = vsel %vm8556, %v7564, -1e+09
        %v8685 = vsel %vm8557, %v7565, -1e+09
        %v8686 = vsel %vm8558, %v7566, -1e+09
        %v8687 = vsel %vm8559, %v7567, -1e+09
        %v8688 = vsel %vm8560, %v7568, -1e+09
        %v8689 = vsel %vm8561, %v7569, -1e+09
        %v8690 = vsel %vm8562, %v7570, -1e+09
        %v8691 = vsel %vm8563, %v7571, -1e+09
        %v8692 = vsel %vm8564, %v7572, -1e+09
        %v8693 = vsel %vm8565, %v7573, -1e+09
        %v8694 = vsel %vm8566, %v7574, -1e+09
        %v8695 = vsel %vm8567, %v7575, -1e+09
        %v8696 = vsel %vm8568, %v7576, -1e+09
        %v8697 = vsel %vm8569, %v7577, -1e+09
        %v8698 = vsel %vm8570, %v7578, -1e+09
        %v8699 = vsel %vm8571, %v7579, -1e+09
        %v8700 = vsel %vm8572, %v7580, -1e+09
        %v8701 = vsel %vm8573, %v7581, -1e+09
        %v8702 = vsel %vm8574, %v7582, -1e+09
        %v8703 = vsel %vm615, %v8575, -inf
        %v8704 = vsel %vm615, %v8576, -inf
        %v8705 = vmax.f32 %v8703, %v8704
        %v8706 = vsel %vm615, %v8577, -inf
        %v8707 = vmax.f32 %v8705, %v8706
        %v8708 = vsel %vm615, %v8578, -inf
        %v8709 = vmax.f32 %v8707, %v8708
        %v8710 = vrot.slane %v8709, 4
        %v8711 = vmax.f32 %v8709, %v8710
        %v8712 = vrot.slane %v8711, 2
        %v8713 = vmax.f32 %v8711, %v8712
        %v8714 = vrot.slane %v8713, 1
        %v8715 = vmax.f32 %v8713, %v8714
        %v8716 = vsel %vm615, %v8579, -inf
        %v8717 = vsel %vm615, %v8580, -inf
        %v8718 = vmax.f32 %v8716, %v8717
        %v8719 = vsel %vm615, %v8581, -inf
        %v8720 = vmax.f32 %v8718, %v8719
        %v8721 = vsel %vm615, %v8582, -inf
        %v8722 = vmax.f32 %v8720, %v8721
        %v8723 = vrot.slane %v8722, 4
        %v8724 = vmax.f32 %v8722, %v8723
        %v8725 = vrot.slane %v8724, 2
        %v8726 = vmax.f32 %v8724, %v8725
        %v8727 = vrot.slane %v8726, 1
        %v8728 = vmax.f32 %v8726, %v8727
        %v8729 = vsel %vm615, %v8583, -inf
        %v8730 = vsel %vm615, %v8584, -inf
        %v8731 = vmax.f32 %v8729, %v8730
        %v8732 = vsel %vm615, %v8585, -inf
        %v8733 = vmax.f32 %v8731, %v8732
        %v8734 = vsel %vm615, %v8586, -inf
        %v8735 = vmax.f32 %v8733, %v8734
        %v8736 = vrot.slane %v8735, 4
        %v8737 = vmax.f32 %v8735, %v8736
        %v8738 = vrot.slane %v8737, 2
        %v8739 = vmax.f32 %v8737, %v8738
        %v8740 = vrot.slane %v8739, 1
        %v8741 = vmax.f32 %v8739, %v8740
        %v8742 = vsel %vm615, %v8587, -inf
        %v8743 = vsel %vm615, %v8588, -inf
        %v8744 = vmax.f32 %v8742, %v8743
        %v8745 = vsel %vm615, %v8589, -inf
        %v8746 = vmax.f32 %v8744, %v8745
        %v8747 = vsel %vm615, %v8590, -inf
        %v8748 = vmax.f32 %v8746, %v8747
        %v8749 = vrot.slane %v8748, 4
        %v8750 = vmax.f32 %v8748, %v8749
        %v8751 = vrot.slane %v8750, 2
        %v8752 = vmax.f32 %v8750, %v8751
        %v8753 = vrot.slane %v8752, 1
        %v8754 = vmax.f32 %v8752, %v8753
        %v8755 = vsel %vm615, %v8591, -inf
        %v8756 = vsel %vm615, %v8592, -inf
        %v8757 = vmax.f32 %v8755, %v8756
        %v8758 = vsel %vm615, %v8593, -inf
        %v8759 = vmax.f32 %v8757, %v8758
        %v8760 = vsel %vm615, %v8594, -inf
        %v8761 = vmax.f32 %v8759, %v8760
        %v8762 = vrot.slane %v8761, 4
        %v8763 = vmax.f32 %v8761, %v8762
        %v8764 = vrot.slane %v8763, 2
        %v8765 = vmax.f32 %v8763, %v8764
        %v8766 = vrot.slane %v8765, 1
        %v8767 = vmax.f32 %v8765, %v8766
        %v8768 = vsel %vm615, %v8595, -inf
        %v8769 = vsel %vm615, %v8596, -inf
        %v8770 = vmax.f32 %v8768, %v8769
        %v8771 = vsel %vm615, %v8597, -inf
        %v8772 = vmax.f32 %v8770, %v8771
        %v8773 = vsel %vm615, %v8598, -inf
        %v8774 = vmax.f32 %v8772, %v8773
        %v8775 = vrot.slane %v8774, 4
        %v8776 = vmax.f32 %v8774, %v8775
        %v8777 = vrot.slane %v8776, 2
        %v8778 = vmax.f32 %v8776, %v8777
        %v8779 = vrot.slane %v8778, 1
        %v8780 = vmax.f32 %v8778, %v8779
        %v8781 = vsel %vm615, %v8599, -inf
        %v8782 = vsel %vm615, %v8600, -inf
        %v8783 = vmax.f32 %v8781, %v8782
        %v8784 = vsel %vm615, %v8601, -inf
        %v8785 = vmax.f32 %v8783, %v8784
        %v8786 = vsel %vm615, %v8602, -inf
        %v8787 = vmax.f32 %v8785, %v8786
        %v8788 = vrot.slane %v8787, 4
        %v8789 = vmax.f32 %v8787, %v8788
        %v8790 = vrot.slane %v8789, 2
        %v8791 = vmax.f32 %v8789, %v8790
        %v8792 = vrot.slane %v8791, 1
        %v8793 = vmax.f32 %v8791, %v8792
        %v8794 = vsel %vm615, %v8603, -inf
        %v8795 = vsel %vm615, %v8604, -inf
        %v8796 = vmax.f32 %v8794, %v8795
        %v8797 = vsel %vm615, %v8605, -inf
        %v8798 = vmax.f32 %v8796, %v8797
        %v8799 = vsel %vm615, %v8606, -inf
        %v8800 = vmax.f32 %v8798, %v8799
        %v8801 = vrot.slane %v8800, 4
        %v8802 = vmax.f32 %v8800, %v8801
        %v8803 = vrot.slane %v8802, 2
        %v8804 = vmax.f32 %v8802, %v8803
        %v8805 = vrot.slane %v8804, 1
        %v8806 = vmax.f32 %v8804, %v8805
        %v8807 = vsel %vm615, %v8607, -inf
        %v8808 = vsel %vm615, %v8608, -inf
        %v8809 = vmax.f32 %v8807, %v8808
        %v8810 = vsel %vm615, %v8609, -inf
        %v8811 = vmax.f32 %v8809, %v8810
        %v8812 = vsel %vm615, %v8610, -inf
        %v8813 = vmax.f32 %v8811, %v8812
        %v8814 = vrot.slane %v8813, 4
        %v8815 = vmax.f32 %v8813, %v8814
        %v8816 = vrot.slane %v8815, 2
        %v8817 = vmax.f32 %v8815, %v8816
        %v8818 = vrot.slane %v8817, 1
        %v8819 = vmax.f32 %v8817, %v8818
        %v8820 = vsel %vm615, %v8611, -inf
        %v8821 = vsel %vm615, %v8612, -inf
        %v8822 = vmax.f32 %v8820, %v8821
        %v8823 = vsel %vm615, %v8613, -inf
        %v8824 = vmax.f32 %v8822, %v8823
        %v8825 = vsel %vm615, %v8614, -inf
        %v8826 = vmax.f32 %v8824, %v8825
        %v8827 = vrot.slane %v8826, 4
        %v8828 = vmax.f32 %v8826, %v8827
        %v8829 = vrot.slane %v8828, 2
        %v8830 = vmax.f32 %v8828, %v8829
        %v8831 = vrot.slane %v8830, 1
        %v8832 = vmax.f32 %v8830, %v8831
        %v8833 = vsel %vm615, %v8615, -inf
        %v8834 = vsel %vm615, %v8616, -inf
        %v8835 = vmax.f32 %v8833, %v8834
        %v8836 = vsel %vm615, %v8617, -inf
        %v8837 = vmax.f32 %v8835, %v8836
        %v8838 = vsel %vm615, %v8618, -inf
        %v8839 = vmax.f32 %v8837, %v8838
        %v8840 = vrot.slane %v8839, 4
        %v8841 = vmax.f32 %v8839, %v8840
        %v8842 = vrot.slane %v8841, 2
        %v8843 = vmax.f32 %v8841, %v8842
        %v8844 = vrot.slane %v8843, 1
        %v8845 = vmax.f32 %v8843, %v8844
        %v8846 = vsel %vm615, %v8619, -inf
        %v8847 = vsel %vm615, %v8620, -inf
        %v8848 = vmax.f32 %v8846, %v8847
        %v8849 = vsel %vm615, %v8621, -inf
        %v8850 = vmax.f32 %v8848, %v8849
        %v8851 = vsel %vm615, %v8622, -inf
        %v8852 = vmax.f32 %v8850, %v8851
        %v8853 = vrot.slane %v8852, 4
        %v8854 = vmax.f32 %v8852, %v8853
        %v8855 = vrot.slane %v8854, 2
        %v8856 = vmax.f32 %v8854, %v8855
        %v8857 = vrot.slane %v8856, 1
        %v8858 = vmax.f32 %v8856, %v8857
        %v8859 = vsel %vm615, %v8623, -inf
        %v8860 = vsel %vm615, %v8624, -inf
        %v8861 = vmax.f32 %v8859, %v8860
        %v8862 = vsel %vm615, %v8625, -inf
        %v8863 = vmax.f32 %v8861, %v8862
        %v8864 = vsel %vm615, %v8626, -inf
        %v8865 = vmax.f32 %v8863, %v8864
        %v8866 = vrot.slane %v8865, 4
        %v8867 = vmax.f32 %v8865, %v8866
        %v8868 = vrot.slane %v8867, 2
        %v8869 = vmax.f32 %v8867, %v8868
        %v8870 = vrot.slane %v8869, 1
        %v8871 = vmax.f32 %v8869, %v8870
        %v8872 = vsel %vm615, %v8627, -inf
        %v8873 = vsel %vm615, %v8628, -inf
        %v8874 = vmax.f32 %v8872, %v8873
        %v8875 = vsel %vm615, %v8629, -inf
        %v8876 = vmax.f32 %v8874, %v8875
        %v8877 = vsel %vm615, %v8630, -inf
        %v8878 = vmax.f32 %v8876, %v8877
        %v8879 = vrot.slane %v8878, 4
        %v8880 = vmax.f32 %v8878, %v8879
        %v8881 = vrot.slane %v8880, 2
        %v8882 = vmax.f32 %v8880, %v8881
        %v8883 = vrot.slane %v8882, 1
        %v8884 = vmax.f32 %v8882, %v8883
        %v8885 = vsel %vm615, %v8631, -inf
        %v8886 = vsel %vm615, %v8632, -inf
        %v8887 = vmax.f32 %v8885, %v8886
        %v8888 = vsel %vm615, %v8633, -inf
        %v8889 = vmax.f32 %v8887, %v8888
        %v8890 = vsel %vm615, %v8634, -inf
        %v8891 = vmax.f32 %v8889, %v8890
        %v8892 = vrot.slane %v8891, 4
        %v8893 = vmax.f32 %v8891, %v8892
        %v8894 = vrot.slane %v8893, 2
        %v8895 = vmax.f32 %v8893, %v8894
        %v8896 = vrot.slane %v8895, 1
        %v8897 = vmax.f32 %v8895, %v8896
        %v8898 = vsel %vm615, %v8635, -inf
        %v8899 = vsel %vm615, %v8636, -inf
        %v8900 = vmax.f32 %v8898, %v8899
        %v8901 = vsel %vm615, %v8637, -inf
        %v8902 = vmax.f32 %v8900, %v8901
        %v8903 = vsel %vm615, %v8638, -inf
        %v8904 = vmax.f32 %v8902, %v8903
        %v8905 = vrot.slane %v8904, 4
        %v8906 = vmax.f32 %v8904, %v8905
        %v8907 = vrot.slane %v8906, 2
        %v8908 = vmax.f32 %v8906, %v8907
        %v8909 = vrot.slane %v8908, 1
        %v8910 = vmax.f32 %v8908, %v8909
        %v8911 = vsel %vm615, %v8639, -inf
        %v8912 = vsel %vm615, %v8640, -inf
        %v8913 = vmax.f32 %v8911, %v8912
        %v8914 = vsel %vm615, %v8641, -inf
        %v8915 = vmax.f32 %v8913, %v8914
        %v8916 = vsel %vm615, %v8642, -inf
        %v8917 = vmax.f32 %v8915, %v8916
        %v8918 = vrot.slane %v8917, 4
        %v8919 = vmax.f32 %v8917, %v8918
        %v8920 = vrot.slane %v8919, 2
        %v8921 = vmax.f32 %v8919, %v8920
        %v8922 = vrot.slane %v8921, 1
        %v8923 = vmax.f32 %v8921, %v8922
        %v8924 = vsel %vm615, %v8643, -inf
        %v8925 = vsel %vm615, %v8644, -inf
        %v8926 = vmax.f32 %v8924, %v8925
        %v8927 = vsel %vm615, %v8645, -inf
        %v8928 = vmax.f32 %v8926, %v8927
        %v8929 = vsel %vm615, %v8646, -inf
        %v8930 = vmax.f32 %v8928, %v8929
        %v8931 = vrot.slane %v8930, 4
        %v8932 = vmax.f32 %v8930, %v8931
        %v8933 = vrot.slane %v8932, 2
        %v8934 = vmax.f32 %v8932, %v8933
        %v8935 = vrot.slane %v8934, 1
        %v8936 = vmax.f32 %v8934, %v8935
        %v8937 = vsel %vm615, %v8647, -inf
        %v8938 = vsel %vm615, %v8648, -inf
        %v8939 = vmax.f32 %v8937, %v8938
        %v8940 = vsel %vm615, %v8649, -inf
        %v8941 = vmax.f32 %v8939, %v8940
        %v8942 = vsel %vm615, %v8650, -inf
        %v8943 = vmax.f32 %v8941, %v8942
        %v8944 = vrot.slane %v8943, 4
        %v8945 = vmax.f32 %v8943, %v8944
        %v8946 = vrot.slane %v8945, 2
        %v8947 = vmax.f32 %v8945, %v8946
        %v8948 = vrot.slane %v8947, 1
        %v8949 = vmax.f32 %v8947, %v8948
        %v8950 = vsel %vm615, %v8651, -inf
        %v8951 = vsel %vm615, %v8652, -inf
        %v8952 = vmax.f32 %v8950, %v8951
        %v8953 = vsel %vm615, %v8653, -inf
        %v8954 = vmax.f32 %v8952, %v8953
        %v8955 = vsel %vm615, %v8654, -inf
        %v8956 = vmax.f32 %v8954, %v8955
        %v8957 = vrot.slane %v8956, 4
        %v8958 = vmax.f32 %v8956, %v8957
        %v8959 = vrot.slane %v8958, 2
        %v8960 = vmax.f32 %v8958, %v8959
        %v8961 = vrot.slane %v8960, 1
        %v8962 = vmax.f32 %v8960, %v8961
        %v8963 = vsel %vm615, %v8655, -inf
        %v8964 = vsel %vm615, %v8656, -inf
        %v8965 = vmax.f32 %v8963, %v8964
        %v8966 = vsel %vm615, %v8657, -inf
        %v8967 = vmax.f32 %v8965, %v8966
        %v8968 = vsel %vm615, %v8658, -inf
        %v8969 = vmax.f32 %v8967, %v8968
        %v8970 = vrot.slane %v8969, 4
        %v8971 = vmax.f32 %v8969, %v8970
        %v8972 = vrot.slane %v8971, 2
        %v8973 = vmax.f32 %v8971, %v8972
        %v8974 = vrot.slane %v8973, 1
        %v8975 = vmax.f32 %v8973, %v8974
        %v8976 = vsel %vm615, %v8659, -inf
        %v8977 = vsel %vm615, %v8660, -inf
        %v8978 = vmax.f32 %v8976, %v8977
        %v8979 = vsel %vm615, %v8661, -inf
        %v8980 = vmax.f32 %v8978, %v8979
        %v8981 = vsel %vm615, %v8662, -inf
        %v8982 = vmax.f32 %v8980, %v8981
        %v8983 = vrot.slane %v8982, 4
        %v8984 = vmax.f32 %v8982, %v8983
        %v8985 = vrot.slane %v8984, 2
        %v8986 = vmax.f32 %v8984, %v8985
        %v8987 = vrot.slane %v8986, 1
        %v8988 = vmax.f32 %v8986, %v8987
        %v8989 = vsel %vm615, %v8663, -inf
        %v8990 = vsel %vm615, %v8664, -inf
        %v8991 = vmax.f32 %v8989, %v8990
        %v8992 = vsel %vm615, %v8665, -inf
        %v8993 = vmax.f32 %v8991, %v8992
        %v8994 = vsel %vm615, %v8666, -inf
        %v8995 = vmax.f32 %v8993, %v8994
        %v8996 = vrot.slane %v8995, 4
        %v8997 = vmax.f32 %v8995, %v8996
        %v8998 = vrot.slane %v8997, 2
        %v8999 = vmax.f32 %v8997, %v8998
        %v9000 = vrot.slane %v8999, 1
        %v9001 = vmax.f32 %v8999, %v9000
        %v9002 = vsel %vm615, %v8667, -inf
        %v9003 = vsel %vm615, %v8668, -inf
        %v9004 = vmax.f32 %v9002, %v9003
        %v9005 = vsel %vm615, %v8669, -inf
        %v9006 = vmax.f32 %v9004, %v9005
        %v9007 = vsel %vm615, %v8670, -inf
        %v9008 = vmax.f32 %v9006, %v9007
        %v9009 = vrot.slane %v9008, 4
        %v9010 = vmax.f32 %v9008, %v9009
        %v9011 = vrot.slane %v9010, 2
        %v9012 = vmax.f32 %v9010, %v9011
        %v9013 = vrot.slane %v9012, 1
        %v9014 = vmax.f32 %v9012, %v9013
        %v9015 = vsel %vm615, %v8671, -inf
        %v9016 = vsel %vm615, %v8672, -inf
        %v9017 = vmax.f32 %v9015, %v9016
        %v9018 = vsel %vm615, %v8673, -inf
        %v9019 = vmax.f32 %v9017, %v9018
        %v9020 = vsel %vm615, %v8674, -inf
        %v9021 = vmax.f32 %v9019, %v9020
        %v9022 = vrot.slane %v9021, 4
        %v9023 = vmax.f32 %v9021, %v9022
        %v9024 = vrot.slane %v9023, 2
        %v9025 = vmax.f32 %v9023, %v9024
        %v9026 = vrot.slane %v9025, 1
        %v9027 = vmax.f32 %v9025, %v9026
        %v9028 = vsel %vm615, %v8675, -inf
        %v9029 = vsel %vm615, %v8676, -inf
        %v9030 = vmax.f32 %v9028, %v9029
        %v9031 = vsel %vm615, %v8677, -inf
        %v9032 = vmax.f32 %v9030, %v9031
        %v9033 = vsel %vm615, %v8678, -inf
        %v9034 = vmax.f32 %v9032, %v9033
        %v9035 = vrot.slane %v9034, 4
        %v9036 = vmax.f32 %v9034, %v9035
        %v9037 = vrot.slane %v9036, 2
        %v9038 = vmax.f32 %v9036, %v9037
        %v9039 = vrot.slane %v9038, 1
        %v9040 = vmax.f32 %v9038, %v9039
        %v9041 = vsel %vm615, %v8679, -inf
        %v9042 = vsel %vm615, %v8680, -inf
        %v9043 = vmax.f32 %v9041, %v9042
        %v9044 = vsel %vm615, %v8681, -inf
        %v9045 = vmax.f32 %v9043, %v9044
        %v9046 = vsel %vm615, %v8682, -inf
        %v9047 = vmax.f32 %v9045, %v9046
        %v9048 = vrot.slane %v9047, 4
        %v9049 = vmax.f32 %v9047, %v9048
        %v9050 = vrot.slane %v9049, 2
        %v9051 = vmax.f32 %v9049, %v9050
        %v9052 = vrot.slane %v9051, 1
        %v9053 = vmax.f32 %v9051, %v9052
        %v9054 = vsel %vm615, %v8683, -inf
        %v9055 = vsel %vm615, %v8684, -inf
        %v9056 = vmax.f32 %v9054, %v9055
        %v9057 = vsel %vm615, %v8685, -inf
        %v9058 = vmax.f32 %v9056, %v9057
        %v9059 = vsel %vm615, %v8686, -inf
        %v9060 = vmax.f32 %v9058, %v9059
        %v9061 = vrot.slane %v9060, 4
        %v9062 = vmax.f32 %v9060, %v9061
        %v9063 = vrot.slane %v9062, 2
        %v9064 = vmax.f32 %v9062, %v9063
        %v9065 = vrot.slane %v9064, 1
        %v9066 = vmax.f32 %v9064, %v9065
        %v9067 = vsel %vm615, %v8687, -inf
        %v9068 = vsel %vm615, %v8688, -inf
        %v9069 = vmax.f32 %v9067, %v9068
        %v9070 = vsel %vm615, %v8689, -inf
        %v9071 = vmax.f32 %v9069, %v9070
        %v9072 = vsel %vm615, %v8690, -inf
        %v9073 = vmax.f32 %v9071, %v9072
        %v9074 = vrot.slane %v9073, 4
        %v9075 = vmax.f32 %v9073, %v9074
        %v9076 = vrot.slane %v9075, 2
        %v9077 = vmax.f32 %v9075, %v9076
        %v9078 = vrot.slane %v9077, 1
        %v9079 = vmax.f32 %v9077, %v9078
        %v9080 = vsel %vm615, %v8691, -inf
        %v9081 = vsel %vm615, %v8692, -inf
        %v9082 = vmax.f32 %v9080, %v9081
        %v9083 = vsel %vm615, %v8693, -inf
        %v9084 = vmax.f32 %v9082, %v9083
        %v9085 = vsel %vm615, %v8694, -inf
        %v9086 = vmax.f32 %v9084, %v9085
        %v9087 = vrot.slane %v9086, 4
        %v9088 = vmax.f32 %v9086, %v9087
        %v9089 = vrot.slane %v9088, 2
        %v9090 = vmax.f32 %v9088, %v9089
        %v9091 = vrot.slane %v9090, 1
        %v9092 = vmax.f32 %v9090, %v9091
        %v9093 = vsel %vm615, %v8695, -inf
        %v9094 = vsel %vm615, %v8696, -inf
        %v9095 = vmax.f32 %v9093, %v9094
        %v9096 = vsel %vm615, %v8697, -inf
        %v9097 = vmax.f32 %v9095, %v9096
        %v9098 = vsel %vm615, %v8698, -inf
        %v9099 = vmax.f32 %v9097, %v9098
        %v9100 = vrot.slane %v9099, 4
        %v9101 = vmax.f32 %v9099, %v9100
        %v9102 = vrot.slane %v9101, 2
        %v9103 = vmax.f32 %v9101, %v9102
        %v9104 = vrot.slane %v9103, 1
        %v9105 = vmax.f32 %v9103, %v9104
        %v9106 = vsel %vm615, %v8699, -inf
        %v9107 = vsel %vm615, %v8700, -inf
        %v9108 = vmax.f32 %v9106, %v9107
        %v9109 = vsel %vm615, %v8701, -inf
        %v9110 = vmax.f32 %v9108, %v9109
        %v9111 = vsel %vm615, %v8702, -inf
        %v9112 = vmax.f32 %v9110, %v9111
        %v9113 = vrot.slane %v9112, 4
        %v9114 = vmax.f32 %v9112, %v9113
        %v9115 = vrot.slane %v9114, 2
        %v9116 = vmax.f32 %v9114, %v9115
        %v9117 = vrot.slane %v9116, 1
        %v9118 = vmax.f32 %v9116, %v9117
        %v9119 = vsub.f32 %v8575, %v8715
        %v9120 = vsub.f32 %v8576, %v8715
        %v9121 = vsub.f32 %v8577, %v8715
        %v9122 = vsub.f32 %v8578, %v8715
        %v9123 = vsub.f32 %v8579, %v8728
        %v9124 = vsub.f32 %v8580, %v8728
        %v9125 = vsub.f32 %v8581, %v8728
        %v9126 = vsub.f32 %v8582, %v8728
        %v9127 = vsub.f32 %v8583, %v8741
        %v9128 = vsub.f32 %v8584, %v8741
        %v9129 = vsub.f32 %v8585, %v8741
        %v9130 = vsub.f32 %v8586, %v8741
        %v9131 = vsub.f32 %v8587, %v8754
        %v9132 = vsub.f32 %v8588, %v8754
        %v9133 = vsub.f32 %v8589, %v8754
        %v9134 = vsub.f32 %v8590, %v8754
        %v9135 = vsub.f32 %v8591, %v8767
        %v9136 = vsub.f32 %v8592, %v8767
        %v9137 = vsub.f32 %v8593, %v8767
        %v9138 = vsub.f32 %v8594, %v8767
        %v9139 = vsub.f32 %v8595, %v8780
        %v9140 = vsub.f32 %v8596, %v8780
        %v9141 = vsub.f32 %v8597, %v8780
        %v9142 = vsub.f32 %v8598, %v8780
        %v9143 = vsub.f32 %v8599, %v8793
        %v9144 = vsub.f32 %v8600, %v8793
        %v9145 = vsub.f32 %v8601, %v8793
        %v9146 = vsub.f32 %v8602, %v8793
        %v9147 = vsub.f32 %v8603, %v8806
        %v9148 = vsub.f32 %v8604, %v8806
        %v9149 = vsub.f32 %v8605, %v8806
        %v9150 = vsub.f32 %v8606, %v8806
        %v9151 = vsub.f32 %v8607, %v8819
        %v9152 = vsub.f32 %v8608, %v8819
        %v9153 = vsub.f32 %v8609, %v8819
        %v9154 = vsub.f32 %v8610, %v8819
        %v9155 = vsub.f32 %v8611, %v8832
        %v9156 = vsub.f32 %v8612, %v8832
        %v9157 = vsub.f32 %v8613, %v8832
        %v9158 = vsub.f32 %v8614, %v8832
        %v9159 = vsub.f32 %v8615, %v8845
        %v9160 = vsub.f32 %v8616, %v8845
        %v9161 = vsub.f32 %v8617, %v8845
        %v9162 = vsub.f32 %v8618, %v8845
        %v9163 = vsub.f32 %v8619, %v8858
        %v9164 = vsub.f32 %v8620, %v8858
        %v9165 = vsub.f32 %v8621, %v8858
        %v9166 = vsub.f32 %v8622, %v8858
        %v9167 = vsub.f32 %v8623, %v8871
        %v9168 = vsub.f32 %v8624, %v8871
        %v9169 = vsub.f32 %v8625, %v8871
        %v9170 = vsub.f32 %v8626, %v8871
        %v9171 = vsub.f32 %v8627, %v8884
        %v9172 = vsub.f32 %v8628, %v8884
        %v9173 = vsub.f32 %v8629, %v8884
        %v9174 = vsub.f32 %v8630, %v8884
        %v9175 = vsub.f32 %v8631, %v8897
        %v9176 = vsub.f32 %v8632, %v8897
        %v9177 = vsub.f32 %v8633, %v8897
        %v9178 = vsub.f32 %v8634, %v8897
        %v9179 = vsub.f32 %v8635, %v8910
        %v9180 = vsub.f32 %v8636, %v8910
        %v9181 = vsub.f32 %v8637, %v8910
        %v9182 = vsub.f32 %v8638, %v8910
        %v9183 = vsub.f32 %v8639, %v8923
        %v9184 = vsub.f32 %v8640, %v8923
        %v9185 = vsub.f32 %v8641, %v8923
        %v9186 = vsub.f32 %v8642, %v8923
        %v9187 = vsub.f32 %v8643, %v8936
        %v9188 = vsub.f32 %v8644, %v8936
        %v9189 = vsub.f32 %v8645, %v8936
        %v9190 = vsub.f32 %v8646, %v8936
        %v9191 = vsub.f32 %v8647, %v8949
        %v9192 = vsub.f32 %v8648, %v8949
        %v9193 = vsub.f32 %v8649, %v8949
        %v9194 = vsub.f32 %v8650, %v8949
        %v9195 = vsub.f32 %v8651, %v8962
        %v9196 = vsub.f32 %v8652, %v8962
        %v9197 = vsub.f32 %v8653, %v8962
        %v9198 = vsub.f32 %v8654, %v8962
        %v9199 = vsub.f32 %v8655, %v8975
        %v9200 = vsub.f32 %v8656, %v8975
        %v9201 = vsub.f32 %v8657, %v8975
        %v9202 = vsub.f32 %v8658, %v8975
        %v9203 = vsub.f32 %v8659, %v8988
        %v9204 = vsub.f32 %v8660, %v8988
        %v9205 = vsub.f32 %v8661, %v8988
        %v9206 = vsub.f32 %v8662, %v8988
        %v9207 = vsub.f32 %v8663, %v9001
        %v9208 = vsub.f32 %v8664, %v9001
        %v9209 = vsub.f32 %v8665, %v9001
        %v9210 = vsub.f32 %v8666, %v9001
        %v9211 = vsub.f32 %v8667, %v9014
        %v9212 = vsub.f32 %v8668, %v9014
        %v9213 = vsub.f32 %v8669, %v9014
        %v9214 = vsub.f32 %v8670, %v9014
        %v9215 = vsub.f32 %v8671, %v9027
        %v9216 = vsub.f32 %v8672, %v9027
        %v9217 = vsub.f32 %v8673, %v9027
        %v9218 = vsub.f32 %v8674, %v9027
        %v9219 = vsub.f32 %v8675, %v9040
        %v9220 = vsub.f32 %v8676, %v9040
        %v9221 = vsub.f32 %v8677, %v9040
        %v9222 = vsub.f32 %v8678, %v9040
        %v9223 = vsub.f32 %v8679, %v9053
        %v9224 = vsub.f32 %v8680, %v9053
        %v9225 = vsub.f32 %v8681, %v9053
        %v9226 = vsub.f32 %v8682, %v9053
        %v9227 = vsub.f32 %v8683, %v9066
        %v9228 = vsub.f32 %v8684, %v9066
        %v9229 = vsub.f32 %v8685, %v9066
        %v9230 = vsub.f32 %v8686, %v9066
        %v9231 = vsub.f32 %v8687, %v9079
        %v9232 = vsub.f32 %v8688, %v9079
        %v9233 = vsub.f32 %v8689, %v9079
        %v9234 = vsub.f32 %v8690, %v9079
        %v9235 = vsub.f32 %v8691, %v9092
        %v9236 = vsub.f32 %v8692, %v9092
        %v9237 = vsub.f32 %v8693, %v9092
        %v9238 = vsub.f32 %v8694, %v9092
        %v9239 = vsub.f32 %v8695, %v9105
        %v9240 = vsub.f32 %v8696, %v9105
        %v9241 = vsub.f32 %v8697, %v9105
        %v9242 = vsub.f32 %v8698, %v9105
        %v9243 = vsub.f32 %v8699, %v9118
        %v9244 = vsub.f32 %v8700, %v9118
        %v9245 = vsub.f32 %v8701, %v9118
        %v9246 = vsub.f32 %v8702, %v9118
        %v9247 = vmul.f32 %v9119, 1.442695
        %v9248 = vpow.pop %v9247
        %v9249 = vmul.f32 %v9120, 1.442695
        %v9250 = vpow.pop %v9249
        %v9251 = vmul.f32 %v9121, 1.442695
        %v9252 = vpow.pop %v9251
        %v9253 = vmul.f32 %v9122, 1.442695
        %v9254 = vpow.pop %v9253
        %v9255 = vmul.f32 %v9123, 1.442695
        %v9256 = vpow.pop %v9255
        %v9257 = vmul.f32 %v9124, 1.442695
        %v9258 = vpow.pop %v9257
        %v9259 = vmul.f32 %v9125, 1.442695
        %v9260 = vpow.pop %v9259
        %v9261 = vmul.f32 %v9126, 1.442695
        %v9262 = vpow.pop %v9261
        %v9263 = vmul.f32 %v9127, 1.442695
        %v9264 = vpow.pop %v9263
        %v9265 = vmul.f32 %v9128, 1.442695
        %v9266 = vpow.pop %v9265
        %v9267 = vmul.f32 %v9129, 1.442695
        %v9268 = vpow.pop %v9267
        %v9269 = vmul.f32 %v9130, 1.442695
        %v9270 = vpow.pop %v9269
        %v9271 = vmul.f32 %v9131, 1.442695
        %v9272 = vpow.pop %v9271
        %v9273 = vmul.f32 %v9132, 1.442695
        %v9274 = vpow.pop %v9273
        %v9275 = vmul.f32 %v9133, 1.442695
        %v9276 = vpow.pop %v9275
        %v9277 = vmul.f32 %v9134, 1.442695
        %v9278 = vpow.pop %v9277
        %v9279 = vmul.f32 %v9135, 1.442695
        %v9280 = vpow.pop %v9279
        %v9281 = vmul.f32 %v9136, 1.442695
        %v9282 = vpow.pop %v9281
        %v9283 = vmul.f32 %v9137, 1.442695
        %v9284 = vpow.pop %v9283
        %v9285 = vmul.f32 %v9138, 1.442695
        %v9286 = vpow.pop %v9285
        %v9287 = vmul.f32 %v9139, 1.442695
        %v9288 = vpow.pop %v9287
        %v9289 = vmul.f32 %v9140, 1.442695
        %v9290 = vpow.pop %v9289
        %v9291 = vmul.f32 %v9141, 1.442695
        %v9292 = vpow.pop %v9291
        %v9293 = vmul.f32 %v9142, 1.442695
        %v9294 = vpow.pop %v9293
        %v9295 = vmul.f32 %v9143, 1.442695
        %v9296 = vpow.pop %v9295
        %v9297 = vmul.f32 %v9144, 1.442695
        %v9298 = vpow.pop %v9297
        %v9299 = vmul.f32 %v9145, 1.442695
        %v9300 = vpow.pop %v9299
        %v9301 = vmul.f32 %v9146, 1.442695
        %v9302 = vpow.pop %v9301
        %v9303 = vmul.f32 %v9147, 1.442695
        %v9304 = vpow.pop %v9303
        %v9305 = vmul.f32 %v9148, 1.442695
        %v9306 = vpow.pop %v9305
        %v9307 = vmul.f32 %v9149, 1.442695
        %v9308 = vpow.pop %v9307
        %v9309 = vmul.f32 %v9150, 1.442695
        %v9310 = vpow.pop %v9309
        %v9311 = vmul.f32 %v9151, 1.442695
        %v9312 = vpow.pop %v9311
        %v9313 = vmul.f32 %v9152, 1.442695
        %v9314 = vpow.pop %v9313
        %v9315 = vmul.f32 %v9153, 1.442695
        %v9316 = vpow.pop %v9315
        %v9317 = vmul.f32 %v9154, 1.442695
        %v9318 = vpow.pop %v9317
        %v9319 = vmul.f32 %v9155, 1.442695
        %v9320 = vpow.pop %v9319
        %v9321 = vmul.f32 %v9156, 1.442695
        %v9322 = vpow.pop %v9321
        %v9323 = vmul.f32 %v9157, 1.442695
        %v9324 = vpow.pop %v9323
        %v9325 = vmul.f32 %v9158, 1.442695
        %v9326 = vpow.pop %v9325
        %v9327 = vmul.f32 %v9159, 1.442695
        %v9328 = vpow.pop %v9327
        %v9329 = vmul.f32 %v9160, 1.442695
        %v9330 = vpow.pop %v9329
        %v9331 = vmul.f32 %v9161, 1.442695
        %v9332 = vpow.pop %v9331
        %v9333 = vmul.f32 %v9162, 1.442695
        %v9334 = vpow.pop %v9333
        %v9335 = vmul.f32 %v9163, 1.442695
        %v9336 = vpow.pop %v9335
        %v9337 = vmul.f32 %v9164, 1.442695
        %v9338 = vpow.pop %v9337
        %v9339 = vmul.f32 %v9165, 1.442695
        %v9340 = vpow.pop %v9339
        %v9341 = vmul.f32 %v9166, 1.442695
        %v9342 = vpow.pop %v9341
        %v9343 = vmul.f32 %v9167, 1.442695
        %v9344 = vpow.pop %v9343
        %v9345 = vmul.f32 %v9168, 1.442695
        %v9346 = vpow.pop %v9345
        %v9347 = vmul.f32 %v9169, 1.442695
        %v9348 = vpow.pop %v9347
        %v9349 = vmul.f32 %v9170, 1.442695
        %v9350 = vpow.pop %v9349
        %v9351 = vmul.f32 %v9171, 1.442695
        %v9352 = vpow.pop %v9351
        %v9353 = vmul.f32 %v9172, 1.442695
        %v9354 = vpow.pop %v9353
        %v9355 = vmul.f32 %v9173, 1.442695
        %v9356 = vpow.pop %v9355
        %v9357 = vmul.f32 %v9174, 1.442695
        %v9358 = vpow.pop %v9357
        %v9359 = vmul.f32 %v9175, 1.442695
        %v9360 = vpow.pop %v9359
        %v9361 = vmul.f32 %v9176, 1.442695
        %v9362 = vpow.pop %v9361
        %v9363 = vmul.f32 %v9177, 1.442695
        %v9364 = vpow.pop %v9363
        %v9365 = vmul.f32 %v9178, 1.442695
        %v9366 = vpow.pop %v9365
        %v9367 = vmul.f32 %v9179, 1.442695
        %v9368 = vpow.pop %v9367
        %v9369 = vmul.f32 %v9180, 1.442695
        %v9370 = vpow.pop %v9369
        %v9371 = vmul.f32 %v9181, 1.442695
        %v9372 = vpow.pop %v9371
        %v9373 = vmul.f32 %v9182, 1.442695
        %v9374 = vpow.pop %v9373
        %v9375 = vmul.f32 %v9183, 1.442695
        %v9376 = vpow.pop %v9375
        %v9377 = vmul.f32 %v9184, 1.442695
        %v9378 = vpow.pop %v9377
        %v9379 = vmul.f32 %v9185, 1.442695
        %v9380 = vpow.pop %v9379
        %v9381 = vmul.f32 %v9186, 1.442695
        %v9382 = vpow.pop %v9381
        %v9383 = vmul.f32 %v9187, 1.442695
        %v9384 = vpow.pop %v9383
        %v9385 = vmul.f32 %v9188, 1.442695
        %v9386 = vpow.pop %v9385
        %v9387 = vmul.f32 %v9189, 1.442695
        %v9388 = vpow.pop %v9387
        %v9389 = vmul.f32 %v9190, 1.442695
        %v9390 = vpow.pop %v9389
        %v9391 = vmul.f32 %v9191, 1.442695
        %v9392 = vpow.pop %v9391
        %v9393 = vmul.f32 %v9192, 1.442695
        %v9394 = vpow.pop %v9393
        %v9395 = vmul.f32 %v9193, 1.442695
        %v9396 = vpow.pop %v9395
        %v9397 = vmul.f32 %v9194, 1.442695
        %v9398 = vpow.pop %v9397
        %v9399 = vmul.f32 %v9195, 1.442695
        %v9400 = vpow.pop %v9399
        %v9401 = vmul.f32 %v9196, 1.442695
        %v9402 = vpow.pop %v9401
        %v9403 = vmul.f32 %v9197, 1.442695
        %v9404 = vpow.pop %v9403
        %v9405 = vmul.f32 %v9198, 1.442695
        %v9406 = vpow.pop %v9405
        %v9407 = vmul.f32 %v9199, 1.442695
        %v9408 = vpow.pop %v9407
        %v9409 = vmul.f32 %v9200, 1.442695
        %v9410 = vpow.pop %v9409
        %v9411 = vmul.f32 %v9201, 1.442695
        %v9412 = vpow.pop %v9411
        %v9413 = vmul.f32 %v9202, 1.442695
        %v9414 = vpow.pop %v9413
        %v9415 = vmul.f32 %v9203, 1.442695
        %v9416 = vpow.pop %v9415
        %v9417 = vmul.f32 %v9204, 1.442695
        %v9418 = vpow.pop %v9417
        %v9419 = vmul.f32 %v9205, 1.442695
        %v9420 = vpow.pop %v9419
        %v9421 = vmul.f32 %v9206, 1.442695
        %v9422 = vpow.pop %v9421
        %v9423 = vmul.f32 %v9207, 1.442695
        %v9424 = vpow.pop %v9423
        %v9425 = vmul.f32 %v9208, 1.442695
        %v9426 = vpow.pop %v9425
        %v9427 = vmul.f32 %v9209, 1.442695
        %v9428 = vpow.pop %v9427
        %v9429 = vmul.f32 %v9210, 1.442695
        %v9430 = vpow.pop %v9429
        %v9431 = vmul.f32 %v9211, 1.442695
        %v9432 = vpow.pop %v9431
        %v9433 = vmul.f32 %v9212, 1.442695
        %v9434 = vpow.pop %v9433
        %v9435 = vmul.f32 %v9213, 1.442695
        %v9436 = vpow.pop %v9435
        %v9437 = vmul.f32 %v9214, 1.442695
        %v9438 = vpow.pop %v9437
        %v9439 = vmul.f32 %v9215, 1.442695
        %v9440 = vpow.pop %v9439
        %v9441 = vmul.f32 %v9216, 1.442695
        %v9442 = vpow.pop %v9441
        %v9443 = vmul.f32 %v9217, 1.442695
        %v9444 = vpow.pop %v9443
        %v9445 = vmul.f32 %v9218, 1.442695
        %v9446 = vpow.pop %v9445
        %v9447 = vmul.f32 %v9219, 1.442695
        %v9448 = vpow.pop %v9447
        %v9449 = vmul.f32 %v9220, 1.442695
        %v9450 = vpow.pop %v9449
        %v9451 = vmul.f32 %v9221, 1.442695
        %v9452 = vpow.pop %v9451
        %v9453 = vmul.f32 %v9222, 1.442695
        %v9454 = vpow.pop %v9453
        %v9455 = vmul.f32 %v9223, 1.442695
        %v9456 = vpow.pop %v9455
        %v9457 = vmul.f32 %v9224, 1.442695
        %v9458 = vpow.pop %v9457
        %v9459 = vmul.f32 %v9225, 1.442695
        %v9460 = vpow.pop %v9459
        %v9461 = vmul.f32 %v9226, 1.442695
        %v9462 = vpow.pop %v9461
        %v9463 = vmul.f32 %v9227, 1.442695
        %v9464 = vpow.pop %v9463
        %v9465 = vmul.f32 %v9228, 1.442695
        %v9466 = vpow.pop %v9465
        %v9467 = vmul.f32 %v9229, 1.442695
        %v9468 = vpow.pop %v9467
        %v9469 = vmul.f32 %v9230, 1.442695
        %v9470 = vpow.pop %v9469
        %v9471 = vmul.f32 %v9231, 1.442695
        %v9472 = vpow.pop %v9471
        %v9473 = vmul.f32 %v9232, 1.442695
        %v9474 = vpow.pop %v9473
        %v9475 = vmul.f32 %v9233, 1.442695
        %v9476 = vpow.pop %v9475
        %v9477 = vmul.f32 %v9234, 1.442695
        %v9478 = vpow.pop %v9477
        %v9479 = vmul.f32 %v9235, 1.442695
        %v9480 = vpow.pop %v9479
        %v9481 = vmul.f32 %v9236, 1.442695
        %v9482 = vpow.pop %v9481
        %v9483 = vmul.f32 %v9237, 1.442695
        %v9484 = vpow.pop %v9483
        %v9485 = vmul.f32 %v9238, 1.442695
        %v9486 = vpow.pop %v9485
        %v9487 = vmul.f32 %v9239, 1.442695
        %v9488 = vpow.pop %v9487
        %v9489 = vmul.f32 %v9240, 1.442695
        %v9490 = vpow.pop %v9489
        %v9491 = vmul.f32 %v9241, 1.442695
        %v9492 = vpow.pop %v9491
        %v9493 = vmul.f32 %v9242, 1.442695
        %v9494 = vpow.pop %v9493
        %v9495 = vmul.f32 %v9243, 1.442695
        %v9496 = vpow.pop %v9495
        %v9497 = vmul.f32 %v9244, 1.442695
        %v9498 = vpow.pop %v9497
        %v9499 = vmul.f32 %v9245, 1.442695
        %v9500 = vpow.pop %v9499
        %v9501 = vmul.f32 %v9246, 1.442695
        %v9502 = vpow.pop %v9501
        %v9503 = vmul.f32 %v9248, %v7589
        %v9504 = vmul.f32 %v9250, %v7593
        %v9505 = vmul.f32 %v9252, %v7597
        %v9506 = vmul.f32 %v9254, %v7601
        %v9507 = vmul.f32 %v9256, %v7608
        %v9508 = vmul.f32 %v9258, %v7612
        %v9509 = vmul.f32 %v9260, %v7616
        %v9510 = vmul.f32 %v9262, %v7620
        %v9511 = vmul.f32 %v9264, %v7627
        %v9512 = vmul.f32 %v9266, %v7631
        %v9513 = vmul.f32 %v9268, %v7635
        %v9514 = vmul.f32 %v9270, %v7639
        %v9515 = vmul.f32 %v9272, %v7646
        %v9516 = vmul.f32 %v9274, %v7650
        %v9517 = vmul.f32 %v9276, %v7654
        %v9518 = vmul.f32 %v9278, %v7658
        %v9519 = vmul.f32 %v9280, %v7665
        %v9520 = vmul.f32 %v9282, %v7669
        %v9521 = vmul.f32 %v9284, %v7673
        %v9522 = vmul.f32 %v9286, %v7677
        %v9523 = vmul.f32 %v9288, %v7684
        %v9524 = vmul.f32 %v9290, %v7688
        %v9525 = vmul.f32 %v9292, %v7692
        %v9526 = vmul.f32 %v9294, %v7696
        %v9527 = vmul.f32 %v9296, %v7703
        %v9528 = vmul.f32 %v9298, %v7707
        %v9529 = vmul.f32 %v9300, %v7711
        %v9530 = vmul.f32 %v9302, %v7715
        %v9531 = vmul.f32 %v9304, %v7722
        %v9532 = vmul.f32 %v9306, %v7726
        %v9533 = vmul.f32 %v9308, %v7730
        %v9534 = vmul.f32 %v9310, %v7734
        %v9535 = vmul.f32 %v9312, %v7741
        %v9536 = vmul.f32 %v9314, %v7745
        %v9537 = vmul.f32 %v9316, %v7749
        %v9538 = vmul.f32 %v9318, %v7753
        %v9539 = vmul.f32 %v9320, %v7760
        %v9540 = vmul.f32 %v9322, %v7764
        %v9541 = vmul.f32 %v9324, %v7768
        %v9542 = vmul.f32 %v9326, %v7772
        %v9543 = vmul.f32 %v9328, %v7779
        %v9544 = vmul.f32 %v9330, %v7783
        %v9545 = vmul.f32 %v9332, %v7787
        %v9546 = vmul.f32 %v9334, %v7791
        %v9547 = vmul.f32 %v9336, %v7798
        %v9548 = vmul.f32 %v9338, %v7802
        %v9549 = vmul.f32 %v9340, %v7806
        %v9550 = vmul.f32 %v9342, %v7810
        %v9551 = vmul.f32 %v9344, %v7817
        %v9552 = vmul.f32 %v9346, %v7821
        %v9553 = vmul.f32 %v9348, %v7825
        %v9554 = vmul.f32 %v9350, %v7829
        %v9555 = vmul.f32 %v9352, %v7836
        %v9556 = vmul.f32 %v9354, %v7840
        %v9557 = vmul.f32 %v9356, %v7844
        %v9558 = vmul.f32 %v9358, %v7848
        %v9559 = vmul.f32 %v9360, %v7855
        %v9560 = vmul.f32 %v9362, %v7859
        %v9561 = vmul.f32 %v9364, %v7863
        %v9562 = vmul.f32 %v9366, %v7867
        %v9563 = vmul.f32 %v9368, %v7874
        %v9564 = vmul.f32 %v9370, %v7878
        %v9565 = vmul.f32 %v9372, %v7882
        %v9566 = vmul.f32 %v9374, %v7886
        %v9567 = vmul.f32 %v9376, %v7893
        %v9568 = vmul.f32 %v9378, %v7897
        %v9569 = vmul.f32 %v9380, %v7901
        %v9570 = vmul.f32 %v9382, %v7905
        %v9571 = vmul.f32 %v9384, %v7912
        %v9572 = vmul.f32 %v9386, %v7916
        %v9573 = vmul.f32 %v9388, %v7920
        %v9574 = vmul.f32 %v9390, %v7924
        %v9575 = vmul.f32 %v9392, %v7931
        %v9576 = vmul.f32 %v9394, %v7935
        %v9577 = vmul.f32 %v9396, %v7939
        %v9578 = vmul.f32 %v9398, %v7943
        %v9579 = vmul.f32 %v9400, %v7950
        %v9580 = vmul.f32 %v9402, %v7954
        %v9581 = vmul.f32 %v9404, %v7958
        %v9582 = vmul.f32 %v9406, %v7962
        %v9583 = vmul.f32 %v9408, %v7969
        %v9584 = vmul.f32 %v9410, %v7973
        %v9585 = vmul.f32 %v9412, %v7977
        %v9586 = vmul.f32 %v9414, %v7981
        %v9587 = vmul.f32 %v9416, %v7988
        %v9588 = vmul.f32 %v9418, %v7992
        %v9589 = vmul.f32 %v9420, %v7996
        %v9590 = vmul.f32 %v9422, %v8000
        %v9591 = vmul.f32 %v9424, %v8007
        %v9592 = vmul.f32 %v9426, %v8011
        %v9593 = vmul.f32 %v9428, %v8015
        %v9594 = vmul.f32 %v9430, %v8019
        %v9595 = vmul.f32 %v9432, %v8026
        %v9596 = vmul.f32 %v9434, %v8030
        %v9597 = vmul.f32 %v9436, %v8034
        %v9598 = vmul.f32 %v9438, %v8038
        %v9599 = vmul.f32 %v9440, %v8045
        %v9600 = vmul.f32 %v9442, %v8049
        %v9601 = vmul.f32 %v9444, %v8053
        %v9602 = vmul.f32 %v9446, %v8057
        %v9603 = vmul.f32 %v9448, %v8064
        %v9604 = vmul.f32 %v9450, %v8068
        %v9605 = vmul.f32 %v9452, %v8072
        %v9606 = vmul.f32 %v9454, %v8076
        %v9607 = vmul.f32 %v9456, %v8083
        %v9608 = vmul.f32 %v9458, %v8087
        %v9609 = vmul.f32 %v9460, %v8091
        %v9610 = vmul.f32 %v9462, %v8095
        %v9611 = vmul.f32 %v9464, %v8102
        %v9612 = vmul.f32 %v9466, %v8106
        %v9613 = vmul.f32 %v9468, %v8110
        %v9614 = vmul.f32 %v9470, %v8114
        %v9615 = vmul.f32 %v9472, %v8121
        %v9616 = vmul.f32 %v9474, %v8125
        %v9617 = vmul.f32 %v9476, %v8129
        %v9618 = vmul.f32 %v9478, %v8133
        %v9619 = vmul.f32 %v9480, %v8140
        %v9620 = vmul.f32 %v9482, %v8144
        %v9621 = vmul.f32 %v9484, %v8148
        %v9622 = vmul.f32 %v9486, %v8152
        %v9623 = vmul.f32 %v9488, %v8159
        %v9624 = vmul.f32 %v9490, %v8163
        %v9625 = vmul.f32 %v9492, %v8167
        %v9626 = vmul.f32 %v9494, %v8171
        %v9627 = vmul.f32 %v9496, %v8178
        %v9628 = vmul.f32 %v9498, %v8182
        %v9629 = vmul.f32 %v9500, %v8186
        %v9630 = vmul.f32 %v9502, %v8190
        %v9631 = vsel %vm615, %v9503, 0.0
        %v9632 = vsel %vm615, %v9504, 0.0
        %v9633 = vadd.f32 %v9631, %v9632
        %v9634 = vsel %vm615, %v9505, 0.0
        %v9635 = vadd.f32 %v9633, %v9634
        %v9636 = vsel %vm615, %v9506, 0.0
        %v9637 = vadd.f32 %v9635, %v9636
        %v9638 = vrot.slane %v9637, 4
        %v9639 = vadd.f32 %v9637, %v9638
        %v9640 = vrot.slane %v9639, 2
        %v9641 = vadd.f32 %v9639, %v9640
        %v9642 = vrot.slane %v9641, 1
        %v9643 = vadd.f32 %v9641, %v9642
        %v9644 = vsel %vm615, %v9507, 0.0
        %v9645 = vsel %vm615, %v9508, 0.0
        %v9646 = vadd.f32 %v9644, %v9645
        %v9647 = vsel %vm615, %v9509, 0.0
        %v9648 = vadd.f32 %v9646, %v9647
        %v9649 = vsel %vm615, %v9510, 0.0
        %v9650 = vadd.f32 %v9648, %v9649
        %v9651 = vrot.slane %v9650, 4
        %v9652 = vadd.f32 %v9650, %v9651
        %v9653 = vrot.slane %v9652, 2
        %v9654 = vadd.f32 %v9652, %v9653
        %v9655 = vrot.slane %v9654, 1
        %v9656 = vadd.f32 %v9654, %v9655
        %v9657 = vsel %vm615, %v9511, 0.0
        %v9658 = vsel %vm615, %v9512, 0.0
        %v9659 = vadd.f32 %v9657, %v9658
        %v9660 = vsel %vm615, %v9513, 0.0
        %v9661 = vadd.f32 %v9659, %v9660
        %v9662 = vsel %vm615, %v9514, 0.0
        %v9663 = vadd.f32 %v9661, %v9662
        %v9664 = vrot.slane %v9663, 4
        %v9665 = vadd.f32 %v9663, %v9664
        %v9666 = vrot.slane %v9665, 2
        %v9667 = vadd.f32 %v9665, %v9666
        %v9668 = vrot.slane %v9667, 1
        %v9669 = vadd.f32 %v9667, %v9668
        %v9670 = vsel %vm615, %v9515, 0.0
        %v9671 = vsel %vm615, %v9516, 0.0
        %v9672 = vadd.f32 %v9670, %v9671
        %v9673 = vsel %vm615, %v9517, 0.0
        %v9674 = vadd.f32 %v9672, %v9673
        %v9675 = vsel %vm615, %v9518, 0.0
        %v9676 = vadd.f32 %v9674, %v9675
        %v9677 = vrot.slane %v9676, 4
        %v9678 = vadd.f32 %v9676, %v9677
        %v9679 = vrot.slane %v9678, 2
        %v9680 = vadd.f32 %v9678, %v9679
        %v9681 = vrot.slane %v9680, 1
        %v9682 = vadd.f32 %v9680, %v9681
        %v9683 = vsel %vm615, %v9519, 0.0
        %v9684 = vsel %vm615, %v9520, 0.0
        %v9685 = vadd.f32 %v9683, %v9684
        %v9686 = vsel %vm615, %v9521, 0.0
        %v9687 = vadd.f32 %v9685, %v9686
        %v9688 = vsel %vm615, %v9522, 0.0
        %v9689 = vadd.f32 %v9687, %v9688
        %v9690 = vrot.slane %v9689, 4
        %v9691 = vadd.f32 %v9689, %v9690
        %v9692 = vrot.slane %v9691, 2
        %v9693 = vadd.f32 %v9691, %v9692
        %v9694 = vrot.slane %v9693, 1
        %v9695 = vadd.f32 %v9693, %v9694
        %v9696 = vsel %vm615, %v9523, 0.0
        %v9697 = vsel %vm615, %v9524, 0.0
        %v9698 = vadd.f32 %v9696, %v9697
        %v9699 = vsel %vm615, %v9525, 0.0
        %v9700 = vadd.f32 %v9698, %v9699
        %v9701 = vsel %vm615, %v9526, 0.0
        %v9702 = vadd.f32 %v9700, %v9701
        %v9703 = vrot.slane %v9702, 4
        %v9704 = vadd.f32 %v9702, %v9703
        %v9705 = vrot.slane %v9704, 2
        %v9706 = vadd.f32 %v9704, %v9705
        %v9707 = vrot.slane %v9706, 1
        %v9708 = vadd.f32 %v9706, %v9707
        %v9709 = vsel %vm615, %v9527, 0.0
        %v9710 = vsel %vm615, %v9528, 0.0
        %v9711 = vadd.f32 %v9709, %v9710
        %v9712 = vsel %vm615, %v9529, 0.0
        %v9713 = vadd.f32 %v9711, %v9712
        %v9714 = vsel %vm615, %v9530, 0.0
        %v9715 = vadd.f32 %v9713, %v9714
        %v9716 = vrot.slane %v9715, 4
        %v9717 = vadd.f32 %v9715, %v9716
        %v9718 = vrot.slane %v9717, 2
        %v9719 = vadd.f32 %v9717, %v9718
        %v9720 = vrot.slane %v9719, 1
        %v9721 = vadd.f32 %v9719, %v9720
        %v9722 = vsel %vm615, %v9531, 0.0
        %v9723 = vsel %vm615, %v9532, 0.0
        %v9724 = vadd.f32 %v9722, %v9723
        %v9725 = vsel %vm615, %v9533, 0.0
        %v9726 = vadd.f32 %v9724, %v9725
        %v9727 = vsel %vm615, %v9534, 0.0
        %v9728 = vadd.f32 %v9726, %v9727
        %v9729 = vrot.slane %v9728, 4
        %v9730 = vadd.f32 %v9728, %v9729
        %v9731 = vrot.slane %v9730, 2
        %v9732 = vadd.f32 %v9730, %v9731
        %v9733 = vrot.slane %v9732, 1
        %v9734 = vadd.f32 %v9732, %v9733
        %v9735 = vsel %vm615, %v9535, 0.0
        %v9736 = vsel %vm615, %v9536, 0.0
        %v9737 = vadd.f32 %v9735, %v9736
        %v9738 = vsel %vm615, %v9537, 0.0
        %v9739 = vadd.f32 %v9737, %v9738
        %v9740 = vsel %vm615, %v9538, 0.0
        %v9741 = vadd.f32 %v9739, %v9740
        %v9742 = vrot.slane %v9741, 4
        %v9743 = vadd.f32 %v9741, %v9742
        %v9744 = vrot.slane %v9743, 2
        %v9745 = vadd.f32 %v9743, %v9744
        %v9746 = vrot.slane %v9745, 1
        %v9747 = vadd.f32 %v9745, %v9746
        %v9748 = vsel %vm615, %v9539, 0.0
        %v9749 = vsel %vm615, %v9540, 0.0
        %v9750 = vadd.f32 %v9748, %v9749
        %v9751 = vsel %vm615, %v9541, 0.0
        %v9752 = vadd.f32 %v9750, %v9751
        %v9753 = vsel %vm615, %v9542, 0.0
        %v9754 = vadd.f32 %v9752, %v9753
        %v9755 = vrot.slane %v9754, 4
        %v9756 = vadd.f32 %v9754, %v9755
        %v9757 = vrot.slane %v9756, 2
        %v9758 = vadd.f32 %v9756, %v9757
        %v9759 = vrot.slane %v9758, 1
        %v9760 = vadd.f32 %v9758, %v9759
        %v9761 = vsel %vm615, %v9543, 0.0
        %v9762 = vsel %vm615, %v9544, 0.0
        %v9763 = vadd.f32 %v9761, %v9762
        %v9764 = vsel %vm615, %v9545, 0.0
        %v9765 = vadd.f32 %v9763, %v9764
        %v9766 = vsel %vm615, %v9546, 0.0
        %v9767 = vadd.f32 %v9765, %v9766
        %v9768 = vrot.slane %v9767, 4
        %v9769 = vadd.f32 %v9767, %v9768
        %v9770 = vrot.slane %v9769, 2
        %v9771 = vadd.f32 %v9769, %v9770
        %v9772 = vrot.slane %v9771, 1
        %v9773 = vadd.f32 %v9771, %v9772
        %v9774 = vsel %vm615, %v9547, 0.0
        %v9775 = vsel %vm615, %v9548, 0.0
        %v9776 = vadd.f32 %v9774, %v9775
        %v9777 = vsel %vm615, %v9549, 0.0
        %v9778 = vadd.f32 %v9776, %v9777
        %v9779 = vsel %vm615, %v9550, 0.0
        %v9780 = vadd.f32 %v9778, %v9779
        %v9781 = vrot.slane %v9780, 4
        %v9782 = vadd.f32 %v9780, %v9781
        %v9783 = vrot.slane %v9782, 2
        %v9784 = vadd.f32 %v9782, %v9783
        %v9785 = vrot.slane %v9784, 1
        %v9786 = vadd.f32 %v9784, %v9785
        %v9787 = vsel %vm615, %v9551, 0.0
        %v9788 = vsel %vm615, %v9552, 0.0
        %v9789 = vadd.f32 %v9787, %v9788
        %v9790 = vsel %vm615, %v9553, 0.0
        %v9791 = vadd.f32 %v9789, %v9790
        %v9792 = vsel %vm615, %v9554, 0.0
        %v9793 = vadd.f32 %v9791, %v9792
        %v9794 = vrot.slane %v9793, 4
        %v9795 = vadd.f32 %v9793, %v9794
        %v9796 = vrot.slane %v9795, 2
        %v9797 = vadd.f32 %v9795, %v9796
        %v9798 = vrot.slane %v9797, 1
        %v9799 = vadd.f32 %v9797, %v9798
        %v9800 = vsel %vm615, %v9555, 0.0
        %v9801 = vsel %vm615, %v9556, 0.0
        %v9802 = vadd.f32 %v9800, %v9801
        %v9803 = vsel %vm615, %v9557, 0.0
        %v9804 = vadd.f32 %v9802, %v9803
        %v9805 = vsel %vm615, %v9558, 0.0
        %v9806 = vadd.f32 %v9804, %v9805
        %v9807 = vrot.slane %v9806, 4
        %v9808 = vadd.f32 %v9806, %v9807
        %v9809 = vrot.slane %v9808, 2
        %v9810 = vadd.f32 %v9808, %v9809
        %v9811 = vrot.slane %v9810, 1
        %v9812 = vadd.f32 %v9810, %v9811
        %v9813 = vsel %vm615, %v9559, 0.0
        %v9814 = vsel %vm615, %v9560, 0.0
        %v9815 = vadd.f32 %v9813, %v9814
        %v9816 = vsel %vm615, %v9561, 0.0
        %v9817 = vadd.f32 %v9815, %v9816
        %v9818 = vsel %vm615, %v9562, 0.0
        %v9819 = vadd.f32 %v9817, %v9818
        %v9820 = vrot.slane %v9819, 4
        %v9821 = vadd.f32 %v9819, %v9820
        %v9822 = vrot.slane %v9821, 2
        %v9823 = vadd.f32 %v9821, %v9822
        %v9824 = vrot.slane %v9823, 1
        %v9825 = vadd.f32 %v9823, %v9824
        %v9826 = vsel %vm615, %v9563, 0.0
        %v9827 = vsel %vm615, %v9564, 0.0
        %v9828 = vadd.f32 %v9826, %v9827
        %v9829 = vsel %vm615, %v9565, 0.0
        %v9830 = vadd.f32 %v9828, %v9829
        %v9831 = vsel %vm615, %v9566, 0.0
        %v9832 = vadd.f32 %v9830, %v9831
        %v9833 = vrot.slane %v9832, 4
        %v9834 = vadd.f32 %v9832, %v9833
        %v9835 = vrot.slane %v9834, 2
        %v9836 = vadd.f32 %v9834, %v9835
        %v9837 = vrot.slane %v9836, 1
        %v9838 = vadd.f32 %v9836, %v9837
        %v9839 = vsel %vm615, %v9567, 0.0
        %v9840 = vsel %vm615, %v9568, 0.0
        %v9841 = vadd.f32 %v9839, %v9840
        %v9842 = vsel %vm615, %v9569, 0.0
        %v9843 = vadd.f32 %v9841, %v9842
        %v9844 = vsel %vm615, %v9570, 0.0
        %v9845 = vadd.f32 %v9843, %v9844
        %v9846 = vrot.slane %v9845, 4
        %v9847 = vadd.f32 %v9845, %v9846
        %v9848 = vrot.slane %v9847, 2
        %v9849 = vadd.f32 %v9847, %v9848
        %v9850 = vrot.slane %v9849, 1
        %v9851 = vadd.f32 %v9849, %v9850
        %v9852 = vsel %vm615, %v9571, 0.0
        %v9853 = vsel %vm615, %v9572, 0.0
        %v9854 = vadd.f32 %v9852, %v9853
        %v9855 = vsel %vm615, %v9573, 0.0
        %v9856 = vadd.f32 %v9854, %v9855
        %v9857 = vsel %vm615, %v9574, 0.0
        %v9858 = vadd.f32 %v9856, %v9857
        %v9859 = vrot.slane %v9858, 4
        %v9860 = vadd.f32 %v9858, %v9859
        %v9861 = vrot.slane %v9860, 2
        %v9862 = vadd.f32 %v9860, %v9861
        %v9863 = vrot.slane %v9862, 1
        %v9864 = vadd.f32 %v9862, %v9863
        %v9865 = vsel %vm615, %v9575, 0.0
        %v9866 = vsel %vm615, %v9576, 0.0
        %v9867 = vadd.f32 %v9865, %v9866
        %v9868 = vsel %vm615, %v9577, 0.0
        %v9869 = vadd.f32 %v9867, %v9868
        %v9870 = vsel %vm615, %v9578, 0.0
        %v9871 = vadd.f32 %v9869, %v9870
        %v9872 = vrot.slane %v9871, 4
        %v9873 = vadd.f32 %v9871, %v9872
        %v9874 = vrot.slane %v9873, 2
        %v9875 = vadd.f32 %v9873, %v9874
        %v9876 = vrot.slane %v9875, 1
        %v9877 = vadd.f32 %v9875, %v9876
        %v9878 = vsel %vm615, %v9579, 0.0
        %v9879 = vsel %vm615, %v9580, 0.0
        %v9880 = vadd.f32 %v9878, %v9879
        %v9881 = vsel %vm615, %v9581, 0.0
        %v9882 = vadd.f32 %v9880, %v9881
        %v9883 = vsel %vm615, %v9582, 0.0
        %v9884 = vadd.f32 %v9882, %v9883
        %v9885 = vrot.slane %v9884, 4
        %v9886 = vadd.f32 %v9884, %v9885
        %v9887 = vrot.slane %v9886, 2
        %v9888 = vadd.f32 %v9886, %v9887
        %v9889 = vrot.slane %v9888, 1
        %v9890 = vadd.f32 %v9888, %v9889
        %v9891 = vsel %vm615, %v9583, 0.0
        %v9892 = vsel %vm615, %v9584, 0.0
        %v9893 = vadd.f32 %v9891, %v9892
        %v9894 = vsel %vm615, %v9585, 0.0
        %v9895 = vadd.f32 %v9893, %v9894
        %v9896 = vsel %vm615, %v9586, 0.0
        %v9897 = vadd.f32 %v9895, %v9896
        %v9898 = vrot.slane %v9897, 4
        %v9899 = vadd.f32 %v9897, %v9898
        %v9900 = vrot.slane %v9899, 2
        %v9901 = vadd.f32 %v9899, %v9900
        %v9902 = vrot.slane %v9901, 1
        %v9903 = vadd.f32 %v9901, %v9902
        %v9904 = vsel %vm615, %v9587, 0.0
        %v9905 = vsel %vm615, %v9588, 0.0
        %v9906 = vadd.f32 %v9904, %v9905
        %v9907 = vsel %vm615, %v9589, 0.0
        %v9908 = vadd.f32 %v9906, %v9907
        %v9909 = vsel %vm615, %v9590, 0.0
        %v9910 = vadd.f32 %v9908, %v9909
        %v9911 = vrot.slane %v9910, 4
        %v9912 = vadd.f32 %v9910, %v9911
        %v9913 = vrot.slane %v9912, 2
        %v9914 = vadd.f32 %v9912, %v9913
        %v9915 = vrot.slane %v9914, 1
        %v9916 = vadd.f32 %v9914, %v9915
        %v9917 = vsel %vm615, %v9591, 0.0
        %v9918 = vsel %vm615, %v9592, 0.0
        %v9919 = vadd.f32 %v9917, %v9918
        %v9920 = vsel %vm615, %v9593, 0.0
        %v9921 = vadd.f32 %v9919, %v9920
        %v9922 = vsel %vm615, %v9594, 0.0
        %v9923 = vadd.f32 %v9921, %v9922
        %v9924 = vrot.slane %v9923, 4
        %v9925 = vadd.f32 %v9923, %v9924
        %v9926 = vrot.slane %v9925, 2
        %v9927 = vadd.f32 %v9925, %v9926
        %v9928 = vrot.slane %v9927, 1
        %v9929 = vadd.f32 %v9927, %v9928
        %v9930 = vsel %vm615, %v9595, 0.0
        %v9931 = vsel %vm615, %v9596, 0.0
        %v9932 = vadd.f32 %v9930, %v9931
        %v9933 = vsel %vm615, %v9597, 0.0
        %v9934 = vadd.f32 %v9932, %v9933
        %v9935 = vsel %vm615, %v9598, 0.0
        %v9936 = vadd.f32 %v9934, %v9935
        %v9937 = vrot.slane %v9936, 4
        %v9938 = vadd.f32 %v9936, %v9937
        %v9939 = vrot.slane %v9938, 2
        %v9940 = vadd.f32 %v9938, %v9939
        %v9941 = vrot.slane %v9940, 1
        %v9942 = vadd.f32 %v9940, %v9941
        %v9943 = vsel %vm615, %v9599, 0.0
        %v9944 = vsel %vm615, %v9600, 0.0
        %v9945 = vadd.f32 %v9943, %v9944
        %v9946 = vsel %vm615, %v9601, 0.0
        %v9947 = vadd.f32 %v9945, %v9946
        %v9948 = vsel %vm615, %v9602, 0.0
        %v9949 = vadd.f32 %v9947, %v9948
        %v9950 = vrot.slane %v9949, 4
        %v9951 = vadd.f32 %v9949, %v9950
        %v9952 = vrot.slane %v9951, 2
        %v9953 = vadd.f32 %v9951, %v9952
        %v9954 = vrot.slane %v9953, 1
        %v9955 = vadd.f32 %v9953, %v9954
        %v9956 = vsel %vm615, %v9603, 0.0
        %v9957 = vsel %vm615, %v9604, 0.0
        %v9958 = vadd.f32 %v9956, %v9957
        %v9959 = vsel %vm615, %v9605, 0.0
        %v9960 = vadd.f32 %v9958, %v9959
        %v9961 = vsel %vm615, %v9606, 0.0
        %v9962 = vadd.f32 %v9960, %v9961
        %v9963 = vrot.slane %v9962, 4
        %v9964 = vadd.f32 %v9962, %v9963
        %v9965 = vrot.slane %v9964, 2
        %v9966 = vadd.f32 %v9964, %v9965
        %v9967 = vrot.slane %v9966, 1
        %v9968 = vadd.f32 %v9966, %v9967
        %v9969 = vsel %vm615, %v9607, 0.0
        %v9970 = vsel %vm615, %v9608, 0.0
        %v9971 = vadd.f32 %v9969, %v9970
        %v9972 = vsel %vm615, %v9609, 0.0
        %v9973 = vadd.f32 %v9971, %v9972
        %v9974 = vsel %vm615, %v9610, 0.0
        %v9975 = vadd.f32 %v9973, %v9974
        %v9976 = vrot.slane %v9975, 4
        %v9977 = vadd.f32 %v9975, %v9976
        %v9978 = vrot.slane %v9977, 2
        %v9979 = vadd.f32 %v9977, %v9978
        %v9980 = vrot.slane %v9979, 1
        %v9981 = vadd.f32 %v9979, %v9980
        %v9982 = vsel %vm615, %v9611, 0.0
        %v9983 = vsel %vm615, %v9612, 0.0
        %v9984 = vadd.f32 %v9982, %v9983
        %v9985 = vsel %vm615, %v9613, 0.0
        %v9986 = vadd.f32 %v9984, %v9985
        %v9987 = vsel %vm615, %v9614, 0.0
        %v9988 = vadd.f32 %v9986, %v9987
        %v9989 = vrot.slane %v9988, 4
        %v9990 = vadd.f32 %v9988, %v9989
        %v9991 = vrot.slane %v9990, 2
        %v9992 = vadd.f32 %v9990, %v9991
        %v9993 = vrot.slane %v9992, 1
        %v9994 = vadd.f32 %v9992, %v9993
        %v9995 = vsel %vm615, %v9615, 0.0
        %v9996 = vsel %vm615, %v9616, 0.0
        %v9997 = vadd.f32 %v9995, %v9996
        %v9998 = vsel %vm615, %v9617, 0.0
        %v9999 = vadd.f32 %v9997, %v9998
        %v10000 = vsel %vm615, %v9618, 0.0
        %v10001 = vadd.f32 %v9999, %v10000
        %v10002 = vrot.slane %v10001, 4
        %v10003 = vadd.f32 %v10001, %v10002
        %v10004 = vrot.slane %v10003, 2
        %v10005 = vadd.f32 %v10003, %v10004
        %v10006 = vrot.slane %v10005, 1
        %v10007 = vadd.f32 %v10005, %v10006
        %v10008 = vsel %vm615, %v9619, 0.0
        %v10009 = vsel %vm615, %v9620, 0.0
        %v10010 = vadd.f32 %v10008, %v10009
        %v10011 = vsel %vm615, %v9621, 0.0
        %v10012 = vadd.f32 %v10010, %v10011
        %v10013 = vsel %vm615, %v9622, 0.0
        %v10014 = vadd.f32 %v10012, %v10013
        %v10015 = vrot.slane %v10014, 4
        %v10016 = vadd.f32 %v10014, %v10015
        %v10017 = vrot.slane %v10016, 2
        %v10018 = vadd.f32 %v10016, %v10017
        %v10019 = vrot.slane %v10018, 1
        %v10020 = vadd.f32 %v10018, %v10019
        %v10021 = vsel %vm615, %v9623, 0.0
        %v10022 = vsel %vm615, %v9624, 0.0
        %v10023 = vadd.f32 %v10021, %v10022
        %v10024 = vsel %vm615, %v9625, 0.0
        %v10025 = vadd.f32 %v10023, %v10024
        %v10026 = vsel %vm615, %v9626, 0.0
        %v10027 = vadd.f32 %v10025, %v10026
        %v10028 = vrot.slane %v10027, 4
        %v10029 = vadd.f32 %v10027, %v10028
        %v10030 = vrot.slane %v10029, 2
        %v10031 = vadd.f32 %v10029, %v10030
        %v10032 = vrot.slane %v10031, 1
        %v10033 = vadd.f32 %v10031, %v10032
        %v10034 = vsel %vm615, %v9627, 0.0
        %v10035 = vsel %vm615, %v9628, 0.0
        %v10036 = vadd.f32 %v10034, %v10035
        %v10037 = vsel %vm615, %v9629, 0.0
        %v10038 = vadd.f32 %v10036, %v10037
        %v10039 = vsel %vm615, %v9630, 0.0
        %v10040 = vadd.f32 %v10038, %v10039
        %v10041 = vrot.slane %v10040, 4
        %v10042 = vadd.f32 %v10040, %v10041
        %v10043 = vrot.slane %v10042, 2
        %v10044 = vadd.f32 %v10042, %v10043
        %v10045 = vrot.slane %v10044, 1
        %v10046 = vadd.f32 %v10044, %v10045
        %v10047 = vmax.f32 %v9643, 1e-12
        %v10048 = vmax.f32 %v9656, 1e-12
        %v10049 = vmax.f32 %v9669, 1e-12
        %v10050 = vmax.f32 %v9682, 1e-12
        %v10051 = vmax.f32 %v9695, 1e-12
        %v10052 = vmax.f32 %v9708, 1e-12
        %v10053 = vmax.f32 %v9721, 1e-12
        %v10054 = vmax.f32 %v9734, 1e-12
        %v10055 = vmax.f32 %v9747, 1e-12
        %v10056 = vmax.f32 %v9760, 1e-12
        %v10057 = vmax.f32 %v9773, 1e-12
        %v10058 = vmax.f32 %v9786, 1e-12
        %v10059 = vmax.f32 %v9799, 1e-12
        %v10060 = vmax.f32 %v9812, 1e-12
        %v10061 = vmax.f32 %v9825, 1e-12
        %v10062 = vmax.f32 %v9838, 1e-12
        %v10063 = vmax.f32 %v9851, 1e-12
        %v10064 = vmax.f32 %v9864, 1e-12
        %v10065 = vmax.f32 %v9877, 1e-12
        %v10066 = vmax.f32 %v9890, 1e-12
        %v10067 = vmax.f32 %v9903, 1e-12
        %v10068 = vmax.f32 %v9916, 1e-12
        %v10069 = vmax.f32 %v9929, 1e-12
        %v10070 = vmax.f32 %v9942, 1e-12
        %v10071 = vmax.f32 %v9955, 1e-12
        %v10072 = vmax.f32 %v9968, 1e-12
        %v10073 = vmax.f32 %v9981, 1e-12
        %v10074 = vmax.f32 %v9994, 1e-12
        %v10075 = vmax.f32 %v10007, 1e-12
        %v10076 = vmax.f32 %v10020, 1e-12
        %v10077 = vmax.f32 %v10033, 1e-12
        %v10078 = vmax.f32 %v10046, 1e-12
        %v10079 = vrcp.pop %v10047
        %v10080 = vrcp.pop %v10048
        %v10081 = vrcp.pop %v10049
        %v10082 = vrcp.pop %v10050
        %v10083 = vrcp.pop %v10051
        %v10084 = vrcp.pop %v10052
        %v10085 = vrcp.pop %v10053
        %v10086 = vrcp.pop %v10054
        %v10087 = vrcp.pop %v10055
        %v10088 = vrcp.pop %v10056
        %v10089 = vrcp.pop %v10057
        %v10090 = vrcp.pop %v10058
        %v10091 = vrcp.pop %v10059
        %v10092 = vrcp.pop %v10060
        %v10093 = vrcp.pop %v10061
        %v10094 = vrcp.pop %v10062
        %v10095 = vrcp.pop %v10063
        %v10096 = vrcp.pop %v10064
        %v10097 = vrcp.pop %v10065
        %v10098 = vrcp.pop %v10066
        %v10099 = vrcp.pop %v10067
        %v10100 = vrcp.pop %v10068
        %v10101 = vrcp.pop %v10069
        %v10102 = vrcp.pop %v10070
        %v10103 = vrcp.pop %v10071
        %v10104 = vrcp.pop %v10072
        %v10105 = vrcp.pop %v10073
        %v10106 = vrcp.pop %v10074
        %v10107 = vrcp.pop %v10075
        %v10108 = vrcp.pop %v10076
        %v10109 = vrcp.pop %v10077
        %v10110 = vrcp.pop %v10078
        %v10111 = vmul.f32 %v9503, %v10079
        %v10112 = vmul.f32 %v9504, %v10079
        %v10113 = vmul.f32 %v9505, %v10079
        %v10114 = vmul.f32 %v9506, %v10079
        %v10115 = vmul.f32 %v9507, %v10080
        %v10116 = vmul.f32 %v9508, %v10080
        %v10117 = vmul.f32 %v9509, %v10080
        %v10118 = vmul.f32 %v9510, %v10080
        %v10119 = vmul.f32 %v9511, %v10081
        %v10120 = vmul.f32 %v9512, %v10081
        %v10121 = vmul.f32 %v9513, %v10081
        %v10122 = vmul.f32 %v9514, %v10081
        %v10123 = vmul.f32 %v9515, %v10082
        %v10124 = vmul.f32 %v9516, %v10082
        %v10125 = vmul.f32 %v9517, %v10082
        %v10126 = vmul.f32 %v9518, %v10082
        %v10127 = vmul.f32 %v9519, %v10083
        %v10128 = vmul.f32 %v9520, %v10083
        %v10129 = vmul.f32 %v9521, %v10083
        %v10130 = vmul.f32 %v9522, %v10083
        %v10131 = vmul.f32 %v9523, %v10084
        %v10132 = vmul.f32 %v9524, %v10084
        %v10133 = vmul.f32 %v9525, %v10084
        %v10134 = vmul.f32 %v9526, %v10084
        %v10135 = vmul.f32 %v9527, %v10085
        %v10136 = vmul.f32 %v9528, %v10085
        %v10137 = vmul.f32 %v9529, %v10085
        %v10138 = vmul.f32 %v9530, %v10085
        %v10139 = vmul.f32 %v9531, %v10086
        %v10140 = vmul.f32 %v9532, %v10086
        %v10141 = vmul.f32 %v9533, %v10086
        %v10142 = vmul.f32 %v9534, %v10086
        %v10143 = vmul.f32 %v9535, %v10087
        %v10144 = vmul.f32 %v9536, %v10087
        %v10145 = vmul.f32 %v9537, %v10087
        %v10146 = vmul.f32 %v9538, %v10087
        %v10147 = vmul.f32 %v9539, %v10088
        %v10148 = vmul.f32 %v9540, %v10088
        %v10149 = vmul.f32 %v9541, %v10088
        %v10150 = vmul.f32 %v9542, %v10088
        %v10151 = vmul.f32 %v9543, %v10089
        %v10152 = vmul.f32 %v9544, %v10089
        %v10153 = vmul.f32 %v9545, %v10089
        %v10154 = vmul.f32 %v9546, %v10089
        %v10155 = vmul.f32 %v9547, %v10090
        %v10156 = vmul.f32 %v9548, %v10090
        %v10157 = vmul.f32 %v9549, %v10090
        %v10158 = vmul.f32 %v9550, %v10090
        %v10159 = vmul.f32 %v9551, %v10091
        %v10160 = vmul.f32 %v9552, %v10091
        %v10161 = vmul.f32 %v9553, %v10091
        %v10162 = vmul.f32 %v9554, %v10091
        %v10163 = vmul.f32 %v9555, %v10092
        %v10164 = vmul.f32 %v9556, %v10092
        %v10165 = vmul.f32 %v9557, %v10092
        %v10166 = vmul.f32 %v9558, %v10092
        %v10167 = vmul.f32 %v9559, %v10093
        %v10168 = vmul.f32 %v9560, %v10093
        %v10169 = vmul.f32 %v9561, %v10093
        %v10170 = vmul.f32 %v9562, %v10093
        %v10171 = vmul.f32 %v9563, %v10094
        %v10172 = vmul.f32 %v9564, %v10094
        %v10173 = vmul.f32 %v9565, %v10094
        %v10174 = vmul.f32 %v9566, %v10094
        %v10175 = vmul.f32 %v9567, %v10095
        %v10176 = vmul.f32 %v9568, %v10095
        %v10177 = vmul.f32 %v9569, %v10095
        %v10178 = vmul.f32 %v9570, %v10095
        %v10179 = vmul.f32 %v9571, %v10096
        %v10180 = vmul.f32 %v9572, %v10096
        %v10181 = vmul.f32 %v9573, %v10096
        %v10182 = vmul.f32 %v9574, %v10096
        %v10183 = vmul.f32 %v9575, %v10097
        %v10184 = vmul.f32 %v9576, %v10097
        %v10185 = vmul.f32 %v9577, %v10097
        %v10186 = vmul.f32 %v9578, %v10097
        %v10187 = vmul.f32 %v9579, %v10098
        %v10188 = vmul.f32 %v9580, %v10098
        %v10189 = vmul.f32 %v9581, %v10098
        %v10190 = vmul.f32 %v9582, %v10098
        %v10191 = vmul.f32 %v9583, %v10099
        %v10192 = vmul.f32 %v9584, %v10099
        %v10193 = vmul.f32 %v9585, %v10099
        %v10194 = vmul.f32 %v9586, %v10099
        %v10195 = vmul.f32 %v9587, %v10100
        %v10196 = vmul.f32 %v9588, %v10100
        %v10197 = vmul.f32 %v9589, %v10100
        %v10198 = vmul.f32 %v9590, %v10100
        %v10199 = vmul.f32 %v9591, %v10101
        %v10200 = vmul.f32 %v9592, %v10101
        %v10201 = vmul.f32 %v9593, %v10101
        %v10202 = vmul.f32 %v9594, %v10101
        %v10203 = vmul.f32 %v9595, %v10102
        %v10204 = vmul.f32 %v9596, %v10102
        %v10205 = vmul.f32 %v9597, %v10102
        %v10206 = vmul.f32 %v9598, %v10102
        %v10207 = vmul.f32 %v9599, %v10103
        %v10208 = vmul.f32 %v9600, %v10103
        %v10209 = vmul.f32 %v9601, %v10103
        %v10210 = vmul.f32 %v9602, %v10103
        %v10211 = vmul.f32 %v9603, %v10104
        %v10212 = vmul.f32 %v9604, %v10104
        %v10213 = vmul.f32 %v9605, %v10104
        %v10214 = vmul.f32 %v9606, %v10104
        %v10215 = vmul.f32 %v9607, %v10105
        %v10216 = vmul.f32 %v9608, %v10105
        %v10217 = vmul.f32 %v9609, %v10105
        %v10218 = vmul.f32 %v9610, %v10105
        %v10219 = vmul.f32 %v9611, %v10106
        %v10220 = vmul.f32 %v9612, %v10106
        %v10221 = vmul.f32 %v9613, %v10106
        %v10222 = vmul.f32 %v9614, %v10106
        %v10223 = vmul.f32 %v9615, %v10107
        %v10224 = vmul.f32 %v9616, %v10107
        %v10225 = vmul.f32 %v9617, %v10107
        %v10226 = vmul.f32 %v9618, %v10107
        %v10227 = vmul.f32 %v9619, %v10108
        %v10228 = vmul.f32 %v9620, %v10108
        %v10229 = vmul.f32 %v9621, %v10108
        %v10230 = vmul.f32 %v9622, %v10108
        %v10231 = vmul.f32 %v9623, %v10109
        %v10232 = vmul.f32 %v9624, %v10109
        %v10233 = vmul.f32 %v9625, %v10109
        %v10234 = vmul.f32 %v9626, %v10109
        %v10235 = vmul.f32 %v9627, %v10110
        %v10236 = vmul.f32 %v9628, %v10110
        %v10237 = vmul.f32 %v9629, %v10110
        %v10238 = vmul.f32 %v9630, %v10110
        %v10239 = vmul.f32 %v10111, %v3882
        %v10240 = vmul.f32 %v10112, %v3884
        %v10241 = vmul.f32 %v10113, %v3886
        %v10242 = vmul.f32 %v10114, %v3888
        %v10243 = vmul.f32 %v10115, %v3882
        %v10244 = vmul.f32 %v10116, %v3884
        %v10245 = vmul.f32 %v10117, %v3886
        %v10246 = vmul.f32 %v10118, %v3888
        %v10247 = vmul.f32 %v10119, %v3882
        %v10248 = vmul.f32 %v10120, %v3884
        %v10249 = vmul.f32 %v10121, %v3886
        %v10250 = vmul.f32 %v10122, %v3888
        %v10251 = vmul.f32 %v10123, %v3882
        %v10252 = vmul.f32 %v10124, %v3884
        %v10253 = vmul.f32 %v10125, %v3886
        %v10254 = vmul.f32 %v10126, %v3888
        %v10255 = vmul.f32 %v10127, %v3882
        %v10256 = vmul.f32 %v10128, %v3884
        %v10257 = vmul.f32 %v10129, %v3886
        %v10258 = vmul.f32 %v10130, %v3888
        %v10259 = vmul.f32 %v10131, %v3882
        %v10260 = vmul.f32 %v10132, %v3884
        %v10261 = vmul.f32 %v10133, %v3886
        %v10262 = vmul.f32 %v10134, %v3888
        %v10263 = vmul.f32 %v10135, %v3882
        %v10264 = vmul.f32 %v10136, %v3884
        %v10265 = vmul.f32 %v10137, %v3886
        %v10266 = vmul.f32 %v10138, %v3888
        %v10267 = vmul.f32 %v10139, %v3882
        %v10268 = vmul.f32 %v10140, %v3884
        %v10269 = vmul.f32 %v10141, %v3886
        %v10270 = vmul.f32 %v10142, %v3888
        %v10271 = vmul.f32 %v10143, %v3882
        %v10272 = vmul.f32 %v10144, %v3884
        %v10273 = vmul.f32 %v10145, %v3886
        %v10274 = vmul.f32 %v10146, %v3888
        %v10275 = vmul.f32 %v10147, %v3882
        %v10276 = vmul.f32 %v10148, %v3884
        %v10277 = vmul.f32 %v10149, %v3886
        %v10278 = vmul.f32 %v10150, %v3888
        %v10279 = vmul.f32 %v10151, %v3882
        %v10280 = vmul.f32 %v10152, %v3884
        %v10281 = vmul.f32 %v10153, %v3886
        %v10282 = vmul.f32 %v10154, %v3888
        %v10283 = vmul.f32 %v10155, %v3882
        %v10284 = vmul.f32 %v10156, %v3884
        %v10285 = vmul.f32 %v10157, %v3886
        %v10286 = vmul.f32 %v10158, %v3888
        %v10287 = vmul.f32 %v10159, %v3882
        %v10288 = vmul.f32 %v10160, %v3884
        %v10289 = vmul.f32 %v10161, %v3886
        %v10290 = vmul.f32 %v10162, %v3888
        %v10291 = vmul.f32 %v10163, %v3882
        %v10292 = vmul.f32 %v10164, %v3884
        %v10293 = vmul.f32 %v10165, %v3886
        %v10294 = vmul.f32 %v10166, %v3888
        %v10295 = vmul.f32 %v10167, %v3882
        %v10296 = vmul.f32 %v10168, %v3884
        %v10297 = vmul.f32 %v10169, %v3886
        %v10298 = vmul.f32 %v10170, %v3888
        %v10299 = vmul.f32 %v10171, %v3882
        %v10300 = vmul.f32 %v10172, %v3884
        %v10301 = vmul.f32 %v10173, %v3886
        %v10302 = vmul.f32 %v10174, %v3888
        %v10303 = vmul.f32 %v10175, %v3882
        %v10304 = vmul.f32 %v10176, %v3884
        %v10305 = vmul.f32 %v10177, %v3886
        %v10306 = vmul.f32 %v10178, %v3888
        %v10307 = vmul.f32 %v10179, %v3882
        %v10308 = vmul.f32 %v10180, %v3884
        %v10309 = vmul.f32 %v10181, %v3886
        %v10310 = vmul.f32 %v10182, %v3888
        %v10311 = vmul.f32 %v10183, %v3882
        %v10312 = vmul.f32 %v10184, %v3884
        %v10313 = vmul.f32 %v10185, %v3886
        %v10314 = vmul.f32 %v10186, %v3888
        %v10315 = vmul.f32 %v10187, %v3882
        %v10316 = vmul.f32 %v10188, %v3884
        %v10317 = vmul.f32 %v10189, %v3886
        %v10318 = vmul.f32 %v10190, %v3888
        %v10319 = vmul.f32 %v10191, %v3882
        %v10320 = vmul.f32 %v10192, %v3884
        %v10321 = vmul.f32 %v10193, %v3886
        %v10322 = vmul.f32 %v10194, %v3888
        %v10323 = vmul.f32 %v10195, %v3882
        %v10324 = vmul.f32 %v10196, %v3884
        %v10325 = vmul.f32 %v10197, %v3886
        %v10326 = vmul.f32 %v10198, %v3888
        %v10327 = vmul.f32 %v10199, %v3882
        %v10328 = vmul.f32 %v10200, %v3884
        %v10329 = vmul.f32 %v10201, %v3886
        %v10330 = vmul.f32 %v10202, %v3888
        %v10331 = vmul.f32 %v10203, %v3882
        %v10332 = vmul.f32 %v10204, %v3884
        %v10333 = vmul.f32 %v10205, %v3886
        %v10334 = vmul.f32 %v10206, %v3888
        %v10335 = vmul.f32 %v10207, %v3882
        %v10336 = vmul.f32 %v10208, %v3884
        %v10337 = vmul.f32 %v10209, %v3886
        %v10338 = vmul.f32 %v10210, %v3888
        %v10339 = vmul.f32 %v10211, %v3882
        %v10340 = vmul.f32 %v10212, %v3884
        %v10341 = vmul.f32 %v10213, %v3886
        %v10342 = vmul.f32 %v10214, %v3888
        %v10343 = vmul.f32 %v10215, %v3882
        %v10344 = vmul.f32 %v10216, %v3884
        %v10345 = vmul.f32 %v10217, %v3886
        %v10346 = vmul.f32 %v10218, %v3888
        %v10347 = vmul.f32 %v10219, %v3882
        %v10348 = vmul.f32 %v10220, %v3884
        %v10349 = vmul.f32 %v10221, %v3886
        %v10350 = vmul.f32 %v10222, %v3888
        %v10351 = vmul.f32 %v10223, %v3882
        %v10352 = vmul.f32 %v10224, %v3884
        %v10353 = vmul.f32 %v10225, %v3886
        %v10354 = vmul.f32 %v10226, %v3888
        %v10355 = vmul.f32 %v10227, %v3882
        %v10356 = vmul.f32 %v10228, %v3884
        %v10357 = vmul.f32 %v10229, %v3886
        %v10358 = vmul.f32 %v10230, %v3888
        %v10359 = vmul.f32 %v10231, %v3882
        %v10360 = vmul.f32 %v10232, %v3884
        %v10361 = vmul.f32 %v10233, %v3886
        %v10362 = vmul.f32 %v10234, %v3888
        %v10363 = vmul.f32 %v10235, %v3882
        %v10364 = vmul.f32 %v10236, %v3884
        %v10365 = vmul.f32 %v10237, %v3886
        %v10366 = vmul.f32 %v10238, %v3888
        %v10367 = vsel %vm615, %v10239, 0.0
        %v10368 = vsel %vm615, %v10240, 0.0
        %v10369 = vadd.f32 %v10367, %v10368
        %v10370 = vsel %vm615, %v10241, 0.0
        %v10371 = vadd.f32 %v10369, %v10370
        %v10372 = vsel %vm615, %v10242, 0.0
        %v10373 = vadd.f32 %v10371, %v10372
        %v10374 = vrot.slane %v10373, 4
        %v10375 = vadd.f32 %v10373, %v10374
        %v10376 = vrot.slane %v10375, 2
        %v10377 = vadd.f32 %v10375, %v10376
        %v10378 = vrot.slane %v10377, 1
        %v10379 = vadd.f32 %v10377, %v10378
        %v10380 = vsel %vm615, %v10243, 0.0
        %v10381 = vsel %vm615, %v10244, 0.0
        %v10382 = vadd.f32 %v10380, %v10381
        %v10383 = vsel %vm615, %v10245, 0.0
        %v10384 = vadd.f32 %v10382, %v10383
        %v10385 = vsel %vm615, %v10246, 0.0
        %v10386 = vadd.f32 %v10384, %v10385
        %v10387 = vrot.slane %v10386, 4
        %v10388 = vadd.f32 %v10386, %v10387
        %v10389 = vrot.slane %v10388, 2
        %v10390 = vadd.f32 %v10388, %v10389
        %v10391 = vrot.slane %v10390, 1
        %v10392 = vadd.f32 %v10390, %v10391
        %v10393 = vsel %vm615, %v10247, 0.0
        %v10394 = vsel %vm615, %v10248, 0.0
        %v10395 = vadd.f32 %v10393, %v10394
        %v10396 = vsel %vm615, %v10249, 0.0
        %v10397 = vadd.f32 %v10395, %v10396
        %v10398 = vsel %vm615, %v10250, 0.0
        %v10399 = vadd.f32 %v10397, %v10398
        %v10400 = vrot.slane %v10399, 4
        %v10401 = vadd.f32 %v10399, %v10400
        %v10402 = vrot.slane %v10401, 2
        %v10403 = vadd.f32 %v10401, %v10402
        %v10404 = vrot.slane %v10403, 1
        %v10405 = vadd.f32 %v10403, %v10404
        %v10406 = vsel %vm615, %v10251, 0.0
        %v10407 = vsel %vm615, %v10252, 0.0
        %v10408 = vadd.f32 %v10406, %v10407
        %v10409 = vsel %vm615, %v10253, 0.0
        %v10410 = vadd.f32 %v10408, %v10409
        %v10411 = vsel %vm615, %v10254, 0.0
        %v10412 = vadd.f32 %v10410, %v10411
        %v10413 = vrot.slane %v10412, 4
        %v10414 = vadd.f32 %v10412, %v10413
        %v10415 = vrot.slane %v10414, 2
        %v10416 = vadd.f32 %v10414, %v10415
        %v10417 = vrot.slane %v10416, 1
        %v10418 = vadd.f32 %v10416, %v10417
        %v10419 = vsel %vm615, %v10255, 0.0
        %v10420 = vsel %vm615, %v10256, 0.0
        %v10421 = vadd.f32 %v10419, %v10420
        %v10422 = vsel %vm615, %v10257, 0.0
        %v10423 = vadd.f32 %v10421, %v10422
        %v10424 = vsel %vm615, %v10258, 0.0
        %v10425 = vadd.f32 %v10423, %v10424
        %v10426 = vrot.slane %v10425, 4
        %v10427 = vadd.f32 %v10425, %v10426
        %v10428 = vrot.slane %v10427, 2
        %v10429 = vadd.f32 %v10427, %v10428
        %v10430 = vrot.slane %v10429, 1
        %v10431 = vadd.f32 %v10429, %v10430
        %v10432 = vsel %vm615, %v10259, 0.0
        %v10433 = vsel %vm615, %v10260, 0.0
        %v10434 = vadd.f32 %v10432, %v10433
        %v10435 = vsel %vm615, %v10261, 0.0
        %v10436 = vadd.f32 %v10434, %v10435
        %v10437 = vsel %vm615, %v10262, 0.0
        %v10438 = vadd.f32 %v10436, %v10437
        %v10439 = vrot.slane %v10438, 4
        %v10440 = vadd.f32 %v10438, %v10439
        %v10441 = vrot.slane %v10440, 2
        %v10442 = vadd.f32 %v10440, %v10441
        %v10443 = vrot.slane %v10442, 1
        %v10444 = vadd.f32 %v10442, %v10443
        %v10445 = vsel %vm615, %v10263, 0.0
        %v10446 = vsel %vm615, %v10264, 0.0
        %v10447 = vadd.f32 %v10445, %v10446
        %v10448 = vsel %vm615, %v10265, 0.0
        %v10449 = vadd.f32 %v10447, %v10448
        %v10450 = vsel %vm615, %v10266, 0.0
        %v10451 = vadd.f32 %v10449, %v10450
        %v10452 = vrot.slane %v10451, 4
        %v10453 = vadd.f32 %v10451, %v10452
        %v10454 = vrot.slane %v10453, 2
        %v10455 = vadd.f32 %v10453, %v10454
        %v10456 = vrot.slane %v10455, 1
        %v10457 = vadd.f32 %v10455, %v10456
        %v10458 = vsel %vm615, %v10267, 0.0
        %v10459 = vsel %vm615, %v10268, 0.0
        %v10460 = vadd.f32 %v10458, %v10459
        %v10461 = vsel %vm615, %v10269, 0.0
        %v10462 = vadd.f32 %v10460, %v10461
        %v10463 = vsel %vm615, %v10270, 0.0
        %v10464 = vadd.f32 %v10462, %v10463
        %v10465 = vrot.slane %v10464, 4
        %v10466 = vadd.f32 %v10464, %v10465
        %v10467 = vrot.slane %v10466, 2
        %v10468 = vadd.f32 %v10466, %v10467
        %v10469 = vrot.slane %v10468, 1
        %v10470 = vadd.f32 %v10468, %v10469
        %v10471 = vsel %vm615, %v10271, 0.0
        %v10472 = vsel %vm615, %v10272, 0.0
        %v10473 = vadd.f32 %v10471, %v10472
        %v10474 = vsel %vm615, %v10273, 0.0
        %v10475 = vadd.f32 %v10473, %v10474
        %v10476 = vsel %vm615, %v10274, 0.0
        %v10477 = vadd.f32 %v10475, %v10476
        %v10478 = vrot.slane %v10477, 4
        %v10479 = vadd.f32 %v10477, %v10478
        %v10480 = vrot.slane %v10479, 2
        %v10481 = vadd.f32 %v10479, %v10480
        %v10482 = vrot.slane %v10481, 1
        %v10483 = vadd.f32 %v10481, %v10482
        %v10484 = vsel %vm615, %v10275, 0.0
        %v10485 = vsel %vm615, %v10276, 0.0
        %v10486 = vadd.f32 %v10484, %v10485
        %v10487 = vsel %vm615, %v10277, 0.0
        %v10488 = vadd.f32 %v10486, %v10487
        %v10489 = vsel %vm615, %v10278, 0.0
        %v10490 = vadd.f32 %v10488, %v10489
        %v10491 = vrot.slane %v10490, 4
        %v10492 = vadd.f32 %v10490, %v10491
        %v10493 = vrot.slane %v10492, 2
        %v10494 = vadd.f32 %v10492, %v10493
        %v10495 = vrot.slane %v10494, 1
        %v10496 = vadd.f32 %v10494, %v10495
        %v10497 = vsel %vm615, %v10279, 0.0
        %v10498 = vsel %vm615, %v10280, 0.0
        %v10499 = vadd.f32 %v10497, %v10498
        %v10500 = vsel %vm615, %v10281, 0.0
        %v10501 = vadd.f32 %v10499, %v10500
        %v10502 = vsel %vm615, %v10282, 0.0
        %v10503 = vadd.f32 %v10501, %v10502
        %v10504 = vrot.slane %v10503, 4
        %v10505 = vadd.f32 %v10503, %v10504
        %v10506 = vrot.slane %v10505, 2
        %v10507 = vadd.f32 %v10505, %v10506
        %v10508 = vrot.slane %v10507, 1
        %v10509 = vadd.f32 %v10507, %v10508
        %v10510 = vsel %vm615, %v10283, 0.0
        %v10511 = vsel %vm615, %v10284, 0.0
        %v10512 = vadd.f32 %v10510, %v10511
        %v10513 = vsel %vm615, %v10285, 0.0
        %v10514 = vadd.f32 %v10512, %v10513
        %v10515 = vsel %vm615, %v10286, 0.0
        %v10516 = vadd.f32 %v10514, %v10515
        %v10517 = vrot.slane %v10516, 4
        %v10518 = vadd.f32 %v10516, %v10517
        %v10519 = vrot.slane %v10518, 2
        %v10520 = vadd.f32 %v10518, %v10519
        %v10521 = vrot.slane %v10520, 1
        %v10522 = vadd.f32 %v10520, %v10521
        %v10523 = vsel %vm615, %v10287, 0.0
        %v10524 = vsel %vm615, %v10288, 0.0
        %v10525 = vadd.f32 %v10523, %v10524
        %v10526 = vsel %vm615, %v10289, 0.0
        %v10527 = vadd.f32 %v10525, %v10526
        %v10528 = vsel %vm615, %v10290, 0.0
        %v10529 = vadd.f32 %v10527, %v10528
        %v10530 = vrot.slane %v10529, 4
        %v10531 = vadd.f32 %v10529, %v10530
        %v10532 = vrot.slane %v10531, 2
        %v10533 = vadd.f32 %v10531, %v10532
        %v10534 = vrot.slane %v10533, 1
        %v10535 = vadd.f32 %v10533, %v10534
        %v10536 = vsel %vm615, %v10291, 0.0
        %v10537 = vsel %vm615, %v10292, 0.0
        %v10538 = vadd.f32 %v10536, %v10537
        %v10539 = vsel %vm615, %v10293, 0.0
        %v10540 = vadd.f32 %v10538, %v10539
        %v10541 = vsel %vm615, %v10294, 0.0
        %v10542 = vadd.f32 %v10540, %v10541
        %v10543 = vrot.slane %v10542, 4
        %v10544 = vadd.f32 %v10542, %v10543
        %v10545 = vrot.slane %v10544, 2
        %v10546 = vadd.f32 %v10544, %v10545
        %v10547 = vrot.slane %v10546, 1
        %v10548 = vadd.f32 %v10546, %v10547
        %v10549 = vsel %vm615, %v10295, 0.0
        %v10550 = vsel %vm615, %v10296, 0.0
        %v10551 = vadd.f32 %v10549, %v10550
        %v10552 = vsel %vm615, %v10297, 0.0
        %v10553 = vadd.f32 %v10551, %v10552
        %v10554 = vsel %vm615, %v10298, 0.0
        %v10555 = vadd.f32 %v10553, %v10554
        %v10556 = vrot.slane %v10555, 4
        %v10557 = vadd.f32 %v10555, %v10556
        %v10558 = vrot.slane %v10557, 2
        %v10559 = vadd.f32 %v10557, %v10558
        %v10560 = vrot.slane %v10559, 1
        %v10561 = vadd.f32 %v10559, %v10560
        %v10562 = vsel %vm615, %v10299, 0.0
        %v10563 = vsel %vm615, %v10300, 0.0
        %v10564 = vadd.f32 %v10562, %v10563
        %v10565 = vsel %vm615, %v10301, 0.0
        %v10566 = vadd.f32 %v10564, %v10565
        %v10567 = vsel %vm615, %v10302, 0.0
        %v10568 = vadd.f32 %v10566, %v10567
        %v10569 = vrot.slane %v10568, 4
        %v10570 = vadd.f32 %v10568, %v10569
        %v10571 = vrot.slane %v10570, 2
        %v10572 = vadd.f32 %v10570, %v10571
        %v10573 = vrot.slane %v10572, 1
        %v10574 = vadd.f32 %v10572, %v10573
        %v10575 = vsel %vm615, %v10303, 0.0
        %v10576 = vsel %vm615, %v10304, 0.0
        %v10577 = vadd.f32 %v10575, %v10576
        %v10578 = vsel %vm615, %v10305, 0.0
        %v10579 = vadd.f32 %v10577, %v10578
        %v10580 = vsel %vm615, %v10306, 0.0
        %v10581 = vadd.f32 %v10579, %v10580
        %v10582 = vrot.slane %v10581, 4
        %v10583 = vadd.f32 %v10581, %v10582
        %v10584 = vrot.slane %v10583, 2
        %v10585 = vadd.f32 %v10583, %v10584
        %v10586 = vrot.slane %v10585, 1
        %v10587 = vadd.f32 %v10585, %v10586
        %v10588 = vsel %vm615, %v10307, 0.0
        %v10589 = vsel %vm615, %v10308, 0.0
        %v10590 = vadd.f32 %v10588, %v10589
        %v10591 = vsel %vm615, %v10309, 0.0
        %v10592 = vadd.f32 %v10590, %v10591
        %v10593 = vsel %vm615, %v10310, 0.0
        %v10594 = vadd.f32 %v10592, %v10593
        %v10595 = vrot.slane %v10594, 4
        %v10596 = vadd.f32 %v10594, %v10595
        %v10597 = vrot.slane %v10596, 2
        %v10598 = vadd.f32 %v10596, %v10597
        %v10599 = vrot.slane %v10598, 1
        %v10600 = vadd.f32 %v10598, %v10599
        %v10601 = vsel %vm615, %v10311, 0.0
        %v10602 = vsel %vm615, %v10312, 0.0
        %v10603 = vadd.f32 %v10601, %v10602
        %v10604 = vsel %vm615, %v10313, 0.0
        %v10605 = vadd.f32 %v10603, %v10604
        %v10606 = vsel %vm615, %v10314, 0.0
        %v10607 = vadd.f32 %v10605, %v10606
        %v10608 = vrot.slane %v10607, 4
        %v10609 = vadd.f32 %v10607, %v10608
        %v10610 = vrot.slane %v10609, 2
        %v10611 = vadd.f32 %v10609, %v10610
        %v10612 = vrot.slane %v10611, 1
        %v10613 = vadd.f32 %v10611, %v10612
        %v10614 = vsel %vm615, %v10315, 0.0
        %v10615 = vsel %vm615, %v10316, 0.0
        %v10616 = vadd.f32 %v10614, %v10615
        %v10617 = vsel %vm615, %v10317, 0.0
        %v10618 = vadd.f32 %v10616, %v10617
        %v10619 = vsel %vm615, %v10318, 0.0
        %v10620 = vadd.f32 %v10618, %v10619
        %v10621 = vrot.slane %v10620, 4
        %v10622 = vadd.f32 %v10620, %v10621
        %v10623 = vrot.slane %v10622, 2
        %v10624 = vadd.f32 %v10622, %v10623
        %v10625 = vrot.slane %v10624, 1
        %v10626 = vadd.f32 %v10624, %v10625
        %v10627 = vsel %vm615, %v10319, 0.0
        %v10628 = vsel %vm615, %v10320, 0.0
        %v10629 = vadd.f32 %v10627, %v10628
        %v10630 = vsel %vm615, %v10321, 0.0
        %v10631 = vadd.f32 %v10629, %v10630
        %v10632 = vsel %vm615, %v10322, 0.0
        %v10633 = vadd.f32 %v10631, %v10632
        %v10634 = vrot.slane %v10633, 4
        %v10635 = vadd.f32 %v10633, %v10634
        %v10636 = vrot.slane %v10635, 2
        %v10637 = vadd.f32 %v10635, %v10636
        %v10638 = vrot.slane %v10637, 1
        %v10639 = vadd.f32 %v10637, %v10638
        %v10640 = vsel %vm615, %v10323, 0.0
        %v10641 = vsel %vm615, %v10324, 0.0
        %v10642 = vadd.f32 %v10640, %v10641
        %v10643 = vsel %vm615, %v10325, 0.0
        %v10644 = vadd.f32 %v10642, %v10643
        %v10645 = vsel %vm615, %v10326, 0.0
        %v10646 = vadd.f32 %v10644, %v10645
        %v10647 = vrot.slane %v10646, 4
        %v10648 = vadd.f32 %v10646, %v10647
        %v10649 = vrot.slane %v10648, 2
        %v10650 = vadd.f32 %v10648, %v10649
        %v10651 = vrot.slane %v10650, 1
        %v10652 = vadd.f32 %v10650, %v10651
        %v10653 = vsel %vm615, %v10327, 0.0
        %v10654 = vsel %vm615, %v10328, 0.0
        %v10655 = vadd.f32 %v10653, %v10654
        %v10656 = vsel %vm615, %v10329, 0.0
        %v10657 = vadd.f32 %v10655, %v10656
        %v10658 = vsel %vm615, %v10330, 0.0
        %v10659 = vadd.f32 %v10657, %v10658
        %v10660 = vrot.slane %v10659, 4
        %v10661 = vadd.f32 %v10659, %v10660
        %v10662 = vrot.slane %v10661, 2
        %v10663 = vadd.f32 %v10661, %v10662
        %v10664 = vrot.slane %v10663, 1
        %v10665 = vadd.f32 %v10663, %v10664
        %v10666 = vsel %vm615, %v10331, 0.0
        %v10667 = vsel %vm615, %v10332, 0.0
        %v10668 = vadd.f32 %v10666, %v10667
        %v10669 = vsel %vm615, %v10333, 0.0
        %v10670 = vadd.f32 %v10668, %v10669
        %v10671 = vsel %vm615, %v10334, 0.0
        %v10672 = vadd.f32 %v10670, %v10671
        %v10673 = vrot.slane %v10672, 4
        %v10674 = vadd.f32 %v10672, %v10673
        %v10675 = vrot.slane %v10674, 2
        %v10676 = vadd.f32 %v10674, %v10675
        %v10677 = vrot.slane %v10676, 1
        %v10678 = vadd.f32 %v10676, %v10677
        %v10679 = vsel %vm615, %v10335, 0.0
        %v10680 = vsel %vm615, %v10336, 0.0
        %v10681 = vadd.f32 %v10679, %v10680
        %v10682 = vsel %vm615, %v10337, 0.0
        %v10683 = vadd.f32 %v10681, %v10682
        %v10684 = vsel %vm615, %v10338, 0.0
        %v10685 = vadd.f32 %v10683, %v10684
        %v10686 = vrot.slane %v10685, 4
        %v10687 = vadd.f32 %v10685, %v10686
        %v10688 = vrot.slane %v10687, 2
        %v10689 = vadd.f32 %v10687, %v10688
        %v10690 = vrot.slane %v10689, 1
        %v10691 = vadd.f32 %v10689, %v10690
        %v10692 = vsel %vm615, %v10339, 0.0
        %v10693 = vsel %vm615, %v10340, 0.0
        %v10694 = vadd.f32 %v10692, %v10693
        %v10695 = vsel %vm615, %v10341, 0.0
        %v10696 = vadd.f32 %v10694, %v10695
        %v10697 = vsel %vm615, %v10342, 0.0
        %v10698 = vadd.f32 %v10696, %v10697
        %v10699 = vrot.slane %v10698, 4
        %v10700 = vadd.f32 %v10698, %v10699
        %v10701 = vrot.slane %v10700, 2
        %v10702 = vadd.f32 %v10700, %v10701
        %v10703 = vrot.slane %v10702, 1
        %v10704 = vadd.f32 %v10702, %v10703
        %v10705 = vsel %vm615, %v10343, 0.0
        %v10706 = vsel %vm615, %v10344, 0.0
        %v10707 = vadd.f32 %v10705, %v10706
        %v10708 = vsel %vm615, %v10345, 0.0
        %v10709 = vadd.f32 %v10707, %v10708
        %v10710 = vsel %vm615, %v10346, 0.0
        %v10711 = vadd.f32 %v10709, %v10710
        %v10712 = vrot.slane %v10711, 4
        %v10713 = vadd.f32 %v10711, %v10712
        %v10714 = vrot.slane %v10713, 2
        %v10715 = vadd.f32 %v10713, %v10714
        %v10716 = vrot.slane %v10715, 1
        %v10717 = vadd.f32 %v10715, %v10716
        %v10718 = vsel %vm615, %v10347, 0.0
        %v10719 = vsel %vm615, %v10348, 0.0
        %v10720 = vadd.f32 %v10718, %v10719
        %v10721 = vsel %vm615, %v10349, 0.0
        %v10722 = vadd.f32 %v10720, %v10721
        %v10723 = vsel %vm615, %v10350, 0.0
        %v10724 = vadd.f32 %v10722, %v10723
        %v10725 = vrot.slane %v10724, 4
        %v10726 = vadd.f32 %v10724, %v10725
        %v10727 = vrot.slane %v10726, 2
        %v10728 = vadd.f32 %v10726, %v10727
        %v10729 = vrot.slane %v10728, 1
        %v10730 = vadd.f32 %v10728, %v10729
        %v10731 = vsel %vm615, %v10351, 0.0
        %v10732 = vsel %vm615, %v10352, 0.0
        %v10733 = vadd.f32 %v10731, %v10732
        %v10734 = vsel %vm615, %v10353, 0.0
        %v10735 = vadd.f32 %v10733, %v10734
        %v10736 = vsel %vm615, %v10354, 0.0
        %v10737 = vadd.f32 %v10735, %v10736
        %v10738 = vrot.slane %v10737, 4
        %v10739 = vadd.f32 %v10737, %v10738
        %v10740 = vrot.slane %v10739, 2
        %v10741 = vadd.f32 %v10739, %v10740
        %v10742 = vrot.slane %v10741, 1
        %v10743 = vadd.f32 %v10741, %v10742
        %v10744 = vsel %vm615, %v10355, 0.0
        %v10745 = vsel %vm615, %v10356, 0.0
        %v10746 = vadd.f32 %v10744, %v10745
        %v10747 = vsel %vm615, %v10357, 0.0
        %v10748 = vadd.f32 %v10746, %v10747
        %v10749 = vsel %vm615, %v10358, 0.0
        %v10750 = vadd.f32 %v10748, %v10749
        %v10751 = vrot.slane %v10750, 4
        %v10752 = vadd.f32 %v10750, %v10751
        %v10753 = vrot.slane %v10752, 2
        %v10754 = vadd.f32 %v10752, %v10753
        %v10755 = vrot.slane %v10754, 1
        %v10756 = vadd.f32 %v10754, %v10755
        %v10757 = vsel %vm615, %v10359, 0.0
        %v10758 = vsel %vm615, %v10360, 0.0
        %v10759 = vadd.f32 %v10757, %v10758
        %v10760 = vsel %vm615, %v10361, 0.0
        %v10761 = vadd.f32 %v10759, %v10760
        %v10762 = vsel %vm615, %v10362, 0.0
        %v10763 = vadd.f32 %v10761, %v10762
        %v10764 = vrot.slane %v10763, 4
        %v10765 = vadd.f32 %v10763, %v10764
        %v10766 = vrot.slane %v10765, 2
        %v10767 = vadd.f32 %v10765, %v10766
        %v10768 = vrot.slane %v10767, 1
        %v10769 = vadd.f32 %v10767, %v10768
        %v10770 = vsel %vm615, %v10363, 0.0
        %v10771 = vsel %vm615, %v10364, 0.0
        %v10772 = vadd.f32 %v10770, %v10771
        %v10773 = vsel %vm615, %v10365, 0.0
        %v10774 = vadd.f32 %v10772, %v10773
        %v10775 = vsel %vm615, %v10366, 0.0
        %v10776 = vadd.f32 %v10774, %v10775
        %v10777 = vrot.slane %v10776, 4
        %v10778 = vadd.f32 %v10776, %v10777
        %v10779 = vrot.slane %v10778, 2
        %v10780 = vadd.f32 %v10778, %v10779
        %v10781 = vrot.slane %v10780, 1
        %v10782 = vadd.f32 %v10780, %v10781
        %vm10799 = vcmask 1041409
        %v10800 = vsel %vm10799, %v2147, %v2138
        %vm10801 = vcmask 1042434
        %v10802 = vsel %vm10801, %v2156, %v10800
        %vm10803 = vcmask 1043459
        %v10804 = vsel %vm10803, %v2165, %v10802
        %vm10805 = vcmask 1044484
        %v10806 = vsel %vm10805, %v2174, %v10804
        %vm10807 = vcmask 1045509
        %v10808 = vsel %vm10807, %v2183, %v10806
        %vm10809 = vcmask 1046534
        %v10810 = vsel %vm10809, %v2192, %v10808
        %vm10811 = vcmask 1047559
        %v10812 = vsel %vm10811, %v2201, %v10810
        %v10813 = vsel %vm10799, %v2219, %v2210
        %v10814 = vsel %vm10801, %v2228, %v10813
        %v10815 = vsel %vm10803, %v2237, %v10814
        %v10816 = vsel %vm10805, %v2246, %v10815
        %v10817 = vsel %vm10807, %v2255, %v10816
        %v10818 = vsel %vm10809, %v2264, %v10817
        %v10819 = vsel %vm10811, %v2273, %v10818
        %v10822 = vadd.f32 %v689, %v10812
        %v10823 = vadd.f32 %v695, %v10819
        %v10840 = vsel %vm10799, %v3982, %v3969
        %v10841 = vsel %vm10801, %v3995, %v10840
        %v10842 = vsel %vm10803, %v4008, %v10841
        %v10843 = vsel %vm10805, %v4021, %v10842
        %v10844 = vsel %vm10807, %v4034, %v10843
        %v10845 = vsel %vm10809, %v4047, %v10844
        %v10846 = vsel %vm10811, %v4060, %v10845
        %v10847 = vsel %vm10799, %v4086, %v4073
        %v10848 = vsel %vm10801, %v4099, %v10847
        %v10849 = vsel %vm10803, %v4112, %v10848
        %v10850 = vsel %vm10805, %v4125, %v10849
        %v10851 = vsel %vm10807, %v4138, %v10850
        %v10852 = vsel %vm10809, %v4151, %v10851
        %v10853 = vsel %vm10811, %v4164, %v10852
        %10854 = vrot.lane.b32.xlu0 %v10846, 64
        %v10855 = vpop.permute.xlu0 %10854
        %10856 = vrot.lane.b32.xlu0 %v10853, 64
        %v10857 = vpop.permute.xlu0 %10856
        %v10860 = vadd.f32 %v10822, %v10855
        %v10861 = vadd.f32 %v10823, %v10857
        %v10862 = vmax.f32 %v10860, 0.0
        %v10863 = vmax.f32 %v10861, 0.0
        %10864 = vst.msk [vmem:[%s553] sm:$0xff] %vm1609, %v10862
        %10865 = vst.msk [vmem:[%s553 + $0x8] sm:$0xff] %vm1609, %v10863
        %v10898 = vsel %vm10799, %v6436, %v6427
        %v10899 = vsel %vm10801, %v6445, %v10898
        %v10900 = vsel %vm10803, %v6454, %v10899
        %v10901 = vsel %vm10805, %v6463, %v10900
        %v10902 = vsel %vm10807, %v6472, %v10901
        %v10903 = vsel %vm10809, %v6481, %v10902
        %v10904 = vsel %vm10811, %v6490, %v10903
        %v10905 = vsel %vm10799, %v6508, %v6499
        %v10906 = vsel %vm10801, %v6517, %v10905
        %v10907 = vsel %vm10803, %v6526, %v10906
        %v10908 = vsel %vm10805, %v6535, %v10907
        %v10909 = vsel %vm10807, %v6544, %v10908
        %v10910 = vsel %vm10809, %v6553, %v10909
        %v10911 = vsel %vm10811, %v6562, %v10910
        %v10912 = vsel %vm10799, %v6580, %v6571
        %v10913 = vsel %vm10801, %v6589, %v10912
        %v10914 = vsel %vm10803, %v6598, %v10913
        %v10915 = vsel %vm10805, %v6607, %v10914
        %v10916 = vsel %vm10807, %v6616, %v10915
        %v10917 = vsel %vm10809, %v6625, %v10916
        %v10918 = vsel %vm10811, %v6634, %v10917
        %v10919 = vsel %vm10799, %v6652, %v6643
        %v10920 = vsel %vm10801, %v6661, %v10919
        %v10921 = vsel %vm10803, %v6670, %v10920
        %v10922 = vsel %vm10805, %v6679, %v10921
        %v10923 = vsel %vm10807, %v6688, %v10922
        %v10924 = vsel %vm10809, %v6697, %v10923
        %v10925 = vsel %vm10811, %v6706, %v10924
        %v10930 = vadd.f32 %v880, %v10904
        %v10931 = vadd.f32 %v886, %v10911
        %v10932 = vadd.f32 %v892, %v10918
        %v10933 = vadd.f32 %v898, %v10925
        %v10966 = vsel %vm10799, %v10392, %v10379
        %v10967 = vsel %vm10801, %v10405, %v10966
        %v10968 = vsel %vm10803, %v10418, %v10967
        %v10969 = vsel %vm10805, %v10431, %v10968
        %v10970 = vsel %vm10807, %v10444, %v10969
        %v10971 = vsel %vm10809, %v10457, %v10970
        %v10972 = vsel %vm10811, %v10470, %v10971
        %v10973 = vsel %vm10799, %v10496, %v10483
        %v10974 = vsel %vm10801, %v10509, %v10973
        %v10975 = vsel %vm10803, %v10522, %v10974
        %v10976 = vsel %vm10805, %v10535, %v10975
        %v10977 = vsel %vm10807, %v10548, %v10976
        %v10978 = vsel %vm10809, %v10561, %v10977
        %v10979 = vsel %vm10811, %v10574, %v10978
        %v10980 = vsel %vm10799, %v10600, %v10587
        %v10981 = vsel %vm10801, %v10613, %v10980
        %v10982 = vsel %vm10803, %v10626, %v10981
        %v10983 = vsel %vm10805, %v10639, %v10982
        %v10984 = vsel %vm10807, %v10652, %v10983
        %v10985 = vsel %vm10809, %v10665, %v10984
        %v10986 = vsel %vm10811, %v10678, %v10985
        %v10987 = vsel %vm10799, %v10704, %v10691
        %v10988 = vsel %vm10801, %v10717, %v10987
        %v10989 = vsel %vm10803, %v10730, %v10988
        %v10990 = vsel %vm10805, %v10743, %v10989
        %v10991 = vsel %vm10807, %v10756, %v10990
        %v10992 = vsel %vm10809, %v10769, %v10991
        %v10993 = vsel %vm10811, %v10782, %v10992
        %v10998 = vadd.f32 %v10930, %v10972
        %v10999 = vadd.f32 %v10931, %v10979
        %v11000 = vadd.f32 %v10932, %v10986
        %v11001 = vadd.f32 %v10933, %v10993
        %v11002 = vmax.f32 %v10998, 0.0
        %v11003 = vmax.f32 %v10999, 0.0
        %v11004 = vmax.f32 %v11000, 0.0
        %v11005 = vmax.f32 %v11001, 0.0
        %11006 = vst.msk [vmem:[%s578] sm:$0xff] %vm615, %v11002
        %11007 = vst.msk [vmem:[%s578 + $0x8] sm:$0xff] %vm615, %v11003
        %11008 = vst.msk [vmem:[%s578 + $0x10] sm:$0xff] %vm615, %v11004
        %11009 = vst.msk [vmem:[%s578 + $0x18] sm:$0xff] %vm615, %v11005
        %s11010 = sand.u32 %s283, 1
        %s11011 = scalar_lea.sflag [#allocation4], %s11010
        %s11012 = sand.u32 %s283, 1
        %s11013 = smul.addr %s11012, 16
        %s11014 = scalar_lea.vmem [#allocation10], %s11013
        %s11015 = smul.u32 4, %s35
        %p11016 = scmp.lt.s32.totalorder %s11015, 7
        %s11017 = scalar_select %p11016, %s11015, 7
        %s11018 = smul.addr %s11017, 8
        %s11019 = scalar_lea.vmem %s11, %s11018
        // Predicated region
        $region77: #{tpu_custom_call.1} parent=59 // pred_check
          %p11020 = pneg %p293
        $region78: #{tpu_custom_call.1} parent=59 // pred_check_branch
          %11022 = sbr.rel (%p11020) target = $region80
        $region79: #{tpu_custom_call.1} parent=59 // pred_region
          %s11023 = smul.u32 2, %s35
          %s11025 = ssub.s32 256, 256
          %11026 = vsyncadd %s11011, %s11025
          %s11027 = smul.addr %s11023, 128
          %s11028 = scalar_lea.hbm %s10, %s11027
          %s11029 = sshll.u32 %s11014, 4
          %s11030 = int_to_ptr.vmem [resolvable:$true] %s11029
          %11035 = dma.vmem_to_hbm [thread:$0]  %s11030, 256, %s11028, %s11011, 128, 128, 8
        $region80: #{tpu_custom_call.1} parent=59 // pred_fallthru
          _
        // Predicated region
        $region81: #{tpu_custom_call.1} parent=59 // pred_check
          %p11036 = pneg %p319
        $region82: #{tpu_custom_call.1} parent=59 // pred_check_branch
          %11038 = sbr.rel (%p11036) target = $region84
        $region83: #{tpu_custom_call.1} parent=59 // pred_region
          %s11039 = smul.u32 4, %s35
        $region84: #{tpu_custom_call.1} parent=59 // pred_fallthru
          _
      $region60: #{tpu_custom_call.1} parent=5 // pred_fallthru
        _
      %p11040 = scmp.le.s32.totalorder 2, %s30
      // Predicated region
      $region85: #{tpu_custom_call.1} parent=5 // pred_check
        %p11041 = pneg %p11040
      $region86: #{tpu_custom_call.1} parent=5 // pred_check_branch
        %11043 = sbr.rel (%p11041) target = $region88
      $region87: #{tpu_custom_call.1} parent=5 // pred_region
        %s11044 = ssub.s32 %s30, 2
        // Predicated region
        $region89: #{tpu_custom_call.1} parent=87 // pred_check
          %p11045 = pneg %p299
        $region90: #{tpu_custom_call.1} parent=87 // pred_check_branch
          %11047 = sbr.rel (%p11045) target = $region92
        $region91: #{tpu_custom_call.1} parent=87 // pred_region
          %s11048 = sand.u32 %s284, 1
          %s11049 = scalar_lea.sflag [#allocation4], %s11048
          %s11050 = sand.u32 %s284, 1
          %s11051 = smul.addr %s11050, 16
          %s11052 = scalar_lea.vmem [#allocation10], %s11051
          %11053 = dma.done %s11049, 256
        $region92: #{tpu_custom_call.1} parent=87 // pred_fallthru
          _
        // Predicated region
        $region93: #{tpu_custom_call.1} parent=87 // pred_check
          %p11054 = pneg %p325
        $region94: #{tpu_custom_call.1} parent=87 // pred_check_branch
          %11056 = sbr.rel (%p11054) target = $region96
        $region95: #{tpu_custom_call.1} parent=87 // pred_region
          %s11057 = smul.u32 4, %s36
          %p11058 = scmp.lt.s32.totalorder %s11057, 7
          %s11059 = scalar_select %p11058, %s11057, 7
          %s11060 = smul.addr %s11059, 8
          %s11061 = scalar_lea.vmem %s11, %s11060
        $region96: #{tpu_custom_call.1} parent=87 // pred_fallthru
          _
      $region88: #{tpu_custom_call.1} parent=5 // pred_fallthru
        _
    $region6: #{tpu_custom_call.1} parent=1 // loop_footer
      %s34 = sadd.s32 1, %s30
    $region7: #{tpu_custom_call.1} parent=1 // loop_footer_branch
      %29 = sbr.rel target = $region3
    $region8: #{tpu_custom_call.1} parent=1 // loop_exit
      _
    %11062 = vsyncpa [#allocation3], 1
    %s11063 = scalar_lea.sflag [#allocation3], 1
    %11064 = vsyncpa %s11063, 1
    %11065 = vsyncpa [#allocation6], 1
    %s11066 = scalar_lea.sflag [#allocation6], 1
    %11067 = vsyncpa %s11066, 1
    %11068 = vsyncpa [#allocation9], 1
    %s11069 = scalar_lea.sflag [#allocation9], 1
    %11070 = vsyncpa %s11069, 1
    %11071 = vsyncpa [#allocation4], 1
    %s11072 = scalar_lea.sflag [#allocation4], 1
    %11073 = vsyncpa %s11072, 1

</llo_original>
